<compile_context>
chip_gen: v7x
topology: tpu7x:2x2x1
jax: 0.10.0
libtpu: 0.0.40
codegen_flags: <defaults>
</compile_context>

<pallas_src>
import jax
import jax.numpy as jnp
from jax.experimental import pallas as pl
from jax.experimental.pallas import tpu as pltpu

TILE_R = 512          # conv stage row tile (multiple of 8; sized for v7x 32 MiB scoped VMEM)
TILE_K = 512          # fc1 reduction tile (multiple of 128)
VMEM_LIMIT = 32 * 1024 * 1024


def _round_up(x, m):
    return (x + m - 1) // m * m


# ----------------------------- Pallas kernels ------------------------------


def _conv_pool_kernel(p_ref, w00_ref, w01_ref, w10_ref, w11_ref, b_ref, o_ref):
    """Fused 2x2-conv + 2x2 max-pool + bias + ReLU for one R-tile.

    p_ref   : (TR, 9*Cin) bf16   stride-2 3x3-footprint patch rows (one row per pooled pos)
    w??_ref : (9*Cin, Cout) bf16 zero-padded conv weight for pooling-window offset (q, p)
    b_ref   : (1, Cout) f32
    o_ref   : (TR, Cout) bf16
    """
    lhs = p_ref[...]
    y = jnp.dot(lhs, w00_ref[...], preferred_element_type=jnp.float32)
    y = jnp.maximum(y, jnp.dot(lhs, w01_ref[...], preferred_element_type=jnp.float32))
    y = jnp.maximum(y, jnp.dot(lhs, w10_ref[...], preferred_element_type=jnp.float32))
    y = jnp.maximum(y, jnp.dot(lhs, w11_ref[...], preferred_element_type=jnp.float32))
    # max-before-(bias,ReLU) is exact: bias is shared across the pool window, ReLU monotone.
    y = jnp.maximum(y + b_ref[...], 0.0)
    o_ref[...] = y.astype(o_ref.dtype)


def _fc_fused_kernel(x_ref, w1_ref, b1_ref, w2_ref, b2_ref, w3_ref, b3_ref, o_ref, acc_ref):
    """K-tiled fc1 (streamed weight, f32 accumulator) with fc2+fc3 fused in the epilogue."""
    k = pl.program_id(0)

    @pl.when(k == 0)
    def _():
        acc_ref[...] = jnp.zeros_like(acc_ref)

    acc_ref[...] += jnp.dot(x_ref[...], w1_ref[...], preferred_element_type=jnp.float32)

    @pl.when(k == pl.num_programs(0) - 1)
    def _():
        h1 = jnp.maximum(acc_ref[...] + b1_ref[...], 0.0)
        # TODO(synk): nn.Dropout(p=0.8) treated as eval-mode identity (training RNG not reproduced).
        h2 = jnp.dot(h1.astype(jnp.bfloat16), w2_ref[...], preferred_element_type=jnp.float32)
        h2 = jnp.maximum(h2 + b2_ref[...], 0.0)
        out = jnp.dot(h2.astype(jnp.bfloat16), w3_ref[...], preferred_element_type=jnp.float32)
        o_ref[...] = (out + b3_ref[...]).astype(o_ref.dtype)


# ------------------------------ Wrappers -----------------------------------


def conv_relu_pool(x_nhwc, p, *, tile_r=TILE_R):
    """conv2d(kernel=2, stride=1) -> ReLU -> max_pool2d(2,2); NHWC bf16 in / NHWC bf16 out."""
    N, H, W, C = x_nhwc.shape
    Cout = p["b"].shape[-1]
    Hp, Wp = (H - 1) // 2, (W - 1) // 2

    # Stride-2 3x3-footprint im2col: one (9*Cin) row per pooled output position.  This is
    # 2.25x the input bytes (vs 16x for per-offset 2x2 im2col) and is shared by all 4 GEMMs.
    taps = [x_nhwc[:, dy:dy + 2 * Hp:2, dx:dx + 2 * Wp:2, :]
            for dy in range(3) for dx in range(3)]
    patch = jnp.concatenate(taps, axis=-1).reshape(N * Hp * Wp, 9 * C)

    R, K9 = patch.shape
    tr = min(tile_r, _round_up(R, 8))
    R_pad = _round_up(R, tr)
    if R_pad != R:
        patch = jnp.pad(patch, ((0, R_pad - R), (0, 0)))

    out = pl.pallas_call(
        _conv_pool_kernel,
        out_shape=jax.ShapeDtypeStruct((R_pad, Cout), jnp.bfloat16),
        grid=(R_pad // tr,),
        in_specs=[pl.BlockSpec((tr, K9), lambda i: (i, 0))]
        + [pl.BlockSpec((K9, Cout), lambda i: (0, 0)) for _ in range(4)]
        + [pl.BlockSpec((1, Cout), lambda i: (0, 0))],
        out_specs=pl.BlockSpec((tr, Cout), lambda i: (i, 0)),
        compiler_params=pltpu.CompilerParams(
            dimension_semantics=("parallel",),
            vmem_limit_bytes=VMEM_LIMIT),
    )(patch, p["w00"], p["w01"], p["w10"], p["w11"], p["b"])
    return out[:R].reshape(N, Hp, Wp, Cout)


def fc_fused(feat, p, *, tile_k=TILE_K):
    """fc1(+ReLU) -> fc2(+ReLU) -> fc3 in one pallas_call (K-tiled fc1)."""
    M, K = feat.shape
    K_pad, N1 = p["w1"].shape
    N2 = p["w2"].shape[1]
    N3 = p["w3"].shape[1]
    M_pad = _round_up(max(M, 8), 8)

    x = jnp.zeros((M_pad, K_pad), jnp.bfloat16).at[:M, :K].set(feat.astype(jnp.bfloat16))

    out = pl.pallas_call(
        _fc_fused_kernel,
        out_shape=jax.ShapeDtypeStruct((M_pad, N3), jnp.float32),
        grid=(K_pad // tile_k,),
        in_specs=[
            pl.BlockSpec((M_pad, tile_k), lambda k: (0, k)),
            pl.BlockSpec((tile_k, N1), lambda k: (k, 0)),
            pl.BlockSpec((1, N1), lambda k: (0, 0)),
            pl.BlockSpec((N1, N2), lambda k: (0, 0)),
            pl.BlockSpec((1, N2), lambda k: (0, 0)),
            pl.BlockSpec((N2, N3), lambda k: (0, 0)),
            pl.BlockSpec((1, N3), lambda k: (0, 0)),
        ],
        out_specs=pl.BlockSpec((M_pad, N3), lambda k: (0, 0)),
        scratch_shapes=[pltpu.VMEM((M_pad, N1), jnp.float32)],
        compiler_params=pltpu.CompilerParams(
            dimension_semantics=("arbitrary",),
            vmem_limit_bytes=VMEM_LIMIT),
    )(x, p["w1"], p["b1"], p["w2"], p["b2"], p["w3"], p["b3"])
    return out[:M]


# ------------------------------ Model setup ---------------------------------


def _shifted_conv_weight(w_hwio, q, p):
    """(2,2,Cin,Cout) -> (9*Cin,Cout), zero-padded so that patch9 @ W_qp equals the 2x2 conv
    evaluated at pooling-window offset (q, p).  Built once at init."""
    _, _, cin, cout = w_hwio.shape
    w9 = jnp.zeros((3, 3, cin, cout), w_hwio.dtype)
    w9 = w9.at[q:q + 2, p:p + 2].set(w_hwio)
    return w9.reshape(9 * cin, cout)


def init_params(key, img=32):
    """Deterministic init mirroring the module's shapes (scaled-down image).  One-time
    weight transforms (tap folding, fc1 NCHW->NHWC row permutation, lane padding) happen
    here so the forward pass contains no runtime layout fixups."""
    conv_cfg = [(3, 32), (32, 64), (64, 128)]
    s = img
    for _ in conv_cfg:
        s = (s - 1) // 2            # conv(k=2,s=1) then max_pool(2,2) with floor
    to_linear = 128 * s * s         # equivalent of self._to_linear

    keys = jax.random.split(key, 12)
    ki = 0
    params = {}
    for idx, (cin, cout) in enumerate(conv_cfg, start=1):
        # HWIO layout (a PyTorch OIHW checkpoint would be transposed (2,3,1,0) once here).
        w = jax.random.normal(keys[ki], (2, 2, cin, cout), jnp.float32) / jnp.sqrt(4.0 * cin)
        b = jax.random.normal(keys[ki + 1], (cout,), jnp.float32) * 0.01
        ki += 2
        params[f"conv{idx}"] = {
            "w00": _shifted_conv_weight(w, 0, 0).astype(jnp.bfloat16),
            "w01": _shifted_conv_weight(w, 0, 1).astype(jnp.bfloat16),
            "w10": _shifted_conv_weight(w, 1, 0).astype(jnp.bfloat16),
            "w11": _shifted_conv_weight(w, 1, 1).astype(jnp.bfloat16),
            "b": b.reshape(1, cout),
        }

    # fc1: created in PyTorch (NCHW-flatten) row order, permuted ONCE to NHWC row order so
    # the kernel consumes the NHWC-flattened conv features directly (no runtime transpose).
    w1_nchw = jax.random.normal(keys[ki], (to_linear, 700), jnp.float32) / jnp.sqrt(float(to_linear))
    b1 = jax.random.normal(keys[ki + 1], (700,), jnp.float32) * 0.01
    ki += 2
    w1_nhwc = w1_nchw.reshape(128, s, s, 700).transpose(1, 2, 0, 3).reshape(to_linear, 700)
    k_pad = _round_up(to_linear, TILE_K)
    w1p = jnp.zeros((k_pad, 768), jnp.bfloat16).at[:to_linear, :700].set(w1_nhwc.astype(jnp.bfloat16))
    b1p = jnp.zeros((1, 768), jnp.float32).at[0, :700].set(b1)

    w2 = jax.random.normal(keys[ki], (700, 100), jnp.float32) / jnp.sqrt(700.0)
    b2 = jax.random.normal(keys[ki + 1], (100,), jnp.float32) * 0.01
    ki += 2
    w2p = jnp.zeros((768, 128), jnp.bfloat16).at[:700, :100].set(w2.astype(jnp.bfloat16))
    b2p = jnp.zeros((1, 128), jnp.float32).at[0, :100].set(b2)

    w3 = jax.random.normal(keys[ki], (100, 2), jnp.float32) / jnp.sqrt(100.0)
    b3 = jax.random.normal(keys[ki + 1], (2,), jnp.float32) * 0.01
    ki += 2
    w3p = jnp.zeros((128, 128), jnp.bfloat16).at[:100, :2].set(w3.astype(jnp.bfloat16))
    b3p = jnp.zeros((1, 128), jnp.float32).at[0, :2].set(b3)

    params["fc"] = {"w1": w1p, "b1": b1p, "w2": w2p, "b2": b2p, "w3": w3p, "b3": b3p}
    return params, to_linear


def can_forward(params, x_nchw):
    """Forward pass of `Can`: 3x(conv+relu+pool) -> flatten -> fc1+relu -> fc2+relu -> fc3."""
    x = jnp.transpose(x_nchw, (0, 2, 3, 1)).astype(jnp.bfloat16)   # NCHW -> NHWC (glue)
    for i in (1, 2, 3):
        x = conv_relu_pool(x, params[f"conv{i}"])
    n = x.shape[0]
    feat = x.reshape(n, -1)            # NHWC flatten; fc1 rows were permuted at init to match
    logits = fc_fused(feat, params["fc"])
    return logits[:, :2]               # drop the lane padding of fc3


# --------------------------------- Main --------------------------------------

if __name__ == "__main__":
    IMG = 32       # scaled-down spatial size (module uses 224); structure identical
    BATCH = 2

    params, to_linear = init_params(jax.random.PRNGKey(42), img=IMG)
    x = jax.random.normal(jax.random.PRNGKey(0), (BATCH, 3, IMG, IMG), jnp.float32)

    out = jax.jit(can_forward)(params, x)
    out = jax.block_until_ready(out)

    assert out.shape == (BATCH, 2), out.shape
    assert bool(jnp.all(jnp.isfinite(out)))
    print("KERNEL_OK")
</pallas_src>

<mosaic_0001>
module attributes {stable_mosaic.version = 11 : i64} {
  func.func @_conv_pool_kernel(%arg0: i32, %arg1: memref<456x27xbf16, #tpu.memory_space<vmem>>, %arg2: memref<27x32xbf16, #tpu.memory_space<vmem>>, %arg3: memref<27x32xbf16, #tpu.memory_space<vmem>>, %arg4: memref<27x32xbf16, #tpu.memory_space<vmem>>, %arg5: memref<27x32xbf16, #tpu.memory_space<vmem>>, %arg6: memref<1x32xf32, #tpu.memory_space<vmem>>, %arg7: memref<456x32xbf16, #tpu.memory_space<vmem>>) attributes {dimension_semantics = [#tpu.dimension_semantics<parallel>], iteration_bounds = array<i64: 1>, scalar_prefetch = 0 : i64, scratch_operands = 0 : i64, tpu.core_type = #tpu.core_type<tc>, window_params = [{transform_indices = @transform_0, window_bounds = array<i64: 456, 27>}, {pipeline_mode = #tpu.pipeline_mode<synchronous>, transform_indices = @transform_1, window_bounds = array<i64: 27, 32>}, {pipeline_mode = #tpu.pipeline_mode<synchronous>, transform_indices = @transform_2, window_bounds = array<i64: 27, 32>}, {pipeline_mode = #tpu.pipeline_mode<synchronous>, transform_indices = @transform_3, window_bounds = array<i64: 27, 32>}, {pipeline_mode = #tpu.pipeline_mode<synchronous>, transform_indices = @transform_4, window_bounds = array<i64: 27, 32>}, {pipeline_mode = #tpu.pipeline_mode<synchronous>, transform_indices = @transform_5, window_bounds = array<i64: 1, 32>}, {transform_indices = @transform_6, window_bounds = array<i64: 456, 32>}]} {
    %c0 = arith.constant 0 : index
    %c0_0 = arith.constant 0 : index
    %0 = vector.load %arg1[%c0, %c0_0] : memref<456x27xbf16, #tpu.memory_space<vmem>>, vector<456x27xbf16>
    %c0_1 = arith.constant 0 : index
    %c0_2 = arith.constant 0 : index
    %1 = vector.load %arg2[%c0_1, %c0_2] : memref<27x32xbf16, #tpu.memory_space<vmem>>, vector<27x32xbf16>
    %cst = arith.constant dense<0.000000e+00> : vector<456x32xf32>
    %2 = tpu.matmul %0, %1, %cst {dimension_numbers = #tpu.dot_dimension_numbers<[1], [0], [0], [1], [0, 0, 1, 1], [], []>} : vector<456x27xbf16>, vector<27x32xbf16>, vector<456x32xf32> -> vector<456x32xf32>
    %c0_3 = arith.constant 0 : index
    %c0_4 = arith.constant 0 : index
    %3 = vector.load %arg3[%c0_3, %c0_4] : memref<27x32xbf16, #tpu.memory_space<vmem>>, vector<27x32xbf16>
    %cst_5 = arith.constant dense<0.000000e+00> : vector<456x32xf32>
    %4 = tpu.matmul %0, %3, %cst_5 {dimension_numbers = #tpu.dot_dimension_numbers<[1], [0], [0], [1], [0, 0, 1, 1], [], []>} : vector<456x27xbf16>, vector<27x32xbf16>, vector<456x32xf32> -> vector<456x32xf32>
    %5 = arith.maximumf %2, %4 : vector<456x32xf32>
    %c0_6 = arith.constant 0 : index
    %c0_7 = arith.constant 0 : index
    %6 = vector.load %arg4[%c0_6, %c0_7] : memref<27x32xbf16, #tpu.memory_space<vmem>>, vector<27x32xbf16>
    %cst_8 = arith.constant dense<0.000000e+00> : vector<456x32xf32>
    %7 = tpu.matmul %0, %6, %cst_8 {dimension_numbers = #tpu.dot_dimension_numbers<[1], [0], [0], [1], [0, 0, 1, 1], [], []>} : vector<456x27xbf16>, vector<27x32xbf16>, vector<456x32xf32> -> vector<456x32xf32>
    %8 = arith.maximumf %5, %7 : vector<456x32xf32>
    %c0_9 = arith.constant 0 : index
    %c0_10 = arith.constant 0 : index
    %9 = vector.load %arg5[%c0_9, %c0_10] : memref<27x32xbf16, #tpu.memory_space<vmem>>, vector<27x32xbf16>
    %cst_11 = arith.constant dense<0.000000e+00> : vector<456x32xf32>
    %10 = tpu.matmul %0, %9, %cst_11 {dimension_numbers = #tpu.dot_dimension_numbers<[1], [0], [0], [1], [0, 0, 1, 1], [], []>} : vector<456x27xbf16>, vector<27x32xbf16>, vector<456x32xf32> -> vector<456x32xf32>
    %11 = arith.maximumf %8, %10 : vector<456x32xf32>
    %c0_12 = arith.constant 0 : index
    %c0_13 = arith.constant 0 : index
    %12 = vector.load %arg6[%c0_12, %c0_13] : memref<1x32xf32, #tpu.memory_space<vmem>>, vector<1x32xf32>
    %13 = vector.broadcast %12 : vector<1x32xf32> to vector<456x32xf32>
    %14 = arith.addf %11, %13 : vector<456x32xf32>
    %cst_14 = arith.constant 0.000000e+00 : f32
    %15 = vector.broadcast %cst_14 : f32 to vector<456x32xf32>
    %16 = arith.maximumf %14, %15 : vector<456x32xf32>
    %17 = arith.truncf %16 : vector<456x32xf32> to vector<456x32xbf16>
    %c0_15 = arith.constant 0 : index
    %c0_16 = arith.constant 0 : index
    %18 = vector.load %arg7[%c0_15, %c0_16] : memref<456x32xbf16, #tpu.memory_space<vmem>>, vector<456x32xbf16>
    tpu.vector_store %arg7[%c0_15, %c0_16], %17 {strides = array<i32>} : memref<456x32xbf16, #tpu.memory_space<vmem>>, vector<456x32xbf16>,
    return
  }
  func.func @transform_0(%arg0: i32) -> (i32, i32) {
    %c0_i32 = arith.constant 0 : i32
    %c0_i32_0 = arith.constant 0 : i32
    return %arg0, %c0_i32 : i32, i32
  }
  func.func @transform_1(%arg0: i32) -> (i32, i32) {
    %c0_i32 = arith.constant 0 : i32
    %c0_i32_0 = arith.constant 0 : i32
    %c0_i32_1 = arith.constant 0 : i32
    return %c0_i32, %c0_i32_0 : i32, i32
  }
  func.func @transform_2(%arg0: i32) -> (i32, i32) {
    %c0_i32 = arith.constant 0 : i32
    %c0_i32_0 = arith.constant 0 : i32
    %c0_i32_1 = arith.constant 0 : i32
    return %c0_i32, %c0_i32_0 : i32, i32
  }
  func.func @transform_3(%arg0: i32) -> (i32, i32) {
    %c0_i32 = arith.constant 0 : i32
    %c0_i32_0 = arith.constant 0 : i32
    %c0_i32_1 = arith.constant 0 : i32
    return %c0_i32, %c0_i32_0 : i32, i32
  }
  func.func @transform_4(%arg0: i32) -> (i32, i32) {
    %c0_i32 = arith.constant 0 : i32
    %c0_i32_0 = arith.constant 0 : i32
    %c0_i32_1 = arith.constant 0 : i32
    return %c0_i32, %c0_i32_0 : i32, i32
  }
  func.func @transform_5(%arg0: i32) -> (i32, i32) {
    %c0_i32 = arith.constant 0 : i32
    %c0_i32_0 = arith.constant 0 : i32
    %c0_i32_1 = arith.constant 0 : i32
    return %c0_i32, %c0_i32_0 : i32, i32
  }
  func.func @transform_6(%arg0: i32) -> (i32, i32) {
    %c0_i32 = arith.constant 0 : i32
    %c0_i32_0 = arith.constant 0 : i32
    return %arg0, %c0_i32 : i32, i32
  }
}

module attributes {stable_mosaic.version = 11 : i64} {
  func.func @_conv_pool_kernel(%arg0: i32, %arg1: memref<104x288xbf16, #tpu.memory_space<vmem>>, %arg2: memref<288x64xbf16, #tpu.memory_space<vmem>>, %arg3: memref<288x64xbf16, #tpu.memory_space<vmem>>, %arg4: memref<288x64xbf16, #tpu.memory_space<vmem>>, %arg5: memref<288x64xbf16, #tpu.memory_space<vmem>>, %arg6: memref<1x64xf32, #tpu.memory_space<vmem>>, %arg7: memref<104x64xbf16, #tpu.memory_space<vmem>>) attributes {dimension_semantics = [#tpu.dimension_semantics<parallel>], iteration_bounds = array<i64: 1>, scalar_prefetch = 0 : i64, scratch_operands = 0 : i64, tpu.core_type = #tpu.core_type<tc>, window_params = [{transform_indices = @transform_0, window_bounds = array<i64: 104, 288>}, {pipeline_mode = #tpu.pipeline_mode<synchronous>, transform_indices = @transform_1, window_bounds = array<i64: 288, 64>}, {pipeline_mode = #tpu.pipeline_mode<synchronous>, transform_indices = @transform_2, window_bounds = array<i64: 288, 64>}, {pipeline_mode = #tpu.pipeline_mode<synchronous>, transform_indices = @transform_3, window_bounds = array<i64: 288, 64>}, {pipeline_mode = #tpu.pipeline_mode<synchronous>, transform_indices = @transform_4, window_bounds = array<i64: 288, 64>}, {pipeline_mode = #tpu.pipeline_mode<synchronous>, transform_indices = @transform_5, window_bounds = array<i64: 1, 64>}, {transform_indices = @transform_6, window_bounds = array<i64: 104, 64>}]} {
    %c0 = arith.constant 0 : index
    %c0_0 = arith.constant 0 : index
    %0 = vector.load %arg1[%c0, %c0_0] : memref<104x288xbf16, #tpu.memory_space<vmem>>, vector<104x288xbf16>
    %c0_1 = arith.constant 0 : index
    %c0_2 = arith.constant 0 : index
    %1 = vector.load %arg2[%c0_1, %c0_2] : memref<288x64xbf16, #tpu.memory_space<vmem>>, vector<288x64xbf16>
    %cst = arith.constant dense<0.000000e+00> : vector<104x64xf32>
    %2 = tpu.matmul %0, %1, %cst {dimension_numbers = #tpu.dot_dimension_numbers<[1], [0], [0], [1], [0, 0, 1, 1], [], []>} : vector<104x288xbf16>, vector<288x64xbf16>, vector<104x64xf32> -> vector<104x64xf32>
    %c0_3 = arith.constant 0 : index
    %c0_4 = arith.constant 0 : index
    %3 = vector.load %arg3[%c0_3, %c0_4] : memref<288x64xbf16, #tpu.memory_space<vmem>>, vector<288x64xbf16>
    %cst_5 = arith.constant dense<0.000000e+00> : vector<104x64xf32>
    %4 = tpu.matmul %0, %3, %cst_5 {dimension_numbers = #tpu.dot_dimension_numbers<[1], [0], [0], [1], [0, 0, 1, 1], [], []>} : vector<104x288xbf16>, vector<288x64xbf16>, vector<104x64xf32> -> vector<104x64xf32>
    %5 = arith.maximumf %2, %4 : vector<104x64xf32>
    %c0_6 = arith.constant 0 : index
    %c0_7 = arith.constant 0 : index
    %6 = vector.load %arg4[%c0_6, %c0_7] : memref<288x64xbf16, #tpu.memory_space<vmem>>, vector<288x64xbf16>
    %cst_8 = arith.constant dense<0.000000e+00> : vector<104x64xf32>
    %7 = tpu.matmul %0, %6, %cst_8 {dimension_numbers = #tpu.dot_dimension_numbers<[1], [0], [0], [1], [0, 0, 1, 1], [], []>} : vector<104x288xbf16>, vector<288x64xbf16>, vector<104x64xf32> -> vector<104x64xf32>
    %8 = arith.maximumf %5, %7 : vector<104x64xf32>
    %c0_9 = arith.constant 0 : index
    %c0_10 = arith.constant 0 : index
    %9 = vector.load %arg5[%c0_9, %c0_10] : memref<288x64xbf16, #tpu.memory_space<vmem>>, vector<288x64xbf16>
    %cst_11 = arith.constant dense<0.000000e+00> : vector<104x64xf32>
    %10 = tpu.matmul %0, %9, %cst_11 {dimension_numbers = #tpu.dot_dimension_numbers<[1], [0], [0], [1], [0, 0, 1, 1], [], []>} : vector<104x288xbf16>, vector<288x64xbf16>, vector<104x64xf32> -> vector<104x64xf32>
    %11 = arith.maximumf %8, %10 : vector<104x64xf32>
    %c0_12 = arith.constant 0 : index
    %c0_13 = arith.constant 0 : index
    %12 = vector.load %arg6[%c0_12, %c0_13] : memref<1x64xf32, #tpu.memory_space<vmem>>, vector<1x64xf32>
    %13 = vector.broadcast %12 : vector<1x64xf32> to vector<104x64xf32>
    %14 = arith.addf %11, %13 : vector<104x64xf32>
    %cst_14 = arith.constant 0.000000e+00 : f32
    %15 = vector.broadcast %cst_14 : f32 to vector<104x64xf32>
    %16 = arith.maximumf %14, %15 : vector<104x64xf32>
    %17 = arith.truncf %16 : vector<104x64xf32> to vector<104x64xbf16>
    %c0_15 = arith.constant 0 : index
    %c0_16 = arith.constant 0 : index
    %18 = vector.load %arg7[%c0_15, %c0_16] : memref<104x64xbf16, #tpu.memory_space<vmem>>, vector<104x64xbf16>
    tpu.vector_store %arg7[%c0_15, %c0_16], %17 {strides = array<i32>} : memref<104x64xbf16, #tpu.memory_space<vmem>>, vector<104x64xbf16>,
    return
  }
  func.func @transform_0(%arg0: i32) -> (i32, i32) {
    %c0_i32 = arith.constant 0 : i32
    %c0_i32_0 = arith.constant 0 : i32
    return %arg0, %c0_i32 : i32, i32
  }
  func.func @transform_1(%arg0: i32) -> (i32, i32) {
    %c0_i32 = arith.constant 0 : i32
    %c0_i32_0 = arith.constant 0 : i32
    %c0_i32_1 = arith.constant 0 : i32
    return %c0_i32, %c0_i32_0 : i32, i32
  }
  func.func @transform_2(%arg0: i32) -> (i32, i32) {
    %c0_i32 = arith.constant 0 : i32
    %c0_i32_0 = arith.constant 0 : i32
    %c0_i32_1 = arith.constant 0 : i32
    return %c0_i32, %c0_i32_0 : i32, i32
  }
  func.func @transform_3(%arg0: i32) -> (i32, i32) {
    %c0_i32 = arith.constant 0 : i32
    %c0_i32_0 = arith.constant 0 : i32
    %c0_i32_1 = arith.constant 0 : i32
    return %c0_i32, %c0_i32_0 : i32, i32
  }
  func.func @transform_4(%arg0: i32) -> (i32, i32) {
    %c0_i32 = arith.constant 0 : i32
    %c0_i32_0 = arith.constant 0 : i32
    %c0_i32_1 = arith.constant 0 : i32
    return %c0_i32, %c0_i32_0 : i32, i32
  }
  func.func @transform_5(%arg0: i32) -> (i32, i32) {
    %c0_i32 = arith.constant 0 : i32
    %c0_i32_0 = arith.constant 0 : i32
    %c0_i32_1 = arith.constant 0 : i32
    return %c0_i32, %c0_i32_0 : i32, i32
  }
  func.func @transform_6(%arg0: i32) -> (i32, i32) {
    %c0_i32 = arith.constant 0 : i32
    %c0_i32_0 = arith.constant 0 : i32
    return %arg0, %c0_i32 : i32, i32
  }
}

module attributes {stable_mosaic.version = 11 : i64} {
  func.func @_conv_pool_kernel(%arg0: i32, %arg1: memref<24x576xbf16, #tpu.memory_space<vmem>>, %arg2: memref<576x128xbf16, #tpu.memory_space<vmem>>, %arg3: memref<576x128xbf16, #tpu.memory_space<vmem>>, %arg4: memref<576x128xbf16, #tpu.memory_space<vmem>>, %arg5: memref<576x128xbf16, #tpu.memory_space<vmem>>, %arg6: memref<1x128xf32, #tpu.memory_space<vmem>>, %arg7: memref<24x128xbf16, #tpu.memory_space<vmem>>) attributes {dimension_semantics = [#tpu.dimension_semantics<parallel>], iteration_bounds = array<i64: 1>, scalar_prefetch = 0 : i64, scratch_operands = 0 : i64, tpu.core_type = #tpu.core_type<tc>, window_params = [{transform_indices = @transform_0, window_bounds = array<i64: 24, 576>}, {pipeline_mode = #tpu.pipeline_mode<synchronous>, transform_indices = @transform_1, window_bounds = array<i64: 576, 128>}, {pipeline_mode = #tpu.pipeline_mode<synchronous>, transform_indices = @transform_2, window_bounds = array<i64: 576, 128>}, {pipeline_mode = #tpu.pipeline_mode<synchronous>, transform_indices = @transform_3, window_bounds = array<i64: 576, 128>}, {pipeline_mode = #tpu.pipeline_mode<synchronous>, transform_indices = @transform_4, window_bounds = array<i64: 576, 128>}, {pipeline_mode = #tpu.pipeline_mode<synchronous>, transform_indices = @transform_5, window_bounds = array<i64: 1, 128>}, {transform_indices = @transform_6, window_bounds = array<i64: 24, 128>}]} {
    %c0 = arith.constant 0 : index
    %c0_0 = arith.constant 0 : index
    %0 = vector.load %arg1[%c0, %c0_0] : memref<24x576xbf16, #tpu.memory_space<vmem>>, vector<24x576xbf16>
    %c0_1 = arith.constant 0 : index
    %c0_2 = arith.constant 0 : index
    %1 = vector.load %arg2[%c0_1, %c0_2] : memref<576x128xbf16, #tpu.memory_space<vmem>>, vector<576x128xbf16>
    %cst = arith.constant dense<0.000000e+00> : vector<24x128xf32>
    %2 = tpu.matmul %0, %1, %cst {dimension_numbers = #tpu.dot_dimension_numbers<[1], [0], [0], [1], [0, 0, 1, 1], [], []>} : vector<24x576xbf16>, vector<576x128xbf16>, vector<24x128xf32> -> vector<24x128xf32>
    %c0_3 = arith.constant 0 : index
    %c0_4 = arith.constant 0 : index
    %3 = vector.load %arg3[%c0_3, %c0_4] : memref<576x128xbf16, #tpu.memory_space<vmem>>, vector<576x128xbf16>
    %cst_5 = arith.constant dense<0.000000e+00> : vector<24x128xf32>
    %4 = tpu.matmul %0, %3, %cst_5 {dimension_numbers = #tpu.dot_dimension_numbers<[1], [0], [0], [1], [0, 0, 1, 1], [], []>} : vector<24x576xbf16>, vector<576x128xbf16>, vector<24x128xf32> -> vector<24x128xf32>
    %5 = arith.maximumf %2, %4 : vector<24x128xf32>
    %c0_6 = arith.constant 0 : index
    %c0_7 = arith.constant 0 : index
    %6 = vector.load %arg4[%c0_6, %c0_7] : memref<576x128xbf16, #tpu.memory_space<vmem>>, vector<576x128xbf16>
    %cst_8 = arith.constant dense<0.000000e+00> : vector<24x128xf32>
    %7 = tpu.matmul %0, %6, %cst_8 {dimension_numbers = #tpu.dot_dimension_numbers<[1], [0], [0], [1], [0, 0, 1, 1], [], []>} : vector<24x576xbf16>, vector<576x128xbf16>, vector<24x128xf32> -> vector<24x128xf32>
    %8 = arith.maximumf %5, %7 : vector<24x128xf32>
    %c0_9 = arith.constant 0 : index
    %c0_10 = arith.constant 0 : index
    %9 = vector.load %arg5[%c0_9, %c0_10] : memref<576x128xbf16, #tpu.memory_space<vmem>>, vector<576x128xbf16>
    %cst_11 = arith.constant dense<0.000000e+00> : vector<24x128xf32>
    %10 = tpu.matmul %0, %9, %cst_11 {dimension_numbers = #tpu.dot_dimension_numbers<[1], [0], [0], [1], [0, 0, 1, 1], [], []>} : vector<24x576xbf16>, vector<576x128xbf16>, vector<24x128xf32> -> vector<24x128xf32>
    %11 = arith.maximumf %8, %10 : vector<24x128xf32>
    %c0_12 = arith.constant 0 : index
    %c0_13 = arith.constant 0 : index
    %12 = vector.load %arg6[%c0_12, %c0_13] : memref<1x128xf32, #tpu.memory_space<vmem>>, vector<1x128xf32>
    %13 = vector.broadcast %12 : vector<1x128xf32> to vector<24x128xf32>
    %14 = arith.addf %11, %13 : vector<24x128xf32>
    %cst_14 = arith.constant 0.000000e+00 : f32
    %15 = vector.broadcast %cst_14 : f32 to vector<24x128xf32>
    %16 = arith.maximumf %14, %15 : vector<24x128xf32>
    %17 = arith.truncf %16 : vector<24x128xf32> to vector<24x128xbf16>
    %c0_15 = arith.constant 0 : index
    %c0_16 = arith.constant 0 : index
    %18 = vector.load %arg7[%c0_15, %c0_16] : memref<24x128xbf16, #tpu.memory_space<vmem>>, vector<24x128xbf16>
    tpu.vector_store %arg7[%c0_15, %c0_16], %17 {strides = array<i32>} : memref<24x128xbf16, #tpu.memory_space<vmem>>, vector<24x128xbf16>,
    return
  }
  func.func @transform_0(%arg0: i32) -> (i32, i32) {
    %c0_i32 = arith.constant 0 : i32
    %c0_i32_0 = arith.constant 0 : i32
    return %arg0, %c0_i32 : i32, i32
  }
  func.func @transform_1(%arg0: i32) -> (i32, i32) {
    %c0_i32 = arith.constant 0 : i32
    %c0_i32_0 = arith.constant 0 : i32
    %c0_i32_1 = arith.constant 0 : i32
    return %c0_i32, %c0_i32_0 : i32, i32
  }
  func.func @transform_2(%arg0: i32) -> (i32, i32) {
    %c0_i32 = arith.constant 0 : i32
    %c0_i32_0 = arith.constant 0 : i32
    %c0_i32_1 = arith.constant 0 : i32
    return %c0_i32, %c0_i32_0 : i32, i32
  }
  func.func @transform_3(%arg0: i32) -> (i32, i32) {
    %c0_i32 = arith.constant 0 : i32
    %c0_i32_0 = arith.constant 0 : i32
    %c0_i32_1 = arith.constant 0 : i32
    return %c0_i32, %c0_i32_0 : i32, i32
  }
  func.func @transform_4(%arg0: i32) -> (i32, i32) {
    %c0_i32 = arith.constant 0 : i32
    %c0_i32_0 = arith.constant 0 : i32
    %c0_i32_1 = arith.constant 0 : i32
    return %c0_i32, %c0_i32_0 : i32, i32
  }
  func.func @transform_5(%arg0: i32) -> (i32, i32) {
    %c0_i32 = arith.constant 0 : i32
    %c0_i32_0 = arith.constant 0 : i32
    %c0_i32_1 = arith.constant 0 : i32
    return %c0_i32, %c0_i32_0 : i32, i32
  }
  func.func @transform_6(%arg0: i32) -> (i32, i32) {
    %c0_i32 = arith.constant 0 : i32
    %c0_i32_0 = arith.constant 0 : i32
    return %arg0, %c0_i32 : i32, i32
  }
}

module attributes {stable_mosaic.version = 11 : i64} {
  func.func @_fc_fused_kernel(%arg0: i32, %arg1: memref<8x512xbf16, #tpu.memory_space<vmem>>, %arg2: memref<512x768xbf16, #tpu.memory_space<vmem>>, %arg3: memref<1x768xf32, #tpu.memory_space<vmem>>, %arg4: memref<768x128xbf16, #tpu.memory_space<vmem>>, %arg5: memref<1x128xf32, #tpu.memory_space<vmem>>, %arg6: memref<128x128xbf16, #tpu.memory_space<vmem>>, %arg7: memref<1x128xf32, #tpu.memory_space<vmem>>, %arg8: memref<8x128xf32, #tpu.memory_space<vmem>>, %arg9: memref<8x768xf32, #tpu.memory_space<vmem>>) attributes {dimension_semantics = [#tpu.dimension_semantics<arbitrary>], iteration_bounds = array<i64: 3>, scalar_prefetch = 0 : i64, scratch_operands = 1 : i64, tpu.core_type = #tpu.core_type<tc>, window_params = [{transform_indices = @transform_0, window_bounds = array<i64: 8, 512>}, {transform_indices = @transform_1, window_bounds = array<i64: 512, 768>}, {pipeline_mode = #tpu.pipeline_mode<synchronous>, transform_indices = @transform_2, window_bounds = array<i64: 1, 768>}, {pipeline_mode = #tpu.pipeline_mode<synchronous>, transform_indices = @transform_3, window_bounds = array<i64: 768, 128>}, {pipeline_mode = #tpu.pipeline_mode<synchronous>, transform_indices = @transform_4, window_bounds = array<i64: 1, 128>}, {pipeline_mode = #tpu.pipeline_mode<synchronous>, transform_indices = @transform_5, window_bounds = array<i64: 128, 128>}, {pipeline_mode = #tpu.pipeline_mode<synchronous>, transform_indices = @transform_6, window_bounds = array<i64: 1, 128>}, {pipeline_mode = #tpu.pipeline_mode<synchronous>, transform_indices = @transform_7, window_bounds = array<i64: 8, 128>}]} {
    %c0_i32 = arith.constant 0 : i32
    %0 = arith.cmpi eq, %arg0, %c0_i32 : i32
    %1 = arith.extui %0 : i1 to i32
    %c0_i32_0 = arith.constant 0 : i32
    %2 = arith.cmpi ne, %1, %c0_i32_0 : i32
    scf.if %2 {
      %cst_9 = arith.constant 0.000000e+00 : f32
      %12 = vector.broadcast %cst_9 : f32 to vector<8x768xf32>
      %c0_10 = arith.constant 0 : index
      %c0_11 = arith.constant 0 : index
      %13 = vector.load %arg9[%c0_10, %c0_11] : memref<8x768xf32, #tpu.memory_space<vmem>>, vector<8x768xf32>
      tpu.vector_store %arg9[%c0_10, %c0_11], %12 {strides = array<i32>} : memref<8x768xf32, #tpu.memory_space<vmem>>, vector<8x768xf32>,
    } else {
    }
    %c0 = arith.constant 0 : index
    %c0_1 = arith.constant 0 : index
    %3 = vector.load %arg9[%c0, %c0_1] : memref<8x768xf32, #tpu.memory_space<vmem>>, vector<8x768xf32>
    %c0_2 = arith.constant 0 : index
    %c0_3 = arith.constant 0 : index
    %4 = vector.load %arg1[%c0_2, %c0_3] : memref<8x512xbf16, #tpu.memory_space<vmem>>, vector<8x512xbf16>
    %c0_4 = arith.constant 0 : index
    %c0_5 = arith.constant 0 : index
    %5 = vector.load %arg2[%c0_4, %c0_5] : memref<512x768xbf16, #tpu.memory_space<vmem>>, vector<512x768xbf16>
    %cst = arith.constant dense<0.000000e+00> : vector<8x768xf32>
    %6 = tpu.matmul %4, %5, %cst {dimension_numbers = #tpu.dot_dimension_numbers<[1], [0], [0], [1], [0, 0, 1, 1], [], []>} : vector<8x512xbf16>, vector<512x768xbf16>, vector<8x768xf32> -> vector<8x768xf32>
    %7 = arith.addf %3, %6 : vector<8x768xf32>
    %c0_6 = arith.constant 0 : index
    %c0_7 = arith.constant 0 : index
    %8 = vector.load %arg9[%c0_6, %c0_7] : memref<8x768xf32, #tpu.memory_space<vmem>>, vector<8x768xf32>
    tpu.vector_store %arg9[%c0_6, %c0_7], %7 {strides = array<i32>} : memref<8x768xf32, #tpu.memory_space<vmem>>, vector<8x768xf32>,
    %c2_i32 = arith.constant 2 : i32
    %9 = arith.cmpi eq, %arg0, %c2_i32 : i32
    %10 = arith.extui %9 : i1 to i32
    %c0_i32_8 = arith.constant 0 : i32
    %11 = arith.cmpi ne, %10, %c0_i32_8 : i32
    scf.if %11 {
      %c0_9 = arith.constant 0 : index
      %c0_10 = arith.constant 0 : index
      %12 = vector.load %arg9[%c0_9, %c0_10] : memref<8x768xf32, #tpu.memory_space<vmem>>, vector<8x768xf32>
      %c0_11 = arith.constant 0 : index
      %c0_12 = arith.constant 0 : index
      %13 = vector.load %arg3[%c0_11, %c0_12] : memref<1x768xf32, #tpu.memory_space<vmem>>, vector<1x768xf32>
      %14 = vector.broadcast %13 : vector<1x768xf32> to vector<8x768xf32>
      %15 = arith.addf %12, %14 : vector<8x768xf32>
      %cst_13 = arith.constant 0.000000e+00 : f32
      %16 = vector.broadcast %cst_13 : f32 to vector<8x768xf32>
      %17 = arith.maximumf %15, %16 : vector<8x768xf32>
      %18 = arith.truncf %17 : vector<8x768xf32> to vector<8x768xbf16>
      %c0_14 = arith.constant 0 : index
      %c0_15 = arith.constant 0 : index
      %19 = vector.load %arg4[%c0_14, %c0_15] : memref<768x128xbf16, #tpu.memory_space<vmem>>, vector<768x128xbf16>
      %cst_16 = arith.constant dense<0.000000e+00> : vector<8x128xf32>
      %20 = tpu.matmul %18, %19, %cst_16 {dimension_numbers = #tpu.dot_dimension_numbers<[1], [0], [0], [1], [0, 0, 1, 1], [], []>} : vector<8x768xbf16>, vector<768x128xbf16>, vector<8x128xf32> -> vector<8x128xf32>
      %c0_17 = arith.constant 0 : index
      %c0_18 = arith.constant 0 : index
      %21 = vector.load %arg5[%c0_17, %c0_18] : memref<1x128xf32, #tpu.memory_space<vmem>>, vector<1x128xf32>
      %22 = vector.broadcast %21 : vector<1x128xf32> to vector<8x128xf32>
      %23 = arith.addf %20, %22 : vector<8x128xf32>
      %cst_19 = arith.constant 0.000000e+00 : f32
      %24 = vector.broadcast %cst_19 : f32 to vector<8x128xf32>
      %25 = arith.maximumf %23, %24 : vector<8x128xf32>
      %26 = arith.truncf %25 : vector<8x128xf32> to vector<8x128xbf16>
      %c0_20 = arith.constant 0 : index
      %c0_21 = arith.constant 0 : index
      %27 = vector.load %arg6[%c0_20, %c0_21] : memref<128x128xbf16, #tpu.memory_space<vmem>>, vector<128x128xbf16>
      %cst_22 = arith.constant dense<0.000000e+00> : vector<8x128xf32>
      %28 = tpu.matmul %26, %27, %cst_22 {dimension_numbers = #tpu.dot_dimension_numbers<[1], [0], [0], [1], [0, 0, 1, 1], [], []>} : vector<8x128xbf16>, vector<128x128xbf16>, vector<8x128xf32> -> vector<8x128xf32>
      %c0_23 = arith.constant 0 : index
      %c0_24 = arith.constant 0 : index
      %29 = vector.load %arg7[%c0_23, %c0_24] : memref<1x128xf32, #tpu.memory_space<vmem>>, vector<1x128xf32>
      %30 = vector.broadcast %29 : vector<1x128xf32> to vector<8x128xf32>
      %31 = arith.addf %28, %30 : vector<8x128xf32>
      %c0_25 = arith.constant 0 : index
      %c0_26 = arith.constant 0 : index
      %32 = vector.load %arg8[%c0_25, %c0_26] : memref<8x128xf32, #tpu.memory_space<vmem>>, vector<8x128xf32>
      tpu.vector_store %arg8[%c0_25, %c0_26], %31 {strides = array<i32>} : memref<8x128xf32, #tpu.memory_space<vmem>>, vector<8x128xf32>,
    } else {
    }
    return
  }
  func.func @transform_0(%arg0: i32) -> (i32, i32) {
    %c0_i32 = arith.constant 0 : i32
    %c0_i32_0 = arith.constant 0 : i32
    return %c0_i32, %arg0 : i32, i32
  }
  func.func @transform_1(%arg0: i32) -> (i32, i32) {
    %c0_i32 = arith.constant 0 : i32
    %c0_i32_0 = arith.constant 0 : i32
    return %arg0, %c0_i32 : i32, i32
  }
  func.func @transform_2(%arg0: i32) -> (i32, i32) {
    %c0_i32 = arith.constant 0 : i32
    %c0_i32_0 = arith.constant 0 : i32
    %c0_i32_1 = arith.constant 0 : i32
    return %c0_i32, %c0_i32_0 : i32, i32
  }
  func.func @transform_3(%arg0: i32) -> (i32, i32) {
    %c0_i32 = arith.constant 0 : i32
    %c0_i32_0 = arith.constant 0 : i32
    %c0_i32_1 = arith.constant 0 : i32
    return %c0_i32, %c0_i32_0 : i32, i32
  }
  func.func @transform_4(%arg0: i32) -> (i32, i32) {
    %c0_i32 = arith.constant 0 : i32
    %c0_i32_0 = arith.constant 0 : i32
    %c0_i32_1 = arith.constant 0 : i32
    return %c0_i32, %c0_i32_0 : i32, i32
  }
  func.func @transform_5(%arg0: i32) -> (i32, i32) {
    %c0_i32 = arith.constant 0 : i32
    %c0_i32_0 = arith.constant 0 : i32
    %c0_i32_1 = arith.constant 0 : i32
    return %c0_i32, %c0_i32_0 : i32, i32
  }
  func.func @transform_6(%arg0: i32) -> (i32, i32) {
    %c0_i32 = arith.constant 0 : i32
    %c0_i32_0 = arith.constant 0 : i32
    %c0_i32_1 = arith.constant 0 : i32
    return %c0_i32, %c0_i32_0 : i32, i32
  }
  func.func @transform_7(%arg0: i32) -> (i32, i32) {
    %c0_i32 = arith.constant 0 : i32
    %c0_i32_0 = arith.constant 0 : i32
    %c0_i32_1 = arith.constant 0 : i32
    return %c0_i32, %c0_i32_0 : i32, i32
  }
}

</mosaic_0001>

<llo_original>
// kernel: can_forward.4
$region0: #{can_forward.4}
  #allocation0 [shape = 'u32[]', space=smem, size = 0x4, offset = 0x4, fixed_abs, tag = 'smem constant byte address 0x4 - core index']
  #allocation1 [shape = 'u32[144,128]{1,0:T(1,128)}', space=vmem, size = 0x12000, scoped, tag = 'internal scratch']
  %s0 = inlined_call_operand.vmem [shape: bf16[456,27], index: 0, kind: input, shape index: {}]
  %s1 = inlined_call_operand.hbm [shape: bf16[27,32], index: 1, kind: input, shape index: {}]
  %s2 = inlined_call_operand.hbm [shape: bf16[27,32], index: 2, kind: input, shape index: {}]
  %s3 = inlined_call_operand.hbm [shape: bf16[27,32], index: 3, kind: input, shape index: {}]
  %s4 = inlined_call_operand.hbm [shape: bf16[27,32], index: 4, kind: input, shape index: {}]
  %s5 = inlined_call_operand.hbm [shape: f32[1,32], index: 5, kind: input, shape index: {}]
  %s6 = inlined_call_operand.vmem [shape: bf16[456,32], index: 6, kind: output, shape index: {}]
  %s7 = sld [smem:[#allocation0]]
  $region54: #{can_forward.4} parent=0
    _
  %s9 = ssub.s32 1, %s7
  %s10 = scalar_select 0, %s9, %s7
  $region1: #{can_forward.4} parent=0
    #allocation2 [shape = 'u8[8192]{0}', space=vmem, size = 0x2000, scoped, tag = 'input window, operand 1, single buffered']
    #allocation3 [shape = 's32[1]{0}', space=sflag, size = 0x4, scoped, tag = 'scoped memory for can_forward.4']
    #allocation4 [shape = 'u8[8192]{0}', space=vmem, size = 0x2000, scoped, tag = 'input window, operand 2, single buffered']
    #allocation5 [shape = 's32[1]{0}', space=sflag, size = 0x4, scoped, tag = 'scoped memory for can_forward.4']
    #allocation6 [shape = 'u8[8192]{0}', space=vmem, size = 0x2000, scoped, tag = 'input window, operand 3, single buffered']
    #allocation7 [shape = 'u8[8192]{0}', space=vmem, size = 0x2000, scoped, tag = 'input window, operand 4, single buffered']
    #allocation8 [shape = 's32[1]{0}', space=sflag, size = 0x4, scoped, tag = 'scoped memory for can_forward.4']
    #allocation9 [shape = 'u8[512]{0}', space=vmem, size = 0x400, scoped, tag = 'input window, operand 5, single buffered']
    %11 = vsyncpa [#allocation3], 0
    %12 = vsyncpa [#allocation5], 0
    %13 = vsyncpa [#allocation8], 0
    // Predicated region
    $region2: #{can_forward.4} parent=1 // pred_check
      _
    $region3: #{can_forward.4} parent=1 // pred_check_branch
      %15 = sbr.rel (0) target = $region5
    $region4: #{can_forward.4} parent=1 // pred_region
      _
    $region5: #{can_forward.4} parent=1 // pred_fallthru
      _
    // Predicated region
    $region6: #{can_forward.4} parent=1 // pred_check
      _
    $region7: #{can_forward.4} parent=1 // pred_check_branch
      %17 = sbr.rel (0) target = $region9
    $region8: #{can_forward.4} parent=1 // pred_region
      %s19 = ssub.s32 256, 256
      %20 = vsyncadd [#allocation3], %s19
      %s21 = sshll.u32 [#allocation2], 4
      %s22 = int_to_ptr.vmem [resolvable:$true] %s21
      %27 = dma.hbm_to_vmem [thread:$0]  %s1, 256, %s22, [#allocation3], 64, 64, 4
    $region9: #{can_forward.4} parent=1 // pred_fallthru
      _
    // Predicated region
    $region10: #{can_forward.4} parent=1 // pred_check
      _
    $region11: #{can_forward.4} parent=1 // pred_check_branch
      %29 = sbr.rel (0) target = $region13
    $region12: #{can_forward.4} parent=1 // pred_region
      %s31 = ssub.s32 256, 256
      %32 = vsyncadd [#allocation5], %s31
      %s33 = sshll.u32 [#allocation4], 4
      %s34 = int_to_ptr.vmem [resolvable:$true] %s33
      %39 = dma.hbm_to_vmem [thread:$0]  %s2, 256, %s34, [#allocation5], 64, 64, 4
    $region13: #{can_forward.4} parent=1 // pred_fallthru
      _
    // Predicated region
    $region14: #{can_forward.4} parent=1 // pred_check
      _
    $region15: #{can_forward.4} parent=1 // pred_check_branch
      %41 = sbr.rel (0) target = $region17
    $region16: #{can_forward.4} parent=1 // pred_region
      %s43 = ssub.s32 256, 256
      %44 = vsyncadd [#allocation5], %s43
      %s45 = sshll.u32 [#allocation6], 4
      %s46 = int_to_ptr.vmem [resolvable:$true] %s45
      %51 = dma.hbm_to_vmem [thread:$0]  %s3, 256, %s46, [#allocation5], 64, 64, 4
    $region17: #{can_forward.4} parent=1 // pred_fallthru
      _
    // Predicated region
    $region18: #{can_forward.4} parent=1 // pred_check
      _
    $region19: #{can_forward.4} parent=1 // pred_check_branch
      %53 = sbr.rel (0) target = $region21
    $region20: #{can_forward.4} parent=1 // pred_region
      %s55 = ssub.s32 256, 256
      %56 = vsyncadd [#allocation8], %s55
      %s57 = sshll.u32 [#allocation7], 4
      %s58 = int_to_ptr.vmem [resolvable:$true] %s57
      %63 = dma.hbm_to_vmem [thread:$0]  %s4, 256, %s58, [#allocation8], 64, 64, 4
    $region21: #{can_forward.4} parent=1 // pred_fallthru
      _
    // Predicated region
    $region22: #{can_forward.4} parent=1 // pred_check
      _
    $region23: #{can_forward.4} parent=1 // pred_check_branch
      %65 = sbr.rel (0) target = $region25
    $region24: #{can_forward.4} parent=1 // pred_region
      %s67 = ssub.s32 16, 16
      %68 = vsyncadd [#allocation8], %s67
      %s70 = sshll.u32 [#allocation9], 4
      %s71 = int_to_ptr.vmem [resolvable:$true] %s70
      %73 = dma.hbm_to_vmem [thread:$0]  %s5, 16, %s71, [#allocation8]
    $region25: #{can_forward.4} parent=1 // pred_fallthru
      _
    // Predicated region
    $region26: #{can_forward.4} parent=1 // pred_check
      _
    $region27: #{can_forward.4} parent=1 // pred_check_branch
      %75 = sbr.rel (0) target = $region29
    $region28: #{can_forward.4} parent=1 // pred_region
      %76 = dma.done [#allocation3], 256
    $region29: #{can_forward.4} parent=1 // pred_fallthru
      _
    // Predicated region
    $region30: #{can_forward.4} parent=1 // pred_check
      _
    $region31: #{can_forward.4} parent=1 // pred_check_branch
      %78 = sbr.rel (0) target = $region33
    $region32: #{can_forward.4} parent=1 // pred_region
      %79 = dma.done [#allocation5], 256
    $region33: #{can_forward.4} parent=1 // pred_fallthru
      _
    // Predicated region
    $region34: #{can_forward.4} parent=1 // pred_check
      _
    $region35: #{can_forward.4} parent=1 // pred_check_branch
      %81 = sbr.rel (0) target = $region37
    $region36: #{can_forward.4} parent=1 // pred_region
      %82 = dma.done [#allocation5], 256
    $region37: #{can_forward.4} parent=1 // pred_fallthru
      _
    // Predicated region
    $region38: #{can_forward.4} parent=1 // pred_check
      _
    $region39: #{can_forward.4} parent=1 // pred_check_branch
      %84 = sbr.rel (0) target = $region41
    $region40: #{can_forward.4} parent=1 // pred_region
      %85 = dma.done [#allocation8], 256
    $region41: #{can_forward.4} parent=1 // pred_fallthru
      _
    // Predicated region
    $region42: #{can_forward.4} parent=1 // pred_check
      _
    $region43: #{can_forward.4} parent=1 // pred_check_branch
      %87 = sbr.rel (0) target = $region45
    $region44: #{can_forward.4} parent=1 // pred_region
      %88 = dma.done [#allocation8], 16
    $region45: #{can_forward.4} parent=1 // pred_fallthru
      _
    %v90 = vld [vmem:[%s0] sm:$0xf]
    %v91 = vld [vmem:[%s0 + $0x4] sm:$0xf]
    %v92 = vld [vmem:[%s0 + $0x8] sm:$0xf]
    %v93 = vld [vmem:[%s0 + $0xc] sm:$0xf]
    %v94 = vld [vmem:[%s0 + $0x10] sm:$0xf]
    %v95 = vld [vmem:[%s0 + $0x14] sm:$0xf]
    %v96 = vld [vmem:[%s0 + $0x18] sm:$0xf]
    %v97 = vld [vmem:[%s0 + $0x1c] sm:$0xf]
    %v98 = vld [vmem:[%s0 + $0x20] sm:$0xf]
    %v99 = vld [vmem:[%s0 + $0x24] sm:$0xf]
    %v100 = vld [vmem:[%s0 + $0x28] sm:$0xf]
    %v101 = vld [vmem:[%s0 + $0x2c] sm:$0xf]
    %v102 = vld [vmem:[%s0 + $0x30] sm:$0xf]
    %v103 = vld [vmem:[%s0 + $0x34] sm:$0xf]
    %v104 = vld [vmem:[%s0 + $0x38] sm:$0xf]
    %v105 = vld [vmem:[%s0 + $0x3c] sm:$0xf]
    %v106 = vld [vmem:[%s0 + $0x40] sm:$0xf]
    %v107 = vld [vmem:[%s0 + $0x44] sm:$0xf]
    %v108 = vld [vmem:[%s0 + $0x48] sm:$0xf]
    %v109 = vld [vmem:[%s0 + $0x4c] sm:$0xf]
    %v110 = vld [vmem:[%s0 + $0x50] sm:$0xf]
    %v111 = vld [vmem:[%s0 + $0x54] sm:$0xf]
    %v112 = vld [vmem:[%s0 + $0x58] sm:$0xf]
    %v113 = vld [vmem:[%s0 + $0x5c] sm:$0xf]
    %v114 = vld [vmem:[%s0 + $0x60] sm:$0xf]
    %v115 = vld [vmem:[%s0 + $0x64] sm:$0xf]
    %v116 = vld [vmem:[%s0 + $0x68] sm:$0xf]
    %v117 = vld [vmem:[%s0 + $0x6c] sm:$0xf]
    %v118 = vld [vmem:[%s0 + $0x70] sm:$0xf]
    %v119 = vld [vmem:[%s0 + $0x74] sm:$0xf]
    %v120 = vld [vmem:[%s0 + $0x78] sm:$0xf]
    %v121 = vld [vmem:[%s0 + $0x7c] sm:$0xf]
    %v122 = vld [vmem:[%s0 + $0x80] sm:$0xf]
    %v123 = vld [vmem:[%s0 + $0x84] sm:$0xf]
    %v124 = vld [vmem:[%s0 + $0x88] sm:$0xf]
    %v125 = vld [vmem:[%s0 + $0x8c] sm:$0xf]
    %v126 = vld [vmem:[%s0 + $0x90] sm:$0xf]
    %v127 = vld [vmem:[%s0 + $0x94] sm:$0xf]
    %v128 = vld [vmem:[%s0 + $0x98] sm:$0xf]
    %v129 = vld [vmem:[%s0 + $0x9c] sm:$0xf]
    %v130 = vld [vmem:[%s0 + $0xa0] sm:$0xf]
    %v131 = vld [vmem:[%s0 + $0xa4] sm:$0xf]
    %v132 = vld [vmem:[%s0 + $0xa8] sm:$0xf]
    %v133 = vld [vmem:[%s0 + $0xac] sm:$0xf]
    %v134 = vld [vmem:[%s0 + $0xb0] sm:$0xf]
    %v135 = vld [vmem:[%s0 + $0xb4] sm:$0xf]
    %v136 = vld [vmem:[%s0 + $0xb8] sm:$0xf]
    %v137 = vld [vmem:[%s0 + $0xbc] sm:$0xf]
    %v138 = vld [vmem:[%s0 + $0xc0] sm:$0xf]
    %v139 = vld [vmem:[%s0 + $0xc4] sm:$0xf]
    %v140 = vld [vmem:[%s0 + $0xc8] sm:$0xf]
    %v141 = vld [vmem:[%s0 + $0xcc] sm:$0xf]
    %v142 = vld [vmem:[%s0 + $0xd0] sm:$0xf]
    %v143 = vld [vmem:[%s0 + $0xd4] sm:$0xf]
    %v144 = vld [vmem:[%s0 + $0xd8] sm:$0xf]
    %v145 = vld [vmem:[%s0 + $0xdc] sm:$0xf]
    %v146 = vld [vmem:[%s0 + $0xe0] sm:$0xf]
    %v147 = vld [vmem:[#allocation2] sm:$0xf]
    %v148 = vld [vmem:[#allocation2 + $0x4] sm:$0xf]
    %v149 = vld [vmem:[#allocation2 + $0x8] sm:$0xf]
    %v150 = vld [vmem:[#allocation2 + $0xc] sm:$0x3]
    %v208 = vunpack.c.l.b16 %v90
    %v209 = vunpack.c.l.b16 %v91
    %v210 = vunpack.c.l.b16 %v92
    %v211 = vunpack.c.l.b16 %v93
    %v212 = vunpack.c.l.b16 %v94
    %v213 = vunpack.c.l.b16 %v95
    %v214 = vunpack.c.l.b16 %v96
    %v215 = vunpack.c.l.b16 %v97
    %v216 = vunpack.c.l.b16 %v98
    %v217 = vunpack.c.l.b16 %v99
    %v218 = vunpack.c.l.b16 %v100
    %v219 = vunpack.c.l.b16 %v101
    %v220 = vunpack.c.l.b16 %v102
    %v221 = vunpack.c.l.b16 %v103
    %v222 = vunpack.c.l.b16 %v104
    %v223 = vunpack.c.l.b16 %v105
    %v224 = vunpack.c.l.b16 %v106
    %v225 = vunpack.c.l.b16 %v107
    %v226 = vunpack.c.l.b16 %v108
    %v227 = vunpack.c.l.b16 %v109
    %v228 = vunpack.c.l.b16 %v110
    %v229 = vunpack.c.l.b16 %v111
    %v230 = vunpack.c.l.b16 %v112
    %v231 = vunpack.c.l.b16 %v113
    %v232 = vunpack.c.l.b16 %v114
    %v233 = vunpack.c.l.b16 %v115
    %v234 = vunpack.c.l.b16 %v116
    %v235 = vunpack.c.l.b16 %v117
    %v236 = vunpack.c.l.b16 %v118
    %v237 = vunpack.c.l.b16 %v119
    %v238 = vunpack.c.l.b16 %v120
    %v239 = vunpack.c.l.b16 %v121
    %v240 = vunpack.c.l.b16 %v122
    %v241 = vunpack.c.l.b16 %v123
    %v242 = vunpack.c.l.b16 %v124
    %v243 = vunpack.c.l.b16 %v125
    %v244 = vunpack.c.l.b16 %v126
    %v245 = vunpack.c.l.b16 %v127
    %v246 = vunpack.c.l.b16 %v128
    %v247 = vunpack.c.l.b16 %v129
    %v248 = vunpack.c.l.b16 %v130
    %v249 = vunpack.c.l.b16 %v131
    %v250 = vunpack.c.l.b16 %v132
    %v251 = vunpack.c.l.b16 %v133
    %v252 = vunpack.c.l.b16 %v134
    %v253 = vunpack.c.l.b16 %v135
    %v254 = vunpack.c.l.b16 %v136
    %v255 = vunpack.c.l.b16 %v137
    %v256 = vunpack.c.l.b16 %v138
    %v257 = vunpack.c.l.b16 %v139
    %v258 = vunpack.c.l.b16 %v140
    %v259 = vunpack.c.l.b16 %v141
    %v260 = vunpack.c.l.b16 %v142
    %v261 = vunpack.c.l.b16 %v143
    %v262 = vunpack.c.l.b16 %v144
    %v263 = vunpack.c.l.b16 %v145
    %v264 = vunpack.c.l.b16 %v146
    %v265 = vpack.c.b16 %v209, %v208
    %v266 = vpack.c.b16 %v211, %v210
    %v267 = vpack.c.b16 %v213, %v212
    %v268 = vpack.c.b16 %v215, %v214
    %v269 = vpack.c.b16 %v217, %v216
    %v270 = vpack.c.b16 %v219, %v218
    %v271 = vpack.c.b16 %v221, %v220
    %v272 = vpack.c.b16 %v223, %v222
    %v273 = vpack.c.b16 %v225, %v224
    %v274 = vpack.c.b16 %v227, %v226
    %v275 = vpack.c.b16 %v229, %v228
    %v276 = vpack.c.b16 %v231, %v230
    %v277 = vpack.c.b16 %v233, %v232
    %v278 = vpack.c.b16 %v235, %v234
    %v279 = vpack.c.b16 %v237, %v236
    %v280 = vpack.c.b16 %v239, %v238
    %v281 = vpack.c.b16 %v241, %v240
    %v282 = vpack.c.b16 %v243, %v242
    %v283 = vpack.c.b16 %v245, %v244
    %v284 = vpack.c.b16 %v247, %v246
    %v285 = vpack.c.b16 %v249, %v248
    %v286 = vpack.c.b16 %v251, %v250
    %v287 = vpack.c.b16 %v253, %v252
    %v288 = vpack.c.b16 %v255, %v254
    %v289 = vpack.c.b16 %v257, %v256
    %v290 = vpack.c.b16 %v259, %v258
    %v291 = vpack.c.b16 %v261, %v260
    %v292 = vpack.c.b16 %v263, %v262
    %v293 = vpack.c.b16 %v264, %v264
    %v298 = vunpack.c.l.b16 %v147
    %v299 = vunpack.c.l.b16 %v148
    %v300 = vunpack.c.l.b16 %v149
    %v301 = vunpack.c.l.b16 %v150
    %v302 = vpack.c.b16 %v299, %v298
    %v303 = vpack.c.b16 %v301, %v300
    %vm305 = vcmask 220160
    %v307 = vsel %vm305, %v265, 0
    %v310 = vsel %vm305, %v266, 0
    %v313 = vsel %vm305, %v267, 0
    %v316 = vsel %vm305, %v268, 0
    %v319 = vsel %vm305, %v269, 0
    %v322 = vsel %vm305, %v270, 0
    %v325 = vsel %vm305, %v271, 0
    %v328 = vsel %vm305, %v272, 0
    %v331 = vsel %vm305, %v273, 0
    %v334 = vsel %vm305, %v274, 0
    %v337 = vsel %vm305, %v275, 0
    %v340 = vsel %vm305, %v276, 0
    %v343 = vsel %vm305, %v277, 0
    %v346 = vsel %vm305, %v278, 0
    %v349 = vsel %vm305, %v279, 0
    %v352 = vsel %vm305, %v280, 0
    %v355 = vsel %vm305, %v281, 0
    %v358 = vsel %vm305, %v282, 0
    %v361 = vsel %vm305, %v283, 0
    %v364 = vsel %vm305, %v284, 0
    %v367 = vsel %vm305, %v285, 0
    %v370 = vsel %vm305, %v286, 0
    %v373 = vsel %vm305, %v287, 0
    %v376 = vsel %vm305, %v288, 0
    %v379 = vsel %vm305, %v289, 0
    %v382 = vsel %vm305, %v290, 0
    %v385 = vsel %vm305, %v291, 0
    %v388 = vsel %vm305, %v292, 0
    %v391 = vsel %vm305, %v293, 0
    %vm393 = vcmask 1044480
    %vm394 = vcmask 1045504
    %v395 = vsel %vm393, 4294967295, 65535
    %v396 = vsel %vm394, %v395, 0
    %v398 = vand.u32 %v303, %v396
    %400 = vmatprep.subr.bf16.mxu0 0
    %401 = vmatpush1.bf16.msra.mxu0 %v302
    %402 = vmatprep.subr.bf16.mxu0 0
    %403 = vmatpush1.bf16.msra.mxu0 %v398
    %404 = vmatprep.subr.bf16.mxu0 0
    %405 = vmatpush1.bf16.msra.mxu0 0
    %406 = vmatprep.subr.bf16.mxu0 0
    %407 = vmatpush1.bf16.msra.mxu0 0
    %408 = vmatprep.subr.bf16.mxu0 0
    %409 = vmatpush1.bf16.msra.mxu0 0
    %410 = vmatprep.subr.bf16.mxu0 0
    %411 = vmatpush1.bf16.msra.mxu0 0
    %412 = vmatprep.subr.bf16.mxu0 0
    %413 = vmatpush1.bf16.msra.mxu0 0
    %414 = vmatprep.subr.bf16.mxu0 0
    %415 = vmatpush1.bf16.msra.mxu0 0
    %416 = vmatprep.subr.bf16.mxu0 0
    %417 = vmatpush1.bf16.msra.mxu0 0
    %418 = vmatprep.subr.bf16.mxu0 0
    %419 = vmatpush1.bf16.msra.mxu0 0
    %420 = vmatprep.subr.bf16.mxu0 0
    %421 = vmatpush1.bf16.msra.mxu0 0
    %422 = vmatprep.subr.bf16.mxu0 0
    %423 = vmatpush1.bf16.msra.mxu0 0
    %424 = vmatprep.subr.bf16.mxu0 0
    %425 = vmatpush1.bf16.msra.mxu0 0
    %426 = vmatprep.subr.bf16.mxu0 0
    %427 = vmatpush1.bf16.msra.mxu0 0
    %428 = vmatprep.subr.bf16.mxu0 0
    %429 = vmatpush1.bf16.msra.mxu0 0
    %430 = vmatprep.subr.bf16.mxu0 0
    %431 = vmatpush1.bf16.msra.mxu0 0
    %432 = vmatprep.mubr.bf16.mxu0 0
    %433 = vmatmul.mubr.bf16.gmra.mrb[0].mxu0 %v307
    %v434 = vpop.f32.mrb[0].mxu0
    %v435 = vadd.f32 0.0, %v434
    %v436 = vpop.f32.mrb[0].mxu0
    %v437 = vpop.f32.mrb[0].mxu0
    %v438 = vadd.f32 0.0, %v437
    %v439 = vpop.f32.mrb[0].mxu0
    %440 = vmatprep.mubr.bf16.mxu0 0
    %441 = vmatmul.mubr.bf16.gmra.mrb[0].mxu0 %v310
    %v442 = vpop.f32.mrb[0].mxu0
    %v443 = vadd.f32 0.0, %v442
    %v444 = vpop.f32.mrb[0].mxu0
    %v445 = vpop.f32.mrb[0].mxu0
    %v446 = vadd.f32 0.0, %v445
    %v447 = vpop.f32.mrb[0].mxu0
    %448 = vmatprep.mubr.bf16.mxu0 0
    %449 = vmatmul.mubr.bf16.gmra.mrb[0].mxu0 %v313
    %v450 = vpop.f32.mrb[0].mxu0
    %v451 = vadd.f32 0.0, %v450
    %v452 = vpop.f32.mrb[0].mxu0
    %v453 = vpop.f32.mrb[0].mxu0
    %v454 = vadd.f32 0.0, %v453
    %v455 = vpop.f32.mrb[0].mxu0
    %456 = vmatprep.mubr.bf16.mxu0 0
    %457 = vmatmul.mubr.bf16.gmra.mrb[0].mxu0 %v316
    %v458 = vpop.f32.mrb[0].mxu0
    %v459 = vadd.f32 0.0, %v458
    %v460 = vpop.f32.mrb[0].mxu0
    %v461 = vpop.f32.mrb[0].mxu0
    %v462 = vadd.f32 0.0, %v461
    %v463 = vpop.f32.mrb[0].mxu0
    %464 = vmatprep.mubr.bf16.mxu0 0
    %465 = vmatmul.mubr.bf16.gmra.mrb[0].mxu0 %v319
    %v466 = vpop.f32.mrb[0].mxu0
    %v467 = vadd.f32 0.0, %v466
    %v468 = vpop.f32.mrb[0].mxu0
    %v469 = vpop.f32.mrb[0].mxu0
    %v470 = vadd.f32 0.0, %v469
    %v471 = vpop.f32.mrb[0].mxu0
    %472 = vmatprep.mubr.bf16.mxu0 0
    %473 = vmatmul.mubr.bf16.gmra.mrb[0].mxu0 %v322
    %v474 = vpop.f32.mrb[0].mxu0
    %v475 = vadd.f32 0.0, %v474
    %v476 = vpop.f32.mrb[0].mxu0
    %v477 = vpop.f32.mrb[0].mxu0
    %v478 = vadd.f32 0.0, %v477
    %v479 = vpop.f32.mrb[0].mxu0
    %480 = vmatprep.mubr.bf16.mxu0 0
    %481 = vmatmul.mubr.bf16.gmra.mrb[0].mxu0 %v325
    %v482 = vpop.f32.mrb[0].mxu0
    %v483 = vadd.f32 0.0, %v482
    %v484 = vpop.f32.mrb[0].mxu0
    %v485 = vpop.f32.mrb[0].mxu0
    %v486 = vadd.f32 0.0, %v485
    %v487 = vpop.f32.mrb[0].mxu0
    %488 = vmatprep.mubr.bf16.mxu0 0
    %489 = vmatmul.mubr.bf16.gmra.mrb[0].mxu0 %v328
    %v490 = vpop.f32.mrb[0].mxu0
    %v491 = vadd.f32 0.0, %v490
    %v492 = vpop.f32.mrb[0].mxu0
    %v493 = vpop.f32.mrb[0].mxu0
    %v494 = vadd.f32 0.0, %v493
    %v495 = vpop.f32.mrb[0].mxu0
    %496 = vmatprep.mubr.bf16.mxu0 0
    %497 = vmatmul.mubr.bf16.gmra.mrb[0].mxu0 %v331
    %v498 = vpop.f32.mrb[0].mxu0
    %v499 = vadd.f32 0.0, %v498
    %v500 = vpop.f32.mrb[0].mxu0
    %v501 = vpop.f32.mrb[0].mxu0
    %v502 = vadd.f32 0.0, %v501
    %v503 = vpop.f32.mrb[0].mxu0
    %504 = vmatprep.mubr.bf16.mxu0 0
    %505 = vmatmul.mubr.bf16.gmra.mrb[0].mxu0 %v334
    %v506 = vpop.f32.mrb[0].mxu0
    %v507 = vadd.f32 0.0, %v506
    %v508 = vpop.f32.mrb[0].mxu0
    %v509 = vpop.f32.mrb[0].mxu0
    %v510 = vadd.f32 0.0, %v509
    %v511 = vpop.f32.mrb[0].mxu0
    %512 = vmatprep.mubr.bf16.mxu0 0
    %513 = vmatmul.mubr.bf16.gmra.mrb[0].mxu0 %v337
    %v514 = vpop.f32.mrb[0].mxu0
    %v515 = vadd.f32 0.0, %v514
    %v516 = vpop.f32.mrb[0].mxu0
    %v517 = vpop.f32.mrb[0].mxu0
    %v518 = vadd.f32 0.0, %v517
    %v519 = vpop.f32.mrb[0].mxu0
    %520 = vmatprep.mubr.bf16.mxu0 0
    %521 = vmatmul.mubr.bf16.gmra.mrb[0].mxu0 %v340
    %v522 = vpop.f32.mrb[0].mxu0
    %v523 = vadd.f32 0.0, %v522
    %v524 = vpop.f32.mrb[0].mxu0
    %v525 = vpop.f32.mrb[0].mxu0
    %v526 = vadd.f32 0.0, %v525
    %v527 = vpop.f32.mrb[0].mxu0
    %528 = vmatprep.mubr.bf16.mxu0 0
    %529 = vmatmul.mubr.bf16.gmra.mrb[0].mxu0 %v343
    %v530 = vpop.f32.mrb[0].mxu0
    %v531 = vadd.f32 0.0, %v530
    %v532 = vpop.f32.mrb[0].mxu0
    %v533 = vpop.f32.mrb[0].mxu0
    %v534 = vadd.f32 0.0, %v533
    %v535 = vpop.f32.mrb[0].mxu0
    %536 = vmatprep.mubr.bf16.mxu0 0
    %537 = vmatmul.mubr.bf16.gmra.mrb[0].mxu0 %v346
    %v538 = vpop.f32.mrb[0].mxu0
    %v539 = vadd.f32 0.0, %v538
    %v540 = vpop.f32.mrb[0].mxu0
    %v541 = vpop.f32.mrb[0].mxu0
    %v542 = vadd.f32 0.0, %v541
    %v543 = vpop.f32.mrb[0].mxu0
    %544 = vmatprep.mubr.bf16.mxu0 0
    %545 = vmatmul.mubr.bf16.gmra.mrb[0].mxu0 %v349
    %v546 = vpop.f32.mrb[0].mxu0
    %v547 = vadd.f32 0.0, %v546
    %v548 = vpop.f32.mrb[0].mxu0
    %v549 = vpop.f32.mrb[0].mxu0
    %v550 = vadd.f32 0.0, %v549
    %v551 = vpop.f32.mrb[0].mxu0
    %552 = vmatprep.mubr.bf16.mxu0 0
    %553 = vmatmul.mubr.bf16.gmra.mrb[0].mxu0 %v352
    %v554 = vpop.f32.mrb[0].mxu0
    %v555 = vadd.f32 0.0, %v554
    %v556 = vpop.f32.mrb[0].mxu0
    %v557 = vpop.f32.mrb[0].mxu0
    %v558 = vadd.f32 0.0, %v557
    %v559 = vpop.f32.mrb[0].mxu0
    %560 = vmatprep.mubr.bf16.mxu0 0
    %561 = vmatmul.mubr.bf16.gmra.mrb[0].mxu0 %v355
    %v562 = vpop.f32.mrb[0].mxu0
    %v563 = vadd.f32 0.0, %v562
    %v564 = vpop.f32.mrb[0].mxu0
    %v565 = vpop.f32.mrb[0].mxu0
    %v566 = vadd.f32 0.0, %v565
    %v567 = vpop.f32.mrb[0].mxu0
    %568 = vmatprep.mubr.bf16.mxu0 0
    %569 = vmatmul.mubr.bf16.gmra.mrb[0].mxu0 %v358
    %v570 = vpop.f32.mrb[0].mxu0
    %v571 = vadd.f32 0.0, %v570
    %v572 = vpop.f32.mrb[0].mxu0
    %v573 = vpop.f32.mrb[0].mxu0
    %v574 = vadd.f32 0.0, %v573
    %v575 = vpop.f32.mrb[0].mxu0
    %576 = vmatprep.mubr.bf16.mxu0 0
    %577 = vmatmul.mubr.bf16.gmra.mrb[0].mxu0 %v361
    %v578 = vpop.f32.mrb[0].mxu0
    %v579 = vadd.f32 0.0, %v578
    %v580 = vpop.f32.mrb[0].mxu0
    %v581 = vpop.f32.mrb[0].mxu0
    %v582 = vadd.f32 0.0, %v581
    %v583 = vpop.f32.mrb[0].mxu0
    %584 = vmatprep.mubr.bf16.mxu0 0
    %585 = vmatmul.mubr.bf16.gmra.mrb[0].mxu0 %v364
    %v586 = vpop.f32.mrb[0].mxu0
    %v587 = vadd.f32 0.0, %v586
    %v588 = vpop.f32.mrb[0].mxu0
    %v589 = vpop.f32.mrb[0].mxu0
    %v590 = vadd.f32 0.0, %v589
    %v591 = vpop.f32.mrb[0].mxu0
    %592 = vmatprep.mubr.bf16.mxu0 0
    %593 = vmatmul.mubr.bf16.gmra.mrb[0].mxu0 %v367
    %v594 = vpop.f32.mrb[0].mxu0
    %v595 = vadd.f32 0.0, %v594
    %v596 = vpop.f32.mrb[0].mxu0
    %v597 = vpop.f32.mrb[0].mxu0
    %v598 = vadd.f32 0.0, %v597
    %v599 = vpop.f32.mrb[0].mxu0
    %600 = vmatprep.mubr.bf16.mxu0 0
    %601 = vmatmul.mubr.bf16.gmra.mrb[0].mxu0 %v370
    %v602 = vpop.f32.mrb[0].mxu0
    %v603 = vadd.f32 0.0, %v602
    %v604 = vpop.f32.mrb[0].mxu0
    %v605 = vpop.f32.mrb[0].mxu0
    %v606 = vadd.f32 0.0, %v605
    %v607 = vpop.f32.mrb[0].mxu0
    %608 = vmatprep.mubr.bf16.mxu0 0
    %609 = vmatmul.mubr.bf16.gmra.mrb[0].mxu0 %v373
    %v610 = vpop.f32.mrb[0].mxu0
    %v611 = vadd.f32 0.0, %v610
    %v612 = vpop.f32.mrb[0].mxu0
    %v613 = vpop.f32.mrb[0].mxu0
    %v614 = vadd.f32 0.0, %v613
    %v615 = vpop.f32.mrb[0].mxu0
    %616 = vmatprep.mubr.bf16.mxu0 0
    %617 = vmatmul.mubr.bf16.gmra.mrb[0].mxu0 %v376
    %v618 = vpop.f32.mrb[0].mxu0
    %v619 = vadd.f32 0.0, %v618
    %v620 = vpop.f32.mrb[0].mxu0
    %v621 = vpop.f32.mrb[0].mxu0
    %v622 = vadd.f32 0.0, %v621
    %v623 = vpop.f32.mrb[0].mxu0
    %624 = vmatprep.mubr.bf16.mxu0 0
    %625 = vmatmul.mubr.bf16.gmra.mrb[0].mxu0 %v379
    %v626 = vpop.f32.mrb[0].mxu0
    %v627 = vadd.f32 0.0, %v626
    %v628 = vpop.f32.mrb[0].mxu0
    %v629 = vpop.f32.mrb[0].mxu0
    %v630 = vadd.f32 0.0, %v629
    %v631 = vpop.f32.mrb[0].mxu0
    %632 = vmatprep.mubr.bf16.mxu0 0
    %633 = vmatmul.mubr.bf16.gmra.mrb[0].mxu0 %v382
    %v634 = vpop.f32.mrb[0].mxu0
    %v635 = vadd.f32 0.0, %v634
    %v636 = vpop.f32.mrb[0].mxu0
    %v637 = vpop.f32.mrb[0].mxu0
    %v638 = vadd.f32 0.0, %v637
    %v639 = vpop.f32.mrb[0].mxu0
    %640 = vmatprep.mubr.bf16.mxu0 0
    %641 = vmatmul.mubr.bf16.gmra.mrb[0].mxu0 %v385
    %v642 = vpop.f32.mrb[0].mxu0
    %v643 = vadd.f32 0.0, %v642
    %v644 = vpop.f32.mrb[0].mxu0
    %v645 = vpop.f32.mrb[0].mxu0
    %v646 = vadd.f32 0.0, %v645
    %v647 = vpop.f32.mrb[0].mxu0
    %648 = vmatprep.mubr.bf16.mxu0 0
    %649 = vmatmul.mubr.bf16.gmra.mrb[0].mxu0 %v388
    %v650 = vpop.f32.mrb[0].mxu0
    %v651 = vadd.f32 0.0, %v650
    %v652 = vpop.f32.mrb[0].mxu0
    %v653 = vpop.f32.mrb[0].mxu0
    %v654 = vadd.f32 0.0, %v653
    %v655 = vpop.f32.mrb[0].mxu0
    %656 = vmatprep.mubr.bf16.mxu0 0
    %657 = vmatmul.mubr.bf16.gmra.mrb[0].mxu0 %v391
    %v658 = vpop.f32.mrb[0].mxu0
    %v659 = vadd.f32 0.0, %v658
    %v660 = vpop.f32.mrb[0].mxu0
    %v661 = vpop.f32.mrb[0].mxu0
    %v662 = vpop.f32.mrb[0].mxu0
    %663 = vdwg.mxu0
    %v664 = vld [vmem:[#allocation4] sm:$0xf]
    %v665 = vld [vmem:[#allocation4 + $0x4] sm:$0xf]
    %v666 = vld [vmem:[#allocation4 + $0x8] sm:$0xf]
    %v667 = vld [vmem:[#allocation4 + $0xc] sm:$0x3]
    %v672 = vunpack.c.l.b16 %v664
    %v673 = vunpack.c.l.b16 %v665
    %v674 = vunpack.c.l.b16 %v666
    %v675 = vunpack.c.l.b16 %v667
    %v676 = vpack.c.b16 %v673, %v672
    %v677 = vpack.c.b16 %v675, %v674
    %v680 = vand.u32 %v677, %v396
    %682 = vmatprep.subr.bf16.mxu0 0
    %683 = vmatpush1.bf16.msra.mxu0 %v676
    %684 = vmatprep.subr.bf16.mxu0 0
    %685 = vmatpush1.bf16.msra.mxu0 %v680
    %686 = vmatprep.subr.bf16.mxu0 0
    %687 = vmatpush1.bf16.msra.mxu0 0
    %688 = vmatprep.subr.bf16.mxu0 0
    %689 = vmatpush1.bf16.msra.mxu0 0
    %690 = vmatprep.subr.bf16.mxu0 0
    %691 = vmatpush1.bf16.msra.mxu0 0
    %692 = vmatprep.subr.bf16.mxu0 0
    %693 = vmatpush1.bf16.msra.mxu0 0
    %694 = vmatprep.subr.bf16.mxu0 0
    %695 = vmatpush1.bf16.msra.mxu0 0
    %696 = vmatprep.subr.bf16.mxu0 0
    %697 = vmatpush1.bf16.msra.mxu0 0
    %698 = vmatprep.subr.bf16.mxu0 0
    %699 = vmatpush1.bf16.msra.mxu0 0
    %700 = vmatprep.subr.bf16.mxu0 0
    %701 = vmatpush1.bf16.msra.mxu0 0
    %702 = vmatprep.subr.bf16.mxu0 0
    %703 = vmatpush1.bf16.msra.mxu0 0
    %704 = vmatprep.subr.bf16.mxu0 0
    %705 = vmatpush1.bf16.msra.mxu0 0
    %706 = vmatprep.subr.bf16.mxu0 0
    %707 = vmatpush1.bf16.msra.mxu0 0
    %708 = vmatprep.subr.bf16.mxu0 0
    %709 = vmatpush1.bf16.msra.mxu0 0
    %710 = vmatprep.subr.bf16.mxu0 0
    %711 = vmatpush1.bf16.msra.mxu0 0
    %712 = vmatprep.subr.bf16.mxu0 0
    %713 = vmatpush1.bf16.msra.mxu0 0
    %714 = vmatprep.mubr.bf16.mxu0 0
    %715 = vmatmul.mubr.bf16.gmra.mrb[0].mxu0 %v307
    %v716 = vpop.f32.mrb[0].mxu0
    %v717 = vadd.f32 0.0, %v716
    %v718 = vpop.f32.mrb[0].mxu0
    %v719 = vpop.f32.mrb[0].mxu0
    %v720 = vadd.f32 0.0, %v719
    %v721 = vpop.f32.mrb[0].mxu0
    %722 = vmatprep.mubr.bf16.mxu0 0
    %723 = vmatmul.mubr.bf16.gmra.mrb[0].mxu0 %v310
    %v724 = vpop.f32.mrb[0].mxu0
    %v725 = vadd.f32 0.0, %v724
    %v726 = vpop.f32.mrb[0].mxu0
    %v727 = vpop.f32.mrb[0].mxu0
    %v728 = vadd.f32 0.0, %v727
    %v729 = vpop.f32.mrb[0].mxu0
    %730 = vmatprep.mubr.bf16.mxu0 0
    %731 = vmatmul.mubr.bf16.gmra.mrb[0].mxu0 %v313
    %v732 = vpop.f32.mrb[0].mxu0
    %v733 = vadd.f32 0.0, %v732
    %v734 = vpop.f32.mrb[0].mxu0
    %v735 = vpop.f32.mrb[0].mxu0
    %v736 = vadd.f32 0.0, %v735
    %v737 = vpop.f32.mrb[0].mxu0
    %738 = vmatprep.mubr.bf16.mxu0 0
    %739 = vmatmul.mubr.bf16.gmra.mrb[0].mxu0 %v316
    %v740 = vpop.f32.mrb[0].mxu0
    %v741 = vadd.f32 0.0, %v740
    %v742 = vpop.f32.mrb[0].mxu0
    %v743 = vpop.f32.mrb[0].mxu0
    %v744 = vadd.f32 0.0, %v743
    %v745 = vpop.f32.mrb[0].mxu0
    %746 = vmatprep.mubr.bf16.mxu0 0
    %747 = vmatmul.mubr.bf16.gmra.mrb[0].mxu0 %v319
    %v748 = vpop.f32.mrb[0].mxu0
    %v749 = vadd.f32 0.0, %v748
    %v750 = vpop.f32.mrb[0].mxu0
    %v751 = vpop.f32.mrb[0].mxu0
    %v752 = vadd.f32 0.0, %v751
    %v753 = vpop.f32.mrb[0].mxu0
    %754 = vmatprep.mubr.bf16.mxu0 0
    %755 = vmatmul.mubr.bf16.gmra.mrb[0].mxu0 %v322
    %v756 = vpop.f32.mrb[0].mxu0
    %v757 = vadd.f32 0.0, %v756
    %v758 = vpop.f32.mrb[0].mxu0
    %v759 = vpop.f32.mrb[0].mxu0
    %v760 = vadd.f32 0.0, %v759
    %v761 = vpop.f32.mrb[0].mxu0
    %762 = vmatprep.mubr.bf16.mxu0 0
    %763 = vmatmul.mubr.bf16.gmra.mrb[0].mxu0 %v325
    %v764 = vpop.f32.mrb[0].mxu0
    %v765 = vadd.f32 0.0, %v764
    %v766 = vpop.f32.mrb[0].mxu0
    %v767 = vpop.f32.mrb[0].mxu0
    %v768 = vadd.f32 0.0, %v767
    %v769 = vpop.f32.mrb[0].mxu0
    %770 = vmatprep.mubr.bf16.mxu0 0
    %771 = vmatmul.mubr.bf16.gmra.mrb[0].mxu0 %v328
    %v772 = vpop.f32.mrb[0].mxu0
    %v773 = vadd.f32 0.0, %v772
    %v774 = vpop.f32.mrb[0].mxu0
    %v775 = vpop.f32.mrb[0].mxu0
    %v776 = vadd.f32 0.0, %v775
    %v777 = vpop.f32.mrb[0].mxu0
    %778 = vmatprep.mubr.bf16.mxu0 0
    %779 = vmatmul.mubr.bf16.gmra.mrb[0].mxu0 %v331
    %v780 = vpop.f32.mrb[0].mxu0
    %v781 = vadd.f32 0.0, %v780
    %v782 = vpop.f32.mrb[0].mxu0
    %v783 = vpop.f32.mrb[0].mxu0
    %v784 = vadd.f32 0.0, %v783
    %v785 = vpop.f32.mrb[0].mxu0
    %786 = vmatprep.mubr.bf16.mxu0 0
    %787 = vmatmul.mubr.bf16.gmra.mrb[0].mxu0 %v334
    %v788 = vpop.f32.mrb[0].mxu0
    %v789 = vadd.f32 0.0, %v788
    %v790 = vpop.f32.mrb[0].mxu0
    %v791 = vpop.f32.mrb[0].mxu0
    %v792 = vadd.f32 0.0, %v791
    %v793 = vpop.f32.mrb[0].mxu0
    %794 = vmatprep.mubr.bf16.mxu0 0
    %795 = vmatmul.mubr.bf16.gmra.mrb[0].mxu0 %v337
    %v796 = vpop.f32.mrb[0].mxu0
    %v797 = vadd.f32 0.0, %v796
    %v798 = vpop.f32.mrb[0].mxu0
    %v799 = vpop.f32.mrb[0].mxu0
    %v800 = vadd.f32 0.0, %v799
    %v801 = vpop.f32.mrb[0].mxu0
    %802 = vmatprep.mubr.bf16.mxu0 0
    %803 = vmatmul.mubr.bf16.gmra.mrb[0].mxu0 %v340
    %v804 = vpop.f32.mrb[0].mxu0
    %v805 = vadd.f32 0.0, %v804
    %v806 = vpop.f32.mrb[0].mxu0
    %v807 = vpop.f32.mrb[0].mxu0
    %v808 = vadd.f32 0.0, %v807
    %v809 = vpop.f32.mrb[0].mxu0
    %810 = vmatprep.mubr.bf16.mxu0 0
    %811 = vmatmul.mubr.bf16.gmra.mrb[0].mxu0 %v343
    %v812 = vpop.f32.mrb[0].mxu0
    %v813 = vadd.f32 0.0, %v812
    %v814 = vpop.f32.mrb[0].mxu0
    %v815 = vpop.f32.mrb[0].mxu0
    %v816 = vadd.f32 0.0, %v815
    %v817 = vpop.f32.mrb[0].mxu0
    %818 = vmatprep.mubr.bf16.mxu0 0
    %819 = vmatmul.mubr.bf16.gmra.mrb[0].mxu0 %v346
    %v820 = vpop.f32.mrb[0].mxu0
    %v821 = vadd.f32 0.0, %v820
    %v822 = vpop.f32.mrb[0].mxu0
    %v823 = vpop.f32.mrb[0].mxu0
    %v824 = vadd.f32 0.0, %v823
    %v825 = vpop.f32.mrb[0].mxu0
    %826 = vmatprep.mubr.bf16.mxu0 0
    %827 = vmatmul.mubr.bf16.gmra.mrb[0].mxu0 %v349
    %v828 = vpop.f32.mrb[0].mxu0
    %v829 = vadd.f32 0.0, %v828
    %v830 = vpop.f32.mrb[0].mxu0
    %v831 = vpop.f32.mrb[0].mxu0
    %v832 = vadd.f32 0.0, %v831
    %v833 = vpop.f32.mrb[0].mxu0
    %834 = vmatprep.mubr.bf16.mxu0 0
    %835 = vmatmul.mubr.bf16.gmra.mrb[0].mxu0 %v352
    %v836 = vpop.f32.mrb[0].mxu0
    %v837 = vadd.f32 0.0, %v836
    %v838 = vpop.f32.mrb[0].mxu0
    %v839 = vpop.f32.mrb[0].mxu0
    %v840 = vadd.f32 0.0, %v839
    %v841 = vpop.f32.mrb[0].mxu0
    %842 = vmatprep.mubr.bf16.mxu0 0
    %843 = vmatmul.mubr.bf16.gmra.mrb[0].mxu0 %v355
    %v844 = vpop.f32.mrb[0].mxu0
    %v845 = vadd.f32 0.0, %v844
    %v846 = vpop.f32.mrb[0].mxu0
    %v847 = vpop.f32.mrb[0].mxu0
    %v848 = vadd.f32 0.0, %v847
    %v849 = vpop.f32.mrb[0].mxu0
    %850 = vmatprep.mubr.bf16.mxu0 0
    %851 = vmatmul.mubr.bf16.gmra.mrb[0].mxu0 %v358
    %v852 = vpop.f32.mrb[0].mxu0
    %v853 = vadd.f32 0.0, %v852
    %v854 = vpop.f32.mrb[0].mxu0
    %v855 = vpop.f32.mrb[0].mxu0
    %v856 = vadd.f32 0.0, %v855
    %v857 = vpop.f32.mrb[0].mxu0
    %858 = vmatprep.mubr.bf16.mxu0 0
    %859 = vmatmul.mubr.bf16.gmra.mrb[0].mxu0 %v361
    %v860 = vpop.f32.mrb[0].mxu0
    %v861 = vadd.f32 0.0, %v860
    %v862 = vpop.f32.mrb[0].mxu0
    %v863 = vpop.f32.mrb[0].mxu0
    %v864 = vadd.f32 0.0, %v863
    %v865 = vpop.f32.mrb[0].mxu0
    %866 = vmatprep.mubr.bf16.mxu0 0
    %867 = vmatmul.mubr.bf16.gmra.mrb[0].mxu0 %v364
    %v868 = vpop.f32.mrb[0].mxu0
    %v869 = vadd.f32 0.0, %v868
    %v870 = vpop.f32.mrb[0].mxu0
    %v871 = vpop.f32.mrb[0].mxu0
    %v872 = vadd.f32 0.0, %v871
    %v873 = vpop.f32.mrb[0].mxu0
    %874 = vmatprep.mubr.bf16.mxu0 0
    %875 = vmatmul.mubr.bf16.gmra.mrb[0].mxu0 %v367
    %v876 = vpop.f32.mrb[0].mxu0
    %v877 = vadd.f32 0.0, %v876
    %v878 = vpop.f32.mrb[0].mxu0
    %v879 = vpop.f32.mrb[0].mxu0
    %v880 = vadd.f32 0.0, %v879
    %v881 = vpop.f32.mrb[0].mxu0
    %882 = vmatprep.mubr.bf16.mxu0 0
    %883 = vmatmul.mubr.bf16.gmra.mrb[0].mxu0 %v370
    %v884 = vpop.f32.mrb[0].mxu0
    %v885 = vadd.f32 0.0, %v884
    %v886 = vpop.f32.mrb[0].mxu0
    %v887 = vpop.f32.mrb[0].mxu0
    %v888 = vadd.f32 0.0, %v887
    %v889 = vpop.f32.mrb[0].mxu0
    %890 = vmatprep.mubr.bf16.mxu0 0
    %891 = vmatmul.mubr.bf16.gmra.mrb[0].mxu0 %v373
    %v892 = vpop.f32.mrb[0].mxu0
    %v893 = vadd.f32 0.0, %v892
    %v894 = vpop.f32.mrb[0].mxu0
    %v895 = vpop.f32.mrb[0].mxu0
    %v896 = vadd.f32 0.0, %v895
    %v897 = vpop.f32.mrb[0].mxu0
    %898 = vmatprep.mubr.bf16.mxu0 0
    %899 = vmatmul.mubr.bf16.gmra.mrb[0].mxu0 %v376
    %v900 = vpop.f32.mrb[0].mxu0
    %v901 = vadd.f32 0.0, %v900
    %v902 = vpop.f32.mrb[0].mxu0
    %v903 = vpop.f32.mrb[0].mxu0
    %v904 = vadd.f32 0.0, %v903
    %v905 = vpop.f32.mrb[0].mxu0
    %906 = vmatprep.mubr.bf16.mxu0 0
    %907 = vmatmul.mubr.bf16.gmra.mrb[0].mxu0 %v379
    %v908 = vpop.f32.mrb[0].mxu0
    %v909 = vadd.f32 0.0, %v908
    %v910 = vpop.f32.mrb[0].mxu0
    %v911 = vpop.f32.mrb[0].mxu0
    %v912 = vadd.f32 0.0, %v911
    %v913 = vpop.f32.mrb[0].mxu0
    %914 = vmatprep.mubr.bf16.mxu0 0
    %915 = vmatmul.mubr.bf16.gmra.mrb[0].mxu0 %v382
    %v916 = vpop.f32.mrb[0].mxu0
    %v917 = vadd.f32 0.0, %v916
    %v918 = vpop.f32.mrb[0].mxu0
    %v919 = vpop.f32.mrb[0].mxu0
    %v920 = vadd.f32 0.0, %v919
    %v921 = vpop.f32.mrb[0].mxu0
    %922 = vmatprep.mubr.bf16.mxu0 0
    %923 = vmatmul.mubr.bf16.gmra.mrb[0].mxu0 %v385
    %v924 = vpop.f32.mrb[0].mxu0
    %v925 = vadd.f32 0.0, %v924
    %v926 = vpop.f32.mrb[0].mxu0
    %v927 = vpop.f32.mrb[0].mxu0
    %v928 = vadd.f32 0.0, %v927
    %v929 = vpop.f32.mrb[0].mxu0
    %930 = vmatprep.mubr.bf16.mxu0 0
    %931 = vmatmul.mubr.bf16.gmra.mrb[0].mxu0 %v388
    %v932 = vpop.f32.mrb[0].mxu0
    %v933 = vadd.f32 0.0, %v932
    %v934 = vpop.f32.mrb[0].mxu0
    %v935 = vpop.f32.mrb[0].mxu0
    %v936 = vadd.f32 0.0, %v935
    %v937 = vpop.f32.mrb[0].mxu0
    %938 = vmatprep.mubr.bf16.mxu0 0
    %939 = vmatmul.mubr.bf16.gmra.mrb[0].mxu0 %v391
    %v940 = vpop.f32.mrb[0].mxu0
    %v941 = vadd.f32 0.0, %v940
    %v942 = vpop.f32.mrb[0].mxu0
    %v943 = vpop.f32.mrb[0].mxu0
    %v944 = vpop.f32.mrb[0].mxu0
    %945 = vdwg.mxu0
    %v946 = vmax.f32 %v435, %v717
    %v947 = vmax.f32 %v438, %v720
    %v948 = vmax.f32 %v443, %v725
    %v949 = vmax.f32 %v446, %v728
    %v950 = vmax.f32 %v451, %v733
    %v951 = vmax.f32 %v454, %v736
    %v952 = vmax.f32 %v459, %v741
    %v953 = vmax.f32 %v462, %v744
    %v954 = vmax.f32 %v467, %v749
    %v955 = vmax.f32 %v470, %v752
    %v956 = vmax.f32 %v475, %v757
    %v957 = vmax.f32 %v478, %v760
    %v958 = vmax.f32 %v483, %v765
    %v959 = vmax.f32 %v486, %v768
    %v960 = vmax.f32 %v491, %v773
    %v961 = vmax.f32 %v494, %v776
    %v962 = vmax.f32 %v499, %v781
    %v963 = vmax.f32 %v502, %v784
    %v964 = vmax.f32 %v507, %v789
    %v965 = vmax.f32 %v510, %v792
    %v966 = vmax.f32 %v515, %v797
    %v967 = vmax.f32 %v518, %v800
    %v968 = vmax.f32 %v523, %v805
    %v969 = vmax.f32 %v526, %v808
    %v970 = vmax.f32 %v531, %v813
    %v971 = vmax.f32 %v534, %v816
    %v972 = vmax.f32 %v539, %v821
    %v973 = vmax.f32 %v542, %v824
    %v974 = vmax.f32 %v547, %v829
    %v975 = vmax.f32 %v550, %v832
    %v976 = vmax.f32 %v555, %v837
    %v977 = vmax.f32 %v558, %v840
    %v978 = vmax.f32 %v563, %v845
    %v979 = vmax.f32 %v566, %v848
    %v980 = vmax.f32 %v571, %v853
    %v981 = vmax.f32 %v574, %v856
    %v982 = vmax.f32 %v579, %v861
    %v983 = vmax.f32 %v582, %v864
    %v984 = vmax.f32 %v587, %v869
    %v985 = vmax.f32 %v590, %v872
    %v986 = vmax.f32 %v595, %v877
    %v987 = vmax.f32 %v598, %v880
    %v988 = vmax.f32 %v603, %v885
    %v989 = vmax.f32 %v606, %v888
    %v990 = vmax.f32 %v611, %v893
    %v991 = vmax.f32 %v614, %v896
    %v992 = vmax.f32 %v619, %v901
    %v993 = vmax.f32 %v622, %v904
    %v994 = vmax.f32 %v627, %v909
    %v995 = vmax.f32 %v630, %v912
    %v996 = vmax.f32 %v635, %v917
    %v997 = vmax.f32 %v638, %v920
    %v998 = vmax.f32 %v643, %v925
    %v999 = vmax.f32 %v646, %v928
    %v1000 = vmax.f32 %v651, %v933
    %v1001 = vmax.f32 %v654, %v936
    %v1002 = vmax.f32 %v659, %v941
    %v1003 = vld [vmem:[#allocation6] sm:$0xf]
    %v1004 = vld [vmem:[#allocation6 + $0x4] sm:$0xf]
    %v1005 = vld [vmem:[#allocation6 + $0x8] sm:$0xf]
    %v1006 = vld [vmem:[#allocation6 + $0xc] sm:$0x3]
    %v1011 = vunpack.c.l.b16 %v1003
    %v1012 = vunpack.c.l.b16 %v1004
    %v1013 = vunpack.c.l.b16 %v1005
    %v1014 = vunpack.c.l.b16 %v1006
    %v1015 = vpack.c.b16 %v1012, %v1011
    %v1016 = vpack.c.b16 %v1014, %v1013
    %v1019 = vand.u32 %v1016, %v396
    %1021 = vmatprep.subr.bf16.mxu0 0
    %1022 = vmatpush1.bf16.msra.mxu0 %v1015
    %1023 = vmatprep.subr.bf16.mxu0 0
    %1024 = vmatpush1.bf16.msra.mxu0 %v1019
    %1025 = vmatprep.subr.bf16.mxu0 0
    %1026 = vmatpush1.bf16.msra.mxu0 0
    %1027 = vmatprep.subr.bf16.mxu0 0
    %1028 = vmatpush1.bf16.msra.mxu0 0
    %1029 = vmatprep.subr.bf16.mxu0 0
    %1030 = vmatpush1.bf16.msra.mxu0 0
    %1031 = vmatprep.subr.bf16.mxu0 0
    %1032 = vmatpush1.bf16.msra.mxu0 0
    %1033 = vmatprep.subr.bf16.mxu0 0
    %1034 = vmatpush1.bf16.msra.mxu0 0
    %1035 = vmatprep.subr.bf16.mxu0 0
    %1036 = vmatpush1.bf16.msra.mxu0 0
    %1037 = vmatprep.subr.bf16.mxu0 0
    %1038 = vmatpush1.bf16.msra.mxu0 0
    %1039 = vmatprep.subr.bf16.mxu0 0
    %1040 = vmatpush1.bf16.msra.mxu0 0
    %1041 = vmatprep.subr.bf16.mxu0 0
    %1042 = vmatpush1.bf16.msra.mxu0 0
    %1043 = vmatprep.subr.bf16.mxu0 0
    %1044 = vmatpush1.bf16.msra.mxu0 0
    %1045 = vmatprep.subr.bf16.mxu0 0
    %1046 = vmatpush1.bf16.msra.mxu0 0
    %1047 = vmatprep.subr.bf16.mxu0 0
    %1048 = vmatpush1.bf16.msra.mxu0 0
    %1049 = vmatprep.subr.bf16.mxu0 0
    %1050 = vmatpush1.bf16.msra.mxu0 0
    %1051 = vmatprep.subr.bf16.mxu0 0
    %1052 = vmatpush1.bf16.msra.mxu0 0
    %1053 = vmatprep.mubr.bf16.mxu0 0
    %1054 = vmatmul.mubr.bf16.gmra.mrb[0].mxu0 %v307
    %v1055 = vpop.f32.mrb[0].mxu0
    %v1056 = vadd.f32 0.0, %v1055
    %v1057 = vpop.f32.mrb[0].mxu0
    %v1058 = vpop.f32.mrb[0].mxu0
    %v1059 = vadd.f32 0.0, %v1058
    %v1060 = vpop.f32.mrb[0].mxu0
    %1061 = vmatprep.mubr.bf16.mxu0 0
    %1062 = vmatmul.mubr.bf16.gmra.mrb[0].mxu0 %v310
    %v1063 = vpop.f32.mrb[0].mxu0
    %v1064 = vadd.f32 0.0, %v1063
    %v1065 = vpop.f32.mrb[0].mxu0
    %v1066 = vpop.f32.mrb[0].mxu0
    %v1067 = vadd.f32 0.0, %v1066
    %v1068 = vpop.f32.mrb[0].mxu0
    %1069 = vmatprep.mubr.bf16.mxu0 0
    %1070 = vmatmul.mubr.bf16.gmra.mrb[0].mxu0 %v313
    %v1071 = vpop.f32.mrb[0].mxu0
    %v1072 = vadd.f32 0.0, %v1071
    %v1073 = vpop.f32.mrb[0].mxu0
    %v1074 = vpop.f32.mrb[0].mxu0
    %v1075 = vadd.f32 0.0, %v1074
    %v1076 = vpop.f32.mrb[0].mxu0
    %1077 = vmatprep.mubr.bf16.mxu0 0
    %1078 = vmatmul.mubr.bf16.gmra.mrb[0].mxu0 %v316
    %v1079 = vpop.f32.mrb[0].mxu0
    %v1080 = vadd.f32 0.0, %v1079
    %v1081 = vpop.f32.mrb[0].mxu0
    %v1082 = vpop.f32.mrb[0].mxu0
    %v1083 = vadd.f32 0.0, %v1082
    %v1084 = vpop.f32.mrb[0].mxu0
    %1085 = vmatprep.mubr.bf16.mxu0 0
    %1086 = vmatmul.mubr.bf16.gmra.mrb[0].mxu0 %v319
    %v1087 = vpop.f32.mrb[0].mxu0
    %v1088 = vadd.f32 0.0, %v1087
    %v1089 = vpop.f32.mrb[0].mxu0
    %v1090 = vpop.f32.mrb[0].mxu0
    %v1091 = vadd.f32 0.0, %v1090
    %v1092 = vpop.f32.mrb[0].mxu0
    %1093 = vmatprep.mubr.bf16.mxu0 0
    %1094 = vmatmul.mubr.bf16.gmra.mrb[0].mxu0 %v322
    %v1095 = vpop.f32.mrb[0].mxu0
    %v1096 = vadd.f32 0.0, %v1095
    %v1097 = vpop.f32.mrb[0].mxu0
    %v1098 = vpop.f32.mrb[0].mxu0
    %v1099 = vadd.f32 0.0, %v1098
    %v1100 = vpop.f32.mrb[0].mxu0
    %1101 = vmatprep.mubr.bf16.mxu0 0
    %1102 = vmatmul.mubr.bf16.gmra.mrb[0].mxu0 %v325
    %v1103 = vpop.f32.mrb[0].mxu0
    %v1104 = vadd.f32 0.0, %v1103
    %v1105 = vpop.f32.mrb[0].mxu0
    %v1106 = vpop.f32.mrb[0].mxu0
    %v1107 = vadd.f32 0.0, %v1106
    %v1108 = vpop.f32.mrb[0].mxu0
    %1109 = vmatprep.mubr.bf16.mxu0 0
    %1110 = vmatmul.mubr.bf16.gmra.mrb[0].mxu0 %v328
    %v1111 = vpop.f32.mrb[0].mxu0
    %v1112 = vadd.f32 0.0, %v1111
    %v1113 = vpop.f32.mrb[0].mxu0
    %v1114 = vpop.f32.mrb[0].mxu0
    %v1115 = vadd.f32 0.0, %v1114
    %v1116 = vpop.f32.mrb[0].mxu0
    %1117 = vmatprep.mubr.bf16.mxu0 0
    %1118 = vmatmul.mubr.bf16.gmra.mrb[0].mxu0 %v331
    %v1119 = vpop.f32.mrb[0].mxu0
    %v1120 = vadd.f32 0.0, %v1119
    %v1121 = vpop.f32.mrb[0].mxu0
    %v1122 = vpop.f32.mrb[0].mxu0
    %v1123 = vadd.f32 0.0, %v1122
    %v1124 = vpop.f32.mrb[0].mxu0
    %1125 = vmatprep.mubr.bf16.mxu0 0
    %1126 = vmatmul.mubr.bf16.gmra.mrb[0].mxu0 %v334
    %v1127 = vpop.f32.mrb[0].mxu0
    %v1128 = vadd.f32 0.0, %v1127
    %v1129 = vpop.f32.mrb[0].mxu0
    %v1130 = vpop.f32.mrb[0].mxu0
    %v1131 = vadd.f32 0.0, %v1130
    %v1132 = vpop.f32.mrb[0].mxu0
    %1133 = vmatprep.mubr.bf16.mxu0 0
    %1134 = vmatmul.mubr.bf16.gmra.mrb[0].mxu0 %v337
    %v1135 = vpop.f32.mrb[0].mxu0
    %v1136 = vadd.f32 0.0, %v1135
    %v1137 = vpop.f32.mrb[0].mxu0
    %v1138 = vpop.f32.mrb[0].mxu0
    %v1139 = vadd.f32 0.0, %v1138
    %v1140 = vpop.f32.mrb[0].mxu0
    %1141 = vmatprep.mubr.bf16.mxu0 0
    %1142 = vmatmul.mubr.bf16.gmra.mrb[0].mxu0 %v340
    %v1143 = vpop.f32.mrb[0].mxu0
    %v1144 = vadd.f32 0.0, %v1143
    %v1145 = vpop.f32.mrb[0].mxu0
    %v1146 = vpop.f32.mrb[0].mxu0
    %v1147 = vadd.f32 0.0, %v1146
    %v1148 = vpop.f32.mrb[0].mxu0
    %1149 = vmatprep.mubr.bf16.mxu0 0
    %1150 = vmatmul.mubr.bf16.gmra.mrb[0].mxu0 %v343
    %v1151 = vpop.f32.mrb[0].mxu0
    %v1152 = vadd.f32 0.0, %v1151
    %v1153 = vpop.f32.mrb[0].mxu0
    %v1154 = vpop.f32.mrb[0].mxu0
    %v1155 = vadd.f32 0.0, %v1154
    %v1156 = vpop.f32.mrb[0].mxu0
    %1157 = vmatprep.mubr.bf16.mxu0 0
    %1158 = vmatmul.mubr.bf16.gmra.mrb[0].mxu0 %v346
    %v1159 = vpop.f32.mrb[0].mxu0
    %v1160 = vadd.f32 0.0, %v1159
    %v1161 = vpop.f32.mrb[0].mxu0
    %v1162 = vpop.f32.mrb[0].mxu0
    %v1163 = vadd.f32 0.0, %v1162
    %v1164 = vpop.f32.mrb[0].mxu0
    %1165 = vmatprep.mubr.bf16.mxu0 0
    %1166 = vmatmul.mubr.bf16.gmra.mrb[0].mxu0 %v349
    %v1167 = vpop.f32.mrb[0].mxu0
    %v1168 = vadd.f32 0.0, %v1167
    %v1169 = vpop.f32.mrb[0].mxu0
    %v1170 = vpop.f32.mrb[0].mxu0
    %v1171 = vadd.f32 0.0, %v1170
    %v1172 = vpop.f32.mrb[0].mxu0
    %1173 = vmatprep.mubr.bf16.mxu0 0
    %1174 = vmatmul.mubr.bf16.gmra.mrb[0].mxu0 %v352
    %v1175 = vpop.f32.mrb[0].mxu0
    %v1176 = vadd.f32 0.0, %v1175
    %v1177 = vpop.f32.mrb[0].mxu0
    %v1178 = vpop.f32.mrb[0].mxu0
    %v1179 = vadd.f32 0.0, %v1178
    %v1180 = vpop.f32.mrb[0].mxu0
    %1181 = vmatprep.mubr.bf16.mxu0 0
    %1182 = vmatmul.mubr.bf16.gmra.mrb[0].mxu0 %v355
    %v1183 = vpop.f32.mrb[0].mxu0
    %v1184 = vadd.f32 0.0, %v1183
    %v1185 = vpop.f32.mrb[0].mxu0
    %v1186 = vpop.f32.mrb[0].mxu0
    %v1187 = vadd.f32 0.0, %v1186
    %v1188 = vpop.f32.mrb[0].mxu0
    %1189 = vmatprep.mubr.bf16.mxu0 0
    %1190 = vmatmul.mubr.bf16.gmra.mrb[0].mxu0 %v358
    %v1191 = vpop.f32.mrb[0].mxu0
    %v1192 = vadd.f32 0.0, %v1191
    %v1193 = vpop.f32.mrb[0].mxu0
    %v1194 = vpop.f32.mrb[0].mxu0
    %v1195 = vadd.f32 0.0, %v1194
    %v1196 = vpop.f32.mrb[0].mxu0
    %1197 = vmatprep.mubr.bf16.mxu0 0
    %1198 = vmatmul.mubr.bf16.gmra.mrb[0].mxu0 %v361
    %v1199 = vpop.f32.mrb[0].mxu0
    %v1200 = vadd.f32 0.0, %v1199
    %v1201 = vpop.f32.mrb[0].mxu0
    %v1202 = vpop.f32.mrb[0].mxu0
    %v1203 = vadd.f32 0.0, %v1202
    %v1204 = vpop.f32.mrb[0].mxu0
    %1205 = vmatprep.mubr.bf16.mxu0 0
    %1206 = vmatmul.mubr.bf16.gmra.mrb[0].mxu0 %v364
    %v1207 = vpop.f32.mrb[0].mxu0
    %v1208 = vadd.f32 0.0, %v1207
    %v1209 = vpop.f32.mrb[0].mxu0
    %v1210 = vpop.f32.mrb[0].mxu0
    %v1211 = vadd.f32 0.0, %v1210
    %v1212 = vpop.f32.mrb[0].mxu0
    %1213 = vmatprep.mubr.bf16.mxu0 0
    %1214 = vmatmul.mubr.bf16.gmra.mrb[0].mxu0 %v367
    %v1215 = vpop.f32.mrb[0].mxu0
    %v1216 = vadd.f32 0.0, %v1215
    %v1217 = vpop.f32.mrb[0].mxu0
    %v1218 = vpop.f32.mrb[0].mxu0
    %v1219 = vadd.f32 0.0, %v1218
    %v1220 = vpop.f32.mrb[0].mxu0
    %1221 = vmatprep.mubr.bf16.mxu0 0
    %1222 = vmatmul.mubr.bf16.gmra.mrb[0].mxu0 %v370
    %v1223 = vpop.f32.mrb[0].mxu0
    %v1224 = vadd.f32 0.0, %v1223
    %v1225 = vpop.f32.mrb[0].mxu0
    %v1226 = vpop.f32.mrb[0].mxu0
    %v1227 = vadd.f32 0.0, %v1226
    %v1228 = vpop.f32.mrb[0].mxu0
    %1229 = vmatprep.mubr.bf16.mxu0 0
    %1230 = vmatmul.mubr.bf16.gmra.mrb[0].mxu0 %v373
    %v1231 = vpop.f32.mrb[0].mxu0
    %v1232 = vadd.f32 0.0, %v1231
    %v1233 = vpop.f32.mrb[0].mxu0
    %v1234 = vpop.f32.mrb[0].mxu0
    %v1235 = vadd.f32 0.0, %v1234
    %v1236 = vpop.f32.mrb[0].mxu0
    %1237 = vmatprep.mubr.bf16.mxu0 0
    %1238 = vmatmul.mubr.bf16.gmra.mrb[0].mxu0 %v376
    %v1239 = vpop.f32.mrb[0].mxu0
    %v1240 = vadd.f32 0.0, %v1239
    %v1241 = vpop.f32.mrb[0].mxu0
    %v1242 = vpop.f32.mrb[0].mxu0
    %v1243 = vadd.f32 0.0, %v1242
    %v1244 = vpop.f32.mrb[0].mxu0
    %1245 = vmatprep.mubr.bf16.mxu0 0
    %1246 = vmatmul.mubr.bf16.gmra.mrb[0].mxu0 %v379
    %v1247 = vpop.f32.mrb[0].mxu0
    %v1248 = vadd.f32 0.0, %v1247
    %v1249 = vpop.f32.mrb[0].mxu0
    %v1250 = vpop.f32.mrb[0].mxu0
    %v1251 = vadd.f32 0.0, %v1250
    %v1252 = vpop.f32.mrb[0].mxu0
    %1253 = vmatprep.mubr.bf16.mxu0 0
    %1254 = vmatmul.mubr.bf16.gmra.mrb[0].mxu0 %v382
    %v1255 = vpop.f32.mrb[0].mxu0
    %v1256 = vadd.f32 0.0, %v1255
    %v1257 = vpop.f32.mrb[0].mxu0
    %v1258 = vpop.f32.mrb[0].mxu0
    %v1259 = vadd.f32 0.0, %v1258
    %v1260 = vpop.f32.mrb[0].mxu0
    %1261 = vmatprep.mubr.bf16.mxu0 0
    %1262 = vmatmul.mubr.bf16.gmra.mrb[0].mxu0 %v385
    %v1263 = vpop.f32.mrb[0].mxu0
    %v1264 = vadd.f32 0.0, %v1263
    %v1265 = vpop.f32.mrb[0].mxu0
    %v1266 = vpop.f32.mrb[0].mxu0
    %v1267 = vadd.f32 0.0, %v1266
    %v1268 = vpop.f32.mrb[0].mxu0
    %1269 = vmatprep.mubr.bf16.mxu0 0
    %1270 = vmatmul.mubr.bf16.gmra.mrb[0].mxu0 %v388
    %v1271 = vpop.f32.mrb[0].mxu0
    %v1272 = vadd.f32 0.0, %v1271
    %v1273 = vpop.f32.mrb[0].mxu0
    %v1274 = vpop.f32.mrb[0].mxu0
    %v1275 = vadd.f32 0.0, %v1274
    %v1276 = vpop.f32.mrb[0].mxu0
    %1277 = vmatprep.mubr.bf16.mxu0 0
    %1278 = vmatmul.mubr.bf16.gmra.mrb[0].mxu0 %v391
    %v1279 = vpop.f32.mrb[0].mxu0
    %v1280 = vadd.f32 0.0, %v1279
    %v1281 = vpop.f32.mrb[0].mxu0
    %v1282 = vpop.f32.mrb[0].mxu0
    %v1283 = vpop.f32.mrb[0].mxu0
    %1284 = vdwg.mxu0
    %v1285 = vmax.f32 %v946, %v1056
    %v1286 = vmax.f32 %v947, %v1059
    %v1287 = vmax.f32 %v948, %v1064
    %v1288 = vmax.f32 %v949, %v1067
    %v1289 = vmax.f32 %v950, %v1072
    %v1290 = vmax.f32 %v951, %v1075
    %v1291 = vmax.f32 %v952, %v1080
    %v1292 = vmax.f32 %v953, %v1083
    %v1293 = vmax.f32 %v954, %v1088
    %v1294 = vmax.f32 %v955, %v1091
    %v1295 = vmax.f32 %v956, %v1096
    %v1296 = vmax.f32 %v957, %v1099
    %v1297 = vmax.f32 %v958, %v1104
    %v1298 = vmax.f32 %v959, %v1107
    %v1299 = vmax.f32 %v960, %v1112
    %v1300 = vmax.f32 %v961, %v1115
    %v1301 = vmax.f32 %v962, %v1120
    %v1302 = vmax.f32 %v963, %v1123
    %v1303 = vmax.f32 %v964, %v1128
    %v1304 = vmax.f32 %v965, %v1131
    %v1305 = vmax.f32 %v966, %v1136
    %v1306 = vmax.f32 %v967, %v1139
    %v1307 = vmax.f32 %v968, %v1144
    %v1308 = vmax.f32 %v969, %v1147
    %v1309 = vmax.f32 %v970, %v1152
    %v1310 = vmax.f32 %v971, %v1155
    %v1311 = vmax.f32 %v972, %v1160
    %v1312 = vmax.f32 %v973, %v1163
    %v1313 = vmax.f32 %v974, %v1168
    %v1314 = vmax.f32 %v975, %v1171
    %v1315 = vmax.f32 %v976, %v1176
    %v1316 = vmax.f32 %v977, %v1179
    %v1317 = vmax.f32 %v978, %v1184
    %v1318 = vmax.f32 %v979, %v1187
    %v1319 = vmax.f32 %v980, %v1192
    %v1320 = vmax.f32 %v981, %v1195
    %v1321 = vmax.f32 %v982, %v1200
    %v1322 = vmax.f32 %v983, %v1203
    %v1323 = vmax.f32 %v984, %v1208
    %v1324 = vmax.f32 %v985, %v1211
    %v1325 = vmax.f32 %v986, %v1216
    %v1326 = vmax.f32 %v987, %v1219
    %v1327 = vmax.f32 %v988, %v1224
    %v1328 = vmax.f32 %v989, %v1227
    %v1329 = vmax.f32 %v990, %v1232
    %v1330 = vmax.f32 %v991, %v1235
    %v1331 = vmax.f32 %v992, %v1240
    %v1332 = vmax.f32 %v993, %v1243
    %v1333 = vmax.f32 %v994, %v1248
    %v1334 = vmax.f32 %v995, %v1251
    %v1335 = vmax.f32 %v996, %v1256
    %v1336 = vmax.f32 %v997, %v1259
    %v1337 = vmax.f32 %v998, %v1264
    %v1338 = vmax.f32 %v999, %v1267
    %v1339 = vmax.f32 %v1000, %v1272
    %v1340 = vmax.f32 %v1001, %v1275
    %v1341 = vmax.f32 %v1002, %v1280
    %v1342 = vld [vmem:[#allocation7] sm:$0xf]
    %v1343 = vld [vmem:[#allocation7 + $0x4] sm:$0xf]
    %v1344 = vld [vmem:[#allocation7 + $0x8] sm:$0xf]
    %v1345 = vld [vmem:[#allocation7 + $0xc] sm:$0x3]
    %v1350 = vunpack.c.l.b16 %v1342
    %v1351 = vunpack.c.l.b16 %v1343
    %v1352 = vunpack.c.l.b16 %v1344
    %v1353 = vunpack.c.l.b16 %v1345
    %v1354 = vpack.c.b16 %v1351, %v1350
    %v1355 = vpack.c.b16 %v1353, %v1352
    %v1358 = vand.u32 %v1355, %v396
    %1360 = vmatprep.subr.bf16.mxu0 0
    %1361 = vmatpush1.bf16.msra.mxu0 %v1354
    %1362 = vmatprep.subr.bf16.mxu0 0
    %1363 = vmatpush1.bf16.msra.mxu0 %v1358
    %1364 = vmatprep.subr.bf16.mxu0 0
    %1365 = vmatpush1.bf16.msra.mxu0 0
    %1366 = vmatprep.subr.bf16.mxu0 0
    %1367 = vmatpush1.bf16.msra.mxu0 0
    %1368 = vmatprep.subr.bf16.mxu0 0
    %1369 = vmatpush1.bf16.msra.mxu0 0
    %1370 = vmatprep.subr.bf16.mxu0 0
    %1371 = vmatpush1.bf16.msra.mxu0 0
    %1372 = vmatprep.subr.bf16.mxu0 0
    %1373 = vmatpush1.bf16.msra.mxu0 0
    %1374 = vmatprep.subr.bf16.mxu0 0
    %1375 = vmatpush1.bf16.msra.mxu0 0
    %1376 = vmatprep.subr.bf16.mxu0 0
    %1377 = vmatpush1.bf16.msra.mxu0 0
    %1378 = vmatprep.subr.bf16.mxu0 0
    %1379 = vmatpush1.bf16.msra.mxu0 0
    %1380 = vmatprep.subr.bf16.mxu0 0
    %1381 = vmatpush1.bf16.msra.mxu0 0
    %1382 = vmatprep.subr.bf16.mxu0 0
    %1383 = vmatpush1.bf16.msra.mxu0 0
    %1384 = vmatprep.subr.bf16.mxu0 0
    %1385 = vmatpush1.bf16.msra.mxu0 0
    %1386 = vmatprep.subr.bf16.mxu0 0
    %1387 = vmatpush1.bf16.msra.mxu0 0
    %1388 = vmatprep.subr.bf16.mxu0 0
    %1389 = vmatpush1.bf16.msra.mxu0 0
    %1390 = vmatprep.subr.bf16.mxu0 0
    %1391 = vmatpush1.bf16.msra.mxu0 0
    %1392 = vmatprep.mubr.bf16.mxu0 0
    %1393 = vmatmul.mubr.bf16.gmra.mrb[0].mxu0 %v307
    %v1394 = vpop.f32.mrb[0].mxu0
    %v1395 = vadd.f32 0.0, %v1394
    %v1396 = vpop.f32.mrb[0].mxu0
    %v1397 = vpop.f32.mrb[0].mxu0
    %v1398 = vadd.f32 0.0, %v1397
    %v1399 = vpop.f32.mrb[0].mxu0
    %1400 = vmatprep.mubr.bf16.mxu0 0
    %1401 = vmatmul.mubr.bf16.gmra.mrb[0].mxu0 %v310
    %v1402 = vpop.f32.mrb[0].mxu0
    %v1403 = vadd.f32 0.0, %v1402
    %v1404 = vpop.f32.mrb[0].mxu0
    %v1405 = vpop.f32.mrb[0].mxu0
    %v1406 = vadd.f32 0.0, %v1405
    %v1407 = vpop.f32.mrb[0].mxu0
    %1408 = vmatprep.mubr.bf16.mxu0 0
    %1409 = vmatmul.mubr.bf16.gmra.mrb[0].mxu0 %v313
    %v1410 = vpop.f32.mrb[0].mxu0
    %v1411 = vadd.f32 0.0, %v1410
    %v1412 = vpop.f32.mrb[0].mxu0
    %v1413 = vpop.f32.mrb[0].mxu0
    %v1414 = vadd.f32 0.0, %v1413
    %v1415 = vpop.f32.mrb[0].mxu0
    %1416 = vmatprep.mubr.bf16.mxu0 0
    %1417 = vmatmul.mubr.bf16.gmra.mrb[0].mxu0 %v316
    %v1418 = vpop.f32.mrb[0].mxu0
    %v1419 = vadd.f32 0.0, %v1418
    %v1420 = vpop.f32.mrb[0].mxu0
    %v1421 = vpop.f32.mrb[0].mxu0
    %v1422 = vadd.f32 0.0, %v1421
    %v1423 = vpop.f32.mrb[0].mxu0
    %1424 = vmatprep.mubr.bf16.mxu0 0
    %1425 = vmatmul.mubr.bf16.gmra.mrb[0].mxu0 %v319
    %v1426 = vpop.f32.mrb[0].mxu0
    %v1427 = vadd.f32 0.0, %v1426
    %v1428 = vpop.f32.mrb[0].mxu0
    %v1429 = vpop.f32.mrb[0].mxu0
    %v1430 = vadd.f32 0.0, %v1429
    %v1431 = vpop.f32.mrb[0].mxu0
    %1432 = vmatprep.mubr.bf16.mxu0 0
    %1433 = vmatmul.mubr.bf16.gmra.mrb[0].mxu0 %v322
    %v1434 = vpop.f32.mrb[0].mxu0
    %v1435 = vadd.f32 0.0, %v1434
    %v1436 = vpop.f32.mrb[0].mxu0
    %v1437 = vpop.f32.mrb[0].mxu0
    %v1438 = vadd.f32 0.0, %v1437
    %v1439 = vpop.f32.mrb[0].mxu0
    %1440 = vmatprep.mubr.bf16.mxu0 0
    %1441 = vmatmul.mubr.bf16.gmra.mrb[0].mxu0 %v325
    %v1442 = vpop.f32.mrb[0].mxu0
    %v1443 = vadd.f32 0.0, %v1442
    %v1444 = vpop.f32.mrb[0].mxu0
    %v1445 = vpop.f32.mrb[0].mxu0
    %v1446 = vadd.f32 0.0, %v1445
    %v1447 = vpop.f32.mrb[0].mxu0
    %1448 = vmatprep.mubr.bf16.mxu0 0
    %1449 = vmatmul.mubr.bf16.gmra.mrb[0].mxu0 %v328
    %v1450 = vpop.f32.mrb[0].mxu0
    %v1451 = vadd.f32 0.0, %v1450
    %v1452 = vpop.f32.mrb[0].mxu0
    %v1453 = vpop.f32.mrb[0].mxu0
    %v1454 = vadd.f32 0.0, %v1453
    %v1455 = vpop.f32.mrb[0].mxu0
    %1456 = vmatprep.mubr.bf16.mxu0 0
    %1457 = vmatmul.mubr.bf16.gmra.mrb[0].mxu0 %v331
    %v1458 = vpop.f32.mrb[0].mxu0
    %v1459 = vadd.f32 0.0, %v1458
    %v1460 = vpop.f32.mrb[0].mxu0
    %v1461 = vpop.f32.mrb[0].mxu0
    %v1462 = vadd.f32 0.0, %v1461
    %v1463 = vpop.f32.mrb[0].mxu0
    %1464 = vmatprep.mubr.bf16.mxu0 0
    %1465 = vmatmul.mubr.bf16.gmra.mrb[0].mxu0 %v334
    %v1466 = vpop.f32.mrb[0].mxu0
    %v1467 = vadd.f32 0.0, %v1466
    %v1468 = vpop.f32.mrb[0].mxu0
    %v1469 = vpop.f32.mrb[0].mxu0
    %v1470 = vadd.f32 0.0, %v1469
    %v1471 = vpop.f32.mrb[0].mxu0
    %1472 = vmatprep.mubr.bf16.mxu0 0
    %1473 = vmatmul.mubr.bf16.gmra.mrb[0].mxu0 %v337
    %v1474 = vpop.f32.mrb[0].mxu0
    %v1475 = vadd.f32 0.0, %v1474
    %v1476 = vpop.f32.mrb[0].mxu0
    %v1477 = vpop.f32.mrb[0].mxu0
    %v1478 = vadd.f32 0.0, %v1477
    %v1479 = vpop.f32.mrb[0].mxu0
    %1480 = vmatprep.mubr.bf16.mxu0 0
    %1481 = vmatmul.mubr.bf16.gmra.mrb[0].mxu0 %v340
    %v1482 = vpop.f32.mrb[0].mxu0
    %v1483 = vadd.f32 0.0, %v1482
    %v1484 = vpop.f32.mrb[0].mxu0
    %v1485 = vpop.f32.mrb[0].mxu0
    %v1486 = vadd.f32 0.0, %v1485
    %v1487 = vpop.f32.mrb[0].mxu0
    %1488 = vmatprep.mubr.bf16.mxu0 0
    %1489 = vmatmul.mubr.bf16.gmra.mrb[0].mxu0 %v343
    %v1490 = vpop.f32.mrb[0].mxu0
    %v1491 = vadd.f32 0.0, %v1490
    %v1492 = vpop.f32.mrb[0].mxu0
    %v1493 = vpop.f32.mrb[0].mxu0
    %v1494 = vadd.f32 0.0, %v1493
    %v1495 = vpop.f32.mrb[0].mxu0
    %1496 = vmatprep.mubr.bf16.mxu0 0
    %1497 = vmatmul.mubr.bf16.gmra.mrb[0].mxu0 %v346
    %v1498 = vpop.f32.mrb[0].mxu0
    %v1499 = vadd.f32 0.0, %v1498
    %v1500 = vpop.f32.mrb[0].mxu0
    %v1501 = vpop.f32.mrb[0].mxu0
    %v1502 = vadd.f32 0.0, %v1501
    %v1503 = vpop.f32.mrb[0].mxu0
    %1504 = vmatprep.mubr.bf16.mxu0 0
    %1505 = vmatmul.mubr.bf16.gmra.mrb[0].mxu0 %v349
    %v1506 = vpop.f32.mrb[0].mxu0
    %v1507 = vadd.f32 0.0, %v1506
    %v1508 = vpop.f32.mrb[0].mxu0
    %v1509 = vpop.f32.mrb[0].mxu0
    %v1510 = vadd.f32 0.0, %v1509
    %v1511 = vpop.f32.mrb[0].mxu0
    %1512 = vmatprep.mubr.bf16.mxu0 0
    %1513 = vmatmul.mubr.bf16.gmra.mrb[0].mxu0 %v352
    %v1514 = vpop.f32.mrb[0].mxu0
    %v1515 = vadd.f32 0.0, %v1514
    %v1516 = vpop.f32.mrb[0].mxu0
    %v1517 = vpop.f32.mrb[0].mxu0
    %v1518 = vadd.f32 0.0, %v1517
    %v1519 = vpop.f32.mrb[0].mxu0
    %1520 = vmatprep.mubr.bf16.mxu0 0
    %1521 = vmatmul.mubr.bf16.gmra.mrb[0].mxu0 %v355
    %v1522 = vpop.f32.mrb[0].mxu0
    %v1523 = vadd.f32 0.0, %v1522
    %v1524 = vpop.f32.mrb[0].mxu0
    %v1525 = vpop.f32.mrb[0].mxu0
    %v1526 = vadd.f32 0.0, %v1525
    %v1527 = vpop.f32.mrb[0].mxu0
    %1528 = vmatprep.mubr.bf16.mxu0 0
    %1529 = vmatmul.mubr.bf16.gmra.mrb[0].mxu0 %v358
    %v1530 = vpop.f32.mrb[0].mxu0
    %v1531 = vadd.f32 0.0, %v1530
    %v1532 = vpop.f32.mrb[0].mxu0
    %v1533 = vpop.f32.mrb[0].mxu0
    %v1534 = vadd.f32 0.0, %v1533
    %v1535 = vpop.f32.mrb[0].mxu0
    %1536 = vmatprep.mubr.bf16.mxu0 0
    %1537 = vmatmul.mubr.bf16.gmra.mrb[0].mxu0 %v361
    %v1538 = vpop.f32.mrb[0].mxu0
    %v1539 = vadd.f32 0.0, %v1538
    %v1540 = vpop.f32.mrb[0].mxu0
    %v1541 = vpop.f32.mrb[0].mxu0
    %v1542 = vadd.f32 0.0, %v1541
    %v1543 = vpop.f32.mrb[0].mxu0
    %1544 = vmatprep.mubr.bf16.mxu0 0
    %1545 = vmatmul.mubr.bf16.gmra.mrb[0].mxu0 %v364
    %v1546 = vpop.f32.mrb[0].mxu0
    %v1547 = vadd.f32 0.0, %v1546
    %v1548 = vpop.f32.mrb[0].mxu0
    %v1549 = vpop.f32.mrb[0].mxu0
    %v1550 = vadd.f32 0.0, %v1549
    %v1551 = vpop.f32.mrb[0].mxu0
    %1552 = vmatprep.mubr.bf16.mxu0 0
    %1553 = vmatmul.mubr.bf16.gmra.mrb[0].mxu0 %v367
    %v1554 = vpop.f32.mrb[0].mxu0
    %v1555 = vadd.f32 0.0, %v1554
    %v1556 = vpop.f32.mrb[0].mxu0
    %v1557 = vpop.f32.mrb[0].mxu0
    %v1558 = vadd.f32 0.0, %v1557
    %v1559 = vpop.f32.mrb[0].mxu0
    %1560 = vmatprep.mubr.bf16.mxu0 0
    %1561 = vmatmul.mubr.bf16.gmra.mrb[0].mxu0 %v370
    %v1562 = vpop.f32.mrb[0].mxu0
    %v1563 = vadd.f32 0.0, %v1562
    %v1564 = vpop.f32.mrb[0].mxu0
    %v1565 = vpop.f32.mrb[0].mxu0
    %v1566 = vadd.f32 0.0, %v1565
    %v1567 = vpop.f32.mrb[0].mxu0
    %1568 = vmatprep.mubr.bf16.mxu0 0
    %1569 = vmatmul.mubr.bf16.gmra.mrb[0].mxu0 %v373
    %v1570 = vpop.f32.mrb[0].mxu0
    %v1571 = vadd.f32 0.0, %v1570
    %v1572 = vpop.f32.mrb[0].mxu0
    %v1573 = vpop.f32.mrb[0].mxu0
    %v1574 = vadd.f32 0.0, %v1573
    %v1575 = vpop.f32.mrb[0].mxu0
    %1576 = vmatprep.mubr.bf16.mxu0 0
    %1577 = vmatmul.mubr.bf16.gmra.mrb[0].mxu0 %v376
    %v1578 = vpop.f32.mrb[0].mxu0
    %v1579 = vadd.f32 0.0, %v1578
    %v1580 = vpop.f32.mrb[0].mxu0
    %v1581 = vpop.f32.mrb[0].mxu0
    %v1582 = vadd.f32 0.0, %v1581
    %v1583 = vpop.f32.mrb[0].mxu0
    %1584 = vmatprep.mubr.bf16.mxu0 0
    %1585 = vmatmul.mubr.bf16.gmra.mrb[0].mxu0 %v379
    %v1586 = vpop.f32.mrb[0].mxu0
    %v1587 = vadd.f32 0.0, %v1586
    %v1588 = vpop.f32.mrb[0].mxu0
    %v1589 = vpop.f32.mrb[0].mxu0
    %v1590 = vadd.f32 0.0, %v1589
    %v1591 = vpop.f32.mrb[0].mxu0
    %1592 = vmatprep.mubr.bf16.mxu0 0
    %1593 = vmatmul.mubr.bf16.gmra.mrb[0].mxu0 %v382
    %v1594 = vpop.f32.mrb[0].mxu0
    %v1595 = vadd.f32 0.0, %v1594
    %v1596 = vpop.f32.mrb[0].mxu0
    %v1597 = vpop.f32.mrb[0].mxu0
    %v1598 = vadd.f32 0.0, %v1597
    %v1599 = vpop.f32.mrb[0].mxu0
    %1600 = vmatprep.mubr.bf16.mxu0 0
    %1601 = vmatmul.mubr.bf16.gmra.mrb[0].mxu0 %v385
    %v1602 = vpop.f32.mrb[0].mxu0
    %v1603 = vadd.f32 0.0, %v1602
    %v1604 = vpop.f32.mrb[0].mxu0
    %v1605 = vpop.f32.mrb[0].mxu0
    %v1606 = vadd.f32 0.0, %v1605
    %v1607 = vpop.f32.mrb[0].mxu0
    %1608 = vmatprep.mubr.bf16.mxu0 0
    %1609 = vmatmul.mubr.bf16.gmra.mrb[0].mxu0 %v388
    %v1610 = vpop.f32.mrb[0].mxu0
    %v1611 = vadd.f32 0.0, %v1610
    %v1612 = vpop.f32.mrb[0].mxu0
    %v1613 = vpop.f32.mrb[0].mxu0
    %v1614 = vadd.f32 0.0, %v1613
    %v1615 = vpop.f32.mrb[0].mxu0
    %1616 = vmatprep.mubr.bf16.mxu0 0
    %1617 = vmatmul.mubr.bf16.gmra.mrb[0].mxu0 %v391
    %v1618 = vpop.f32.mrb[0].mxu0
    %v1619 = vadd.f32 0.0, %v1618
    %v1620 = vpop.f32.mrb[0].mxu0
    %v1621 = vpop.f32.mrb[0].mxu0
    %v1622 = vpop.f32.mrb[0].mxu0
    %1623 = vdwg.mxu0
    %v1624 = vmax.f32 %v1285, %v1395
    %v1625 = vmax.f32 %v1286, %v1398
    %v1626 = vmax.f32 %v1287, %v1403
    %v1627 = vmax.f32 %v1288, %v1406
    %v1628 = vmax.f32 %v1289, %v1411
    %v1629 = vmax.f32 %v1290, %v1414
    %v1630 = vmax.f32 %v1291, %v1419
    %v1631 = vmax.f32 %v1292, %v1422
    %v1632 = vmax.f32 %v1293, %v1427
    %v1633 = vmax.f32 %v1294, %v1430
    %v1634 = vmax.f32 %v1295, %v1435
    %v1635 = vmax.f32 %v1296, %v1438
    %v1636 = vmax.f32 %v1297, %v1443
    %v1637 = vmax.f32 %v1298, %v1446
    %v1638 = vmax.f32 %v1299, %v1451
    %v1639 = vmax.f32 %v1300, %v1454
    %v1640 = vmax.f32 %v1301, %v1459
    %v1641 = vmax.f32 %v1302, %v1462
    %v1642 = vmax.f32 %v1303, %v1467
    %v1643 = vmax.f32 %v1304, %v1470
    %v1644 = vmax.f32 %v1305, %v1475
    %v1645 = vmax.f32 %v1306, %v1478
    %v1646 = vmax.f32 %v1307, %v1483
    %v1647 = vmax.f32 %v1308, %v1486
    %v1648 = vmax.f32 %v1309, %v1491
    %v1649 = vmax.f32 %v1310, %v1494
    %v1650 = vmax.f32 %v1311, %v1499
    %v1651 = vmax.f32 %v1312, %v1502
    %v1652 = vmax.f32 %v1313, %v1507
    %v1653 = vmax.f32 %v1314, %v1510
    %v1654 = vmax.f32 %v1315, %v1515
    %v1655 = vmax.f32 %v1316, %v1518
    %v1656 = vmax.f32 %v1317, %v1523
    %v1657 = vmax.f32 %v1318, %v1526
    %v1658 = vmax.f32 %v1319, %v1531
    %v1659 = vmax.f32 %v1320, %v1534
    %v1660 = vmax.f32 %v1321, %v1539
    %v1661 = vmax.f32 %v1322, %v1542
    %v1662 = vmax.f32 %v1323, %v1547
    %v1663 = vmax.f32 %v1324, %v1550
    %v1664 = vmax.f32 %v1325, %v1555
    %v1665 = vmax.f32 %v1326, %v1558
    %v1666 = vmax.f32 %v1327, %v1563
    %v1667 = vmax.f32 %v1328, %v1566
    %v1668 = vmax.f32 %v1329, %v1571
    %v1669 = vmax.f32 %v1330, %v1574
    %v1670 = vmax.f32 %v1331, %v1579
    %v1671 = vmax.f32 %v1332, %v1582
    %v1672 = vmax.f32 %v1333, %v1587
    %v1673 = vmax.f32 %v1334, %v1590
    %v1674 = vmax.f32 %v1335, %v1595
    %v1675 = vmax.f32 %v1336, %v1598
    %v1676 = vmax.f32 %v1337, %v1603
    %v1677 = vmax.f32 %v1338, %v1606
    %v1678 = vmax.f32 %v1339, %v1611
    %v1679 = vmax.f32 %v1340, %v1614
    %v1680 = vmax.f32 %v1341, %v1619
    %v1681 = vld [vmem:[#allocation9] sm:$0x1]
    %v1683 = vlaneseq
    %v1684 = vshrl.u32 %v1683, 7
    %v1685 = vsub.s32 0, %v1684
    %v1686 = vrot.slane %v1681, %v1685
    %v1688 = vadd.f32 %v1624, %v1686
    %v1689 = vadd.f32 %v1625, %v1686
    %v1690 = vadd.f32 %v1626, %v1686
    %v1691 = vadd.f32 %v1627, %v1686
    %v1692 = vadd.f32 %v1628, %v1686
    %v1693 = vadd.f32 %v1629, %v1686
    %v1694 = vadd.f32 %v1630, %v1686
    %v1695 = vadd.f32 %v1631, %v1686
    %v1696 = vadd.f32 %v1632, %v1686
    %v1697 = vadd.f32 %v1633, %v1686
    %v1698 = vadd.f32 %v1634, %v1686
    %v1699 = vadd.f32 %v1635, %v1686
    %v1700 = vadd.f32 %v1636, %v1686
    %v1701 = vadd.f32 %v1637, %v1686
    %v1702 = vadd.f32 %v1638, %v1686
    %v1703 = vadd.f32 %v1639, %v1686
    %v1704 = vadd.f32 %v1640, %v1686
    %v1705 = vadd.f32 %v1641, %v1686
    %v1706 = vadd.f32 %v1642, %v1686
    %v1707 = vadd.f32 %v1643, %v1686
    %v1708 = vadd.f32 %v1644, %v1686
    %v1709 = vadd.f32 %v1645, %v1686
    %v1710 = vadd.f32 %v1646, %v1686
    %v1711 = vadd.f32 %v1647, %v1686
    %v1712 = vadd.f32 %v1648, %v1686
    %v1713 = vadd.f32 %v1649, %v1686
    %v1714 = vadd.f32 %v1650, %v1686
    %v1715 = vadd.f32 %v1651, %v1686
    %v1716 = vadd.f32 %v1652, %v1686
    %v1717 = vadd.f32 %v1653, %v1686
    %v1718 = vadd.f32 %v1654, %v1686
    %v1719 = vadd.f32 %v1655, %v1686
    %v1720 = vadd.f32 %v1656, %v1686
    %v1721 = vadd.f32 %v1657, %v1686
    %v1722 = vadd.f32 %v1658, %v1686
    %v1723 = vadd.f32 %v1659, %v1686
    %v1724 = vadd.f32 %v1660, %v1686
    %v1725 = vadd.f32 %v1661, %v1686
    %v1726 = vadd.f32 %v1662, %v1686
    %v1727 = vadd.f32 %v1663, %v1686
    %v1728 = vadd.f32 %v1664, %v1686
    %v1729 = vadd.f32 %v1665, %v1686
    %v1730 = vadd.f32 %v1666, %v1686
    %v1731 = vadd.f32 %v1667, %v1686
    %v1732 = vadd.f32 %v1668, %v1686
    %v1733 = vadd.f32 %v1669, %v1686
    %v1734 = vadd.f32 %v1670, %v1686
    %v1735 = vadd.f32 %v1671, %v1686
    %v1736 = vadd.f32 %v1672, %v1686
    %v1737 = vadd.f32 %v1673, %v1686
    %v1738 = vadd.f32 %v1674, %v1686
    %v1739 = vadd.f32 %v1675, %v1686
    %v1740 = vadd.f32 %v1676, %v1686
    %v1741 = vadd.f32 %v1677, %v1686
    %v1742 = vadd.f32 %v1678, %v1686
    %v1743 = vadd.f32 %v1679, %v1686
    %v1744 = vadd.f32 %v1680, %v1686
    %v1745 = vmax.f32 %v1688, 0.0
    %v1746 = vmax.f32 %v1689, 0.0
    %v1747 = vmax.f32 %v1690, 0.0
    %v1748 = vmax.f32 %v1691, 0.0
    %v1749 = vmax.f32 %v1692, 0.0
    %v1750 = vmax.f32 %v1693, 0.0
    %v1751 = vmax.f32 %v1694, 0.0
    %v1752 = vmax.f32 %v1695, 0.0
    %v1753 = vmax.f32 %v1696, 0.0
    %v1754 = vmax.f32 %v1697, 0.0
    %v1755 = vmax.f32 %v1698, 0.0
    %v1756 = vmax.f32 %v1699, 0.0
    %v1757 = vmax.f32 %v1700, 0.0
    %v1758 = vmax.f32 %v1701, 0.0
    %v1759 = vmax.f32 %v1702, 0.0
    %v1760 = vmax.f32 %v1703, 0.0
    %v1761 = vmax.f32 %v1704, 0.0
    %v1762 = vmax.f32 %v1705, 0.0
    %v1763 = vmax.f32 %v1706, 0.0
    %v1764 = vmax.f32 %v1707, 0.0
    %v1765 = vmax.f32 %v1708, 0.0
    %v1766 = vmax.f32 %v1709, 0.0
    %v1767 = vmax.f32 %v1710, 0.0
    %v1768 = vmax.f32 %v1711, 0.0
    %v1769 = vmax.f32 %v1712, 0.0
    %v1770 = vmax.f32 %v1713, 0.0
    %v1771 = vmax.f32 %v1714, 0.0
    %v1772 = vmax.f32 %v1715, 0.0
    %v1773 = vmax.f32 %v1716, 0.0
    %v1774 = vmax.f32 %v1717, 0.0
    %v1775 = vmax.f32 %v1718, 0.0
    %v1776 = vmax.f32 %v1719, 0.0
    %v1777 = vmax.f32 %v1720, 0.0
    %v1778 = vmax.f32 %v1721, 0.0
    %v1779 = vmax.f32 %v1722, 0.0
    %v1780 = vmax.f32 %v1723, 0.0
    %v1781 = vmax.f32 %v1724, 0.0
    %v1782 = vmax.f32 %v1725, 0.0
    %v1783 = vmax.f32 %v1726, 0.0
    %v1784 = vmax.f32 %v1727, 0.0
    %v1785 = vmax.f32 %v1728, 0.0
    %v1786 = vmax.f32 %v1729, 0.0
    %v1787 = vmax.f32 %v1730, 0.0
    %v1788 = vmax.f32 %v1731, 0.0
    %v1789 = vmax.f32 %v1732, 0.0
    %v1790 = vmax.f32 %v1733, 0.0
    %v1791 = vmax.f32 %v1734, 0.0
    %v1792 = vmax.f32 %v1735, 0.0
    %v1793 = vmax.f32 %v1736, 0.0
    %v1794 = vmax.f32 %v1737, 0.0
    %v1795 = vmax.f32 %v1738, 0.0
    %v1796 = vmax.f32 %v1739, 0.0
    %v1797 = vmax.f32 %v1740, 0.0
    %v1798 = vmax.f32 %v1741, 0.0
    %v1799 = vmax.f32 %v1742, 0.0
    %v1800 = vmax.f32 %v1743, 0.0
    %v1801 = vmax.f32 %v1744, 0.0
    %v1802 = vpack.c.bf16 %v1746, %v1745
    %v1803 = vpack.c.bf16 %v1748, %v1747
    %v1804 = vpack.c.bf16 %v1750, %v1749
    %v1805 = vpack.c.bf16 %v1752, %v1751
    %v1806 = vpack.c.bf16 %v1754, %v1753
    %v1807 = vpack.c.bf16 %v1756, %v1755
    %v1808 = vpack.c.bf16 %v1758, %v1757
    %v1809 = vpack.c.bf16 %v1760, %v1759
    %v1810 = vpack.c.bf16 %v1762, %v1761
    %v1811 = vpack.c.bf16 %v1764, %v1763
    %v1812 = vpack.c.bf16 %v1766, %v1765
    %v1813 = vpack.c.bf16 %v1768, %v1767
    %v1814 = vpack.c.bf16 %v1770, %v1769
    %v1815 = vpack.c.bf16 %v1772, %v1771
    %v1816 = vpack.c.bf16 %v1774, %v1773
    %v1817 = vpack.c.bf16 %v1776, %v1775
    %v1818 = vpack.c.bf16 %v1778, %v1777
    %v1819 = vpack.c.bf16 %v1780, %v1779
    %v1820 = vpack.c.bf16 %v1782, %v1781
    %v1821 = vpack.c.bf16 %v1784, %v1783
    %v1822 = vpack.c.bf16 %v1786, %v1785
    %v1823 = vpack.c.bf16 %v1788, %v1787
    %v1824 = vpack.c.bf16 %v1790, %v1789
    %v1825 = vpack.c.bf16 %v1792, %v1791
    %v1826 = vpack.c.bf16 %v1794, %v1793
    %v1827 = vpack.c.bf16 %v1796, %v1795
    %v1828 = vpack.c.bf16 %v1798, %v1797
    %v1829 = vpack.c.bf16 %v1800, %v1799
    %v1830 = vpack.c.bf16 %v1801, %v1801
    %v1860 = vunpack.c.l.b16 %v1802
    %v1861 = vunpack.c.h.b16 %v1802
    %v1862 = vunpack.c.l.b16 %v1803
    %v1863 = vunpack.c.h.b16 %v1803
    %v1864 = vunpack.c.l.b16 %v1804
    %v1865 = vunpack.c.h.b16 %v1804
    %v1866 = vunpack.c.l.b16 %v1805
    %v1867 = vunpack.c.h.b16 %v1805
    %v1868 = vunpack.c.l.b16 %v1806
    %v1869 = vunpack.c.h.b16 %v1806
    %v1870 = vunpack.c.l.b16 %v1807
    %v1871 = vunpack.c.h.b16 %v1807
    %v1872 = vunpack.c.l.b16 %v1808
    %v1873 = vunpack.c.h.b16 %v1808
    %v1874 = vunpack.c.l.b16 %v1809
    %v1875 = vunpack.c.h.b16 %v1809
    %v1876 = vunpack.c.l.b16 %v1810
    %v1877 = vunpack.c.h.b16 %v1810
    %v1878 = vunpack.c.l.b16 %v1811
    %v1879 = vunpack.c.h.b16 %v1811
    %v1880 = vunpack.c.l.b16 %v1812
    %v1881 = vunpack.c.h.b16 %v1812
    %v1882 = vunpack.c.l.b16 %v1813
    %v1883 = vunpack.c.h.b16 %v1813
    %v1884 = vunpack.c.l.b16 %v1814
    %v1885 = vunpack.c.h.b16 %v1814
    %v1886 = vunpack.c.l.b16 %v1815
    %v1887 = vunpack.c.h.b16 %v1815
    %v1888 = vunpack.c.l.b16 %v1816
    %v1889 = vunpack.c.h.b16 %v1816
    %v1890 = vunpack.c.l.b16 %v1817
    %v1891 = vunpack.c.h.b16 %v1817
    %v1892 = vunpack.c.l.b16 %v1818
    %v1893 = vunpack.c.h.b16 %v1818
    %v1894 = vunpack.c.l.b16 %v1819
    %v1895 = vunpack.c.h.b16 %v1819
    %v1896 = vunpack.c.l.b16 %v1820
    %v1897 = vunpack.c.h.b16 %v1820
    %v1898 = vunpack.c.l.b16 %v1821
    %v1899 = vunpack.c.h.b16 %v1821
    %v1900 = vunpack.c.l.b16 %v1822
    %v1901 = vunpack.c.h.b16 %v1822
    %v1902 = vunpack.c.l.b16 %v1823
    %v1903 = vunpack.c.h.b16 %v1823
    %v1904 = vunpack.c.l.b16 %v1824
    %v1905 = vunpack.c.h.b16 %v1824
    %v1906 = vunpack.c.l.b16 %v1825
    %v1907 = vunpack.c.h.b16 %v1825
    %v1908 = vunpack.c.l.b16 %v1826
    %v1909 = vunpack.c.h.b16 %v1826
    %v1910 = vunpack.c.l.b16 %v1827
    %v1911 = vunpack.c.h.b16 %v1827
    %v1912 = vunpack.c.l.b16 %v1828
    %v1913 = vunpack.c.h.b16 %v1828
    %v1914 = vunpack.c.l.b16 %v1829
    %v1915 = vunpack.c.h.b16 %v1829
    %v1916 = vunpack.c.l.b16 %v1830
    %v1917 = vpack.c.b16 %v1860, %v1860
    %v1918 = vpack.c.b16 %v1861, %v1861
    %v1919 = vpack.c.b16 %v1862, %v1862
    %v1920 = vpack.c.b16 %v1863, %v1863
    %v1921 = vpack.c.b16 %v1864, %v1864
    %v1922 = vpack.c.b16 %v1865, %v1865
    %v1923 = vpack.c.b16 %v1866, %v1866
    %v1924 = vpack.c.b16 %v1867, %v1867
    %v1925 = vpack.c.b16 %v1868, %v1868
    %v1926 = vpack.c.b16 %v1869, %v1869
    %v1927 = vpack.c.b16 %v1870, %v1870
    %v1928 = vpack.c.b16 %v1871, %v1871
    %v1929 = vpack.c.b16 %v1872, %v1872
    %v1930 = vpack.c.b16 %v1873, %v1873
    %v1931 = vpack.c.b16 %v1874, %v1874
    %v1932 = vpack.c.b16 %v1875, %v1875
    %v1933 = vpack.c.b16 %v1876, %v1876
    %v1934 = vpack.c.b16 %v1877, %v1877
    %v1935 = vpack.c.b16 %v1878, %v1878
    %v1936 = vpack.c.b16 %v1879, %v1879
    %v1937 = vpack.c.b16 %v1880, %v1880
    %v1938 = vpack.c.b16 %v1881, %v1881
    %v1939 = vpack.c.b16 %v1882, %v1882
    %v1940 = vpack.c.b16 %v1883, %v1883
    %v1941 = vpack.c.b16 %v1884, %v1884
    %v1942 = vpack.c.b16 %v1885, %v1885
    %v1943 = vpack.c.b16 %v1886, %v1886
    %v1944 = vpack.c.b16 %v1887, %v1887
    %v1945 = vpack.c.b16 %v1888, %v1888
    %v1946 = vpack.c.b16 %v1889, %v1889
    %v1947 = vpack.c.b16 %v1890, %v1890
    %v1948 = vpack.c.b16 %v1891, %v1891
    %v1949 = vpack.c.b16 %v1892, %v1892
    %v1950 = vpack.c.b16 %v1893, %v1893
    %v1951 = vpack.c.b16 %v1894, %v1894
    %v1952 = vpack.c.b16 %v1895, %v1895
    %v1953 = vpack.c.b16 %v1896, %v1896
    %v1954 = vpack.c.b16 %v1897, %v1897
    %v1955 = vpack.c.b16 %v1898, %v1898
    %v1956 = vpack.c.b16 %v1899, %v1899
    %v1957 = vpack.c.b16 %v1900, %v1900
    %v1958 = vpack.c.b16 %v1901, %v1901
    %v1959 = vpack.c.b16 %v1902, %v1902
    %v1960 = vpack.c.b16 %v1903, %v1903
    %v1961 = vpack.c.b16 %v1904, %v1904
    %v1962 = vpack.c.b16 %v1905, %v1905
    %v1963 = vpack.c.b16 %v1906, %v1906
    %v1964 = vpack.c.b16 %v1907, %v1907
    %v1965 = vpack.c.b16 %v1908, %v1908
    %v1966 = vpack.c.b16 %v1909, %v1909
    %v1967 = vpack.c.b16 %v1910, %v1910
    %v1968 = vpack.c.b16 %v1911, %v1911
    %v1969 = vpack.c.b16 %v1912, %v1912
    %v1970 = vpack.c.b16 %v1913, %v1913
    %v1971 = vpack.c.b16 %v1914, %v1914
    %v1972 = vpack.c.b16 %v1915, %v1915
    %v1973 = vpack.c.b16 %v1916, %v1916
    %vm2031 = vcmask 257024
    %2032 = vst.msk [vmem:[%s6] sm:$0xf] %vm2031, %v1917
    %2033 = vst.msk [vmem:[%s6 + $0x4] sm:$0xf] %vm2031, %v1918
    %2034 = vst.msk [vmem:[%s6 + $0x8] sm:$0xf] %vm2031, %v1919
    %2035 = vst.msk [vmem:[%s6 + $0xc] sm:$0xf] %vm2031, %v1920
    %2036 = vst.msk [vmem:[%s6 + $0x10] sm:$0xf] %vm2031, %v1921
    %2037 = vst.msk [vmem:[%s6 + $0x14] sm:$0xf] %vm2031, %v1922
    %2038 = vst.msk [vmem:[%s6 + $0x18] sm:$0xf] %vm2031, %v1923
    %2039 = vst.msk [vmem:[%s6 + $0x1c] sm:$0xf] %vm2031, %v1924
    %2040 = vst.msk [vmem:[%s6 + $0x20] sm:$0xf] %vm2031, %v1925
    %2041 = vst.msk [vmem:[%s6 + $0x24] sm:$0xf] %vm2031, %v1926
    %2042 = vst.msk [vmem:[%s6 + $0x28] sm:$0xf] %vm2031, %v1927
    %2043 = vst.msk [vmem:[%s6 + $0x2c] sm:$0xf] %vm2031, %v1928
    %2044 = vst.msk [vmem:[%s6 + $0x30] sm:$0xf] %vm2031, %v1929
    %2045 = vst.msk [vmem:[%s6 + $0x34] sm:$0xf] %vm2031, %v1930
    %2046 = vst.msk [vmem:[%s6 + $0x38] sm:$0xf] %vm2031, %v1931
    %2047 = vst.msk [vmem:[%s6 + $0x3c] sm:$0xf] %vm2031, %v1932
    %2048 = vst.msk [vmem:[%s6 + $0x40] sm:$0xf] %vm2031, %v1933
    %2049 = vst.msk [vmem:[%s6 + $0x44] sm:$0xf] %vm2031, %v1934
    %2050 = vst.msk [vmem:[%s6 + $0x48] sm:$0xf] %vm2031, %v1935
    %2051 = vst.msk [vmem:[%s6 + $0x4c] sm:$0xf] %vm2031, %v1936
    %2052 = vst.msk [vmem:[%s6 + $0x50] sm:$0xf] %vm2031, %v1937
    %2053 = vst.msk [vmem:[%s6 + $0x54] sm:$0xf] %vm2031, %v1938
    %2054 = vst.msk [vmem:[%s6 + $0x58] sm:$0xf] %vm2031, %v1939
    %2055 = vst.msk [vmem:[%s6 + $0x5c] sm:$0xf] %vm2031, %v1940
    %2056 = vst.msk [vmem:[%s6 + $0x60] sm:$0xf] %vm2031, %v1941
    %2057 = vst.msk [vmem:[%s6 + $0x64] sm:$0xf] %vm2031, %v1942
    %2058 = vst.msk [vmem:[%s6 + $0x68] sm:$0xf] %vm2031, %v1943
    %2059 = vst.msk [vmem:[%s6 + $0x6c] sm:$0xf] %vm2031, %v1944
    %2060 = vst.msk [vmem:[%s6 + $0x70] sm:$0xf] %vm2031, %v1945
    %2061 = vst.msk [vmem:[%s6 + $0x74] sm:$0xf] %vm2031, %v1946
    %2062 = vst.msk [vmem:[%s6 + $0x78] sm:$0xf] %vm2031, %v1947
    %2063 = vst.msk [vmem:[%s6 + $0x7c] sm:$0xf] %vm2031, %v1948
    %2064 = vst.msk [vmem:[%s6 + $0x80] sm:$0xf] %vm2031, %v1949
    %2065 = vst.msk [vmem:[%s6 + $0x84] sm:$0xf] %vm2031, %v1950
    %2066 = vst.msk [vmem:[%s6 + $0x88] sm:$0xf] %vm2031, %v1951
    %2067 = vst.msk [vmem:[%s6 + $0x8c] sm:$0xf] %vm2031, %v1952
    %2068 = vst.msk [vmem:[%s6 + $0x90] sm:$0xf] %vm2031, %v1953
    %2069 = vst.msk [vmem:[%s6 + $0x94] sm:$0xf] %vm2031, %v1954
    %2070 = vst.msk [vmem:[%s6 + $0x98] sm:$0xf] %vm2031, %v1955
    %2071 = vst.msk [vmem:[%s6 + $0x9c] sm:$0xf] %vm2031, %v1956
    %2072 = vst.msk [vmem:[%s6 + $0xa0] sm:$0xf] %vm2031, %v1957
    %2073 = vst.msk [vmem:[%s6 + $0xa4] sm:$0xf] %vm2031, %v1958
    %2074 = vst.msk [vmem:[%s6 + $0xa8] sm:$0xf] %vm2031, %v1959
    %2075 = vst.msk [vmem:[%s6 + $0xac] sm:$0xf] %vm2031, %v1960
    %2076 = vst.msk [vmem:[%s6 + $0xb0] sm:$0xf] %vm2031, %v1961
    %2077 = vst.msk [vmem:[%s6 + $0xb4] sm:$0xf] %vm2031, %v1962
    %2078 = vst.msk [vmem:[%s6 + $0xb8] sm:$0xf] %vm2031, %v1963
    %2079 = vst.msk [vmem:[%s6 + $0xbc] sm:$0xf] %vm2031, %v1964
    %2080 = vst.msk [vmem:[%s6 + $0xc0] sm:$0xf] %vm2031, %v1965
    %2081 = vst.msk [vmem:[%s6 + $0xc4] sm:$0xf] %vm2031, %v1966
    %2082 = vst.msk [vmem:[%s6 + $0xc8] sm:$0xf] %vm2031, %v1967
    %2083 = vst.msk [vmem:[%s6 + $0xcc] sm:$0xf] %vm2031, %v1968
    %2084 = vst.msk [vmem:[%s6 + $0xd0] sm:$0xf] %vm2031, %v1969
    %2085 = vst.msk [vmem:[%s6 + $0xd4] sm:$0xf] %vm2031, %v1970
    %2086 = vst.msk [vmem:[%s6 + $0xd8] sm:$0xf] %vm2031, %v1971
    %2087 = vst.msk [vmem:[%s6 + $0xdc] sm:$0xf] %vm2031, %v1972
    %2088 = vst.msk [vmem:[%s6 + $0xe0] sm:$0xf] %vm2031, %v1973
    // Predicated region
    $region46: #{can_forward.4} parent=1 // pred_check
      _
    $region47: #{can_forward.4} parent=1 // pred_check_branch
      %2090 = sbr.rel (0) target = $region49
    $region48: #{can_forward.4} parent=1 // pred_region
      _
    $region49: #{can_forward.4} parent=1 // pred_fallthru
      _
    // Predicated region
    $region50: #{can_forward.4} parent=1 // pred_check
      _
    $region51: #{can_forward.4} parent=1 // pred_check_branch
      %2092 = sbr.rel (0) target = $region53
    $region52: #{can_forward.4} parent=1 // pred_region
      _
    $region53: #{can_forward.4} parent=1 // pred_fallthru
      _
    %2093 = vsyncpa [#allocation3], 1
    %2094 = vsyncpa [#allocation5], 1
    %2095 = vsyncpa [#allocation8], 1

// kernel: can_forward.5
$region0: #{can_forward.5}
  #allocation0 [shape = 'u32[]', space=smem, size = 0x4, offset = 0x4, fixed_abs, tag = 'smem constant byte address 0x4 - core index']
  #allocation1 [shape = 'u32[144,128]{1,0:T(1,128)}', space=vmem, size = 0x12000, scoped, tag = 'internal scratch']
  %s0 = inlined_call_operand.vmem [shape: bf16[104,288], index: 0, kind: input, shape index: {}]
  %s1 = inlined_call_operand.vmem [shape: bf16[288,64], index: 1, kind: input, shape index: {}]
  %s2 = inlined_call_operand.vmem [shape: bf16[288,64], index: 2, kind: input, shape index: {}]
  %s3 = inlined_call_operand.vmem [shape: bf16[288,64], index: 3, kind: input, shape index: {}]
  %s4 = inlined_call_operand.vmem [shape: bf16[288,64], index: 4, kind: input, shape index: {}]
  %s5 = inlined_call_operand.vmem [shape: f32[1,64], index: 5, kind: input, shape index: {}]
  %s6 = inlined_call_operand.vmem [shape: bf16[104,64], index: 6, kind: output, shape index: {}]
  %s7 = sld [smem:[#allocation0]]
  $region34: #{can_forward.5} parent=0
    _
  %s9 = ssub.s32 1, %s7
  %s10 = scalar_select 0, %s9, %s7
  // Predicated region
  $region2: #{can_forward.5} parent=0 // pred_check
    _
  $region3: #{can_forward.5} parent=0 // pred_check_branch
    %12 = sbr.rel (0) target = $region5
  $region4: #{can_forward.5} parent=0 // pred_region
    _
  $region5: #{can_forward.5} parent=0 // pred_fallthru
    _
  // Predicated region
  $region6: #{can_forward.5} parent=0 // pred_check
    _
  $region7: #{can_forward.5} parent=0 // pred_check_branch
    %14 = sbr.rel (0) target = $region9
  $region8: #{can_forward.5} parent=0 // pred_region
    _
  $region9: #{can_forward.5} parent=0 // pred_fallthru
    _
  // Predicated region
  $region10: #{can_forward.5} parent=0 // pred_check
    _
  $region11: #{can_forward.5} parent=0 // pred_check_branch
    %16 = sbr.rel (0) target = $region13
  $region12: #{can_forward.5} parent=0 // pred_region
    _
  $region13: #{can_forward.5} parent=0 // pred_fallthru
    _
  // Predicated region
  $region14: #{can_forward.5} parent=0 // pred_check
    _
  $region15: #{can_forward.5} parent=0 // pred_check_branch
    %18 = sbr.rel (0) target = $region17
  $region16: #{can_forward.5} parent=0 // pred_region
    _
  $region17: #{can_forward.5} parent=0 // pred_fallthru
    _
  // Predicated region
  $region18: #{can_forward.5} parent=0 // pred_check
    _
  $region19: #{can_forward.5} parent=0 // pred_check_branch
    %20 = sbr.rel (0) target = $region21
  $region20: #{can_forward.5} parent=0 // pred_region
    _
  $region21: #{can_forward.5} parent=0 // pred_fallthru
    _
  // Predicated region
  $region22: #{can_forward.5} parent=0 // pred_check
    _
  $region23: #{can_forward.5} parent=0 // pred_check_branch
    %22 = sbr.rel (0) target = $region25
  $region24: #{can_forward.5} parent=0 // pred_region
    _
  $region25: #{can_forward.5} parent=0 // pred_fallthru
    _
  %v24 = vld [vmem:[%s0] sm:$0xff]
  %v25 = vld [vmem:[%s0 + $0x8] sm:$0xf]
  %v26 = vld [vmem:[%s0 + $0xc] sm:$0xff]
  %v27 = vld [vmem:[%s0 + $0x14] sm:$0xf]
  %v28 = vld [vmem:[%s0 + $0x18] sm:$0xff]
  %v29 = vld [vmem:[%s0 + $0x20] sm:$0xf]
  %v30 = vld [vmem:[%s0 + $0x24] sm:$0xff]
  %v31 = vld [vmem:[%s0 + $0x2c] sm:$0xf]
  %v32 = vld [vmem:[%s0 + $0x30] sm:$0xff]
  %v33 = vld [vmem:[%s0 + $0x38] sm:$0xf]
  %v34 = vld [vmem:[%s0 + $0x3c] sm:$0xff]
  %v35 = vld [vmem:[%s0 + $0x44] sm:$0xf]
  %v36 = vld [vmem:[%s0 + $0x48] sm:$0xff]
  %v37 = vld [vmem:[%s0 + $0x50] sm:$0xf]
  %v38 = vld [vmem:[%s0 + $0x54] sm:$0xff]
  %v39 = vld [vmem:[%s0 + $0x5c] sm:$0xf]
  %v40 = vld [vmem:[%s0 + $0x60] sm:$0xff]
  %v41 = vld [vmem:[%s0 + $0x68] sm:$0xf]
  %v42 = vld [vmem:[%s0 + $0x6c] sm:$0xff]
  %v43 = vld [vmem:[%s0 + $0x74] sm:$0xf]
  %v44 = vld [vmem:[%s0 + $0x78] sm:$0xff]
  %v45 = vld [vmem:[%s0 + $0x80] sm:$0xf]
  %v46 = vld [vmem:[%s0 + $0x84] sm:$0xff]
  %v47 = vld [vmem:[%s0 + $0x8c] sm:$0xf]
  %v48 = vld [vmem:[%s0 + $0x90] sm:$0xff]
  %v49 = vld [vmem:[%s0 + $0x98] sm:$0xf]
  %v50 = vld [vmem:[%s1] sm:$0xf]
  %v51 = vld [vmem:[%s1 + $0x4] sm:$0xf]
  %v52 = vld [vmem:[%s1 + $0x8] sm:$0xf]
  %v53 = vld [vmem:[%s1 + $0xc] sm:$0xf]
  %v54 = vld [vmem:[%s1 + $0x10] sm:$0xf]
  %v55 = vld [vmem:[%s1 + $0x14] sm:$0xf]
  %v56 = vld [vmem:[%s1 + $0x18] sm:$0xf]
  %v57 = vld [vmem:[%s1 + $0x1c] sm:$0xf]
  %v58 = vld [vmem:[%s1 + $0x20] sm:$0xf]
  %v59 = vld [vmem:[%s1 + $0x24] sm:$0xf]
  %v60 = vld [vmem:[%s1 + $0x28] sm:$0xf]
  %v61 = vld [vmem:[%s1 + $0x2c] sm:$0xf]
  %v62 = vld [vmem:[%s1 + $0x30] sm:$0xf]
  %v63 = vld [vmem:[%s1 + $0x34] sm:$0xf]
  %v64 = vld [vmem:[%s1 + $0x38] sm:$0xf]
  %v65 = vld [vmem:[%s1 + $0x3c] sm:$0xf]
  %v66 = vld [vmem:[%s1 + $0x40] sm:$0xf]
  %v67 = vld [vmem:[%s1 + $0x44] sm:$0xf]
  %v68 = vld [vmem:[%s1 + $0x48] sm:$0xf]
  %v69 = vld [vmem:[%s1 + $0x4c] sm:$0xf]
  %v70 = vld [vmem:[%s1 + $0x50] sm:$0xf]
  %v71 = vld [vmem:[%s1 + $0x54] sm:$0xf]
  %v72 = vld [vmem:[%s1 + $0x58] sm:$0xf]
  %v73 = vld [vmem:[%s1 + $0x5c] sm:$0xf]
  %v74 = vld [vmem:[%s1 + $0x60] sm:$0xf]
  %v75 = vld [vmem:[%s1 + $0x64] sm:$0xf]
  %v76 = vld [vmem:[%s1 + $0x68] sm:$0xf]
  %v77 = vld [vmem:[%s1 + $0x6c] sm:$0xf]
  %v78 = vld [vmem:[%s1 + $0x70] sm:$0xf]
  %v79 = vld [vmem:[%s1 + $0x74] sm:$0xf]
  %v80 = vld [vmem:[%s1 + $0x78] sm:$0xf]
  %v81 = vld [vmem:[%s1 + $0x7c] sm:$0xf]
  %v82 = vld [vmem:[%s1 + $0x80] sm:$0xf]
  %v83 = vld [vmem:[%s1 + $0x84] sm:$0xf]
  %v84 = vld [vmem:[%s1 + $0x88] sm:$0xf]
  %v85 = vld [vmem:[%s1 + $0x8c] sm:$0xf]
  %v112 = vunpack.c.l.b16 %v24
  %v113 = vunpack.c.h.b16 %v24
  %v114 = vunpack.c.l.b16 %v25
  %v115 = vunpack.c.l.b16 %v26
  %v116 = vunpack.c.h.b16 %v26
  %v117 = vunpack.c.l.b16 %v27
  %v118 = vunpack.c.l.b16 %v28
  %v119 = vunpack.c.h.b16 %v28
  %v120 = vunpack.c.l.b16 %v29
  %v121 = vunpack.c.l.b16 %v30
  %v122 = vunpack.c.h.b16 %v30
  %v123 = vunpack.c.l.b16 %v31
  %v124 = vunpack.c.l.b16 %v32
  %v125 = vunpack.c.h.b16 %v32
  %v126 = vunpack.c.l.b16 %v33
  %v127 = vunpack.c.l.b16 %v34
  %v128 = vunpack.c.h.b16 %v34
  %v129 = vunpack.c.l.b16 %v35
  %v130 = vunpack.c.l.b16 %v36
  %v131 = vunpack.c.h.b16 %v36
  %v132 = vunpack.c.l.b16 %v37
  %v133 = vunpack.c.l.b16 %v38
  %v134 = vunpack.c.h.b16 %v38
  %v135 = vunpack.c.l.b16 %v39
  %v136 = vunpack.c.l.b16 %v40
  %v137 = vunpack.c.h.b16 %v40
  %v138 = vunpack.c.l.b16 %v41
  %v139 = vunpack.c.l.b16 %v42
  %v140 = vunpack.c.h.b16 %v42
  %v141 = vunpack.c.l.b16 %v43
  %v142 = vunpack.c.l.b16 %v44
  %v143 = vunpack.c.h.b16 %v44
  %v144 = vunpack.c.l.b16 %v45
  %v145 = vunpack.c.l.b16 %v46
  %v146 = vunpack.c.h.b16 %v46
  %v147 = vunpack.c.l.b16 %v47
  %v148 = vunpack.c.l.b16 %v48
  %v149 = vunpack.c.h.b16 %v48
  %v150 = vunpack.c.l.b16 %v49
  %v151 = vpack.c.b16 %v115, %v112
  %v152 = vpack.c.b16 %v116, %v113
  %v153 = vpack.c.b16 %v117, %v114
  %v154 = vpack.c.b16 %v121, %v118
  %v155 = vpack.c.b16 %v122, %v119
  %v156 = vpack.c.b16 %v123, %v120
  %v157 = vpack.c.b16 %v127, %v124
  %v158 = vpack.c.b16 %v128, %v125
  %v159 = vpack.c.b16 %v129, %v126
  %v160 = vpack.c.b16 %v133, %v130
  %v161 = vpack.c.b16 %v134, %v131
  %v162 = vpack.c.b16 %v135, %v132
  %v163 = vpack.c.b16 %v139, %v136
  %v164 = vpack.c.b16 %v140, %v137
  %v165 = vpack.c.b16 %v141, %v138
  %v166 = vpack.c.b16 %v145, %v142
  %v167 = vpack.c.b16 %v146, %v143
  %v168 = vpack.c.b16 %v147, %v144
  %v169 = vpack.c.b16 %v148, %v148
  %v170 = vpack.c.b16 %v149, %v149
  %v171 = vpack.c.b16 %v150, %v150
  %v222 = vunpack.c.l.b16 %v50
  %v223 = vunpack.c.l.b16 %v51
  %v224 = vunpack.c.l.b16 %v52
  %v225 = vunpack.c.l.b16 %v53
  %v226 = vunpack.c.l.b16 %v54
  %v227 = vunpack.c.l.b16 %v55
  %v228 = vunpack.c.l.b16 %v56
  %v229 = vunpack.c.l.b16 %v57
  %v230 = vunpack.c.l.b16 %v58
  %v231 = vunpack.c.l.b16 %v59
  %v232 = vunpack.c.l.b16 %v60
  %v233 = vunpack.c.l.b16 %v61
  %v234 = vunpack.c.l.b16 %v62
  %v235 = vunpack.c.l.b16 %v63
  %v236 = vunpack.c.l.b16 %v64
  %v237 = vunpack.c.l.b16 %v65
  %v238 = vunpack.c.l.b16 %v66
  %v239 = vunpack.c.l.b16 %v67
  %v240 = vunpack.c.l.b16 %v68
  %v241 = vunpack.c.l.b16 %v69
  %v242 = vunpack.c.l.b16 %v70
  %v243 = vunpack.c.l.b16 %v71
  %v244 = vunpack.c.l.b16 %v72
  %v245 = vunpack.c.l.b16 %v73
  %v246 = vunpack.c.l.b16 %v74
  %v247 = vunpack.c.l.b16 %v75
  %v248 = vunpack.c.l.b16 %v76
  %v249 = vunpack.c.l.b16 %v77
  %v250 = vunpack.c.l.b16 %v78
  %v251 = vunpack.c.l.b16 %v79
  %v252 = vunpack.c.l.b16 %v80
  %v253 = vunpack.c.l.b16 %v81
  %v254 = vunpack.c.l.b16 %v82
  %v255 = vunpack.c.l.b16 %v83
  %v256 = vunpack.c.l.b16 %v84
  %v257 = vunpack.c.l.b16 %v85
  %v258 = vpack.c.b16 %v223, %v222
  %v259 = vpack.c.b16 %v225, %v224
  %v260 = vpack.c.b16 %v227, %v226
  %v261 = vpack.c.b16 %v229, %v228
  %v262 = vpack.c.b16 %v231, %v230
  %v263 = vpack.c.b16 %v233, %v232
  %v264 = vpack.c.b16 %v235, %v234
  %v265 = vpack.c.b16 %v237, %v236
  %v266 = vpack.c.b16 %v239, %v238
  %v267 = vpack.c.b16 %v241, %v240
  %v268 = vpack.c.b16 %v243, %v242
  %v269 = vpack.c.b16 %v245, %v244
  %v270 = vpack.c.b16 %v247, %v246
  %v271 = vpack.c.b16 %v249, %v248
  %v272 = vpack.c.b16 %v251, %v250
  %v273 = vpack.c.b16 %v253, %v252
  %v274 = vpack.c.b16 %v255, %v254
  %v275 = vpack.c.b16 %v257, %v256
  %vm294 = vcmask 261120
  %v296 = vsel %vm294, %v153, 0
  %v299 = vsel %vm294, %v156, 0
  %v302 = vsel %vm294, %v159, 0
  %v305 = vsel %vm294, %v162, 0
  %v308 = vsel %vm294, %v165, 0
  %v311 = vsel %vm294, %v168, 0
  %v314 = vsel %vm294, %v171, 0
  %316 = vmatprep.subr.bf16.mxu0 0
  %317 = vmatpush1.bf16.msra.mxu0 %v258
  %318 = vmatprep.subr.bf16.mxu0 0
  %319 = vmatpush1.bf16.msra.mxu0 %v259
  %320 = vmatprep.subr.bf16.mxu0 0
  %321 = vmatpush1.bf16.msra.mxu0 %v260
  %322 = vmatprep.subr.bf16.mxu0 0
  %323 = vmatpush1.bf16.msra.mxu0 %v261
  %324 = vmatprep.subr.bf16.mxu0 0
  %325 = vmatpush1.bf16.msra.mxu0 %v262
  %326 = vmatprep.subr.bf16.mxu0 0
  %327 = vmatpush1.bf16.msra.mxu0 %v263
  %328 = vmatprep.subr.bf16.mxu0 0
  %329 = vmatpush1.bf16.msra.mxu0 %v264
  %330 = vmatprep.subr.bf16.mxu0 0
  %331 = vmatpush1.bf16.msra.mxu0 %v265
  %332 = vmatprep.subr.bf16.mxu0 0
  %333 = vmatpush1.bf16.msra.mxu0 %v266
  %334 = vmatprep.subr.bf16.mxu0 0
  %335 = vmatpush1.bf16.msra.mxu0 %v267
  %336 = vmatprep.subr.bf16.mxu0 0
  %337 = vmatpush1.bf16.msra.mxu0 %v268
  %338 = vmatprep.subr.bf16.mxu0 0
  %339 = vmatpush1.bf16.msra.mxu0 %v269
  %340 = vmatprep.subr.bf16.mxu0 0
  %341 = vmatpush1.bf16.msra.mxu0 %v270
  %342 = vmatprep.subr.bf16.mxu0 0
  %343 = vmatpush1.bf16.msra.mxu0 %v271
  %344 = vmatprep.subr.bf16.mxu0 0
  %345 = vmatpush1.bf16.msra.mxu0 %v272
  %346 = vmatprep.subr.bf16.mxu0 0
  %347 = vmatpush1.bf16.msra.mxu0 %v273
  %348 = vmatprep.mubr.bf16.mxu0 %v152
  %349 = vmatmul.mubr.bf16.gmra.mrb[0].mxu0 %v151
  %v350 = vpop.f32.mrb[0].mxu0
  %v351 = vadd.f32 0.0, %v350
  %v352 = vpop.f32.mrb[0].mxu0
  %v353 = vpop.f32.mrb[0].mxu0
  %v354 = vadd.f32 0.0, %v353
  %v355 = vpop.f32.mrb[0].mxu0
  %356 = vmatprep.mubr.bf16.mxu0 %v155
  %357 = vmatmul.mubr.bf16.gmra.mrb[0].mxu0 %v154
  %v358 = vpop.f32.mrb[0].mxu0
  %v359 = vadd.f32 0.0, %v358
  %v360 = vpop.f32.mrb[0].mxu0
  %v361 = vpop.f32.mrb[0].mxu0
  %v362 = vadd.f32 0.0, %v361
  %v363 = vpop.f32.mrb[0].mxu0
  %364 = vmatprep.mubr.bf16.mxu0 %v158
  %365 = vmatmul.mubr.bf16.gmra.mrb[0].mxu0 %v157
  %v366 = vpop.f32.mrb[0].mxu0
  %v367 = vadd.f32 0.0, %v366
  %v368 = vpop.f32.mrb[0].mxu0
  %v369 = vpop.f32.mrb[0].mxu0
  %v370 = vadd.f32 0.0, %v369
  %v371 = vpop.f32.mrb[0].mxu0
  %372 = vmatprep.mubr.bf16.mxu0 %v161
  %373 = vmatmul.mubr.bf16.gmra.mrb[0].mxu0 %v160
  %v374 = vpop.f32.mrb[0].mxu0
  %v375 = vadd.f32 0.0, %v374
  %v376 = vpop.f32.mrb[0].mxu0
  %v377 = vpop.f32.mrb[0].mxu0
  %v378 = vadd.f32 0.0, %v377
  %v379 = vpop.f32.mrb[0].mxu0
  %380 = vmatprep.mubr.bf16.mxu0 %v164
  %381 = vmatmul.mubr.bf16.gmra.mrb[0].mxu0 %v163
  %v382 = vpop.f32.mrb[0].mxu0
  %v383 = vadd.f32 0.0, %v382
  %v384 = vpop.f32.mrb[0].mxu0
  %v385 = vpop.f32.mrb[0].mxu0
  %v386 = vadd.f32 0.0, %v385
  %v387 = vpop.f32.mrb[0].mxu0
  %388 = vmatprep.mubr.bf16.mxu0 %v167
  %389 = vmatmul.mubr.bf16.gmra.mrb[0].mxu0 %v166
  %v390 = vpop.f32.mrb[0].mxu0
  %v391 = vadd.f32 0.0, %v390
  %v392 = vpop.f32.mrb[0].mxu0
  %v393 = vpop.f32.mrb[0].mxu0
  %v394 = vadd.f32 0.0, %v393
  %v395 = vpop.f32.mrb[0].mxu0
  %396 = vmatprep.mubr.bf16.mxu0 %v170
  %397 = vmatmul.mubr.bf16.gmra.mrb[0].mxu0 %v169
  %v398 = vpop.f32.mrb[0].mxu0
  %v399 = vadd.f32 0.0, %v398
  %v400 = vpop.f32.mrb[0].mxu0
  %v401 = vpop.f32.mrb[0].mxu0
  %v402 = vpop.f32.mrb[0].mxu0
  %403 = vdwg.mxu0
  %404 = vmatprep.subr.bf16.mxu0 0
  %405 = vmatpush1.bf16.msra.mxu0 %v274
  %406 = vmatprep.subr.bf16.mxu0 0
  %407 = vmatpush1.bf16.msra.mxu0 %v275
  %408 = vmatprep.subr.bf16.mxu0 0
  %409 = vmatpush1.bf16.msra.mxu0 0
  %410 = vmatprep.subr.bf16.mxu0 0
  %411 = vmatpush1.bf16.msra.mxu0 0
  %412 = vmatprep.subr.bf16.mxu0 0
  %413 = vmatpush1.bf16.msra.mxu0 0
  %414 = vmatprep.subr.bf16.mxu0 0
  %415 = vmatpush1.bf16.msra.mxu0 0
  %416 = vmatprep.subr.bf16.mxu0 0
  %417 = vmatpush1.bf16.msra.mxu0 0
  %418 = vmatprep.subr.bf16.mxu0 0
  %419 = vmatpush1.bf16.msra.mxu0 0
  %420 = vmatprep.subr.bf16.mxu0 0
  %421 = vmatpush1.bf16.msra.mxu0 0
  %422 = vmatprep.subr.bf16.mxu0 0
  %423 = vmatpush1.bf16.msra.mxu0 0
  %424 = vmatprep.subr.bf16.mxu0 0
  %425 = vmatpush1.bf16.msra.mxu0 0
  %426 = vmatprep.subr.bf16.mxu0 0
  %427 = vmatpush1.bf16.msra.mxu0 0
  %428 = vmatprep.subr.bf16.mxu0 0
  %429 = vmatpush1.bf16.msra.mxu0 0
  %430 = vmatprep.subr.bf16.mxu0 0
  %431 = vmatpush1.bf16.msra.mxu0 0
  %432 = vmatprep.subr.bf16.mxu0 0
  %433 = vmatpush1.bf16.msra.mxu0 0
  %434 = vmatprep.subr.bf16.mxu0 0
  %435 = vmatpush1.bf16.msra.mxu0 0
  %436 = vmatprep.mubr.bf16.mxu0 0
  %437 = vmatmul.mubr.bf16.gmra.mrb[0].mxu0 %v296
  %v438 = vpop.f32.mrb[0].mxu0
  %v439 = vadd.f32 %v351, %v438
  %v440 = vpop.f32.mrb[0].mxu0
  %v441 = vpop.f32.mrb[0].mxu0
  %v442 = vadd.f32 %v354, %v441
  %v443 = vpop.f32.mrb[0].mxu0
  %444 = vmatprep.mubr.bf16.mxu0 0
  %445 = vmatmul.mubr.bf16.gmra.mrb[0].mxu0 %v299
  %v446 = vpop.f32.mrb[0].mxu0
  %v447 = vadd.f32 %v359, %v446
  %v448 = vpop.f32.mrb[0].mxu0
  %v449 = vpop.f32.mrb[0].mxu0
  %v450 = vadd.f32 %v362, %v449
  %v451 = vpop.f32.mrb[0].mxu0
  %452 = vmatprep.mubr.bf16.mxu0 0
  %453 = vmatmul.mubr.bf16.gmra.mrb[0].mxu0 %v302
  %v454 = vpop.f32.mrb[0].mxu0
  %v455 = vadd.f32 %v367, %v454
  %v456 = vpop.f32.mrb[0].mxu0
  %v457 = vpop.f32.mrb[0].mxu0
  %v458 = vadd.f32 %v370, %v457
  %v459 = vpop.f32.mrb[0].mxu0
  %460 = vmatprep.mubr.bf16.mxu0 0
  %461 = vmatmul.mubr.bf16.gmra.mrb[0].mxu0 %v305
  %v462 = vpop.f32.mrb[0].mxu0
  %v463 = vadd.f32 %v375, %v462
  %v464 = vpop.f32.mrb[0].mxu0
  %v465 = vpop.f32.mrb[0].mxu0
  %v466 = vadd.f32 %v378, %v465
  %v467 = vpop.f32.mrb[0].mxu0
  %468 = vmatprep.mubr.bf16.mxu0 0
  %469 = vmatmul.mubr.bf16.gmra.mrb[0].mxu0 %v308
  %v470 = vpop.f32.mrb[0].mxu0
  %v471 = vadd.f32 %v383, %v470
  %v472 = vpop.f32.mrb[0].mxu0
  %v473 = vpop.f32.mrb[0].mxu0
  %v474 = vadd.f32 %v386, %v473
  %v475 = vpop.f32.mrb[0].mxu0
  %476 = vmatprep.mubr.bf16.mxu0 0
  %477 = vmatmul.mubr.bf16.gmra.mrb[0].mxu0 %v311
  %v478 = vpop.f32.mrb[0].mxu0
  %v479 = vadd.f32 %v391, %v478
  %v480 = vpop.f32.mrb[0].mxu0
  %v481 = vpop.f32.mrb[0].mxu0
  %v482 = vadd.f32 %v394, %v481
  %v483 = vpop.f32.mrb[0].mxu0
  %484 = vmatprep.mubr.bf16.mxu0 0
  %485 = vmatmul.mubr.bf16.gmra.mrb[0].mxu0 %v314
  %v486 = vpop.f32.mrb[0].mxu0
  %v487 = vadd.f32 %v399, %v486
  %v488 = vpop.f32.mrb[0].mxu0
  %v489 = vpop.f32.mrb[0].mxu0
  %v490 = vpop.f32.mrb[0].mxu0
  %491 = vdwg.mxu0
  %v492 = vld [vmem:[%s2] sm:$0xf]
  %v493 = vld [vmem:[%s2 + $0x4] sm:$0xf]
  %v494 = vld [vmem:[%s2 + $0x8] sm:$0xf]
  %v495 = vld [vmem:[%s2 + $0xc] sm:$0xf]
  %v496 = vld [vmem:[%s2 + $0x10] sm:$0xf]
  %v497 = vld [vmem:[%s2 + $0x14] sm:$0xf]
  %v498 = vld [vmem:[%s2 + $0x18] sm:$0xf]
  %v499 = vld [vmem:[%s2 + $0x1c] sm:$0xf]
  %v500 = vld [vmem:[%s2 + $0x20] sm:$0xf]
  %v501 = vld [vmem:[%s2 + $0x24] sm:$0xf]
  %v502 = vld [vmem:[%s2 + $0x28] sm:$0xf]
  %v503 = vld [vmem:[%s2 + $0x2c] sm:$0xf]
  %v504 = vld [vmem:[%s2 + $0x30] sm:$0xf]
  %v505 = vld [vmem:[%s2 + $0x34] sm:$0xf]
  %v506 = vld [vmem:[%s2 + $0x38] sm:$0xf]
  %v507 = vld [vmem:[%s2 + $0x3c] sm:$0xf]
  %v508 = vld [vmem:[%s2 + $0x40] sm:$0xf]
  %v509 = vld [vmem:[%s2 + $0x44] sm:$0xf]
  %v510 = vld [vmem:[%s2 + $0x48] sm:$0xf]
  %v511 = vld [vmem:[%s2 + $0x4c] sm:$0xf]
  %v512 = vld [vmem:[%s2 + $0x50] sm:$0xf]
  %v513 = vld [vmem:[%s2 + $0x54] sm:$0xf]
  %v514 = vld [vmem:[%s2 + $0x58] sm:$0xf]
  %v515 = vld [vmem:[%s2 + $0x5c] sm:$0xf]
  %v516 = vld [vmem:[%s2 + $0x60] sm:$0xf]
  %v517 = vld [vmem:[%s2 + $0x64] sm:$0xf]
  %v518 = vld [vmem:[%s2 + $0x68] sm:$0xf]
  %v519 = vld [vmem:[%s2 + $0x6c] sm:$0xf]
  %v520 = vld [vmem:[%s2 + $0x70] sm:$0xf]
  %v521 = vld [vmem:[%s2 + $0x74] sm:$0xf]
  %v522 = vld [vmem:[%s2 + $0x78] sm:$0xf]
  %v523 = vld [vmem:[%s2 + $0x7c] sm:$0xf]
  %v524 = vld [vmem:[%s2 + $0x80] sm:$0xf]
  %v525 = vld [vmem:[%s2 + $0x84] sm:$0xf]
  %v526 = vld [vmem:[%s2 + $0x88] sm:$0xf]
  %v527 = vld [vmem:[%s2 + $0x8c] sm:$0xf]
  %v564 = vunpack.c.l.b16 %v492
  %v565 = vunpack.c.l.b16 %v493
  %v566 = vunpack.c.l.b16 %v494
  %v567 = vunpack.c.l.b16 %v495
  %v568 = vunpack.c.l.b16 %v496
  %v569 = vunpack.c.l.b16 %v497
  %v570 = vunpack.c.l.b16 %v498
  %v571 = vunpack.c.l.b16 %v499
  %v572 = vunpack.c.l.b16 %v500
  %v573 = vunpack.c.l.b16 %v501
  %v574 = vunpack.c.l.b16 %v502
  %v575 = vunpack.c.l.b16 %v503
  %v576 = vunpack.c.l.b16 %v504
  %v577 = vunpack.c.l.b16 %v505
  %v578 = vunpack.c.l.b16 %v506
  %v579 = vunpack.c.l.b16 %v507
  %v580 = vunpack.c.l.b16 %v508
  %v581 = vunpack.c.l.b16 %v509
  %v582 = vunpack.c.l.b16 %v510
  %v583 = vunpack.c.l.b16 %v511
  %v584 = vunpack.c.l.b16 %v512
  %v585 = vunpack.c.l.b16 %v513
  %v586 = vunpack.c.l.b16 %v514
  %v587 = vunpack.c.l.b16 %v515
  %v588 = vunpack.c.l.b16 %v516
  %v589 = vunpack.c.l.b16 %v517
  %v590 = vunpack.c.l.b16 %v518
  %v591 = vunpack.c.l.b16 %v519
  %v592 = vunpack.c.l.b16 %v520
  %v593 = vunpack.c.l.b16 %v521
  %v594 = vunpack.c.l.b16 %v522
  %v595 = vunpack.c.l.b16 %v523
  %v596 = vunpack.c.l.b16 %v524
  %v597 = vunpack.c.l.b16 %v525
  %v598 = vunpack.c.l.b16 %v526
  %v599 = vunpack.c.l.b16 %v527
  %v600 = vpack.c.b16 %v565, %v564
  %v601 = vpack.c.b16 %v567, %v566
  %v602 = vpack.c.b16 %v569, %v568
  %v603 = vpack.c.b16 %v571, %v570
  %v604 = vpack.c.b16 %v573, %v572
  %v605 = vpack.c.b16 %v575, %v574
  %v606 = vpack.c.b16 %v577, %v576
  %v607 = vpack.c.b16 %v579, %v578
  %v608 = vpack.c.b16 %v581, %v580
  %v609 = vpack.c.b16 %v583, %v582
  %v610 = vpack.c.b16 %v585, %v584
  %v611 = vpack.c.b16 %v587, %v586
  %v612 = vpack.c.b16 %v589, %v588
  %v613 = vpack.c.b16 %v591, %v590
  %v614 = vpack.c.b16 %v593, %v592
  %v615 = vpack.c.b16 %v595, %v594
  %v616 = vpack.c.b16 %v597, %v596
  %v617 = vpack.c.b16 %v599, %v598
  %636 = vmatprep.subr.bf16.mxu0 0
  %637 = vmatpush1.bf16.msra.mxu0 %v600
  %638 = vmatprep.subr.bf16.mxu0 0
  %639 = vmatpush1.bf16.msra.mxu0 %v601
  %640 = vmatprep.subr.bf16.mxu0 0
  %641 = vmatpush1.bf16.msra.mxu0 %v602
  %642 = vmatprep.subr.bf16.mxu0 0
  %643 = vmatpush1.bf16.msra.mxu0 %v603
  %644 = vmatprep.subr.bf16.mxu0 0
  %645 = vmatpush1.bf16.msra.mxu0 %v604
  %646 = vmatprep.subr.bf16.mxu0 0
  %647 = vmatpush1.bf16.msra.mxu0 %v605
  %648 = vmatprep.subr.bf16.mxu0 0
  %649 = vmatpush1.bf16.msra.mxu0 %v606
  %650 = vmatprep.subr.bf16.mxu0 0
  %651 = vmatpush1.bf16.msra.mxu0 %v607
  %652 = vmatprep.subr.bf16.mxu0 0
  %653 = vmatpush1.bf16.msra.mxu0 %v608
  %654 = vmatprep.subr.bf16.mxu0 0
  %655 = vmatpush1.bf16.msra.mxu0 %v609
  %656 = vmatprep.subr.bf16.mxu0 0
  %657 = vmatpush1.bf16.msra.mxu0 %v610
  %658 = vmatprep.subr.bf16.mxu0 0
  %659 = vmatpush1.bf16.msra.mxu0 %v611
  %660 = vmatprep.subr.bf16.mxu0 0
  %661 = vmatpush1.bf16.msra.mxu0 %v612
  %662 = vmatprep.subr.bf16.mxu0 0
  %663 = vmatpush1.bf16.msra.mxu0 %v613
  %664 = vmatprep.subr.bf16.mxu0 0
  %665 = vmatpush1.bf16.msra.mxu0 %v614
  %666 = vmatprep.subr.bf16.mxu0 0
  %667 = vmatpush1.bf16.msra.mxu0 %v615
  %668 = vmatprep.mubr.bf16.mxu0 %v152
  %669 = vmatmul.mubr.bf16.gmra.mrb[0].mxu0 %v151
  %v670 = vpop.f32.mrb[0].mxu0
  %v671 = vadd.f32 0.0, %v670
  %v672 = vpop.f32.mrb[0].mxu0
  %v673 = vpop.f32.mrb[0].mxu0
  %v674 = vadd.f32 0.0, %v673
  %v675 = vpop.f32.mrb[0].mxu0
  %676 = vmatprep.mubr.bf16.mxu0 %v155
  %677 = vmatmul.mubr.bf16.gmra.mrb[0].mxu0 %v154
  %v678 = vpop.f32.mrb[0].mxu0
  %v679 = vadd.f32 0.0, %v678
  %v680 = vpop.f32.mrb[0].mxu0
  %v681 = vpop.f32.mrb[0].mxu0
  %v682 = vadd.f32 0.0, %v681
  %v683 = vpop.f32.mrb[0].mxu0
  %684 = vmatprep.mubr.bf16.mxu0 %v158
  %685 = vmatmul.mubr.bf16.gmra.mrb[0].mxu0 %v157
  %v686 = vpop.f32.mrb[0].mxu0
  %v687 = vadd.f32 0.0, %v686
  %v688 = vpop.f32.mrb[0].mxu0
  %v689 = vpop.f32.mrb[0].mxu0
  %v690 = vadd.f32 0.0, %v689
  %v691 = vpop.f32.mrb[0].mxu0
  %692 = vmatprep.mubr.bf16.mxu0 %v161
  %693 = vmatmul.mubr.bf16.gmra.mrb[0].mxu0 %v160
  %v694 = vpop.f32.mrb[0].mxu0
  %v695 = vadd.f32 0.0, %v694
  %v696 = vpop.f32.mrb[0].mxu0
  %v697 = vpop.f32.mrb[0].mxu0
  %v698 = vadd.f32 0.0, %v697
  %v699 = vpop.f32.mrb[0].mxu0
  %700 = vmatprep.mubr.bf16.mxu0 %v164
  %701 = vmatmul.mubr.bf16.gmra.mrb[0].mxu0 %v163
  %v702 = vpop.f32.mrb[0].mxu0
  %v703 = vadd.f32 0.0, %v702
  %v704 = vpop.f32.mrb[0].mxu0
  %v705 = vpop.f32.mrb[0].mxu0
  %v706 = vadd.f32 0.0, %v705
  %v707 = vpop.f32.mrb[0].mxu0
  %708 = vmatprep.mubr.bf16.mxu0 %v167
  %709 = vmatmul.mubr.bf16.gmra.mrb[0].mxu0 %v166
  %v710 = vpop.f32.mrb[0].mxu0
  %v711 = vadd.f32 0.0, %v710
  %v712 = vpop.f32.mrb[0].mxu0
  %v713 = vpop.f32.mrb[0].mxu0
  %v714 = vadd.f32 0.0, %v713
  %v715 = vpop.f32.mrb[0].mxu0
  %716 = vmatprep.mubr.bf16.mxu0 %v170
  %717 = vmatmul.mubr.bf16.gmra.mrb[0].mxu0 %v169
  %v718 = vpop.f32.mrb[0].mxu0
  %v719 = vadd.f32 0.0, %v718
  %v720 = vpop.f32.mrb[0].mxu0
  %v721 = vpop.f32.mrb[0].mxu0
  %v722 = vpop.f32.mrb[0].mxu0
  %723 = vdwg.mxu0
  %724 = vmatprep.subr.bf16.mxu0 0
  %725 = vmatpush1.bf16.msra.mxu0 %v616
  %726 = vmatprep.subr.bf16.mxu0 0
  %727 = vmatpush1.bf16.msra.mxu0 %v617
  %728 = vmatprep.subr.bf16.mxu0 0
  %729 = vmatpush1.bf16.msra.mxu0 0
  %730 = vmatprep.subr.bf16.mxu0 0
  %731 = vmatpush1.bf16.msra.mxu0 0
  %732 = vmatprep.subr.bf16.mxu0 0
  %733 = vmatpush1.bf16.msra.mxu0 0
  %734 = vmatprep.subr.bf16.mxu0 0
  %735 = vmatpush1.bf16.msra.mxu0 0
  %736 = vmatprep.subr.bf16.mxu0 0
  %737 = vmatpush1.bf16.msra.mxu0 0
  %738 = vmatprep.subr.bf16.mxu0 0
  %739 = vmatpush1.bf16.msra.mxu0 0
  %740 = vmatprep.subr.bf16.mxu0 0
  %741 = vmatpush1.bf16.msra.mxu0 0
  %742 = vmatprep.subr.bf16.mxu0 0
  %743 = vmatpush1.bf16.msra.mxu0 0
  %744 = vmatprep.subr.bf16.mxu0 0
  %745 = vmatpush1.bf16.msra.mxu0 0
  %746 = vmatprep.subr.bf16.mxu0 0
  %747 = vmatpush1.bf16.msra.mxu0 0
  %748 = vmatprep.subr.bf16.mxu0 0
  %749 = vmatpush1.bf16.msra.mxu0 0
  %750 = vmatprep.subr.bf16.mxu0 0
  %751 = vmatpush1.bf16.msra.mxu0 0
  %752 = vmatprep.subr.bf16.mxu0 0
  %753 = vmatpush1.bf16.msra.mxu0 0
  %754 = vmatprep.subr.bf16.mxu0 0
  %755 = vmatpush1.bf16.msra.mxu0 0
  %756 = vmatprep.mubr.bf16.mxu0 0
  %757 = vmatmul.mubr.bf16.gmra.mrb[0].mxu0 %v296
  %v758 = vpop.f32.mrb[0].mxu0
  %v759 = vadd.f32 %v671, %v758
  %v760 = vpop.f32.mrb[0].mxu0
  %v761 = vpop.f32.mrb[0].mxu0
  %v762 = vadd.f32 %v674, %v761
  %v763 = vpop.f32.mrb[0].mxu0
  %764 = vmatprep.mubr.bf16.mxu0 0
  %765 = vmatmul.mubr.bf16.gmra.mrb[0].mxu0 %v299
  %v766 = vpop.f32.mrb[0].mxu0
  %v767 = vadd.f32 %v679, %v766
  %v768 = vpop.f32.mrb[0].mxu0
  %v769 = vpop.f32.mrb[0].mxu0
  %v770 = vadd.f32 %v682, %v769
  %v771 = vpop.f32.mrb[0].mxu0
  %772 = vmatprep.mubr.bf16.mxu0 0
  %773 = vmatmul.mubr.bf16.gmra.mrb[0].mxu0 %v302
  %v774 = vpop.f32.mrb[0].mxu0
  %v775 = vadd.f32 %v687, %v774
  %v776 = vpop.f32.mrb[0].mxu0
  %v777 = vpop.f32.mrb[0].mxu0
  %v778 = vadd.f32 %v690, %v777
  %v779 = vpop.f32.mrb[0].mxu0
  %780 = vmatprep.mubr.bf16.mxu0 0
  %781 = vmatmul.mubr.bf16.gmra.mrb[0].mxu0 %v305
  %v782 = vpop.f32.mrb[0].mxu0
  %v783 = vadd.f32 %v695, %v782
  %v784 = vpop.f32.mrb[0].mxu0
  %v785 = vpop.f32.mrb[0].mxu0
  %v786 = vadd.f32 %v698, %v785
  %v787 = vpop.f32.mrb[0].mxu0
  %788 = vmatprep.mubr.bf16.mxu0 0
  %789 = vmatmul.mubr.bf16.gmra.mrb[0].mxu0 %v308
  %v790 = vpop.f32.mrb[0].mxu0
  %v791 = vadd.f32 %v703, %v790
  %v792 = vpop.f32.mrb[0].mxu0
  %v793 = vpop.f32.mrb[0].mxu0
  %v794 = vadd.f32 %v706, %v793
  %v795 = vpop.f32.mrb[0].mxu0
  %796 = vmatprep.mubr.bf16.mxu0 0
  %797 = vmatmul.mubr.bf16.gmra.mrb[0].mxu0 %v311
  %v798 = vpop.f32.mrb[0].mxu0
  %v799 = vadd.f32 %v711, %v798
  %v800 = vpop.f32.mrb[0].mxu0
  %v801 = vpop.f32.mrb[0].mxu0
  %v802 = vadd.f32 %v714, %v801
  %v803 = vpop.f32.mrb[0].mxu0
  %804 = vmatprep.mubr.bf16.mxu0 0
  %805 = vmatmul.mubr.bf16.gmra.mrb[0].mxu0 %v314
  %v806 = vpop.f32.mrb[0].mxu0
  %v807 = vadd.f32 %v719, %v806
  %v808 = vpop.f32.mrb[0].mxu0
  %v809 = vpop.f32.mrb[0].mxu0
  %v810 = vpop.f32.mrb[0].mxu0
  %811 = vdwg.mxu0
  %v812 = vmax.f32 %v439, %v759
  %v813 = vmax.f32 %v442, %v762
  %v814 = vmax.f32 %v447, %v767
  %v815 = vmax.f32 %v450, %v770
  %v816 = vmax.f32 %v455, %v775
  %v817 = vmax.f32 %v458, %v778
  %v818 = vmax.f32 %v463, %v783
  %v819 = vmax.f32 %v466, %v786
  %v820 = vmax.f32 %v471, %v791
  %v821 = vmax.f32 %v474, %v794
  %v822 = vmax.f32 %v479, %v799
  %v823 = vmax.f32 %v482, %v802
  %v824 = vmax.f32 %v487, %v807
  %v825 = vld [vmem:[%s3] sm:$0xf]
  %v826 = vld [vmem:[%s3 + $0x4] sm:$0xf]
  %v827 = vld [vmem:[%s3 + $0x8] sm:$0xf]
  %v828 = vld [vmem:[%s3 + $0xc] sm:$0xf]
  %v829 = vld [vmem:[%s3 + $0x10] sm:$0xf]
  %v830 = vld [vmem:[%s3 + $0x14] sm:$0xf]
  %v831 = vld [vmem:[%s3 + $0x18] sm:$0xf]
  %v832 = vld [vmem:[%s3 + $0x1c] sm:$0xf]
  %v833 = vld [vmem:[%s3 + $0x20] sm:$0xf]
  %v834 = vld [vmem:[%s3 + $0x24] sm:$0xf]
  %v835 = vld [vmem:[%s3 + $0x28] sm:$0xf]
  %v836 = vld [vmem:[%s3 + $0x2c] sm:$0xf]
  %v837 = vld [vmem:[%s3 + $0x30] sm:$0xf]
  %v838 = vld [vmem:[%s3 + $0x34] sm:$0xf]
  %v839 = vld [vmem:[%s3 + $0x38] sm:$0xf]
  %v840 = vld [vmem:[%s3 + $0x3c] sm:$0xf]
  %v841 = vld [vmem:[%s3 + $0x40] sm:$0xf]
  %v842 = vld [vmem:[%s3 + $0x44] sm:$0xf]
  %v843 = vld [vmem:[%s3 + $0x48] sm:$0xf]
  %v844 = vld [vmem:[%s3 + $0x4c] sm:$0xf]
  %v845 = vld [vmem:[%s3 + $0x50] sm:$0xf]
  %v846 = vld [vmem:[%s3 + $0x54] sm:$0xf]
  %v847 = vld [vmem:[%s3 + $0x58] sm:$0xf]
  %v848 = vld [vmem:[%s3 + $0x5c] sm:$0xf]
  %v849 = vld [vmem:[%s3 + $0x60] sm:$0xf]
  %v850 = vld [vmem:[%s3 + $0x64] sm:$0xf]
  %v851 = vld [vmem:[%s3 + $0x68] sm:$0xf]
  %v852 = vld [vmem:[%s3 + $0x6c] sm:$0xf]
  %v853 = vld [vmem:[%s3 + $0x70] sm:$0xf]
  %v854 = vld [vmem:[%s3 + $0x74] sm:$0xf]
  %v855 = vld [vmem:[%s3 + $0x78] sm:$0xf]
  %v856 = vld [vmem:[%s3 + $0x7c] sm:$0xf]
  %v857 = vld [vmem:[%s3 + $0x80] sm:$0xf]
  %v858 = vld [vmem:[%s3 + $0x84] sm:$0xf]
  %v859 = vld [vmem:[%s3 + $0x88] sm:$0xf]
  %v860 = vld [vmem:[%s3 + $0x8c] sm:$0xf]
  %v897 = vunpack.c.l.b16 %v825
  %v898 = vunpack.c.l.b16 %v826
  %v899 = vunpack.c.l.b16 %v827
  %v900 = vunpack.c.l.b16 %v828
  %v901 = vunpack.c.l.b16 %v829
  %v902 = vunpack.c.l.b16 %v830
  %v903 = vunpack.c.l.b16 %v831
  %v904 = vunpack.c.l.b16 %v832
  %v905 = vunpack.c.l.b16 %v833
  %v906 = vunpack.c.l.b16 %v834
  %v907 = vunpack.c.l.b16 %v835
  %v908 = vunpack.c.l.b16 %v836
  %v909 = vunpack.c.l.b16 %v837
  %v910 = vunpack.c.l.b16 %v838
  %v911 = vunpack.c.l.b16 %v839
  %v912 = vunpack.c.l.b16 %v840
  %v913 = vunpack.c.l.b16 %v841
  %v914 = vunpack.c.l.b16 %v842
  %v915 = vunpack.c.l.b16 %v843
  %v916 = vunpack.c.l.b16 %v844
  %v917 = vunpack.c.l.b16 %v845
  %v918 = vunpack.c.l.b16 %v846
  %v919 = vunpack.c.l.b16 %v847
  %v920 = vunpack.c.l.b16 %v848
  %v921 = vunpack.c.l.b16 %v849
  %v922 = vunpack.c.l.b16 %v850
  %v923 = vunpack.c.l.b16 %v851
  %v924 = vunpack.c.l.b16 %v852
  %v925 = vunpack.c.l.b16 %v853
  %v926 = vunpack.c.l.b16 %v854
  %v927 = vunpack.c.l.b16 %v855
  %v928 = vunpack.c.l.b16 %v856
  %v929 = vunpack.c.l.b16 %v857
  %v930 = vunpack.c.l.b16 %v858
  %v931 = vunpack.c.l.b16 %v859
  %v932 = vunpack.c.l.b16 %v860
  %v933 = vpack.c.b16 %v898, %v897
  %v934 = vpack.c.b16 %v900, %v899
  %v935 = vpack.c.b16 %v902, %v901
  %v936 = vpack.c.b16 %v904, %v903
  %v937 = vpack.c.b16 %v906, %v905
  %v938 = vpack.c.b16 %v908, %v907
  %v939 = vpack.c.b16 %v910, %v909
  %v940 = vpack.c.b16 %v912, %v911
  %v941 = vpack.c.b16 %v914, %v913
  %v942 = vpack.c.b16 %v916, %v915
  %v943 = vpack.c.b16 %v918, %v917
  %v944 = vpack.c.b16 %v920, %v919
  %v945 = vpack.c.b16 %v922, %v921
  %v946 = vpack.c.b16 %v924, %v923
  %v947 = vpack.c.b16 %v926, %v925
  %v948 = vpack.c.b16 %v928, %v927
  %v949 = vpack.c.b16 %v930, %v929
  %v950 = vpack.c.b16 %v932, %v931
  %969 = vmatprep.subr.bf16.mxu0 0
  %970 = vmatpush1.bf16.msra.mxu0 %v933
  %971 = vmatprep.subr.bf16.mxu0 0
  %972 = vmatpush1.bf16.msra.mxu0 %v934
  %973 = vmatprep.subr.bf16.mxu0 0
  %974 = vmatpush1.bf16.msra.mxu0 %v935
  %975 = vmatprep.subr.bf16.mxu0 0
  %976 = vmatpush1.bf16.msra.mxu0 %v936
  %977 = vmatprep.subr.bf16.mxu0 0
  %978 = vmatpush1.bf16.msra.mxu0 %v937
  %979 = vmatprep.subr.bf16.mxu0 0
  %980 = vmatpush1.bf16.msra.mxu0 %v938
  %981 = vmatprep.subr.bf16.mxu0 0
  %982 = vmatpush1.bf16.msra.mxu0 %v939
  %983 = vmatprep.subr.bf16.mxu0 0
  %984 = vmatpush1.bf16.msra.mxu0 %v940
  %985 = vmatprep.subr.bf16.mxu0 0
  %986 = vmatpush1.bf16.msra.mxu0 %v941
  %987 = vmatprep.subr.bf16.mxu0 0
  %988 = vmatpush1.bf16.msra.mxu0 %v942
  %989 = vmatprep.subr.bf16.mxu0 0
  %990 = vmatpush1.bf16.msra.mxu0 %v943
  %991 = vmatprep.subr.bf16.mxu0 0
  %992 = vmatpush1.bf16.msra.mxu0 %v944
  %993 = vmatprep.subr.bf16.mxu0 0
  %994 = vmatpush1.bf16.msra.mxu0 %v945
  %995 = vmatprep.subr.bf16.mxu0 0
  %996 = vmatpush1.bf16.msra.mxu0 %v946
  %997 = vmatprep.subr.bf16.mxu0 0
  %998 = vmatpush1.bf16.msra.mxu0 %v947
  %999 = vmatprep.subr.bf16.mxu0 0
  %1000 = vmatpush1.bf16.msra.mxu0 %v948
  %1001 = vmatprep.mubr.bf16.mxu0 %v152
  %1002 = vmatmul.mubr.bf16.gmra.mrb[0].mxu0 %v151
  %v1003 = vpop.f32.mrb[0].mxu0
  %v1004 = vadd.f32 0.0, %v1003
  %v1005 = vpop.f32.mrb[0].mxu0
  %v1006 = vpop.f32.mrb[0].mxu0
  %v1007 = vadd.f32 0.0, %v1006
  %v1008 = vpop.f32.mrb[0].mxu0
  %1009 = vmatprep.mubr.bf16.mxu0 %v155
  %1010 = vmatmul.mubr.bf16.gmra.mrb[0].mxu0 %v154
  %v1011 = vpop.f32.mrb[0].mxu0
  %v1012 = vadd.f32 0.0, %v1011
  %v1013 = vpop.f32.mrb[0].mxu0
  %v1014 = vpop.f32.mrb[0].mxu0
  %v1015 = vadd.f32 0.0, %v1014
  %v1016 = vpop.f32.mrb[0].mxu0
  %1017 = vmatprep.mubr.bf16.mxu0 %v158
  %1018 = vmatmul.mubr.bf16.gmra.mrb[0].mxu0 %v157
  %v1019 = vpop.f32.mrb[0].mxu0
  %v1020 = vadd.f32 0.0, %v1019
  %v1021 = vpop.f32.mrb[0].mxu0
  %v1022 = vpop.f32.mrb[0].mxu0
  %v1023 = vadd.f32 0.0, %v1022
  %v1024 = vpop.f32.mrb[0].mxu0
  %1025 = vmatprep.mubr.bf16.mxu0 %v161
  %1026 = vmatmul.mubr.bf16.gmra.mrb[0].mxu0 %v160
  %v1027 = vpop.f32.mrb[0].mxu0
  %v1028 = vadd.f32 0.0, %v1027
  %v1029 = vpop.f32.mrb[0].mxu0
  %v1030 = vpop.f32.mrb[0].mxu0
  %v1031 = vadd.f32 0.0, %v1030
  %v1032 = vpop.f32.mrb[0].mxu0
  %1033 = vmatprep.mubr.bf16.mxu0 %v164
  %1034 = vmatmul.mubr.bf16.gmra.mrb[0].mxu0 %v163
  %v1035 = vpop.f32.mrb[0].mxu0
  %v1036 = vadd.f32 0.0, %v1035
  %v1037 = vpop.f32.mrb[0].mxu0
  %v1038 = vpop.f32.mrb[0].mxu0
  %v1039 = vadd.f32 0.0, %v1038
  %v1040 = vpop.f32.mrb[0].mxu0
  %1041 = vmatprep.mubr.bf16.mxu0 %v167
  %1042 = vmatmul.mubr.bf16.gmra.mrb[0].mxu0 %v166
  %v1043 = vpop.f32.mrb[0].mxu0
  %v1044 = vadd.f32 0.0, %v1043
  %v1045 = vpop.f32.mrb[0].mxu0
  %v1046 = vpop.f32.mrb[0].mxu0
  %v1047 = vadd.f32 0.0, %v1046
  %v1048 = vpop.f32.mrb[0].mxu0
  %1049 = vmatprep.mubr.bf16.mxu0 %v170
  %1050 = vmatmul.mubr.bf16.gmra.mrb[0].mxu0 %v169
  %v1051 = vpop.f32.mrb[0].mxu0
  %v1052 = vadd.f32 0.0, %v1051
  %v1053 = vpop.f32.mrb[0].mxu0
  %v1054 = vpop.f32.mrb[0].mxu0
  %v1055 = vpop.f32.mrb[0].mxu0
  %1056 = vdwg.mxu0
  %1057 = vmatprep.subr.bf16.mxu0 0
  %1058 = vmatpush1.bf16.msra.mxu0 %v949
  %1059 = vmatprep.subr.bf16.mxu0 0
  %1060 = vmatpush1.bf16.msra.mxu0 %v950
  %1061 = vmatprep.subr.bf16.mxu0 0
  %1062 = vmatpush1.bf16.msra.mxu0 0
  %1063 = vmatprep.subr.bf16.mxu0 0
  %1064 = vmatpush1.bf16.msra.mxu0 0
  %1065 = vmatprep.subr.bf16.mxu0 0
  %1066 = vmatpush1.bf16.msra.mxu0 0
  %1067 = vmatprep.subr.bf16.mxu0 0
  %1068 = vmatpush1.bf16.msra.mxu0 0
  %1069 = vmatprep.subr.bf16.mxu0 0
  %1070 = vmatpush1.bf16.msra.mxu0 0
  %1071 = vmatprep.subr.bf16.mxu0 0
  %1072 = vmatpush1.bf16.msra.mxu0 0
  %1073 = vmatprep.subr.bf16.mxu0 0
  %1074 = vmatpush1.bf16.msra.mxu0 0
  %1075 = vmatprep.subr.bf16.mxu0 0
  %1076 = vmatpush1.bf16.msra.mxu0 0
  %1077 = vmatprep.subr.bf16.mxu0 0
  %1078 = vmatpush1.bf16.msra.mxu0 0
  %1079 = vmatprep.subr.bf16.mxu0 0
  %1080 = vmatpush1.bf16.msra.mxu0 0
  %1081 = vmatprep.subr.bf16.mxu0 0
  %1082 = vmatpush1.bf16.msra.mxu0 0
  %1083 = vmatprep.subr.bf16.mxu0 0
  %1084 = vmatpush1.bf16.msra.mxu0 0
  %1085 = vmatprep.subr.bf16.mxu0 0
  %1086 = vmatpush1.bf16.msra.mxu0 0
  %1087 = vmatprep.subr.bf16.mxu0 0
  %1088 = vmatpush1.bf16.msra.mxu0 0
  %1089 = vmatprep.mubr.bf16.mxu0 0
  %1090 = vmatmul.mubr.bf16.gmra.mrb[0].mxu0 %v296
  %v1091 = vpop.f32.mrb[0].mxu0
  %v1092 = vadd.f32 %v1004, %v1091
  %v1093 = vpop.f32.mrb[0].mxu0
  %v1094 = vpop.f32.mrb[0].mxu0
  %v1095 = vadd.f32 %v1007, %v1094
  %v1096 = vpop.f32.mrb[0].mxu0
  %1097 = vmatprep.mubr.bf16.mxu0 0
  %1098 = vmatmul.mubr.bf16.gmra.mrb[0].mxu0 %v299
  %v1099 = vpop.f32.mrb[0].mxu0
  %v1100 = vadd.f32 %v1012, %v1099
  %v1101 = vpop.f32.mrb[0].mxu0
  %v1102 = vpop.f32.mrb[0].mxu0
  %v1103 = vadd.f32 %v1015, %v1102
  %v1104 = vpop.f32.mrb[0].mxu0
  %1105 = vmatprep.mubr.bf16.mxu0 0
  %1106 = vmatmul.mubr.bf16.gmra.mrb[0].mxu0 %v302
  %v1107 = vpop.f32.mrb[0].mxu0
  %v1108 = vadd.f32 %v1020, %v1107
  %v1109 = vpop.f32.mrb[0].mxu0
  %v1110 = vpop.f32.mrb[0].mxu0
  %v1111 = vadd.f32 %v1023, %v1110
  %v1112 = vpop.f32.mrb[0].mxu0
  %1113 = vmatprep.mubr.bf16.mxu0 0
  %1114 = vmatmul.mubr.bf16.gmra.mrb[0].mxu0 %v305
  %v1115 = vpop.f32.mrb[0].mxu0
  %v1116 = vadd.f32 %v1028, %v1115
  %v1117 = vpop.f32.mrb[0].mxu0
  %v1118 = vpop.f32.mrb[0].mxu0
  %v1119 = vadd.f32 %v1031, %v1118
  %v1120 = vpop.f32.mrb[0].mxu0
  %1121 = vmatprep.mubr.bf16.mxu0 0
  %1122 = vmatmul.mubr.bf16.gmra.mrb[0].mxu0 %v308
  %v1123 = vpop.f32.mrb[0].mxu0
  %v1124 = vadd.f32 %v1036, %v1123
  %v1125 = vpop.f32.mrb[0].mxu0
  %v1126 = vpop.f32.mrb[0].mxu0
  %v1127 = vadd.f32 %v1039, %v1126
  %v1128 = vpop.f32.mrb[0].mxu0
  %1129 = vmatprep.mubr.bf16.mxu0 0
  %1130 = vmatmul.mubr.bf16.gmra.mrb[0].mxu0 %v311
  %v1131 = vpop.f32.mrb[0].mxu0
  %v1132 = vadd.f32 %v1044, %v1131
  %v1133 = vpop.f32.mrb[0].mxu0
  %v1134 = vpop.f32.mrb[0].mxu0
  %v1135 = vadd.f32 %v1047, %v1134
  %v1136 = vpop.f32.mrb[0].mxu0
  %1137 = vmatprep.mubr.bf16.mxu0 0
  %1138 = vmatmul.mubr.bf16.gmra.mrb[0].mxu0 %v314
  %v1139 = vpop.f32.mrb[0].mxu0
  %v1140 = vadd.f32 %v1052, %v1139
  %v1141 = vpop.f32.mrb[0].mxu0
  %v1142 = vpop.f32.mrb[0].mxu0
  %v1143 = vpop.f32.mrb[0].mxu0
  %1144 = vdwg.mxu0
  %v1145 = vmax.f32 %v812, %v1092
  %v1146 = vmax.f32 %v813, %v1095
  %v1147 = vmax.f32 %v814, %v1100
  %v1148 = vmax.f32 %v815, %v1103
  %v1149 = vmax.f32 %v816, %v1108
  %v1150 = vmax.f32 %v817, %v1111
  %v1151 = vmax.f32 %v818, %v1116
  %v1152 = vmax.f32 %v819, %v1119
  %v1153 = vmax.f32 %v820, %v1124
  %v1154 = vmax.f32 %v821, %v1127
  %v1155 = vmax.f32 %v822, %v1132
  %v1156 = vmax.f32 %v823, %v1135
  %v1157 = vmax.f32 %v824, %v1140
  %v1158 = vld [vmem:[%s4] sm:$0xf]
  %v1159 = vld [vmem:[%s4 + $0x4] sm:$0xf]
  %v1160 = vld [vmem:[%s4 + $0x8] sm:$0xf]
  %v1161 = vld [vmem:[%s4 + $0xc] sm:$0xf]
  %v1162 = vld [vmem:[%s4 + $0x10] sm:$0xf]
  %v1163 = vld [vmem:[%s4 + $0x14] sm:$0xf]
  %v1164 = vld [vmem:[%s4 + $0x18] sm:$0xf]
  %v1165 = vld [vmem:[%s4 + $0x1c] sm:$0xf]
  %v1166 = vld [vmem:[%s4 + $0x20] sm:$0xf]
  %v1167 = vld [vmem:[%s4 + $0x24] sm:$0xf]
  %v1168 = vld [vmem:[%s4 + $0x28] sm:$0xf]
  %v1169 = vld [vmem:[%s4 + $0x2c] sm:$0xf]
  %v1170 = vld [vmem:[%s4 + $0x30] sm:$0xf]
  %v1171 = vld [vmem:[%s4 + $0x34] sm:$0xf]
  %v1172 = vld [vmem:[%s4 + $0x38] sm:$0xf]
  %v1173 = vld [vmem:[%s4 + $0x3c] sm:$0xf]
  %v1174 = vld [vmem:[%s4 + $0x40] sm:$0xf]
  %v1175 = vld [vmem:[%s4 + $0x44] sm:$0xf]
  %v1176 = vld [vmem:[%s4 + $0x48] sm:$0xf]
  %v1177 = vld [vmem:[%s4 + $0x4c] sm:$0xf]
  %v1178 = vld [vmem:[%s4 + $0x50] sm:$0xf]
  %v1179 = vld [vmem:[%s4 + $0x54] sm:$0xf]
  %v1180 = vld [vmem:[%s4 + $0x58] sm:$0xf]
  %v1181 = vld [vmem:[%s4 + $0x5c] sm:$0xf]
  %v1182 = vld [vmem:[%s4 + $0x60] sm:$0xf]
  %v1183 = vld [vmem:[%s4 + $0x64] sm:$0xf]
  %v1184 = vld [vmem:[%s4 + $0x68] sm:$0xf]
  %v1185 = vld [vmem:[%s4 + $0x6c] sm:$0xf]
  %v1186 = vld [vmem:[%s4 + $0x70] sm:$0xf]
  %v1187 = vld [vmem:[%s4 + $0x74] sm:$0xf]
  %v1188 = vld [vmem:[%s4 + $0x78] sm:$0xf]
  %v1189 = vld [vmem:[%s4 + $0x7c] sm:$0xf]
  %v1190 = vld [vmem:[%s4 + $0x80] sm:$0xf]
  %v1191 = vld [vmem:[%s4 + $0x84] sm:$0xf]
  %v1192 = vld [vmem:[%s4 + $0x88] sm:$0xf]
  %v1193 = vld [vmem:[%s4 + $0x8c] sm:$0xf]
  %v1230 = vunpack.c.l.b16 %v1158
  %v1231 = vunpack.c.l.b16 %v1159
  %v1232 = vunpack.c.l.b16 %v1160
  %v1233 = vunpack.c.l.b16 %v1161
  %v1234 = vunpack.c.l.b16 %v1162
  %v1235 = vunpack.c.l.b16 %v1163
  %v1236 = vunpack.c.l.b16 %v1164
  %v1237 = vunpack.c.l.b16 %v1165
  %v1238 = vunpack.c.l.b16 %v1166
  %v1239 = vunpack.c.l.b16 %v1167
  %v1240 = vunpack.c.l.b16 %v1168
  %v1241 = vunpack.c.l.b16 %v1169
  %v1242 = vunpack.c.l.b16 %v1170
  %v1243 = vunpack.c.l.b16 %v1171
  %v1244 = vunpack.c.l.b16 %v1172
  %v1245 = vunpack.c.l.b16 %v1173
  %v1246 = vunpack.c.l.b16 %v1174
  %v1247 = vunpack.c.l.b16 %v1175
  %v1248 = vunpack.c.l.b16 %v1176
  %v1249 = vunpack.c.l.b16 %v1177
  %v1250 = vunpack.c.l.b16 %v1178
  %v1251 = vunpack.c.l.b16 %v1179
  %v1252 = vunpack.c.l.b16 %v1180
  %v1253 = vunpack.c.l.b16 %v1181
  %v1254 = vunpack.c.l.b16 %v1182
  %v1255 = vunpack.c.l.b16 %v1183
  %v1256 = vunpack.c.l.b16 %v1184
  %v1257 = vunpack.c.l.b16 %v1185
  %v1258 = vunpack.c.l.b16 %v1186
  %v1259 = vunpack.c.l.b16 %v1187
  %v1260 = vunpack.c.l.b16 %v1188
  %v1261 = vunpack.c.l.b16 %v1189
  %v1262 = vunpack.c.l.b16 %v1190
  %v1263 = vunpack.c.l.b16 %v1191
  %v1264 = vunpack.c.l.b16 %v1192
  %v1265 = vunpack.c.l.b16 %v1193
  %v1266 = vpack.c.b16 %v1231, %v1230
  %v1267 = vpack.c.b16 %v1233, %v1232
  %v1268 = vpack.c.b16 %v1235, %v1234
  %v1269 = vpack.c.b16 %v1237, %v1236
  %v1270 = vpack.c.b16 %v1239, %v1238
  %v1271 = vpack.c.b16 %v1241, %v1240
  %v1272 = vpack.c.b16 %v1243, %v1242
  %v1273 = vpack.c.b16 %v1245, %v1244
  %v1274 = vpack.c.b16 %v1247, %v1246
  %v1275 = vpack.c.b16 %v1249, %v1248
  %v1276 = vpack.c.b16 %v1251, %v1250
  %v1277 = vpack.c.b16 %v1253, %v1252
  %v1278 = vpack.c.b16 %v1255, %v1254
  %v1279 = vpack.c.b16 %v1257, %v1256
  %v1280 = vpack.c.b16 %v1259, %v1258
  %v1281 = vpack.c.b16 %v1261, %v1260
  %v1282 = vpack.c.b16 %v1263, %v1262
  %v1283 = vpack.c.b16 %v1265, %v1264
  %1302 = vmatprep.subr.bf16.mxu0 0
  %1303 = vmatpush1.bf16.msra.mxu0 %v1266
  %1304 = vmatprep.subr.bf16.mxu0 0
  %1305 = vmatpush1.bf16.msra.mxu0 %v1267
  %1306 = vmatprep.subr.bf16.mxu0 0
  %1307 = vmatpush1.bf16.msra.mxu0 %v1268
  %1308 = vmatprep.subr.bf16.mxu0 0
  %1309 = vmatpush1.bf16.msra.mxu0 %v1269
  %1310 = vmatprep.subr.bf16.mxu0 0
  %1311 = vmatpush1.bf16.msra.mxu0 %v1270
  %1312 = vmatprep.subr.bf16.mxu0 0
  %1313 = vmatpush1.bf16.msra.mxu0 %v1271
  %1314 = vmatprep.subr.bf16.mxu0 0
  %1315 = vmatpush1.bf16.msra.mxu0 %v1272
  %1316 = vmatprep.subr.bf16.mxu0 0
  %1317 = vmatpush1.bf16.msra.mxu0 %v1273
  %1318 = vmatprep.subr.bf16.mxu0 0
  %1319 = vmatpush1.bf16.msra.mxu0 %v1274
  %1320 = vmatprep.subr.bf16.mxu0 0
  %1321 = vmatpush1.bf16.msra.mxu0 %v1275
  %1322 = vmatprep.subr.bf16.mxu0 0
  %1323 = vmatpush1.bf16.msra.mxu0 %v1276
  %1324 = vmatprep.subr.bf16.mxu0 0
  %1325 = vmatpush1.bf16.msra.mxu0 %v1277
  %1326 = vmatprep.subr.bf16.mxu0 0
  %1327 = vmatpush1.bf16.msra.mxu0 %v1278
  %1328 = vmatprep.subr.bf16.mxu0 0
  %1329 = vmatpush1.bf16.msra.mxu0 %v1279
  %1330 = vmatprep.subr.bf16.mxu0 0
  %1331 = vmatpush1.bf16.msra.mxu0 %v1280
  %1332 = vmatprep.subr.bf16.mxu0 0
  %1333 = vmatpush1.bf16.msra.mxu0 %v1281
  %1334 = vmatprep.mubr.bf16.mxu0 %v152
  %1335 = vmatmul.mubr.bf16.gmra.mrb[0].mxu0 %v151
  %v1336 = vpop.f32.mrb[0].mxu0
  %v1337 = vadd.f32 0.0, %v1336
  %v1338 = vpop.f32.mrb[0].mxu0
  %v1339 = vpop.f32.mrb[0].mxu0
  %v1340 = vadd.f32 0.0, %v1339
  %v1341 = vpop.f32.mrb[0].mxu0
  %1342 = vmatprep.mubr.bf16.mxu0 %v155
  %1343 = vmatmul.mubr.bf16.gmra.mrb[0].mxu0 %v154
  %v1344 = vpop.f32.mrb[0].mxu0
  %v1345 = vadd.f32 0.0, %v1344
  %v1346 = vpop.f32.mrb[0].mxu0
  %v1347 = vpop.f32.mrb[0].mxu0
  %v1348 = vadd.f32 0.0, %v1347
  %v1349 = vpop.f32.mrb[0].mxu0
  %1350 = vmatprep.mubr.bf16.mxu0 %v158
  %1351 = vmatmul.mubr.bf16.gmra.mrb[0].mxu0 %v157
  %v1352 = vpop.f32.mrb[0].mxu0
  %v1353 = vadd.f32 0.0, %v1352
  %v1354 = vpop.f32.mrb[0].mxu0
  %v1355 = vpop.f32.mrb[0].mxu0
  %v1356 = vadd.f32 0.0, %v1355
  %v1357 = vpop.f32.mrb[0].mxu0
  %1358 = vmatprep.mubr.bf16.mxu0 %v161
  %1359 = vmatmul.mubr.bf16.gmra.mrb[0].mxu0 %v160
  %v1360 = vpop.f32.mrb[0].mxu0
  %v1361 = vadd.f32 0.0, %v1360
  %v1362 = vpop.f32.mrb[0].mxu0
  %v1363 = vpop.f32.mrb[0].mxu0
  %v1364 = vadd.f32 0.0, %v1363
  %v1365 = vpop.f32.mrb[0].mxu0
  %1366 = vmatprep.mubr.bf16.mxu0 %v164
  %1367 = vmatmul.mubr.bf16.gmra.mrb[0].mxu0 %v163
  %v1368 = vpop.f32.mrb[0].mxu0
  %v1369 = vadd.f32 0.0, %v1368
  %v1370 = vpop.f32.mrb[0].mxu0
  %v1371 = vpop.f32.mrb[0].mxu0
  %v1372 = vadd.f32 0.0, %v1371
  %v1373 = vpop.f32.mrb[0].mxu0
  %1374 = vmatprep.mubr.bf16.mxu0 %v167
  %1375 = vmatmul.mubr.bf16.gmra.mrb[0].mxu0 %v166
  %v1376 = vpop.f32.mrb[0].mxu0
  %v1377 = vadd.f32 0.0, %v1376
  %v1378 = vpop.f32.mrb[0].mxu0
  %v1379 = vpop.f32.mrb[0].mxu0
  %v1380 = vadd.f32 0.0, %v1379
  %v1381 = vpop.f32.mrb[0].mxu0
  %1382 = vmatprep.mubr.bf16.mxu0 %v170
  %1383 = vmatmul.mubr.bf16.gmra.mrb[0].mxu0 %v169
  %v1384 = vpop.f32.mrb[0].mxu0
  %v1385 = vadd.f32 0.0, %v1384
  %v1386 = vpop.f32.mrb[0].mxu0
  %v1387 = vpop.f32.mrb[0].mxu0
  %v1388 = vpop.f32.mrb[0].mxu0
  %1389 = vdwg.mxu0
  %1390 = vmatprep.subr.bf16.mxu0 0
  %1391 = vmatpush1.bf16.msra.mxu0 %v1282
  %1392 = vmatprep.subr.bf16.mxu0 0
  %1393 = vmatpush1.bf16.msra.mxu0 %v1283
  %1394 = vmatprep.subr.bf16.mxu0 0
  %1395 = vmatpush1.bf16.msra.mxu0 0
  %1396 = vmatprep.subr.bf16.mxu0 0
  %1397 = vmatpush1.bf16.msra.mxu0 0
  %1398 = vmatprep.subr.bf16.mxu0 0
  %1399 = vmatpush1.bf16.msra.mxu0 0
  %1400 = vmatprep.subr.bf16.mxu0 0
  %1401 = vmatpush1.bf16.msra.mxu0 0
  %1402 = vmatprep.subr.bf16.mxu0 0
  %1403 = vmatpush1.bf16.msra.mxu0 0
  %1404 = vmatprep.subr.bf16.mxu0 0
  %1405 = vmatpush1.bf16.msra.mxu0 0
  %1406 = vmatprep.subr.bf16.mxu0 0
  %1407 = vmatpush1.bf16.msra.mxu0 0
  %1408 = vmatprep.subr.bf16.mxu0 0
  %1409 = vmatpush1.bf16.msra.mxu0 0
  %1410 = vmatprep.subr.bf16.mxu0 0
  %1411 = vmatpush1.bf16.msra.mxu0 0
  %1412 = vmatprep.subr.bf16.mxu0 0
  %1413 = vmatpush1.bf16.msra.mxu0 0
  %1414 = vmatprep.subr.bf16.mxu0 0
  %1415 = vmatpush1.bf16.msra.mxu0 0
  %1416 = vmatprep.subr.bf16.mxu0 0
  %1417 = vmatpush1.bf16.msra.mxu0 0
  %1418 = vmatprep.subr.bf16.mxu0 0
  %1419 = vmatpush1.bf16.msra.mxu0 0
  %1420 = vmatprep.subr.bf16.mxu0 0
  %1421 = vmatpush1.bf16.msra.mxu0 0
  %1422 = vmatprep.mubr.bf16.mxu0 0
  %1423 = vmatmul.mubr.bf16.gmra.mrb[0].mxu0 %v296
  %v1424 = vpop.f32.mrb[0].mxu0
  %v1425 = vadd.f32 %v1337, %v1424
  %v1426 = vpop.f32.mrb[0].mxu0
  %v1427 = vpop.f32.mrb[0].mxu0
  %v1428 = vadd.f32 %v1340, %v1427
  %v1429 = vpop.f32.mrb[0].mxu0
  %1430 = vmatprep.mubr.bf16.mxu0 0
  %1431 = vmatmul.mubr.bf16.gmra.mrb[0].mxu0 %v299
  %v1432 = vpop.f32.mrb[0].mxu0
  %v1433 = vadd.f32 %v1345, %v1432
  %v1434 = vpop.f32.mrb[0].mxu0
  %v1435 = vpop.f32.mrb[0].mxu0
  %v1436 = vadd.f32 %v1348, %v1435
  %v1437 = vpop.f32.mrb[0].mxu0
  %1438 = vmatprep.mubr.bf16.mxu0 0
  %1439 = vmatmul.mubr.bf16.gmra.mrb[0].mxu0 %v302
  %v1440 = vpop.f32.mrb[0].mxu0
  %v1441 = vadd.f32 %v1353, %v1440
  %v1442 = vpop.f32.mrb[0].mxu0
  %v1443 = vpop.f32.mrb[0].mxu0
  %v1444 = vadd.f32 %v1356, %v1443
  %v1445 = vpop.f32.mrb[0].mxu0
  %1446 = vmatprep.mubr.bf16.mxu0 0
  %1447 = vmatmul.mubr.bf16.gmra.mrb[0].mxu0 %v305
  %v1448 = vpop.f32.mrb[0].mxu0
  %v1449 = vadd.f32 %v1361, %v1448
  %v1450 = vpop.f32.mrb[0].mxu0
  %v1451 = vpop.f32.mrb[0].mxu0
  %v1452 = vadd.f32 %v1364, %v1451
  %v1453 = vpop.f32.mrb[0].mxu0
  %1454 = vmatprep.mubr.bf16.mxu0 0
  %1455 = vmatmul.mubr.bf16.gmra.mrb[0].mxu0 %v308
  %v1456 = vpop.f32.mrb[0].mxu0
  %v1457 = vadd.f32 %v1369, %v1456
  %v1458 = vpop.f32.mrb[0].mxu0
  %v1459 = vpop.f32.mrb[0].mxu0
  %v1460 = vadd.f32 %v1372, %v1459
  %v1461 = vpop.f32.mrb[0].mxu0
  %1462 = vmatprep.mubr.bf16.mxu0 0
  %1463 = vmatmul.mubr.bf16.gmra.mrb[0].mxu0 %v311
  %v1464 = vpop.f32.mrb[0].mxu0
  %v1465 = vadd.f32 %v1377, %v1464
  %v1466 = vpop.f32.mrb[0].mxu0
  %v1467 = vpop.f32.mrb[0].mxu0
  %v1468 = vadd.f32 %v1380, %v1467
  %v1469 = vpop.f32.mrb[0].mxu0
  %1470 = vmatprep.mubr.bf16.mxu0 0
  %1471 = vmatmul.mubr.bf16.gmra.mrb[0].mxu0 %v314
  %v1472 = vpop.f32.mrb[0].mxu0
  %v1473 = vadd.f32 %v1385, %v1472
  %v1474 = vpop.f32.mrb[0].mxu0
  %v1475 = vpop.f32.mrb[0].mxu0
  %v1476 = vpop.f32.mrb[0].mxu0
  %1477 = vdwg.mxu0
  %v1478 = vmax.f32 %v1145, %v1425
  %v1479 = vmax.f32 %v1146, %v1428
  %v1480 = vmax.f32 %v1147, %v1433
  %v1481 = vmax.f32 %v1148, %v1436
  %v1482 = vmax.f32 %v1149, %v1441
  %v1483 = vmax.f32 %v1150, %v1444
  %v1484 = vmax.f32 %v1151, %v1449
  %v1485 = vmax.f32 %v1152, %v1452
  %v1486 = vmax.f32 %v1153, %v1457
  %v1487 = vmax.f32 %v1154, %v1460
  %v1488 = vmax.f32 %v1155, %v1465
  %v1489 = vmax.f32 %v1156, %v1468
  %v1490 = vmax.f32 %v1157, %v1473
  %v1491 = vld [vmem:[%s5] sm:$0x1]
  %v1493 = vlaneseq
  %v1494 = vshrl.u32 %v1493, 7
  %v1495 = vsub.s32 0, %v1494
  %v1496 = vrot.slane %v1491, %v1495
  %v1498 = vadd.f32 %v1478, %v1496
  %v1499 = vadd.f32 %v1479, %v1496
  %v1500 = vadd.f32 %v1480, %v1496
  %v1501 = vadd.f32 %v1481, %v1496
  %v1502 = vadd.f32 %v1482, %v1496
  %v1503 = vadd.f32 %v1483, %v1496
  %v1504 = vadd.f32 %v1484, %v1496
  %v1505 = vadd.f32 %v1485, %v1496
  %v1506 = vadd.f32 %v1486, %v1496
  %v1507 = vadd.f32 %v1487, %v1496
  %v1508 = vadd.f32 %v1488, %v1496
  %v1509 = vadd.f32 %v1489, %v1496
  %v1510 = vadd.f32 %v1490, %v1496
  %v1511 = vmax.f32 %v1498, 0.0
  %v1512 = vmax.f32 %v1499, 0.0
  %v1513 = vmax.f32 %v1500, 0.0
  %v1514 = vmax.f32 %v1501, 0.0
  %v1515 = vmax.f32 %v1502, 0.0
  %v1516 = vmax.f32 %v1503, 0.0
  %v1517 = vmax.f32 %v1504, 0.0
  %v1518 = vmax.f32 %v1505, 0.0
  %v1519 = vmax.f32 %v1506, 0.0
  %v1520 = vmax.f32 %v1507, 0.0
  %v1521 = vmax.f32 %v1508, 0.0
  %v1522 = vmax.f32 %v1509, 0.0
  %v1523 = vmax.f32 %v1510, 0.0
  %v1524 = vpack.c.bf16 %v1512, %v1511
  %v1525 = vpack.c.bf16 %v1514, %v1513
  %v1526 = vpack.c.bf16 %v1516, %v1515
  %v1527 = vpack.c.bf16 %v1518, %v1517
  %v1528 = vpack.c.bf16 %v1520, %v1519
  %v1529 = vpack.c.bf16 %v1522, %v1521
  %v1530 = vpack.c.bf16 %v1523, %v1523
  %v1538 = vunpack.c.l.b16 %v1524
  %v1539 = vunpack.c.h.b16 %v1524
  %v1540 = vunpack.c.l.b16 %v1525
  %v1541 = vunpack.c.h.b16 %v1525
  %v1542 = vunpack.c.l.b16 %v1526
  %v1543 = vunpack.c.h.b16 %v1526
  %v1544 = vunpack.c.l.b16 %v1527
  %v1545 = vunpack.c.h.b16 %v1527
  %v1546 = vunpack.c.l.b16 %v1528
  %v1547 = vunpack.c.h.b16 %v1528
  %v1548 = vunpack.c.l.b16 %v1529
  %v1549 = vunpack.c.h.b16 %v1529
  %v1550 = vunpack.c.l.b16 %v1530
  %v1551 = vpack.c.b16 %v1538, %v1538
  %v1552 = vpack.c.b16 %v1539, %v1539
  %v1553 = vpack.c.b16 %v1540, %v1540
  %v1554 = vpack.c.b16 %v1541, %v1541
  %v1555 = vpack.c.b16 %v1542, %v1542
  %v1556 = vpack.c.b16 %v1543, %v1543
  %v1557 = vpack.c.b16 %v1544, %v1544
  %v1558 = vpack.c.b16 %v1545, %v1545
  %v1559 = vpack.c.b16 %v1546, %v1546
  %v1560 = vpack.c.b16 %v1547, %v1547
  %v1561 = vpack.c.b16 %v1548, %v1548
  %v1562 = vpack.c.b16 %v1549, %v1549
  %v1563 = vpack.c.b16 %v1550, %v1550
  %vm1577 = vcmask 519168
  %1578 = vst.msk [vmem:[%s6] sm:$0xf] %vm1577, %v1551
  %1579 = vst.msk [vmem:[%s6 + $0x4] sm:$0xf] %vm1577, %v1552
  %1580 = vst.msk [vmem:[%s6 + $0x8] sm:$0xf] %vm1577, %v1553
  %1581 = vst.msk [vmem:[%s6 + $0xc] sm:$0xf] %vm1577, %v1554
  %1582 = vst.msk [vmem:[%s6 + $0x10] sm:$0xf] %vm1577, %v1555
  %1583 = vst.msk [vmem:[%s6 + $0x14] sm:$0xf] %vm1577, %v1556
  %1584 = vst.msk [vmem:[%s6 + $0x18] sm:$0xf] %vm1577, %v1557
  %1585 = vst.msk [vmem:[%s6 + $0x1c] sm:$0xf] %vm1577, %v1558
  %1586 = vst.msk [vmem:[%s6 + $0x20] sm:$0xf] %vm1577, %v1559
  %1587 = vst.msk [vmem:[%s6 + $0x24] sm:$0xf] %vm1577, %v1560
  %1588 = vst.msk [vmem:[%s6 + $0x28] sm:$0xf] %vm1577, %v1561
  %1589 = vst.msk [vmem:[%s6 + $0x2c] sm:$0xf] %vm1577, %v1562
  %1590 = vst.msk [vmem:[%s6 + $0x30] sm:$0xf] %vm1577, %v1563
  // Predicated region
  $region26: #{can_forward.5} parent=0 // pred_check
    _
  $region27: #{can_forward.5} parent=0 // pred_check_branch
    %1592 = sbr.rel (0) target = $region29
  $region28: #{can_forward.5} parent=0 // pred_region
    _
  $region29: #{can_forward.5} parent=0 // pred_fallthru
    _
  // Predicated region
  $region30: #{can_forward.5} parent=0 // pred_check
    _
  $region31: #{can_forward.5} parent=0 // pred_check_branch
    %1594 = sbr.rel (0) target = $region33
  $region32: #{can_forward.5} parent=0 // pred_region
    _
  $region33: #{can_forward.5} parent=0 // pred_fallthru
    _

// kernel: can_forward.6
$region0: #{can_forward.6}
  #allocation0 [shape = 'u32[]', space=smem, size = 0x4, offset = 0x4, fixed_abs, tag = 'smem constant byte address 0x4 - core index']
  #allocation1 [shape = 'u32[144,128]{1,0:T(1,128)}', space=vmem, size = 0x12000, scoped, tag = 'internal scratch']
  %s0 = inlined_call_operand.vmem [shape: bf16[24,576], index: 0, kind: input, shape index: {}]
  %s1 = inlined_call_operand.vmem [shape: bf16[576,128], index: 1, kind: input, shape index: {}]
  %s2 = inlined_call_operand.vmem [shape: bf16[576,128], index: 2, kind: input, shape index: {}]
  %s3 = inlined_call_operand.vmem [shape: bf16[576,128], index: 3, kind: input, shape index: {}]
  %s4 = inlined_call_operand.vmem [shape: bf16[576,128], index: 4, kind: input, shape index: {}]
  %s5 = inlined_call_operand.vmem [shape: f32[1,128], index: 5, kind: input, shape index: {}]
  %s6 = inlined_call_operand.vmem [shape: bf16[24,128], index: 6, kind: output, shape index: {}]
  %s7 = sld [smem:[#allocation0]]
  $region34: #{can_forward.6} parent=0
    _
  %s9 = ssub.s32 1, %s7
  %s10 = scalar_select 0, %s9, %s7
  // Predicated region
  $region2: #{can_forward.6} parent=0 // pred_check
    _
  $region3: #{can_forward.6} parent=0 // pred_check_branch
    %12 = sbr.rel (0) target = $region5
  $region4: #{can_forward.6} parent=0 // pred_region
    _
  $region5: #{can_forward.6} parent=0 // pred_fallthru
    _
  // Predicated region
  $region6: #{can_forward.6} parent=0 // pred_check
    _
  $region7: #{can_forward.6} parent=0 // pred_check_branch
    %14 = sbr.rel (0) target = $region9
  $region8: #{can_forward.6} parent=0 // pred_region
    _
  $region9: #{can_forward.6} parent=0 // pred_fallthru
    _
  // Predicated region
  $region10: #{can_forward.6} parent=0 // pred_check
    _
  $region11: #{can_forward.6} parent=0 // pred_check_branch
    %16 = sbr.rel (0) target = $region13
  $region12: #{can_forward.6} parent=0 // pred_region
    _
  $region13: #{can_forward.6} parent=0 // pred_fallthru
    _
  // Predicated region
  $region14: #{can_forward.6} parent=0 // pred_check
    _
  $region15: #{can_forward.6} parent=0 // pred_check_branch
    %18 = sbr.rel (0) target = $region17
  $region16: #{can_forward.6} parent=0 // pred_region
    _
  $region17: #{can_forward.6} parent=0 // pred_fallthru
    _
  // Predicated region
  $region18: #{can_forward.6} parent=0 // pred_check
    _
  $region19: #{can_forward.6} parent=0 // pred_check_branch
    %20 = sbr.rel (0) target = $region21
  $region20: #{can_forward.6} parent=0 // pred_region
    _
  $region21: #{can_forward.6} parent=0 // pred_fallthru
    _
  // Predicated region
  $region22: #{can_forward.6} parent=0 // pred_check
    _
  $region23: #{can_forward.6} parent=0 // pred_check_branch
    %22 = sbr.rel (0) target = $region25
  $region24: #{can_forward.6} parent=0 // pred_region
    _
  $region25: #{can_forward.6} parent=0 // pred_fallthru
    _
  %v24 = vld [vmem:[%s0] sm:$0xff]
  %v25 = vld [vmem:[%s0 + $0x8] sm:$0xff]
  %v26 = vld [vmem:[%s0 + $0x10] sm:$0xf]
  %v27 = vld [vmem:[%s0 + $0x14] sm:$0xff]
  %v28 = vld [vmem:[%s0 + $0x1c] sm:$0xff]
  %v29 = vld [vmem:[%s0 + $0x24] sm:$0xf]
  %v30 = vld [vmem:[%s0 + $0x28] sm:$0xff]
  %v31 = vld [vmem:[%s0 + $0x30] sm:$0xff]
  %v32 = vld [vmem:[%s0 + $0x38] sm:$0xf]
  %v33 = vld [vmem:[%s1] sm:$0xf]
  %v34 = vld [vmem:[%s1 + $0x4] sm:$0xf]
  %v35 = vld [vmem:[%s1 + $0x8] sm:$0xf]
  %v36 = vld [vmem:[%s1 + $0xc] sm:$0xf]
  %v37 = vld [vmem:[%s1 + $0x10] sm:$0xf]
  %v38 = vld [vmem:[%s1 + $0x14] sm:$0xf]
  %v39 = vld [vmem:[%s1 + $0x18] sm:$0xf]
  %v40 = vld [vmem:[%s1 + $0x1c] sm:$0xf]
  %v41 = vld [vmem:[%s1 + $0x20] sm:$0xf]
  %v42 = vld [vmem:[%s1 + $0x24] sm:$0xf]
  %v43 = vld [vmem:[%s1 + $0x28] sm:$0xf]
  %v44 = vld [vmem:[%s1 + $0x2c] sm:$0xf]
  %v45 = vld [vmem:[%s1 + $0x30] sm:$0xf]
  %v46 = vld [vmem:[%s1 + $0x34] sm:$0xf]
  %v47 = vld [vmem:[%s1 + $0x38] sm:$0xf]
  %v48 = vld [vmem:[%s1 + $0x3c] sm:$0xf]
  %v49 = vld [vmem:[%s1 + $0x40] sm:$0xf]
  %v50 = vld [vmem:[%s1 + $0x44] sm:$0xf]
  %v51 = vld [vmem:[%s1 + $0x48] sm:$0xf]
  %v52 = vld [vmem:[%s1 + $0x4c] sm:$0xf]
  %v53 = vld [vmem:[%s1 + $0x50] sm:$0xf]
  %v54 = vld [vmem:[%s1 + $0x54] sm:$0xf]
  %v55 = vld [vmem:[%s1 + $0x58] sm:$0xf]
  %v56 = vld [vmem:[%s1 + $0x5c] sm:$0xf]
  %v57 = vld [vmem:[%s1 + $0x60] sm:$0xf]
  %v58 = vld [vmem:[%s1 + $0x64] sm:$0xf]
  %v59 = vld [vmem:[%s1 + $0x68] sm:$0xf]
  %v60 = vld [vmem:[%s1 + $0x6c] sm:$0xf]
  %v61 = vld [vmem:[%s1 + $0x70] sm:$0xf]
  %v62 = vld [vmem:[%s1 + $0x74] sm:$0xf]
  %v63 = vld [vmem:[%s1 + $0x78] sm:$0xf]
  %v64 = vld [vmem:[%s1 + $0x7c] sm:$0xf]
  %v65 = vld [vmem:[%s1 + $0x80] sm:$0xf]
  %v66 = vld [vmem:[%s1 + $0x84] sm:$0xf]
  %v67 = vld [vmem:[%s1 + $0x88] sm:$0xf]
  %v68 = vld [vmem:[%s1 + $0x8c] sm:$0xf]
  %v69 = vld [vmem:[%s1 + $0x90] sm:$0xf]
  %v70 = vld [vmem:[%s1 + $0x94] sm:$0xf]
  %v71 = vld [vmem:[%s1 + $0x98] sm:$0xf]
  %v72 = vld [vmem:[%s1 + $0x9c] sm:$0xf]
  %v73 = vld [vmem:[%s1 + $0xa0] sm:$0xf]
  %v74 = vld [vmem:[%s1 + $0xa4] sm:$0xf]
  %v75 = vld [vmem:[%s1 + $0xa8] sm:$0xf]
  %v76 = vld [vmem:[%s1 + $0xac] sm:$0xf]
  %v77 = vld [vmem:[%s1 + $0xb0] sm:$0xf]
  %v78 = vld [vmem:[%s1 + $0xb4] sm:$0xf]
  %v79 = vld [vmem:[%s1 + $0xb8] sm:$0xf]
  %v80 = vld [vmem:[%s1 + $0xbc] sm:$0xf]
  %v81 = vld [vmem:[%s1 + $0xc0] sm:$0xf]
  %v82 = vld [vmem:[%s1 + $0xc4] sm:$0xf]
  %v83 = vld [vmem:[%s1 + $0xc8] sm:$0xf]
  %v84 = vld [vmem:[%s1 + $0xcc] sm:$0xf]
  %v85 = vld [vmem:[%s1 + $0xd0] sm:$0xf]
  %v86 = vld [vmem:[%s1 + $0xd4] sm:$0xf]
  %v87 = vld [vmem:[%s1 + $0xd8] sm:$0xf]
  %v88 = vld [vmem:[%s1 + $0xdc] sm:$0xf]
  %v89 = vld [vmem:[%s1 + $0xe0] sm:$0xf]
  %v90 = vld [vmem:[%s1 + $0xe4] sm:$0xf]
  %v91 = vld [vmem:[%s1 + $0xe8] sm:$0xf]
  %v92 = vld [vmem:[%s1 + $0xec] sm:$0xf]
  %v93 = vld [vmem:[%s1 + $0xf0] sm:$0xf]
  %v94 = vld [vmem:[%s1 + $0xf4] sm:$0xf]
  %v95 = vld [vmem:[%s1 + $0xf8] sm:$0xf]
  %v96 = vld [vmem:[%s1 + $0xfc] sm:$0xf]
  %v97 = vld [vmem:[%s1 + $0x100] sm:$0xf]
  %v98 = vld [vmem:[%s1 + $0x104] sm:$0xf]
  %v99 = vld [vmem:[%s1 + $0x108] sm:$0xf]
  %v100 = vld [vmem:[%s1 + $0x10c] sm:$0xf]
  %v101 = vld [vmem:[%s1 + $0x110] sm:$0xf]
  %v102 = vld [vmem:[%s1 + $0x114] sm:$0xf]
  %v103 = vld [vmem:[%s1 + $0x118] sm:$0xf]
  %v104 = vld [vmem:[%s1 + $0x11c] sm:$0xf]
  %v114 = vunpack.c.l.b16 %v24
  %v115 = vunpack.c.h.b16 %v24
  %v116 = vunpack.c.l.b16 %v25
  %v117 = vunpack.c.h.b16 %v25
  %v118 = vunpack.c.l.b16 %v26
  %v119 = vunpack.c.l.b16 %v27
  %v120 = vunpack.c.h.b16 %v27
  %v121 = vunpack.c.l.b16 %v28
  %v122 = vunpack.c.h.b16 %v28
  %v123 = vunpack.c.l.b16 %v29
  %v124 = vunpack.c.l.b16 %v30
  %v125 = vunpack.c.h.b16 %v30
  %v126 = vunpack.c.l.b16 %v31
  %v127 = vunpack.c.h.b16 %v31
  %v128 = vunpack.c.l.b16 %v32
  %v129 = vpack.c.b16 %v119, %v114
  %v130 = vpack.c.b16 %v120, %v115
  %v131 = vpack.c.b16 %v121, %v116
  %v132 = vpack.c.b16 %v122, %v117
  %v133 = vpack.c.b16 %v123, %v118
  %v134 = vpack.c.b16 %v124, %v124
  %v135 = vpack.c.b16 %v125, %v125
  %v136 = vpack.c.b16 %v126, %v126
  %v137 = vpack.c.b16 %v127, %v127
  %v138 = vpack.c.b16 %v128, %v128
  %v219 = vunpack.c.l.b16 %v33
  %v220 = vunpack.c.l.b16 %v34
  %v221 = vunpack.c.l.b16 %v35
  %v222 = vunpack.c.l.b16 %v36
  %v223 = vunpack.c.l.b16 %v37
  %v224 = vunpack.c.l.b16 %v38
  %v225 = vunpack.c.l.b16 %v39
  %v226 = vunpack.c.l.b16 %v40
  %v227 = vunpack.c.l.b16 %v41
  %v228 = vunpack.c.l.b16 %v42
  %v229 = vunpack.c.l.b16 %v43
  %v230 = vunpack.c.l.b16 %v44
  %v231 = vunpack.c.l.b16 %v45
  %v232 = vunpack.c.l.b16 %v46
  %v233 = vunpack.c.l.b16 %v47
  %v234 = vunpack.c.l.b16 %v48
  %v235 = vunpack.c.l.b16 %v49
  %v236 = vunpack.c.l.b16 %v50
  %v237 = vunpack.c.l.b16 %v51
  %v238 = vunpack.c.l.b16 %v52
  %v239 = vunpack.c.l.b16 %v53
  %v240 = vunpack.c.l.b16 %v54
  %v241 = vunpack.c.l.b16 %v55
  %v242 = vunpack.c.l.b16 %v56
  %v243 = vunpack.c.l.b16 %v57
  %v244 = vunpack.c.l.b16 %v58
  %v245 = vunpack.c.l.b16 %v59
  %v246 = vunpack.c.l.b16 %v60
  %v247 = vunpack.c.l.b16 %v61
  %v248 = vunpack.c.l.b16 %v62
  %v249 = vunpack.c.l.b16 %v63
  %v250 = vunpack.c.l.b16 %v64
  %v251 = vunpack.c.l.b16 %v65
  %v252 = vunpack.c.l.b16 %v66
  %v253 = vunpack.c.l.b16 %v67
  %v254 = vunpack.c.l.b16 %v68
  %v255 = vunpack.c.l.b16 %v69
  %v256 = vunpack.c.l.b16 %v70
  %v257 = vunpack.c.l.b16 %v71
  %v258 = vunpack.c.l.b16 %v72
  %v259 = vunpack.c.l.b16 %v73
  %v260 = vunpack.c.l.b16 %v74
  %v261 = vunpack.c.l.b16 %v75
  %v262 = vunpack.c.l.b16 %v76
  %v263 = vunpack.c.l.b16 %v77
  %v264 = vunpack.c.l.b16 %v78
  %v265 = vunpack.c.l.b16 %v79
  %v266 = vunpack.c.l.b16 %v80
  %v267 = vunpack.c.l.b16 %v81
  %v268 = vunpack.c.l.b16 %v82
  %v269 = vunpack.c.l.b16 %v83
  %v270 = vunpack.c.l.b16 %v84
  %v271 = vunpack.c.l.b16 %v85
  %v272 = vunpack.c.l.b16 %v86
  %v273 = vunpack.c.l.b16 %v87
  %v274 = vunpack.c.l.b16 %v88
  %v275 = vunpack.c.l.b16 %v89
  %v276 = vunpack.c.l.b16 %v90
  %v277 = vunpack.c.l.b16 %v91
  %v278 = vunpack.c.l.b16 %v92
  %v279 = vunpack.c.l.b16 %v93
  %v280 = vunpack.c.l.b16 %v94
  %v281 = vunpack.c.l.b16 %v95
  %v282 = vunpack.c.l.b16 %v96
  %v283 = vunpack.c.l.b16 %v97
  %v284 = vunpack.c.l.b16 %v98
  %v285 = vunpack.c.l.b16 %v99
  %v286 = vunpack.c.l.b16 %v100
  %v287 = vunpack.c.l.b16 %v101
  %v288 = vunpack.c.l.b16 %v102
  %v289 = vunpack.c.l.b16 %v103
  %v290 = vunpack.c.l.b16 %v104
  %v291 = vpack.c.b16 %v220, %v219
  %v292 = vpack.c.b16 %v222, %v221
  %v293 = vpack.c.b16 %v224, %v223
  %v294 = vpack.c.b16 %v226, %v225
  %v295 = vpack.c.b16 %v228, %v227
  %v296 = vpack.c.b16 %v230, %v229
  %v297 = vpack.c.b16 %v232, %v231
  %v298 = vpack.c.b16 %v234, %v233
  %v299 = vpack.c.b16 %v236, %v235
  %v300 = vpack.c.b16 %v238, %v237
  %v301 = vpack.c.b16 %v240, %v239
  %v302 = vpack.c.b16 %v242, %v241
  %v303 = vpack.c.b16 %v244, %v243
  %v304 = vpack.c.b16 %v246, %v245
  %v305 = vpack.c.b16 %v248, %v247
  %v306 = vpack.c.b16 %v250, %v249
  %v307 = vpack.c.b16 %v252, %v251
  %v308 = vpack.c.b16 %v254, %v253
  %v309 = vpack.c.b16 %v256, %v255
  %v310 = vpack.c.b16 %v258, %v257
  %v311 = vpack.c.b16 %v260, %v259
  %v312 = vpack.c.b16 %v262, %v261
  %v313 = vpack.c.b16 %v264, %v263
  %v314 = vpack.c.b16 %v266, %v265
  %v315 = vpack.c.b16 %v268, %v267
  %v316 = vpack.c.b16 %v270, %v269
  %v317 = vpack.c.b16 %v272, %v271
  %v318 = vpack.c.b16 %v274, %v273
  %v319 = vpack.c.b16 %v276, %v275
  %v320 = vpack.c.b16 %v278, %v277
  %v321 = vpack.c.b16 %v280, %v279
  %v322 = vpack.c.b16 %v282, %v281
  %v323 = vpack.c.b16 %v284, %v283
  %v324 = vpack.c.b16 %v286, %v285
  %v325 = vpack.c.b16 %v288, %v287
  %v326 = vpack.c.b16 %v290, %v289
  %vm363 = vcmask 523264
  %v365 = vsel %vm363, %v133, 0
  %v368 = vsel %vm363, %v138, 0
  %370 = vmatprep.subr.bf16.mxu0 0
  %371 = vmatpush1.bf16.msra.mxu0 %v291
  %372 = vmatprep.subr.bf16.mxu0 0
  %373 = vmatpush1.bf16.msra.mxu0 %v292
  %374 = vmatprep.subr.bf16.mxu0 0
  %375 = vmatpush1.bf16.msra.mxu0 %v293
  %376 = vmatprep.subr.bf16.mxu0 0
  %377 = vmatpush1.bf16.msra.mxu0 %v294
  %378 = vmatprep.subr.bf16.mxu0 0
  %379 = vmatpush1.bf16.msra.mxu0 %v295
  %380 = vmatprep.subr.bf16.mxu0 0
  %381 = vmatpush1.bf16.msra.mxu0 %v296
  %382 = vmatprep.subr.bf16.mxu0 0
  %383 = vmatpush1.bf16.msra.mxu0 %v297
  %384 = vmatprep.subr.bf16.mxu0 0
  %385 = vmatpush1.bf16.msra.mxu0 %v298
  %386 = vmatprep.subr.bf16.mxu0 0
  %387 = vmatpush1.bf16.msra.mxu0 %v299
  %388 = vmatprep.subr.bf16.mxu0 0
  %389 = vmatpush1.bf16.msra.mxu0 %v300
  %390 = vmatprep.subr.bf16.mxu0 0
  %391 = vmatpush1.bf16.msra.mxu0 %v301
  %392 = vmatprep.subr.bf16.mxu0 0
  %393 = vmatpush1.bf16.msra.mxu0 %v302
  %394 = vmatprep.subr.bf16.mxu0 0
  %395 = vmatpush1.bf16.msra.mxu0 %v303
  %396 = vmatprep.subr.bf16.mxu0 0
  %397 = vmatpush1.bf16.msra.mxu0 %v304
  %398 = vmatprep.subr.bf16.mxu0 0
  %399 = vmatpush1.bf16.msra.mxu0 %v305
  %400 = vmatprep.subr.bf16.mxu0 0
  %401 = vmatpush1.bf16.msra.mxu0 %v306
  %402 = vmatprep.mubr.bf16.mxu0 %v130
  %403 = vmatmul.mubr.bf16.gmra.mrb[0].mxu0 %v129
  %v404 = vpop.f32.mrb[0].mxu0
  %v405 = vadd.f32 0.0, %v404
  %v406 = vpop.f32.mrb[0].mxu0
  %v407 = vpop.f32.mrb[0].mxu0
  %v408 = vadd.f32 0.0, %v407
  %v409 = vpop.f32.mrb[0].mxu0
  %410 = vmatprep.mubr.bf16.mxu0 %v135
  %411 = vmatmul.mubr.bf16.gmra.mrb[0].mxu0 %v134
  %v412 = vpop.f32.mrb[0].mxu0
  %v413 = vadd.f32 0.0, %v412
  %v414 = vpop.f32.mrb[0].mxu0
  %v415 = vpop.f32.mrb[0].mxu0
  %v416 = vpop.f32.mrb[0].mxu0
  %417 = vdwg.mxu0
  %418 = vmatprep.subr.bf16.mxu0 0
  %419 = vmatpush1.bf16.msra.mxu0 %v307
  %420 = vmatprep.subr.bf16.mxu0 0
  %421 = vmatpush1.bf16.msra.mxu0 %v308
  %422 = vmatprep.subr.bf16.mxu0 0
  %423 = vmatpush1.bf16.msra.mxu0 %v309
  %424 = vmatprep.subr.bf16.mxu0 0
  %425 = vmatpush1.bf16.msra.mxu0 %v310
  %426 = vmatprep.subr.bf16.mxu0 0
  %427 = vmatpush1.bf16.msra.mxu0 %v311
  %428 = vmatprep.subr.bf16.mxu0 0
  %429 = vmatpush1.bf16.msra.mxu0 %v312
  %430 = vmatprep.subr.bf16.mxu0 0
  %431 = vmatpush1.bf16.msra.mxu0 %v313
  %432 = vmatprep.subr.bf16.mxu0 0
  %433 = vmatpush1.bf16.msra.mxu0 %v314
  %434 = vmatprep.subr.bf16.mxu0 0
  %435 = vmatpush1.bf16.msra.mxu0 %v315
  %436 = vmatprep.subr.bf16.mxu0 0
  %437 = vmatpush1.bf16.msra.mxu0 %v316
  %438 = vmatprep.subr.bf16.mxu0 0
  %439 = vmatpush1.bf16.msra.mxu0 %v317
  %440 = vmatprep.subr.bf16.mxu0 0
  %441 = vmatpush1.bf16.msra.mxu0 %v318
  %442 = vmatprep.subr.bf16.mxu0 0
  %443 = vmatpush1.bf16.msra.mxu0 %v319
  %444 = vmatprep.subr.bf16.mxu0 0
  %445 = vmatpush1.bf16.msra.mxu0 %v320
  %446 = vmatprep.subr.bf16.mxu0 0
  %447 = vmatpush1.bf16.msra.mxu0 %v321
  %448 = vmatprep.subr.bf16.mxu0 0
  %449 = vmatpush1.bf16.msra.mxu0 %v322
  %450 = vmatprep.mubr.bf16.mxu0 %v132
  %451 = vmatmul.mubr.bf16.gmra.mrb[0].mxu0 %v131
  %v452 = vpop.f32.mrb[0].mxu0
  %v453 = vadd.f32 %v405, %v452
  %v454 = vpop.f32.mrb[0].mxu0
  %v455 = vpop.f32.mrb[0].mxu0
  %v456 = vadd.f32 %v408, %v455
  %v457 = vpop.f32.mrb[0].mxu0
  %458 = vmatprep.mubr.bf16.mxu0 %v137
  %459 = vmatmul.mubr.bf16.gmra.mrb[0].mxu0 %v136
  %v460 = vpop.f32.mrb[0].mxu0
  %v461 = vadd.f32 %v413, %v460
  %v462 = vpop.f32.mrb[0].mxu0
  %v463 = vpop.f32.mrb[0].mxu0
  %v464 = vpop.f32.mrb[0].mxu0
  %465 = vdwg.mxu0
  %466 = vmatprep.subr.bf16.mxu0 0
  %467 = vmatpush1.bf16.msra.mxu0 %v323
  %468 = vmatprep.subr.bf16.mxu0 0
  %469 = vmatpush1.bf16.msra.mxu0 %v324
  %470 = vmatprep.subr.bf16.mxu0 0
  %471 = vmatpush1.bf16.msra.mxu0 %v325
  %472 = vmatprep.subr.bf16.mxu0 0
  %473 = vmatpush1.bf16.msra.mxu0 %v326
  %474 = vmatprep.subr.bf16.mxu0 0
  %475 = vmatpush1.bf16.msra.mxu0 0
  %476 = vmatprep.subr.bf16.mxu0 0
  %477 = vmatpush1.bf16.msra.mxu0 0
  %478 = vmatprep.subr.bf16.mxu0 0
  %479 = vmatpush1.bf16.msra.mxu0 0
  %480 = vmatprep.subr.bf16.mxu0 0
  %481 = vmatpush1.bf16.msra.mxu0 0
  %482 = vmatprep.subr.bf16.mxu0 0
  %483 = vmatpush1.bf16.msra.mxu0 0
  %484 = vmatprep.subr.bf16.mxu0 0
  %485 = vmatpush1.bf16.msra.mxu0 0
  %486 = vmatprep.subr.bf16.mxu0 0
  %487 = vmatpush1.bf16.msra.mxu0 0
  %488 = vmatprep.subr.bf16.mxu0 0
  %489 = vmatpush1.bf16.msra.mxu0 0
  %490 = vmatprep.subr.bf16.mxu0 0
  %491 = vmatpush1.bf16.msra.mxu0 0
  %492 = vmatprep.subr.bf16.mxu0 0
  %493 = vmatpush1.bf16.msra.mxu0 0
  %494 = vmatprep.subr.bf16.mxu0 0
  %495 = vmatpush1.bf16.msra.mxu0 0
  %496 = vmatprep.subr.bf16.mxu0 0
  %497 = vmatpush1.bf16.msra.mxu0 0
  %498 = vmatprep.mubr.bf16.mxu0 0
  %499 = vmatmul.mubr.bf16.gmra.mrb[0].mxu0 %v365
  %v500 = vpop.f32.mrb[0].mxu0
  %v501 = vadd.f32 %v453, %v500
  %v502 = vpop.f32.mrb[0].mxu0
  %v503 = vpop.f32.mrb[0].mxu0
  %v504 = vadd.f32 %v456, %v503
  %v505 = vpop.f32.mrb[0].mxu0
  %506 = vmatprep.mubr.bf16.mxu0 0
  %507 = vmatmul.mubr.bf16.gmra.mrb[0].mxu0 %v368
  %v508 = vpop.f32.mrb[0].mxu0
  %v509 = vadd.f32 %v461, %v508
  %v510 = vpop.f32.mrb[0].mxu0
  %v511 = vpop.f32.mrb[0].mxu0
  %v512 = vpop.f32.mrb[0].mxu0
  %513 = vdwg.mxu0
  %v514 = vld [vmem:[%s2] sm:$0xf]
  %v515 = vld [vmem:[%s2 + $0x4] sm:$0xf]
  %v516 = vld [vmem:[%s2 + $0x8] sm:$0xf]
  %v517 = vld [vmem:[%s2 + $0xc] sm:$0xf]
  %v518 = vld [vmem:[%s2 + $0x10] sm:$0xf]
  %v519 = vld [vmem:[%s2 + $0x14] sm:$0xf]
  %v520 = vld [vmem:[%s2 + $0x18] sm:$0xf]
  %v521 = vld [vmem:[%s2 + $0x1c] sm:$0xf]
  %v522 = vld [vmem:[%s2 + $0x20] sm:$0xf]
  %v523 = vld [vmem:[%s2 + $0x24] sm:$0xf]
  %v524 = vld [vmem:[%s2 + $0x28] sm:$0xf]
  %v525 = vld [vmem:[%s2 + $0x2c] sm:$0xf]
  %v526 = vld [vmem:[%s2 + $0x30] sm:$0xf]
  %v527 = vld [vmem:[%s2 + $0x34] sm:$0xf]
  %v528 = vld [vmem:[%s2 + $0x38] sm:$0xf]
  %v529 = vld [vmem:[%s2 + $0x3c] sm:$0xf]
  %v530 = vld [vmem:[%s2 + $0x40] sm:$0xf]
  %v531 = vld [vmem:[%s2 + $0x44] sm:$0xf]
  %v532 = vld [vmem:[%s2 + $0x48] sm:$0xf]
  %v533 = vld [vmem:[%s2 + $0x4c] sm:$0xf]
  %v534 = vld [vmem:[%s2 + $0x50] sm:$0xf]
  %v535 = vld [vmem:[%s2 + $0x54] sm:$0xf]
  %v536 = vld [vmem:[%s2 + $0x58] sm:$0xf]
  %v537 = vld [vmem:[%s2 + $0x5c] sm:$0xf]
  %v538 = vld [vmem:[%s2 + $0x60] sm:$0xf]
  %v539 = vld [vmem:[%s2 + $0x64] sm:$0xf]
  %v540 = vld [vmem:[%s2 + $0x68] sm:$0xf]
  %v541 = vld [vmem:[%s2 + $0x6c] sm:$0xf]
  %v542 = vld [vmem:[%s2 + $0x70] sm:$0xf]
  %v543 = vld [vmem:[%s2 + $0x74] sm:$0xf]
  %v544 = vld [vmem:[%s2 + $0x78] sm:$0xf]
  %v545 = vld [vmem:[%s2 + $0x7c] sm:$0xf]
  %v546 = vld [vmem:[%s2 + $0x80] sm:$0xf]
  %v547 = vld [vmem:[%s2 + $0x84] sm:$0xf]
  %v548 = vld [vmem:[%s2 + $0x88] sm:$0xf]
  %v549 = vld [vmem:[%s2 + $0x8c] sm:$0xf]
  %v550 = vld [vmem:[%s2 + $0x90] sm:$0xf]
  %v551 = vld [vmem:[%s2 + $0x94] sm:$0xf]
  %v552 = vld [vmem:[%s2 + $0x98] sm:$0xf]
  %v553 = vld [vmem:[%s2 + $0x9c] sm:$0xf]
  %v554 = vld [vmem:[%s2 + $0xa0] sm:$0xf]
  %v555 = vld [vmem:[%s2 + $0xa4] sm:$0xf]
  %v556 = vld [vmem:[%s2 + $0xa8] sm:$0xf]
  %v557 = vld [vmem:[%s2 + $0xac] sm:$0xf]
  %v558 = vld [vmem:[%s2 + $0xb0] sm:$0xf]
  %v559 = vld [vmem:[%s2 + $0xb4] sm:$0xf]
  %v560 = vld [vmem:[%s2 + $0xb8] sm:$0xf]
  %v561 = vld [vmem:[%s2 + $0xbc] sm:$0xf]
  %v562 = vld [vmem:[%s2 + $0xc0] sm:$0xf]
  %v563 = vld [vmem:[%s2 + $0xc4] sm:$0xf]
  %v564 = vld [vmem:[%s2 + $0xc8] sm:$0xf]
  %v565 = vld [vmem:[%s2 + $0xcc] sm:$0xf]
  %v566 = vld [vmem:[%s2 + $0xd0] sm:$0xf]
  %v567 = vld [vmem:[%s2 + $0xd4] sm:$0xf]
  %v568 = vld [vmem:[%s2 + $0xd8] sm:$0xf]
  %v569 = vld [vmem:[%s2 + $0xdc] sm:$0xf]
  %v570 = vld [vmem:[%s2 + $0xe0] sm:$0xf]
  %v571 = vld [vmem:[%s2 + $0xe4] sm:$0xf]
  %v572 = vld [vmem:[%s2 + $0xe8] sm:$0xf]
  %v573 = vld [vmem:[%s2 + $0xec] sm:$0xf]
  %v574 = vld [vmem:[%s2 + $0xf0] sm:$0xf]
  %v575 = vld [vmem:[%s2 + $0xf4] sm:$0xf]
  %v576 = vld [vmem:[%s2 + $0xf8] sm:$0xf]
  %v577 = vld [vmem:[%s2 + $0xfc] sm:$0xf]
  %v578 = vld [vmem:[%s2 + $0x100] sm:$0xf]
  %v579 = vld [vmem:[%s2 + $0x104] sm:$0xf]
  %v580 = vld [vmem:[%s2 + $0x108] sm:$0xf]
  %v581 = vld [vmem:[%s2 + $0x10c] sm:$0xf]
  %v582 = vld [vmem:[%s2 + $0x110] sm:$0xf]
  %v583 = vld [vmem:[%s2 + $0x114] sm:$0xf]
  %v584 = vld [vmem:[%s2 + $0x118] sm:$0xf]
  %v585 = vld [vmem:[%s2 + $0x11c] sm:$0xf]
  %v658 = vunpack.c.l.b16 %v514
  %v659 = vunpack.c.l.b16 %v515
  %v660 = vunpack.c.l.b16 %v516
  %v661 = vunpack.c.l.b16 %v517
  %v662 = vunpack.c.l.b16 %v518
  %v663 = vunpack.c.l.b16 %v519
  %v664 = vunpack.c.l.b16 %v520
  %v665 = vunpack.c.l.b16 %v521
  %v666 = vunpack.c.l.b16 %v522
  %v667 = vunpack.c.l.b16 %v523
  %v668 = vunpack.c.l.b16 %v524
  %v669 = vunpack.c.l.b16 %v525
  %v670 = vunpack.c.l.b16 %v526
  %v671 = vunpack.c.l.b16 %v527
  %v672 = vunpack.c.l.b16 %v528
  %v673 = vunpack.c.l.b16 %v529
  %v674 = vunpack.c.l.b16 %v530
  %v675 = vunpack.c.l.b16 %v531
  %v676 = vunpack.c.l.b16 %v532
  %v677 = vunpack.c.l.b16 %v533
  %v678 = vunpack.c.l.b16 %v534
  %v679 = vunpack.c.l.b16 %v535
  %v680 = vunpack.c.l.b16 %v536
  %v681 = vunpack.c.l.b16 %v537
  %v682 = vunpack.c.l.b16 %v538
  %v683 = vunpack.c.l.b16 %v539
  %v684 = vunpack.c.l.b16 %v540
  %v685 = vunpack.c.l.b16 %v541
  %v686 = vunpack.c.l.b16 %v542
  %v687 = vunpack.c.l.b16 %v543
  %v688 = vunpack.c.l.b16 %v544
  %v689 = vunpack.c.l.b16 %v545
  %v690 = vunpack.c.l.b16 %v546
  %v691 = vunpack.c.l.b16 %v547
  %v692 = vunpack.c.l.b16 %v548
  %v693 = vunpack.c.l.b16 %v549
  %v694 = vunpack.c.l.b16 %v550
  %v695 = vunpack.c.l.b16 %v551
  %v696 = vunpack.c.l.b16 %v552
  %v697 = vunpack.c.l.b16 %v553
  %v698 = vunpack.c.l.b16 %v554
  %v699 = vunpack.c.l.b16 %v555
  %v700 = vunpack.c.l.b16 %v556
  %v701 = vunpack.c.l.b16 %v557
  %v702 = vunpack.c.l.b16 %v558
  %v703 = vunpack.c.l.b16 %v559
  %v704 = vunpack.c.l.b16 %v560
  %v705 = vunpack.c.l.b16 %v561
  %v706 = vunpack.c.l.b16 %v562
  %v707 = vunpack.c.l.b16 %v563
  %v708 = vunpack.c.l.b16 %v564
  %v709 = vunpack.c.l.b16 %v565
  %v710 = vunpack.c.l.b16 %v566
  %v711 = vunpack.c.l.b16 %v567
  %v712 = vunpack.c.l.b16 %v568
  %v713 = vunpack.c.l.b16 %v569
  %v714 = vunpack.c.l.b16 %v570
  %v715 = vunpack.c.l.b16 %v571
  %v716 = vunpack.c.l.b16 %v572
  %v717 = vunpack.c.l.b16 %v573
  %v718 = vunpack.c.l.b16 %v574
  %v719 = vunpack.c.l.b16 %v575
  %v720 = vunpack.c.l.b16 %v576
  %v721 = vunpack.c.l.b16 %v577
  %v722 = vunpack.c.l.b16 %v578
  %v723 = vunpack.c.l.b16 %v579
  %v724 = vunpack.c.l.b16 %v580
  %v725 = vunpack.c.l.b16 %v581
  %v726 = vunpack.c.l.b16 %v582
  %v727 = vunpack.c.l.b16 %v583
  %v728 = vunpack.c.l.b16 %v584
  %v729 = vunpack.c.l.b16 %v585
  %v730 = vpack.c.b16 %v659, %v658
  %v731 = vpack.c.b16 %v661, %v660
  %v732 = vpack.c.b16 %v663, %v662
  %v733 = vpack.c.b16 %v665, %v664
  %v734 = vpack.c.b16 %v667, %v666
  %v735 = vpack.c.b16 %v669, %v668
  %v736 = vpack.c.b16 %v671, %v670
  %v737 = vpack.c.b16 %v673, %v672
  %v738 = vpack.c.b16 %v675, %v674
  %v739 = vpack.c.b16 %v677, %v676
  %v740 = vpack.c.b16 %v679, %v678
  %v741 = vpack.c.b16 %v681, %v680
  %v742 = vpack.c.b16 %v683, %v682
  %v743 = vpack.c.b16 %v685, %v684
  %v744 = vpack.c.b16 %v687, %v686
  %v745 = vpack.c.b16 %v689, %v688
  %v746 = vpack.c.b16 %v691, %v690
  %v747 = vpack.c.b16 %v693, %v692
  %v748 = vpack.c.b16 %v695, %v694
  %v749 = vpack.c.b16 %v697, %v696
  %v750 = vpack.c.b16 %v699, %v698
  %v751 = vpack.c.b16 %v701, %v700
  %v752 = vpack.c.b16 %v703, %v702
  %v753 = vpack.c.b16 %v705, %v704
  %v754 = vpack.c.b16 %v707, %v706
  %v755 = vpack.c.b16 %v709, %v708
  %v756 = vpack.c.b16 %v711, %v710
  %v757 = vpack.c.b16 %v713, %v712
  %v758 = vpack.c.b16 %v715, %v714
  %v759 = vpack.c.b16 %v717, %v716
  %v760 = vpack.c.b16 %v719, %v718
  %v761 = vpack.c.b16 %v721, %v720
  %v762 = vpack.c.b16 %v723, %v722
  %v763 = vpack.c.b16 %v725, %v724
  %v764 = vpack.c.b16 %v727, %v726
  %v765 = vpack.c.b16 %v729, %v728
  %802 = vmatprep.subr.bf16.mxu0 0
  %803 = vmatpush1.bf16.msra.mxu0 %v730
  %804 = vmatprep.subr.bf16.mxu0 0
  %805 = vmatpush1.bf16.msra.mxu0 %v731
  %806 = vmatprep.subr.bf16.mxu0 0
  %807 = vmatpush1.bf16.msra.mxu0 %v732
  %808 = vmatprep.subr.bf16.mxu0 0
  %809 = vmatpush1.bf16.msra.mxu0 %v733
  %810 = vmatprep.subr.bf16.mxu0 0
  %811 = vmatpush1.bf16.msra.mxu0 %v734
  %812 = vmatprep.subr.bf16.mxu0 0
  %813 = vmatpush1.bf16.msra.mxu0 %v735
  %814 = vmatprep.subr.bf16.mxu0 0
  %815 = vmatpush1.bf16.msra.mxu0 %v736
  %816 = vmatprep.subr.bf16.mxu0 0
  %817 = vmatpush1.bf16.msra.mxu0 %v737
  %818 = vmatprep.subr.bf16.mxu0 0
  %819 = vmatpush1.bf16.msra.mxu0 %v738
  %820 = vmatprep.subr.bf16.mxu0 0
  %821 = vmatpush1.bf16.msra.mxu0 %v739
  %822 = vmatprep.subr.bf16.mxu0 0
  %823 = vmatpush1.bf16.msra.mxu0 %v740
  %824 = vmatprep.subr.bf16.mxu0 0
  %825 = vmatpush1.bf16.msra.mxu0 %v741
  %826 = vmatprep.subr.bf16.mxu0 0
  %827 = vmatpush1.bf16.msra.mxu0 %v742
  %828 = vmatprep.subr.bf16.mxu0 0
  %829 = vmatpush1.bf16.msra.mxu0 %v743
  %830 = vmatprep.subr.bf16.mxu0 0
  %831 = vmatpush1.bf16.msra.mxu0 %v744
  %832 = vmatprep.subr.bf16.mxu0 0
  %833 = vmatpush1.bf16.msra.mxu0 %v745
  %834 = vmatprep.mubr.bf16.mxu0 %v130
  %835 = vmatmul.mubr.bf16.gmra.mrb[0].mxu0 %v129
  %v836 = vpop.f32.mrb[0].mxu0
  %v837 = vadd.f32 0.0, %v836
  %v838 = vpop.f32.mrb[0].mxu0
  %v839 = vpop.f32.mrb[0].mxu0
  %v840 = vadd.f32 0.0, %v839
  %v841 = vpop.f32.mrb[0].mxu0
  %842 = vmatprep.mubr.bf16.mxu0 %v135
  %843 = vmatmul.mubr.bf16.gmra.mrb[0].mxu0 %v134
  %v844 = vpop.f32.mrb[0].mxu0
  %v845 = vadd.f32 0.0, %v844
  %v846 = vpop.f32.mrb[0].mxu0
  %v847 = vpop.f32.mrb[0].mxu0
  %v848 = vpop.f32.mrb[0].mxu0
  %849 = vdwg.mxu0
  %850 = vmatprep.subr.bf16.mxu0 0
  %851 = vmatpush1.bf16.msra.mxu0 %v746
  %852 = vmatprep.subr.bf16.mxu0 0
  %853 = vmatpush1.bf16.msra.mxu0 %v747
  %854 = vmatprep.subr.bf16.mxu0 0
  %855 = vmatpush1.bf16.msra.mxu0 %v748
  %856 = vmatprep.subr.bf16.mxu0 0
  %857 = vmatpush1.bf16.msra.mxu0 %v749
  %858 = vmatprep.subr.bf16.mxu0 0
  %859 = vmatpush1.bf16.msra.mxu0 %v750
  %860 = vmatprep.subr.bf16.mxu0 0
  %861 = vmatpush1.bf16.msra.mxu0 %v751
  %862 = vmatprep.subr.bf16.mxu0 0
  %863 = vmatpush1.bf16.msra.mxu0 %v752
  %864 = vmatprep.subr.bf16.mxu0 0
  %865 = vmatpush1.bf16.msra.mxu0 %v753
  %866 = vmatprep.subr.bf16.mxu0 0
  %867 = vmatpush1.bf16.msra.mxu0 %v754
  %868 = vmatprep.subr.bf16.mxu0 0
  %869 = vmatpush1.bf16.msra.mxu0 %v755
  %870 = vmatprep.subr.bf16.mxu0 0
  %871 = vmatpush1.bf16.msra.mxu0 %v756
  %872 = vmatprep.subr.bf16.mxu0 0
  %873 = vmatpush1.bf16.msra.mxu0 %v757
  %874 = vmatprep.subr.bf16.mxu0 0
  %875 = vmatpush1.bf16.msra.mxu0 %v758
  %876 = vmatprep.subr.bf16.mxu0 0
  %877 = vmatpush1.bf16.msra.mxu0 %v759
  %878 = vmatprep.subr.bf16.mxu0 0
  %879 = vmatpush1.bf16.msra.mxu0 %v760
  %880 = vmatprep.subr.bf16.mxu0 0
  %881 = vmatpush1.bf16.msra.mxu0 %v761
  %882 = vmatprep.mubr.bf16.mxu0 %v132
  %883 = vmatmul.mubr.bf16.gmra.mrb[0].mxu0 %v131
  %v884 = vpop.f32.mrb[0].mxu0
  %v885 = vadd.f32 %v837, %v884
  %v886 = vpop.f32.mrb[0].mxu0
  %v887 = vpop.f32.mrb[0].mxu0
  %v888 = vadd.f32 %v840, %v887
  %v889 = vpop.f32.mrb[0].mxu0
  %890 = vmatprep.mubr.bf16.mxu0 %v137
  %891 = vmatmul.mubr.bf16.gmra.mrb[0].mxu0 %v136
  %v892 = vpop.f32.mrb[0].mxu0
  %v893 = vadd.f32 %v845, %v892
  %v894 = vpop.f32.mrb[0].mxu0
  %v895 = vpop.f32.mrb[0].mxu0
  %v896 = vpop.f32.mrb[0].mxu0
  %897 = vdwg.mxu0
  %898 = vmatprep.subr.bf16.mxu0 0
  %899 = vmatpush1.bf16.msra.mxu0 %v762
  %900 = vmatprep.subr.bf16.mxu0 0
  %901 = vmatpush1.bf16.msra.mxu0 %v763
  %902 = vmatprep.subr.bf16.mxu0 0
  %903 = vmatpush1.bf16.msra.mxu0 %v764
  %904 = vmatprep.subr.bf16.mxu0 0
  %905 = vmatpush1.bf16.msra.mxu0 %v765
  %906 = vmatprep.subr.bf16.mxu0 0
  %907 = vmatpush1.bf16.msra.mxu0 0
  %908 = vmatprep.subr.bf16.mxu0 0
  %909 = vmatpush1.bf16.msra.mxu0 0
  %910 = vmatprep.subr.bf16.mxu0 0
  %911 = vmatpush1.bf16.msra.mxu0 0
  %912 = vmatprep.subr.bf16.mxu0 0
  %913 = vmatpush1.bf16.msra.mxu0 0
  %914 = vmatprep.subr.bf16.mxu0 0
  %915 = vmatpush1.bf16.msra.mxu0 0
  %916 = vmatprep.subr.bf16.mxu0 0
  %917 = vmatpush1.bf16.msra.mxu0 0
  %918 = vmatprep.subr.bf16.mxu0 0
  %919 = vmatpush1.bf16.msra.mxu0 0
  %920 = vmatprep.subr.bf16.mxu0 0
  %921 = vmatpush1.bf16.msra.mxu0 0
  %922 = vmatprep.subr.bf16.mxu0 0
  %923 = vmatpush1.bf16.msra.mxu0 0
  %924 = vmatprep.subr.bf16.mxu0 0
  %925 = vmatpush1.bf16.msra.mxu0 0
  %926 = vmatprep.subr.bf16.mxu0 0
  %927 = vmatpush1.bf16.msra.mxu0 0
  %928 = vmatprep.subr.bf16.mxu0 0
  %929 = vmatpush1.bf16.msra.mxu0 0
  %930 = vmatprep.mubr.bf16.mxu0 0
  %931 = vmatmul.mubr.bf16.gmra.mrb[0].mxu0 %v365
  %v932 = vpop.f32.mrb[0].mxu0
  %v933 = vadd.f32 %v885, %v932
  %v934 = vpop.f32.mrb[0].mxu0
  %v935 = vpop.f32.mrb[0].mxu0
  %v936 = vadd.f32 %v888, %v935
  %v937 = vpop.f32.mrb[0].mxu0
  %938 = vmatprep.mubr.bf16.mxu0 0
  %939 = vmatmul.mubr.bf16.gmra.mrb[0].mxu0 %v368
  %v940 = vpop.f32.mrb[0].mxu0
  %v941 = vadd.f32 %v893, %v940
  %v942 = vpop.f32.mrb[0].mxu0
  %v943 = vpop.f32.mrb[0].mxu0
  %v944 = vpop.f32.mrb[0].mxu0
  %945 = vdwg.mxu0
  %v946 = vmax.f32 %v501, %v933
  %v947 = vmax.f32 %v504, %v936
  %v948 = vmax.f32 %v509, %v941
  %v949 = vld [vmem:[%s3] sm:$0xf]
  %v950 = vld [vmem:[%s3 + $0x4] sm:$0xf]
  %v951 = vld [vmem:[%s3 + $0x8] sm:$0xf]
  %v952 = vld [vmem:[%s3 + $0xc] sm:$0xf]
  %v953 = vld [vmem:[%s3 + $0x10] sm:$0xf]
  %v954 = vld [vmem:[%s3 + $0x14] sm:$0xf]
  %v955 = vld [vmem:[%s3 + $0x18] sm:$0xf]
  %v956 = vld [vmem:[%s3 + $0x1c] sm:$0xf]
  %v957 = vld [vmem:[%s3 + $0x20] sm:$0xf]
  %v958 = vld [vmem:[%s3 + $0x24] sm:$0xf]
  %v959 = vld [vmem:[%s3 + $0x28] sm:$0xf]
  %v960 = vld [vmem:[%s3 + $0x2c] sm:$0xf]
  %v961 = vld [vmem:[%s3 + $0x30] sm:$0xf]
  %v962 = vld [vmem:[%s3 + $0x34] sm:$0xf]
  %v963 = vld [vmem:[%s3 + $0x38] sm:$0xf]
  %v964 = vld [vmem:[%s3 + $0x3c] sm:$0xf]
  %v965 = vld [vmem:[%s3 + $0x40] sm:$0xf]
  %v966 = vld [vmem:[%s3 + $0x44] sm:$0xf]
  %v967 = vld [vmem:[%s3 + $0x48] sm:$0xf]
  %v968 = vld [vmem:[%s3 + $0x4c] sm:$0xf]
  %v969 = vld [vmem:[%s3 + $0x50] sm:$0xf]
  %v970 = vld [vmem:[%s3 + $0x54] sm:$0xf]
  %v971 = vld [vmem:[%s3 + $0x58] sm:$0xf]
  %v972 = vld [vmem:[%s3 + $0x5c] sm:$0xf]
  %v973 = vld [vmem:[%s3 + $0x60] sm:$0xf]
  %v974 = vld [vmem:[%s3 + $0x64] sm:$0xf]
  %v975 = vld [vmem:[%s3 + $0x68] sm:$0xf]
  %v976 = vld [vmem:[%s3 + $0x6c] sm:$0xf]
  %v977 = vld [vmem:[%s3 + $0x70] sm:$0xf]
  %v978 = vld [vmem:[%s3 + $0x74] sm:$0xf]
  %v979 = vld [vmem:[%s3 + $0x78] sm:$0xf]
  %v980 = vld [vmem:[%s3 + $0x7c] sm:$0xf]
  %v981 = vld [vmem:[%s3 + $0x80] sm:$0xf]
  %v982 = vld [vmem:[%s3 + $0x84] sm:$0xf]
  %v983 = vld [vmem:[%s3 + $0x88] sm:$0xf]
  %v984 = vld [vmem:[%s3 + $0x8c] sm:$0xf]
  %v985 = vld [vmem:[%s3 + $0x90] sm:$0xf]
  %v986 = vld [vmem:[%s3 + $0x94] sm:$0xf]
  %v987 = vld [vmem:[%s3 + $0x98] sm:$0xf]
  %v988 = vld [vmem:[%s3 + $0x9c] sm:$0xf]
  %v989 = vld [vmem:[%s3 + $0xa0] sm:$0xf]
  %v990 = vld [vmem:[%s3 + $0xa4] sm:$0xf]
  %v991 = vld [vmem:[%s3 + $0xa8] sm:$0xf]
  %v992 = vld [vmem:[%s3 + $0xac] sm:$0xf]
  %v993 = vld [vmem:[%s3 + $0xb0] sm:$0xf]
  %v994 = vld [vmem:[%s3 + $0xb4] sm:$0xf]
  %v995 = vld [vmem:[%s3 + $0xb8] sm:$0xf]
  %v996 = vld [vmem:[%s3 + $0xbc] sm:$0xf]
  %v997 = vld [vmem:[%s3 + $0xc0] sm:$0xf]
  %v998 = vld [vmem:[%s3 + $0xc4] sm:$0xf]
  %v999 = vld [vmem:[%s3 + $0xc8] sm:$0xf]
  %v1000 = vld [vmem:[%s3 + $0xcc] sm:$0xf]
  %v1001 = vld [vmem:[%s3 + $0xd0] sm:$0xf]
  %v1002 = vld [vmem:[%s3 + $0xd4] sm:$0xf]
  %v1003 = vld [vmem:[%s3 + $0xd8] sm:$0xf]
  %v1004 = vld [vmem:[%s3 + $0xdc] sm:$0xf]
  %v1005 = vld [vmem:[%s3 + $0xe0] sm:$0xf]
  %v1006 = vld [vmem:[%s3 + $0xe4] sm:$0xf]
  %v1007 = vld [vmem:[%s3 + $0xe8] sm:$0xf]
  %v1008 = vld [vmem:[%s3 + $0xec] sm:$0xf]
  %v1009 = vld [vmem:[%s3 + $0xf0] sm:$0xf]
  %v1010 = vld [vmem:[%s3 + $0xf4] sm:$0xf]
  %v1011 = vld [vmem:[%s3 + $0xf8] sm:$0xf]
  %v1012 = vld [vmem:[%s3 + $0xfc] sm:$0xf]
  %v1013 = vld [vmem:[%s3 + $0x100] sm:$0xf]
  %v1014 = vld [vmem:[%s3 + $0x104] sm:$0xf]
  %v1015 = vld [vmem:[%s3 + $0x108] sm:$0xf]
  %v1016 = vld [vmem:[%s3 + $0x10c] sm:$0xf]
  %v1017 = vld [vmem:[%s3 + $0x110] sm:$0xf]
  %v1018 = vld [vmem:[%s3 + $0x114] sm:$0xf]
  %v1019 = vld [vmem:[%s3 + $0x118] sm:$0xf]
  %v1020 = vld [vmem:[%s3 + $0x11c] sm:$0xf]
  %v1093 = vunpack.c.l.b16 %v949
  %v1094 = vunpack.c.l.b16 %v950
  %v1095 = vunpack.c.l.b16 %v951
  %v1096 = vunpack.c.l.b16 %v952
  %v1097 = vunpack.c.l.b16 %v953
  %v1098 = vunpack.c.l.b16 %v954
  %v1099 = vunpack.c.l.b16 %v955
  %v1100 = vunpack.c.l.b16 %v956
  %v1101 = vunpack.c.l.b16 %v957
  %v1102 = vunpack.c.l.b16 %v958
  %v1103 = vunpack.c.l.b16 %v959
  %v1104 = vunpack.c.l.b16 %v960
  %v1105 = vunpack.c.l.b16 %v961
  %v1106 = vunpack.c.l.b16 %v962
  %v1107 = vunpack.c.l.b16 %v963
  %v1108 = vunpack.c.l.b16 %v964
  %v1109 = vunpack.c.l.b16 %v965
  %v1110 = vunpack.c.l.b16 %v966
  %v1111 = vunpack.c.l.b16 %v967
  %v1112 = vunpack.c.l.b16 %v968
  %v1113 = vunpack.c.l.b16 %v969
  %v1114 = vunpack.c.l.b16 %v970
  %v1115 = vunpack.c.l.b16 %v971
  %v1116 = vunpack.c.l.b16 %v972
  %v1117 = vunpack.c.l.b16 %v973
  %v1118 = vunpack.c.l.b16 %v974
  %v1119 = vunpack.c.l.b16 %v975
  %v1120 = vunpack.c.l.b16 %v976
  %v1121 = vunpack.c.l.b16 %v977
  %v1122 = vunpack.c.l.b16 %v978
  %v1123 = vunpack.c.l.b16 %v979
  %v1124 = vunpack.c.l.b16 %v980
  %v1125 = vunpack.c.l.b16 %v981
  %v1126 = vunpack.c.l.b16 %v982
  %v1127 = vunpack.c.l.b16 %v983
  %v1128 = vunpack.c.l.b16 %v984
  %v1129 = vunpack.c.l.b16 %v985
  %v1130 = vunpack.c.l.b16 %v986
  %v1131 = vunpack.c.l.b16 %v987
  %v1132 = vunpack.c.l.b16 %v988
  %v1133 = vunpack.c.l.b16 %v989
  %v1134 = vunpack.c.l.b16 %v990
  %v1135 = vunpack.c.l.b16 %v991
  %v1136 = vunpack.c.l.b16 %v992
  %v1137 = vunpack.c.l.b16 %v993
  %v1138 = vunpack.c.l.b16 %v994
  %v1139 = vunpack.c.l.b16 %v995
  %v1140 = vunpack.c.l.b16 %v996
  %v1141 = vunpack.c.l.b16 %v997
  %v1142 = vunpack.c.l.b16 %v998
  %v1143 = vunpack.c.l.b16 %v999
  %v1144 = vunpack.c.l.b16 %v1000
  %v1145 = vunpack.c.l.b16 %v1001
  %v1146 = vunpack.c.l.b16 %v1002
  %v1147 = vunpack.c.l.b16 %v1003
  %v1148 = vunpack.c.l.b16 %v1004
  %v1149 = vunpack.c.l.b16 %v1005
  %v1150 = vunpack.c.l.b16 %v1006
  %v1151 = vunpack.c.l.b16 %v1007
  %v1152 = vunpack.c.l.b16 %v1008
  %v1153 = vunpack.c.l.b16 %v1009
  %v1154 = vunpack.c.l.b16 %v1010
  %v1155 = vunpack.c.l.b16 %v1011
  %v1156 = vunpack.c.l.b16 %v1012
  %v1157 = vunpack.c.l.b16 %v1013
  %v1158 = vunpack.c.l.b16 %v1014
  %v1159 = vunpack.c.l.b16 %v1015
  %v1160 = vunpack.c.l.b16 %v1016
  %v1161 = vunpack.c.l.b16 %v1017
  %v1162 = vunpack.c.l.b16 %v1018
  %v1163 = vunpack.c.l.b16 %v1019
  %v1164 = vunpack.c.l.b16 %v1020
  %v1165 = vpack.c.b16 %v1094, %v1093
  %v1166 = vpack.c.b16 %v1096, %v1095
  %v1167 = vpack.c.b16 %v1098, %v1097
  %v1168 = vpack.c.b16 %v1100, %v1099
  %v1169 = vpack.c.b16 %v1102, %v1101
  %v1170 = vpack.c.b16 %v1104, %v1103
  %v1171 = vpack.c.b16 %v1106, %v1105
  %v1172 = vpack.c.b16 %v1108, %v1107
  %v1173 = vpack.c.b16 %v1110, %v1109
  %v1174 = vpack.c.b16 %v1112, %v1111
  %v1175 = vpack.c.b16 %v1114, %v1113
  %v1176 = vpack.c.b16 %v1116, %v1115
  %v1177 = vpack.c.b16 %v1118, %v1117
  %v1178 = vpack.c.b16 %v1120, %v1119
  %v1179 = vpack.c.b16 %v1122, %v1121
  %v1180 = vpack.c.b16 %v1124, %v1123
  %v1181 = vpack.c.b16 %v1126, %v1125
  %v1182 = vpack.c.b16 %v1128, %v1127
  %v1183 = vpack.c.b16 %v1130, %v1129
  %v1184 = vpack.c.b16 %v1132, %v1131
  %v1185 = vpack.c.b16 %v1134, %v1133
  %v1186 = vpack.c.b16 %v1136, %v1135
  %v1187 = vpack.c.b16 %v1138, %v1137
  %v1188 = vpack.c.b16 %v1140, %v1139
  %v1189 = vpack.c.b16 %v1142, %v1141
  %v1190 = vpack.c.b16 %v1144, %v1143
  %v1191 = vpack.c.b16 %v1146, %v1145
  %v1192 = vpack.c.b16 %v1148, %v1147
  %v1193 = vpack.c.b16 %v1150, %v1149
  %v1194 = vpack.c.b16 %v1152, %v1151
  %v1195 = vpack.c.b16 %v1154, %v1153
  %v1196 = vpack.c.b16 %v1156, %v1155
  %v1197 = vpack.c.b16 %v1158, %v1157
  %v1198 = vpack.c.b16 %v1160, %v1159
  %v1199 = vpack.c.b16 %v1162, %v1161
  %v1200 = vpack.c.b16 %v1164, %v1163
  %1237 = vmatprep.subr.bf16.mxu0 0
  %1238 = vmatpush1.bf16.msra.mxu0 %v1165
  %1239 = vmatprep.subr.bf16.mxu0 0
  %1240 = vmatpush1.bf16.msra.mxu0 %v1166
  %1241 = vmatprep.subr.bf16.mxu0 0
  %1242 = vmatpush1.bf16.msra.mxu0 %v1167
  %1243 = vmatprep.subr.bf16.mxu0 0
  %1244 = vmatpush1.bf16.msra.mxu0 %v1168
  %1245 = vmatprep.subr.bf16.mxu0 0
  %1246 = vmatpush1.bf16.msra.mxu0 %v1169
  %1247 = vmatprep.subr.bf16.mxu0 0
  %1248 = vmatpush1.bf16.msra.mxu0 %v1170
  %1249 = vmatprep.subr.bf16.mxu0 0
  %1250 = vmatpush1.bf16.msra.mxu0 %v1171
  %1251 = vmatprep.subr.bf16.mxu0 0
  %1252 = vmatpush1.bf16.msra.mxu0 %v1172
  %1253 = vmatprep.subr.bf16.mxu0 0
  %1254 = vmatpush1.bf16.msra.mxu0 %v1173
  %1255 = vmatprep.subr.bf16.mxu0 0
  %1256 = vmatpush1.bf16.msra.mxu0 %v1174
  %1257 = vmatprep.subr.bf16.mxu0 0
  %1258 = vmatpush1.bf16.msra.mxu0 %v1175
  %1259 = vmatprep.subr.bf16.mxu0 0
  %1260 = vmatpush1.bf16.msra.mxu0 %v1176
  %1261 = vmatprep.subr.bf16.mxu0 0
  %1262 = vmatpush1.bf16.msra.mxu0 %v1177
  %1263 = vmatprep.subr.bf16.mxu0 0
  %1264 = vmatpush1.bf16.msra.mxu0 %v1178
  %1265 = vmatprep.subr.bf16.mxu0 0
  %1266 = vmatpush1.bf16.msra.mxu0 %v1179
  %1267 = vmatprep.subr.bf16.mxu0 0
  %1268 = vmatpush1.bf16.msra.mxu0 %v1180
  %1269 = vmatprep.mubr.bf16.mxu0 %v130
  %1270 = vmatmul.mubr.bf16.gmra.mrb[0].mxu0 %v129
  %v1271 = vpop.f32.mrb[0].mxu0
  %v1272 = vadd.f32 0.0, %v1271
  %v1273 = vpop.f32.mrb[0].mxu0
  %v1274 = vpop.f32.mrb[0].mxu0
  %v1275 = vadd.f32 0.0, %v1274
  %v1276 = vpop.f32.mrb[0].mxu0
  %1277 = vmatprep.mubr.bf16.mxu0 %v135
  %1278 = vmatmul.mubr.bf16.gmra.mrb[0].mxu0 %v134
  %v1279 = vpop.f32.mrb[0].mxu0
  %v1280 = vadd.f32 0.0, %v1279
  %v1281 = vpop.f32.mrb[0].mxu0
  %v1282 = vpop.f32.mrb[0].mxu0
  %v1283 = vpop.f32.mrb[0].mxu0
  %1284 = vdwg.mxu0
  %1285 = vmatprep.subr.bf16.mxu0 0
  %1286 = vmatpush1.bf16.msra.mxu0 %v1181
  %1287 = vmatprep.subr.bf16.mxu0 0
  %1288 = vmatpush1.bf16.msra.mxu0 %v1182
  %1289 = vmatprep.subr.bf16.mxu0 0
  %1290 = vmatpush1.bf16.msra.mxu0 %v1183
  %1291 = vmatprep.subr.bf16.mxu0 0
  %1292 = vmatpush1.bf16.msra.mxu0 %v1184
  %1293 = vmatprep.subr.bf16.mxu0 0
  %1294 = vmatpush1.bf16.msra.mxu0 %v1185
  %1295 = vmatprep.subr.bf16.mxu0 0
  %1296 = vmatpush1.bf16.msra.mxu0 %v1186
  %1297 = vmatprep.subr.bf16.mxu0 0
  %1298 = vmatpush1.bf16.msra.mxu0 %v1187
  %1299 = vmatprep.subr.bf16.mxu0 0
  %1300 = vmatpush1.bf16.msra.mxu0 %v1188
  %1301 = vmatprep.subr.bf16.mxu0 0
  %1302 = vmatpush1.bf16.msra.mxu0 %v1189
  %1303 = vmatprep.subr.bf16.mxu0 0
  %1304 = vmatpush1.bf16.msra.mxu0 %v1190
  %1305 = vmatprep.subr.bf16.mxu0 0
  %1306 = vmatpush1.bf16.msra.mxu0 %v1191
  %1307 = vmatprep.subr.bf16.mxu0 0
  %1308 = vmatpush1.bf16.msra.mxu0 %v1192
  %1309 = vmatprep.subr.bf16.mxu0 0
  %1310 = vmatpush1.bf16.msra.mxu0 %v1193
  %1311 = vmatprep.subr.bf16.mxu0 0
  %1312 = vmatpush1.bf16.msra.mxu0 %v1194
  %1313 = vmatprep.subr.bf16.mxu0 0
  %1314 = vmatpush1.bf16.msra.mxu0 %v1195
  %1315 = vmatprep.subr.bf16.mxu0 0
  %1316 = vmatpush1.bf16.msra.mxu0 %v1196
  %1317 = vmatprep.mubr.bf16.mxu0 %v132
  %1318 = vmatmul.mubr.bf16.gmra.mrb[0].mxu0 %v131
  %v1319 = vpop.f32.mrb[0].mxu0
  %v1320 = vadd.f32 %v1272, %v1319
  %v1321 = vpop.f32.mrb[0].mxu0
  %v1322 = vpop.f32.mrb[0].mxu0
  %v1323 = vadd.f32 %v1275, %v1322
  %v1324 = vpop.f32.mrb[0].mxu0
  %1325 = vmatprep.mubr.bf16.mxu0 %v137
  %1326 = vmatmul.mubr.bf16.gmra.mrb[0].mxu0 %v136
  %v1327 = vpop.f32.mrb[0].mxu0
  %v1328 = vadd.f32 %v1280, %v1327
  %v1329 = vpop.f32.mrb[0].mxu0
  %v1330 = vpop.f32.mrb[0].mxu0
  %v1331 = vpop.f32.mrb[0].mxu0
  %1332 = vdwg.mxu0
  %1333 = vmatprep.subr.bf16.mxu0 0
  %1334 = vmatpush1.bf16.msra.mxu0 %v1197
  %1335 = vmatprep.subr.bf16.mxu0 0
  %1336 = vmatpush1.bf16.msra.mxu0 %v1198
  %1337 = vmatprep.subr.bf16.mxu0 0
  %1338 = vmatpush1.bf16.msra.mxu0 %v1199
  %1339 = vmatprep.subr.bf16.mxu0 0
  %1340 = vmatpush1.bf16.msra.mxu0 %v1200
  %1341 = vmatprep.subr.bf16.mxu0 0
  %1342 = vmatpush1.bf16.msra.mxu0 0
  %1343 = vmatprep.subr.bf16.mxu0 0
  %1344 = vmatpush1.bf16.msra.mxu0 0
  %1345 = vmatprep.subr.bf16.mxu0 0
  %1346 = vmatpush1.bf16.msra.mxu0 0
  %1347 = vmatprep.subr.bf16.mxu0 0
  %1348 = vmatpush1.bf16.msra.mxu0 0
  %1349 = vmatprep.subr.bf16.mxu0 0
  %1350 = vmatpush1.bf16.msra.mxu0 0
  %1351 = vmatprep.subr.bf16.mxu0 0
  %1352 = vmatpush1.bf16.msra.mxu0 0
  %1353 = vmatprep.subr.bf16.mxu0 0
  %1354 = vmatpush1.bf16.msra.mxu0 0
  %1355 = vmatprep.subr.bf16.mxu0 0
  %1356 = vmatpush1.bf16.msra.mxu0 0
  %1357 = vmatprep.subr.bf16.mxu0 0
  %1358 = vmatpush1.bf16.msra.mxu0 0
  %1359 = vmatprep.subr.bf16.mxu0 0
  %1360 = vmatpush1.bf16.msra.mxu0 0
  %1361 = vmatprep.subr.bf16.mxu0 0
  %1362 = vmatpush1.bf16.msra.mxu0 0
  %1363 = vmatprep.subr.bf16.mxu0 0
  %1364 = vmatpush1.bf16.msra.mxu0 0
  %1365 = vmatprep.mubr.bf16.mxu0 0
  %1366 = vmatmul.mubr.bf16.gmra.mrb[0].mxu0 %v365
  %v1367 = vpop.f32.mrb[0].mxu0
  %v1368 = vadd.f32 %v1320, %v1367
  %v1369 = vpop.f32.mrb[0].mxu0
  %v1370 = vpop.f32.mrb[0].mxu0
  %v1371 = vadd.f32 %v1323, %v1370
  %v1372 = vpop.f32.mrb[0].mxu0
  %1373 = vmatprep.mubr.bf16.mxu0 0
  %1374 = vmatmul.mubr.bf16.gmra.mrb[0].mxu0 %v368
  %v1375 = vpop.f32.mrb[0].mxu0
  %v1376 = vadd.f32 %v1328, %v1375
  %v1377 = vpop.f32.mrb[0].mxu0
  %v1378 = vpop.f32.mrb[0].mxu0
  %v1379 = vpop.f32.mrb[0].mxu0
  %1380 = vdwg.mxu0
  %v1381 = vmax.f32 %v946, %v1368
  %v1382 = vmax.f32 %v947, %v1371
  %v1383 = vmax.f32 %v948, %v1376
  %v1384 = vld [vmem:[%s4] sm:$0xf]
  %v1385 = vld [vmem:[%s4 + $0x4] sm:$0xf]
  %v1386 = vld [vmem:[%s4 + $0x8] sm:$0xf]
  %v1387 = vld [vmem:[%s4 + $0xc] sm:$0xf]
  %v1388 = vld [vmem:[%s4 + $0x10] sm:$0xf]
  %v1389 = vld [vmem:[%s4 + $0x14] sm:$0xf]
  %v1390 = vld [vmem:[%s4 + $0x18] sm:$0xf]
  %v1391 = vld [vmem:[%s4 + $0x1c] sm:$0xf]
  %v1392 = vld [vmem:[%s4 + $0x20] sm:$0xf]
  %v1393 = vld [vmem:[%s4 + $0x24] sm:$0xf]
  %v1394 = vld [vmem:[%s4 + $0x28] sm:$0xf]
  %v1395 = vld [vmem:[%s4 + $0x2c] sm:$0xf]
  %v1396 = vld [vmem:[%s4 + $0x30] sm:$0xf]
  %v1397 = vld [vmem:[%s4 + $0x34] sm:$0xf]
  %v1398 = vld [vmem:[%s4 + $0x38] sm:$0xf]
  %v1399 = vld [vmem:[%s4 + $0x3c] sm:$0xf]
  %v1400 = vld [vmem:[%s4 + $0x40] sm:$0xf]
  %v1401 = vld [vmem:[%s4 + $0x44] sm:$0xf]
  %v1402 = vld [vmem:[%s4 + $0x48] sm:$0xf]
  %v1403 = vld [vmem:[%s4 + $0x4c] sm:$0xf]
  %v1404 = vld [vmem:[%s4 + $0x50] sm:$0xf]
  %v1405 = vld [vmem:[%s4 + $0x54] sm:$0xf]
  %v1406 = vld [vmem:[%s4 + $0x58] sm:$0xf]
  %v1407 = vld [vmem:[%s4 + $0x5c] sm:$0xf]
  %v1408 = vld [vmem:[%s4 + $0x60] sm:$0xf]
  %v1409 = vld [vmem:[%s4 + $0x64] sm:$0xf]
  %v1410 = vld [vmem:[%s4 + $0x68] sm:$0xf]
  %v1411 = vld [vmem:[%s4 + $0x6c] sm:$0xf]
  %v1412 = vld [vmem:[%s4 + $0x70] sm:$0xf]
  %v1413 = vld [vmem:[%s4 + $0x74] sm:$0xf]
  %v1414 = vld [vmem:[%s4 + $0x78] sm:$0xf]
  %v1415 = vld [vmem:[%s4 + $0x7c] sm:$0xf]
  %v1416 = vld [vmem:[%s4 + $0x80] sm:$0xf]
  %v1417 = vld [vmem:[%s4 + $0x84] sm:$0xf]
  %v1418 = vld [vmem:[%s4 + $0x88] sm:$0xf]
  %v1419 = vld [vmem:[%s4 + $0x8c] sm:$0xf]
  %v1420 = vld [vmem:[%s4 + $0x90] sm:$0xf]
  %v1421 = vld [vmem:[%s4 + $0x94] sm:$0xf]
  %v1422 = vld [vmem:[%s4 + $0x98] sm:$0xf]
  %v1423 = vld [vmem:[%s4 + $0x9c] sm:$0xf]
  %v1424 = vld [vmem:[%s4 + $0xa0] sm:$0xf]
  %v1425 = vld [vmem:[%s4 + $0xa4] sm:$0xf]
  %v1426 = vld [vmem:[%s4 + $0xa8] sm:$0xf]
  %v1427 = vld [vmem:[%s4 + $0xac] sm:$0xf]
  %v1428 = vld [vmem:[%s4 + $0xb0] sm:$0xf]
  %v1429 = vld [vmem:[%s4 + $0xb4] sm:$0xf]
  %v1430 = vld [vmem:[%s4 + $0xb8] sm:$0xf]
  %v1431 = vld [vmem:[%s4 + $0xbc] sm:$0xf]
  %v1432 = vld [vmem:[%s4 + $0xc0] sm:$0xf]
  %v1433 = vld [vmem:[%s4 + $0xc4] sm:$0xf]
  %v1434 = vld [vmem:[%s4 + $0xc8] sm:$0xf]
  %v1435 = vld [vmem:[%s4 + $0xcc] sm:$0xf]
  %v1436 = vld [vmem:[%s4 + $0xd0] sm:$0xf]
  %v1437 = vld [vmem:[%s4 + $0xd4] sm:$0xf]
  %v1438 = vld [vmem:[%s4 + $0xd8] sm:$0xf]
  %v1439 = vld [vmem:[%s4 + $0xdc] sm:$0xf]
  %v1440 = vld [vmem:[%s4 + $0xe0] sm:$0xf]
  %v1441 = vld [vmem:[%s4 + $0xe4] sm:$0xf]
  %v1442 = vld [vmem:[%s4 + $0xe8] sm:$0xf]
  %v1443 = vld [vmem:[%s4 + $0xec] sm:$0xf]
  %v1444 = vld [vmem:[%s4 + $0xf0] sm:$0xf]
  %v1445 = vld [vmem:[%s4 + $0xf4] sm:$0xf]
  %v1446 = vld [vmem:[%s4 + $0xf8] sm:$0xf]
  %v1447 = vld [vmem:[%s4 + $0xfc] sm:$0xf]
  %v1448 = vld [vmem:[%s4 + $0x100] sm:$0xf]
  %v1449 = vld [vmem:[%s4 + $0x104] sm:$0xf]
  %v1450 = vld [vmem:[%s4 + $0x108] sm:$0xf]
  %v1451 = vld [vmem:[%s4 + $0x10c] sm:$0xf]
  %v1452 = vld [vmem:[%s4 + $0x110] sm:$0xf]
  %v1453 = vld [vmem:[%s4 + $0x114] sm:$0xf]
  %v1454 = vld [vmem:[%s4 + $0x118] sm:$0xf]
  %v1455 = vld [vmem:[%s4 + $0x11c] sm:$0xf]
  %v1528 = vunpack.c.l.b16 %v1384
  %v1529 = vunpack.c.l.b16 %v1385
  %v1530 = vunpack.c.l.b16 %v1386
  %v1531 = vunpack.c.l.b16 %v1387
  %v1532 = vunpack.c.l.b16 %v1388
  %v1533 = vunpack.c.l.b16 %v1389
  %v1534 = vunpack.c.l.b16 %v1390
  %v1535 = vunpack.c.l.b16 %v1391
  %v1536 = vunpack.c.l.b16 %v1392
  %v1537 = vunpack.c.l.b16 %v1393
  %v1538 = vunpack.c.l.b16 %v1394
  %v1539 = vunpack.c.l.b16 %v1395
  %v1540 = vunpack.c.l.b16 %v1396
  %v1541 = vunpack.c.l.b16 %v1397
  %v1542 = vunpack.c.l.b16 %v1398
  %v1543 = vunpack.c.l.b16 %v1399
  %v1544 = vunpack.c.l.b16 %v1400
  %v1545 = vunpack.c.l.b16 %v1401
  %v1546 = vunpack.c.l.b16 %v1402
  %v1547 = vunpack.c.l.b16 %v1403
  %v1548 = vunpack.c.l.b16 %v1404
  %v1549 = vunpack.c.l.b16 %v1405
  %v1550 = vunpack.c.l.b16 %v1406
  %v1551 = vunpack.c.l.b16 %v1407
  %v1552 = vunpack.c.l.b16 %v1408
  %v1553 = vunpack.c.l.b16 %v1409
  %v1554 = vunpack.c.l.b16 %v1410
  %v1555 = vunpack.c.l.b16 %v1411
  %v1556 = vunpack.c.l.b16 %v1412
  %v1557 = vunpack.c.l.b16 %v1413
  %v1558 = vunpack.c.l.b16 %v1414
  %v1559 = vunpack.c.l.b16 %v1415
  %v1560 = vunpack.c.l.b16 %v1416
  %v1561 = vunpack.c.l.b16 %v1417
  %v1562 = vunpack.c.l.b16 %v1418
  %v1563 = vunpack.c.l.b16 %v1419
  %v1564 = vunpack.c.l.b16 %v1420
  %v1565 = vunpack.c.l.b16 %v1421
  %v1566 = vunpack.c.l.b16 %v1422
  %v1567 = vunpack.c.l.b16 %v1423
  %v1568 = vunpack.c.l.b16 %v1424
  %v1569 = vunpack.c.l.b16 %v1425
  %v1570 = vunpack.c.l.b16 %v1426
  %v1571 = vunpack.c.l.b16 %v1427
  %v1572 = vunpack.c.l.b16 %v1428
  %v1573 = vunpack.c.l.b16 %v1429
  %v1574 = vunpack.c.l.b16 %v1430
  %v1575 = vunpack.c.l.b16 %v1431
  %v1576 = vunpack.c.l.b16 %v1432
  %v1577 = vunpack.c.l.b16 %v1433
  %v1578 = vunpack.c.l.b16 %v1434
  %v1579 = vunpack.c.l.b16 %v1435
  %v1580 = vunpack.c.l.b16 %v1436
  %v1581 = vunpack.c.l.b16 %v1437
  %v1582 = vunpack.c.l.b16 %v1438
  %v1583 = vunpack.c.l.b16 %v1439
  %v1584 = vunpack.c.l.b16 %v1440
  %v1585 = vunpack.c.l.b16 %v1441
  %v1586 = vunpack.c.l.b16 %v1442
  %v1587 = vunpack.c.l.b16 %v1443
  %v1588 = vunpack.c.l.b16 %v1444
  %v1589 = vunpack.c.l.b16 %v1445
  %v1590 = vunpack.c.l.b16 %v1446
  %v1591 = vunpack.c.l.b16 %v1447
  %v1592 = vunpack.c.l.b16 %v1448
  %v1593 = vunpack.c.l.b16 %v1449
  %v1594 = vunpack.c.l.b16 %v1450
  %v1595 = vunpack.c.l.b16 %v1451
  %v1596 = vunpack.c.l.b16 %v1452
  %v1597 = vunpack.c.l.b16 %v1453
  %v1598 = vunpack.c.l.b16 %v1454
  %v1599 = vunpack.c.l.b16 %v1455
  %v1600 = vpack.c.b16 %v1529, %v1528
  %v1601 = vpack.c.b16 %v1531, %v1530
  %v1602 = vpack.c.b16 %v1533, %v1532
  %v1603 = vpack.c.b16 %v1535, %v1534
  %v1604 = vpack.c.b16 %v1537, %v1536
  %v1605 = vpack.c.b16 %v1539, %v1538
  %v1606 = vpack.c.b16 %v1541, %v1540
  %v1607 = vpack.c.b16 %v1543, %v1542
  %v1608 = vpack.c.b16 %v1545, %v1544
  %v1609 = vpack.c.b16 %v1547, %v1546
  %v1610 = vpack.c.b16 %v1549, %v1548
  %v1611 = vpack.c.b16 %v1551, %v1550
  %v1612 = vpack.c.b16 %v1553, %v1552
  %v1613 = vpack.c.b16 %v1555, %v1554
  %v1614 = vpack.c.b16 %v1557, %v1556
  %v1615 = vpack.c.b16 %v1559, %v1558
  %v1616 = vpack.c.b16 %v1561, %v1560
  %v1617 = vpack.c.b16 %v1563, %v1562
  %v1618 = vpack.c.b16 %v1565, %v1564
  %v1619 = vpack.c.b16 %v1567, %v1566
  %v1620 = vpack.c.b16 %v1569, %v1568
  %v1621 = vpack.c.b16 %v1571, %v1570
  %v1622 = vpack.c.b16 %v1573, %v1572
  %v1623 = vpack.c.b16 %v1575, %v1574
  %v1624 = vpack.c.b16 %v1577, %v1576
  %v1625 = vpack.c.b16 %v1579, %v1578
  %v1626 = vpack.c.b16 %v1581, %v1580
  %v1627 = vpack.c.b16 %v1583, %v1582
  %v1628 = vpack.c.b16 %v1585, %v1584
  %v1629 = vpack.c.b16 %v1587, %v1586
  %v1630 = vpack.c.b16 %v1589, %v1588
  %v1631 = vpack.c.b16 %v1591, %v1590
  %v1632 = vpack.c.b16 %v1593, %v1592
  %v1633 = vpack.c.b16 %v1595, %v1594
  %v1634 = vpack.c.b16 %v1597, %v1596
  %v1635 = vpack.c.b16 %v1599, %v1598
  %1672 = vmatprep.subr.bf16.mxu0 0
  %1673 = vmatpush1.bf16.msra.mxu0 %v1600
  %1674 = vmatprep.subr.bf16.mxu0 0
  %1675 = vmatpush1.bf16.msra.mxu0 %v1601
  %1676 = vmatprep.subr.bf16.mxu0 0
  %1677 = vmatpush1.bf16.msra.mxu0 %v1602
  %1678 = vmatprep.subr.bf16.mxu0 0
  %1679 = vmatpush1.bf16.msra.mxu0 %v1603
  %1680 = vmatprep.subr.bf16.mxu0 0
  %1681 = vmatpush1.bf16.msra.mxu0 %v1604
  %1682 = vmatprep.subr.bf16.mxu0 0
  %1683 = vmatpush1.bf16.msra.mxu0 %v1605
  %1684 = vmatprep.subr.bf16.mxu0 0
  %1685 = vmatpush1.bf16.msra.mxu0 %v1606
  %1686 = vmatprep.subr.bf16.mxu0 0
  %1687 = vmatpush1.bf16.msra.mxu0 %v1607
  %1688 = vmatprep.subr.bf16.mxu0 0
  %1689 = vmatpush1.bf16.msra.mxu0 %v1608
  %1690 = vmatprep.subr.bf16.mxu0 0
  %1691 = vmatpush1.bf16.msra.mxu0 %v1609
  %1692 = vmatprep.subr.bf16.mxu0 0
  %1693 = vmatpush1.bf16.msra.mxu0 %v1610
  %1694 = vmatprep.subr.bf16.mxu0 0
  %1695 = vmatpush1.bf16.msra.mxu0 %v1611
  %1696 = vmatprep.subr.bf16.mxu0 0
  %1697 = vmatpush1.bf16.msra.mxu0 %v1612
  %1698 = vmatprep.subr.bf16.mxu0 0
  %1699 = vmatpush1.bf16.msra.mxu0 %v1613
  %1700 = vmatprep.subr.bf16.mxu0 0
  %1701 = vmatpush1.bf16.msra.mxu0 %v1614
  %1702 = vmatprep.subr.bf16.mxu0 0
  %1703 = vmatpush1.bf16.msra.mxu0 %v1615
  %1704 = vmatprep.mubr.bf16.mxu0 %v130
  %1705 = vmatmul.mubr.bf16.gmra.mrb[0].mxu0 %v129
  %v1706 = vpop.f32.mrb[0].mxu0
  %v1707 = vadd.f32 0.0, %v1706
  %v1708 = vpop.f32.mrb[0].mxu0
  %v1709 = vpop.f32.mrb[0].mxu0
  %v1710 = vadd.f32 0.0, %v1709
  %v1711 = vpop.f32.mrb[0].mxu0
  %1712 = vmatprep.mubr.bf16.mxu0 %v135
  %1713 = vmatmul.mubr.bf16.gmra.mrb[0].mxu0 %v134
  %v1714 = vpop.f32.mrb[0].mxu0
  %v1715 = vadd.f32 0.0, %v1714
  %v1716 = vpop.f32.mrb[0].mxu0
  %v1717 = vpop.f32.mrb[0].mxu0
  %v1718 = vpop.f32.mrb[0].mxu0
  %1719 = vdwg.mxu0
  %1720 = vmatprep.subr.bf16.mxu0 0
  %1721 = vmatpush1.bf16.msra.mxu0 %v1616
  %1722 = vmatprep.subr.bf16.mxu0 0
  %1723 = vmatpush1.bf16.msra.mxu0 %v1617
  %1724 = vmatprep.subr.bf16.mxu0 0
  %1725 = vmatpush1.bf16.msra.mxu0 %v1618
  %1726 = vmatprep.subr.bf16.mxu0 0
  %1727 = vmatpush1.bf16.msra.mxu0 %v1619
  %1728 = vmatprep.subr.bf16.mxu0 0
  %1729 = vmatpush1.bf16.msra.mxu0 %v1620
  %1730 = vmatprep.subr.bf16.mxu0 0
  %1731 = vmatpush1.bf16.msra.mxu0 %v1621
  %1732 = vmatprep.subr.bf16.mxu0 0
  %1733 = vmatpush1.bf16.msra.mxu0 %v1622
  %1734 = vmatprep.subr.bf16.mxu0 0
  %1735 = vmatpush1.bf16.msra.mxu0 %v1623
  %1736 = vmatprep.subr.bf16.mxu0 0
  %1737 = vmatpush1.bf16.msra.mxu0 %v1624
  %1738 = vmatprep.subr.bf16.mxu0 0
  %1739 = vmatpush1.bf16.msra.mxu0 %v1625
  %1740 = vmatprep.subr.bf16.mxu0 0
  %1741 = vmatpush1.bf16.msra.mxu0 %v1626
  %1742 = vmatprep.subr.bf16.mxu0 0
  %1743 = vmatpush1.bf16.msra.mxu0 %v1627
  %1744 = vmatprep.subr.bf16.mxu0 0
  %1745 = vmatpush1.bf16.msra.mxu0 %v1628
  %1746 = vmatprep.subr.bf16.mxu0 0
  %1747 = vmatpush1.bf16.msra.mxu0 %v1629
  %1748 = vmatprep.subr.bf16.mxu0 0
  %1749 = vmatpush1.bf16.msra.mxu0 %v1630
  %1750 = vmatprep.subr.bf16.mxu0 0
  %1751 = vmatpush1.bf16.msra.mxu0 %v1631
  %1752 = vmatprep.mubr.bf16.mxu0 %v132
  %1753 = vmatmul.mubr.bf16.gmra.mrb[0].mxu0 %v131
  %v1754 = vpop.f32.mrb[0].mxu0
  %v1755 = vadd.f32 %v1707, %v1754
  %v1756 = vpop.f32.mrb[0].mxu0
  %v1757 = vpop.f32.mrb[0].mxu0
  %v1758 = vadd.f32 %v1710, %v1757
  %v1759 = vpop.f32.mrb[0].mxu0
  %1760 = vmatprep.mubr.bf16.mxu0 %v137
  %1761 = vmatmul.mubr.bf16.gmra.mrb[0].mxu0 %v136
  %v1762 = vpop.f32.mrb[0].mxu0
  %v1763 = vadd.f32 %v1715, %v1762
  %v1764 = vpop.f32.mrb[0].mxu0
  %v1765 = vpop.f32.mrb[0].mxu0
  %v1766 = vpop.f32.mrb[0].mxu0
  %1767 = vdwg.mxu0
  %1768 = vmatprep.subr.bf16.mxu0 0
  %1769 = vmatpush1.bf16.msra.mxu0 %v1632
  %1770 = vmatprep.subr.bf16.mxu0 0
  %1771 = vmatpush1.bf16.msra.mxu0 %v1633
  %1772 = vmatprep.subr.bf16.mxu0 0
  %1773 = vmatpush1.bf16.msra.mxu0 %v1634
  %1774 = vmatprep.subr.bf16.mxu0 0
  %1775 = vmatpush1.bf16.msra.mxu0 %v1635
  %1776 = vmatprep.subr.bf16.mxu0 0
  %1777 = vmatpush1.bf16.msra.mxu0 0
  %1778 = vmatprep.subr.bf16.mxu0 0
  %1779 = vmatpush1.bf16.msra.mxu0 0
  %1780 = vmatprep.subr.bf16.mxu0 0
  %1781 = vmatpush1.bf16.msra.mxu0 0
  %1782 = vmatprep.subr.bf16.mxu0 0
  %1783 = vmatpush1.bf16.msra.mxu0 0
  %1784 = vmatprep.subr.bf16.mxu0 0
  %1785 = vmatpush1.bf16.msra.mxu0 0
  %1786 = vmatprep.subr.bf16.mxu0 0
  %1787 = vmatpush1.bf16.msra.mxu0 0
  %1788 = vmatprep.subr.bf16.mxu0 0
  %1789 = vmatpush1.bf16.msra.mxu0 0
  %1790 = vmatprep.subr.bf16.mxu0 0
  %1791 = vmatpush1.bf16.msra.mxu0 0
  %1792 = vmatprep.subr.bf16.mxu0 0
  %1793 = vmatpush1.bf16.msra.mxu0 0
  %1794 = vmatprep.subr.bf16.mxu0 0
  %1795 = vmatpush1.bf16.msra.mxu0 0
  %1796 = vmatprep.subr.bf16.mxu0 0
  %1797 = vmatpush1.bf16.msra.mxu0 0
  %1798 = vmatprep.subr.bf16.mxu0 0
  %1799 = vmatpush1.bf16.msra.mxu0 0
  %1800 = vmatprep.mubr.bf16.mxu0 0
  %1801 = vmatmul.mubr.bf16.gmra.mrb[0].mxu0 %v365
  %v1802 = vpop.f32.mrb[0].mxu0
  %v1803 = vadd.f32 %v1755, %v1802
  %v1804 = vpop.f32.mrb[0].mxu0
  %v1805 = vpop.f32.mrb[0].mxu0
  %v1806 = vadd.f32 %v1758, %v1805
  %v1807 = vpop.f32.mrb[0].mxu0
  %1808 = vmatprep.mubr.bf16.mxu0 0
  %1809 = vmatmul.mubr.bf16.gmra.mrb[0].mxu0 %v368
  %v1810 = vpop.f32.mrb[0].mxu0
  %v1811 = vadd.f32 %v1763, %v1810
  %v1812 = vpop.f32.mrb[0].mxu0
  %v1813 = vpop.f32.mrb[0].mxu0
  %v1814 = vpop.f32.mrb[0].mxu0
  %1815 = vdwg.mxu0
  %v1816 = vmax.f32 %v1381, %v1803
  %v1817 = vmax.f32 %v1382, %v1806
  %v1818 = vmax.f32 %v1383, %v1811
  %v1819 = vld [vmem:[%s5] sm:$0x1]
  %v1821 = vlaneseq
  %v1822 = vshrl.u32 %v1821, 7
  %v1823 = vsub.s32 0, %v1822
  %v1824 = vrot.slane %v1819, %v1823
  %v1826 = vadd.f32 %v1816, %v1824
  %v1827 = vadd.f32 %v1817, %v1824
  %v1828 = vadd.f32 %v1818, %v1824
  %v1829 = vmax.f32 %v1826, 0.0
  %v1830 = vmax.f32 %v1827, 0.0
  %v1831 = vmax.f32 %v1828, 0.0
  %v1832 = vpack.c.bf16 %v1830, %v1829
  %v1833 = vpack.c.bf16 %v1831, %v1831
  %v1836 = vunpack.c.l.b16 %v1832
  %v1837 = vunpack.c.h.b16 %v1832
  %v1838 = vunpack.c.l.b16 %v1833
  %v1839 = vpack.c.b16 %v1836, %v1836
  %v1840 = vpack.c.b16 %v1837, %v1837
  %v1841 = vpack.c.b16 %v1838, %v1838
  %1845 = vst [vmem:[%s6] sm:$0xf] %v1839
  %1846 = vst [vmem:[%s6 + $0x4] sm:$0xf] %v1840
  %1847 = vst [vmem:[%s6 + $0x8] sm:$0xf] %v1841
  // Predicated region
  $region26: #{can_forward.6} parent=0 // pred_check
    _
  $region27: #{can_forward.6} parent=0 // pred_check_branch
    %1849 = sbr.rel (0) target = $region29
  $region28: #{can_forward.6} parent=0 // pred_region
    _
  $region29: #{can_forward.6} parent=0 // pred_fallthru
    _
  // Predicated region
  $region30: #{can_forward.6} parent=0 // pred_check
    _
  $region31: #{can_forward.6} parent=0 // pred_check_branch
    %1851 = sbr.rel (0) target = $region33
  $region32: #{can_forward.6} parent=0 // pred_region
    _
  $region33: #{can_forward.6} parent=0 // pred_fallthru
    _

// kernel: can_forward.7
$region0: #{can_forward.7}
  #allocation0 [shape = 'u32[]', space=smem, size = 0x4, offset = 0x4, fixed_abs, tag = 'smem constant byte address 0x4 - core index']
  #allocation1 [shape = 'u32[144,128]{1,0:T(1,128)}', space=vmem, size = 0x12000, scoped, tag = 'internal scratch']
  #allocation2 [shape = 'f32[8,768]{1,0:T(8,128)}', space=vmem, size = 0x6000, scoped, tag = 'scratch operand']
  %s0 = inlined_call_operand.vmem [shape: bf16[8,1536], index: 0, kind: input, shape index: {}]
  %s1 = inlined_call_operand.vmem [shape: bf16[1536,768], index: 1, kind: input, shape index: {}]
  %s2 = inlined_call_operand.vmem [shape: f32[1,768], index: 2, kind: input, shape index: {}]
  %s3 = inlined_call_operand.vmem [shape: bf16[768,128], index: 3, kind: input, shape index: {}]
  %s4 = inlined_call_operand.vmem [shape: f32[1,128], index: 4, kind: input, shape index: {}]
  %s5 = inlined_call_operand.vmem [shape: bf16[128,128], index: 5, kind: input, shape index: {}]
  %s6 = inlined_call_operand.vmem [shape: f32[1,128], index: 6, kind: input, shape index: {}]
  %s7 = inlined_call_operand.vmem [shape: f32[8,128], index: 7, kind: output, shape index: {}]
  %s8 = sld [smem:[#allocation0]]
  $region69: #{can_forward.7} parent=0
    _
  %s10 = ssub.s32 1, %s8
  %s11 = scalar_select 0, %s10, %s8
  loop: start=0, step=1, limit=5
  $region2: #{can_forward.7} parent=0 // loop_pre_header
    _
  $region3: #{can_forward.7} parent=0 // loop_header
    %s13 = sphi 0, %s17
    %p14 = scmp.ge.s32.totalorder %s13, 5
    %s23 = sphi 0, %s25
    %s26 = sphi 0, %s23
    %s27 = sphi 0, %s26
    %s43 = sphi 0, %s27
    %s49 = sphi 0, %s51
    %s52 = sphi 0, %s49
    %s53 = sphi 0, %s52
    %s69 = sphi 0, %s53
    %s73 = sphi 0, %s73
    %s75 = sphi 0, %s73
    %s76 = sphi 0, %s75
    %s90 = sphi 0, %s76
    %s94 = sphi 0, %s94
    %s96 = sphi 0, %s94
    %s97 = sphi 0, %s96
    %s111 = sphi 0, %s97
    %s115 = sphi 0, %s115
    %s117 = sphi 0, %s115
    %s118 = sphi 0, %s117
    %s132 = sphi 0, %s118
    %s136 = sphi 0, %s136
    %s138 = sphi 0, %s136
    %s139 = sphi 0, %s138
    %s153 = sphi 0, %s139
    %s157 = sphi 0, %s157
    %s159 = sphi 0, %s157
    %s160 = sphi 0, %s159
    %s174 = sphi 0, %s160
    %s178 = sphi 0, %s178
    %s180 = sphi 0, %s178
    %s181 = sphi 0, %s180
    %s195 = sphi 0, %s181
  $region4: #{can_forward.7} parent=0 // loop_header_branch
    %16 = sbr.rel (%p14) target = $region8
  $region5: #{can_forward.7} parent=0 // loop_body
    %s18 = ssub.s32 %s13, 1
    %s19 = ssub.s32 %s13, 2
    %s20 = sadd.s32 %s13, 1
    %s21 = ssub.s32 %s13, %s20
    %p22 = scmp.eq.s32.totalorder %s21, 0
    %s24 = sadd.s32 %s23, 1
    %s25 = scalar_select %p22, %s23, %s24
    %p28 = pneg %p22
    %p29 = scmp.eq.s32.totalorder %s13, 2
    %p30 = por %p28, %p29
    %p31 = scmp.ne.s32.totalorder %s23, %s26
    %p32 = scmp.eq.s32.totalorder %s13, 0
    %p33 = por %p31, %p32
    %p34 = scmp.ne.s32.totalorder %s23, %s26
    %p35 = scmp.eq.s32.totalorder %s18, 2
    %p36 = por %p34, %p35
    %p37 = scmp.ne.s32.totalorder %s26, %s27
    %p38 = scmp.eq.s32.totalorder %s18, 0
    %p39 = por %p37, %p38
    %p40 = scmp.ne.s32.totalorder %s26, %s27
    %p41 = scmp.eq.s32.totalorder %s19, 2
    %p42 = por %p40, %p41
    %p44 = scmp.ne.s32.totalorder %s27, %s43
    %p45 = scmp.eq.s32.totalorder %s19, 0
    %p46 = por %p44, %p45
    %s47 = ssub.s32 %s13, %s20
    %p48 = scmp.eq.s32.totalorder %s47, 0
    %s50 = sadd.s32 %s49, 1
    %s51 = scalar_select %p48, %s49, %s50
    %p54 = pneg %p48
    %p55 = scmp.eq.s32.totalorder %s13, 2
    %p56 = por %p54, %p55
    %p57 = scmp.ne.s32.totalorder %s49, %s52
    %p58 = scmp.eq.s32.totalorder %s13, 0
    %p59 = por %p57, %p58
    %p60 = scmp.ne.s32.totalorder %s49, %s52
    %p61 = scmp.eq.s32.totalorder %s18, 2
    %p62 = por %p60, %p61
    %p63 = scmp.ne.s32.totalorder %s52, %s53
    %p64 = scmp.eq.s32.totalorder %s18, 0
    %p65 = por %p63, %p64
    %p66 = scmp.ne.s32.totalorder %s52, %s53
    %p67 = scmp.eq.s32.totalorder %s19, 2
    %p68 = por %p66, %p67
    %p70 = scmp.ne.s32.totalorder %s53, %s69
    %p71 = scmp.eq.s32.totalorder %s19, 0
    %p72 = por %p70, %p71
    %s74 = sadd.s32 %s73, 1
    %p77 = scmp.eq.s32.totalorder %s13, 2
    %p78 = scmp.ne.s32.totalorder %s73, %s75
    %p79 = scmp.eq.s32.totalorder %s13, 0
    %p80 = por %p78, %p79
    %p81 = scmp.ne.s32.totalorder %s73, %s75
    %p82 = scmp.eq.s32.totalorder %s18, 2
    %p83 = por %p81, %p82
    %p84 = scmp.ne.s32.totalorder %s75, %s76
    %p85 = scmp.eq.s32.totalorder %s18, 0
    %p86 = por %p84, %p85
    %p87 = scmp.ne.s32.totalorder %s75, %s76
    %p88 = scmp.eq.s32.totalorder %s19, 2
    %p89 = por %p87, %p88
    %p91 = scmp.ne.s32.totalorder %s76, %s90
    %p92 = scmp.eq.s32.totalorder %s19, 0
    %p93 = por %p91, %p92
    %s95 = sadd.s32 %s94, 1
    %p98 = scmp.eq.s32.totalorder %s13, 2
    %p99 = scmp.ne.s32.totalorder %s94, %s96
    %p100 = scmp.eq.s32.totalorder %s13, 0
    %p101 = por %p99, %p100
    %p102 = scmp.ne.s32.totalorder %s94, %s96
    %p103 = scmp.eq.s32.totalorder %s18, 2
    %p104 = por %p102, %p103
    %p105 = scmp.ne.s32.totalorder %s96, %s97
    %p106 = scmp.eq.s32.totalorder %s18, 0
    %p107 = por %p105, %p106
    %p108 = scmp.ne.s32.totalorder %s96, %s97
    %p109 = scmp.eq.s32.totalorder %s19, 2
    %p110 = por %p108, %p109
    %p112 = scmp.ne.s32.totalorder %s97, %s111
    %p113 = scmp.eq.s32.totalorder %s19, 0
    %p114 = por %p112, %p113
    %s116 = sadd.s32 %s115, 1
    %p119 = scmp.eq.s32.totalorder %s13, 2
    %p120 = scmp.ne.s32.totalorder %s115, %s117
    %p121 = scmp.eq.s32.totalorder %s13, 0
    %p122 = por %p120, %p121
    %p123 = scmp.ne.s32.totalorder %s115, %s117
    %p124 = scmp.eq.s32.totalorder %s18, 2
    %p125 = por %p123, %p124
    %p126 = scmp.ne.s32.totalorder %s117, %s118
    %p127 = scmp.eq.s32.totalorder %s18, 0
    %p128 = por %p126, %p127
    %p129 = scmp.ne.s32.totalorder %s117, %s118
    %p130 = scmp.eq.s32.totalorder %s19, 2
    %p131 = por %p129, %p130
    %p133 = scmp.ne.s32.totalorder %s118, %s132
    %p134 = scmp.eq.s32.totalorder %s19, 0
    %p135 = por %p133, %p134
    %s137 = sadd.s32 %s136, 1
    %p140 = scmp.eq.s32.totalorder %s13, 2
    %p141 = scmp.ne.s32.totalorder %s136, %s138
    %p142 = scmp.eq.s32.totalorder %s13, 0
    %p143 = por %p141, %p142
    %p144 = scmp.ne.s32.totalorder %s136, %s138
    %p145 = scmp.eq.s32.totalorder %s18, 2
    %p146 = por %p144, %p145
    %p147 = scmp.ne.s32.totalorder %s138, %s139
    %p148 = scmp.eq.s32.totalorder %s18, 0
    %p149 = por %p147, %p148
    %p150 = scmp.ne.s32.totalorder %s138, %s139
    %p151 = scmp.eq.s32.totalorder %s19, 2
    %p152 = por %p150, %p151
    %p154 = scmp.ne.s32.totalorder %s139, %s153
    %p155 = scmp.eq.s32.totalorder %s19, 0
    %p156 = por %p154, %p155
    %s158 = sadd.s32 %s157, 1
    %p161 = scmp.eq.s32.totalorder %s13, 2
    %p162 = scmp.ne.s32.totalorder %s157, %s159
    %p163 = scmp.eq.s32.totalorder %s13, 0
    %p164 = por %p162, %p163
    %p165 = scmp.ne.s32.totalorder %s157, %s159
    %p166 = scmp.eq.s32.totalorder %s18, 2
    %p167 = por %p165, %p166
    %p168 = scmp.ne.s32.totalorder %s159, %s160
    %p169 = scmp.eq.s32.totalorder %s18, 0
    %p170 = por %p168, %p169
    %p171 = scmp.ne.s32.totalorder %s159, %s160
    %p172 = scmp.eq.s32.totalorder %s19, 2
    %p173 = por %p171, %p172
    %p175 = scmp.ne.s32.totalorder %s160, %s174
    %p176 = scmp.eq.s32.totalorder %s19, 0
    %p177 = por %p175, %p176
    %s179 = sadd.s32 %s178, 1
    %p182 = scmp.eq.s32.totalorder %s13, 2
    %p183 = scmp.ne.s32.totalorder %s178, %s180
    %p184 = scmp.eq.s32.totalorder %s13, 0
    %p185 = por %p183, %p184
    %p186 = scmp.ne.s32.totalorder %s178, %s180
    %p187 = scmp.eq.s32.totalorder %s18, 2
    %p188 = por %p186, %p187
    %p189 = scmp.ne.s32.totalorder %s180, %s181
    %p190 = scmp.eq.s32.totalorder %s18, 0
    %p191 = por %p189, %p190
    %p192 = scmp.ne.s32.totalorder %s180, %s181
    %p193 = scmp.eq.s32.totalorder %s19, 2
    %p194 = por %p192, %p193
    %p196 = scmp.ne.s32.totalorder %s181, %s195
    %p197 = scmp.eq.s32.totalorder %s19, 0
    %p198 = por %p196, %p197
    %p199 = scmp.le.s32.totalorder 1, %s13
    %p200 = scmp.lt.s32.totalorder %s13, 4
    %p201 = pnand %p199, %p200
    %p202 = pneg %p201
    // Predicated region
    $region9: #{can_forward.7} parent=5 // pred_check
      _
    $region10: #{can_forward.7} parent=5 // pred_check_branch
      %204 = sbr.rel (%p201) target = $region12
    $region11: #{can_forward.7} parent=5 // pred_region
      %s205 = ssub.s32 %s13, 1
      // Predicated region
      $region13: #{can_forward.7} parent=11 // pred_check
        %p206 = pneg %p86
      $region14: #{can_forward.7} parent=11 // pred_check_branch
        %208 = sbr.rel (%p206) target = $region16
      $region15: #{can_forward.7} parent=11 // pred_region
        _
      $region16: #{can_forward.7} parent=11 // pred_fallthru
        _
      // Predicated region
      $region17: #{can_forward.7} parent=11 // pred_check
        %p209 = pneg %p107
      $region18: #{can_forward.7} parent=11 // pred_check_branch
        %211 = sbr.rel (%p209) target = $region20
      $region19: #{can_forward.7} parent=11 // pred_region
        _
      $region20: #{can_forward.7} parent=11 // pred_fallthru
        _
      // Predicated region
      $region21: #{can_forward.7} parent=11 // pred_check
        %p212 = pneg %p128
      $region22: #{can_forward.7} parent=11 // pred_check_branch
        %214 = sbr.rel (%p212) target = $region24
      $region23: #{can_forward.7} parent=11 // pred_region
        _
      $region24: #{can_forward.7} parent=11 // pred_fallthru
        _
      // Predicated region
      $region25: #{can_forward.7} parent=11 // pred_check
        %p215 = pneg %p149
      $region26: #{can_forward.7} parent=11 // pred_check_branch
        %217 = sbr.rel (%p215) target = $region28
      $region27: #{can_forward.7} parent=11 // pred_region
        _
      $region28: #{can_forward.7} parent=11 // pred_fallthru
        _
      // Predicated region
      $region29: #{can_forward.7} parent=11 // pred_check
        %p218 = pneg %p170
      $region30: #{can_forward.7} parent=11 // pred_check_branch
        %220 = sbr.rel (%p218) target = $region32
      $region31: #{can_forward.7} parent=11 // pred_region
        _
      $region32: #{can_forward.7} parent=11 // pred_fallthru
        _
    $region12: #{can_forward.7} parent=5 // pred_fallthru
      _
    %p221 = scmp.lt.s32.totalorder %s13, 3
    // Predicated region
    $region33: #{can_forward.7} parent=5 // pred_check
      %p222 = pneg %p221
    $region34: #{can_forward.7} parent=5 // pred_check_branch
      %224 = sbr.rel (%p222) target = $region36
    $region35: #{can_forward.7} parent=5 // pred_region
      // Predicated region
      $region37: #{can_forward.7} parent=35 // pred_check
        %p225 = pneg %p33
      $region38: #{can_forward.7} parent=35 // pred_check_branch
        %227 = sbr.rel (%p225) target = $region40
      $region39: #{can_forward.7} parent=35 // pred_region
        %s228 = smul.u32 4, %s13
        %p229 = scmp.lt.s32.totalorder %s228, 11
        %s230 = scalar_select %p229, %s228, 11
        %s231 = smul.addr %s230, 4
        %s232 = scalar_lea.vmem %s0, %s231
        %s233 = smul.u32 4, %s13
      $region40: #{can_forward.7} parent=35 // pred_fallthru
        _
      // Predicated region
      $region41: #{can_forward.7} parent=35 // pred_check
        %p234 = pneg %p59
      $region42: #{can_forward.7} parent=35 // pred_check_branch
        %236 = sbr.rel (%p234) target = $region44
      $region43: #{can_forward.7} parent=35 // pred_region
        %s237 = smul.u32 64, %s13
        %p238 = scmp.lt.s32.totalorder %s237, 191
        %s239 = scalar_select %p238, %s237, 191
        %s240 = smul.addr %s239, 6
        %s241 = smul.addr %s240, 4
        %s242 = scalar_lea.vmem %s1, %s241
        %s243 = smul.u32 64, %s13
      $region44: #{can_forward.7} parent=35 // pred_fallthru
        _
    $region36: #{can_forward.7} parent=5 // pred_fallthru
      _
    %p244 = scmp.le.s32.totalorder 1, %s13
    %p245 = scmp.lt.s32.totalorder %s13, 4
    %p246 = pnand %p244, %p245
    %p247 = pneg %p246
    // Predicated region
    $region45: #{can_forward.7} parent=5 // pred_check
      _
    $region46: #{can_forward.7} parent=5 // pred_check_branch
      %249 = sbr.rel (%p246) target = $region48
    $region47: #{can_forward.7} parent=5 // pred_region
      %s250 = ssub.s32 %s13, 1
      %s251 = smul.u32 4, %s18
      %p252 = scmp.lt.s32.totalorder %s251, 11
      %s253 = scalar_select %p252, %s251, 11
      %s254 = smul.addr %s253, 4
      %s255 = scalar_lea.vmem %s0, %s254
      %p256 = pneg %p39
      %p257 = pneg %p36
      %s258 = smul.u32 64, %s18
      %p259 = scmp.lt.s32.totalorder %s258, 191
      %s260 = scalar_select %p259, %s258, 191
      %s261 = smul.addr %s260, 6
      %s262 = smul.addr %s261, 4
      %s263 = scalar_lea.vmem %s1, %s262
      %p264 = pneg %p65
      %p265 = pneg %p62
      %p266 = pneg %p86
      %p267 = pneg %p83
      %p268 = pneg %p107
      %p269 = pneg %p104
      %p270 = pneg %p128
      %p271 = pneg %p125
      %p272 = pneg %p149
      %p273 = pneg %p146
      %p274 = pneg %p170
      %p275 = pneg %p167
      %p276 = pneg %p191
      %p277 = pneg %p188
      %s278 = smul.u32 4, %s18
      %p279 = scmp.lt.s32.totalorder %s278, 11
      %s280 = scalar_select %p279, %s278, 11
      %s281 = smul.addr %s280, 4
      %s282 = scalar_lea.vmem %s0, %s281
      %s283 = smul.u32 4, %s18
      %s284 = smul.u32 64, %s18
      %p285 = scmp.lt.s32.totalorder %s284, 191
      %s286 = scalar_select %p285, %s284, 191
      %s287 = smul.addr %s286, 6
      %s288 = smul.addr %s287, 4
      %s289 = scalar_lea.vmem %s1, %s288
      %s290 = smul.u32 64, %s18
      %p292 = scmp.eq.s32.totalorder %s18, 0
      // Predicated region
      $region49: #{can_forward.7} parent=47 // pred_check
        %p293 = pneg %p292
      $region50: #{can_forward.7} parent=47 // pred_check_branch
        %295 = sbr.rel (%p293) target = $region52
      $region51: #{can_forward.7} parent=47 // pred_region
        %296 = vst [vmem:[#allocation2] sm:$0xff] 0.0
        %297 = vst [vmem:[#allocation2 + $0x8] sm:$0xff] 0.0
        %298 = vst [vmem:[#allocation2 + $0x10] sm:$0xff] 0.0
        %299 = vst [vmem:[#allocation2 + $0x18] sm:$0xff] 0.0
        %300 = vst [vmem:[#allocation2 + $0x20] sm:$0xff] 0.0
        %301 = vst [vmem:[#allocation2 + $0x28] sm:$0xff] 0.0
      $region52: #{can_forward.7} parent=47 // pred_fallthru
        _
      %v302 = vld [vmem:[#allocation2] sm:$0xff]
      %v303 = vld [vmem:[#allocation2 + $0x8] sm:$0xff]
      %v304 = vld [vmem:[#allocation2 + $0x10] sm:$0xff]
      %v305 = vld [vmem:[#allocation2 + $0x18] sm:$0xff]
      %v306 = vld [vmem:[#allocation2 + $0x20] sm:$0xff]
      %v307 = vld [vmem:[#allocation2 + $0x28] sm:$0xff]
      %v308 = vld [vmem:[%s282] sm:$0xff]
      %v309 = vld [vmem:[%s282 + $0x8] sm:$0xff]
      %v310 = vld [vmem:[%s289] sm:$0xff]
      %v311 = vld [vmem:[%s289 + $0x8] sm:$0xff]
      %v312 = vld [vmem:[%s289 + $0x10] sm:$0xff]
      %v313 = vld [vmem:[%s289 + $0x18] sm:$0xff]
      %v314 = vld [vmem:[%s289 + $0x20] sm:$0xff]
      %v315 = vld [vmem:[%s289 + $0x28] sm:$0xff]
      %v316 = vld [vmem:[%s289 + $0x30] sm:$0xff]
      %v317 = vld [vmem:[%s289 + $0x38] sm:$0xff]
      %v318 = vld [vmem:[%s289 + $0x40] sm:$0xff]
      %v319 = vld [vmem:[%s289 + $0x48] sm:$0xff]
      %v320 = vld [vmem:[%s289 + $0x50] sm:$0xff]
      %v321 = vld [vmem:[%s289 + $0x58] sm:$0xff]
      %v322 = vld [vmem:[%s289 + $0x60] sm:$0xff]
      %v323 = vld [vmem:[%s289 + $0x68] sm:$0xff]
      %v324 = vld [vmem:[%s289 + $0x70] sm:$0xff]
      %v325 = vld [vmem:[%s289 + $0x78] sm:$0xff]
      %v326 = vld [vmem:[%s289 + $0x80] sm:$0xff]
      %v327 = vld [vmem:[%s289 + $0x88] sm:$0xff]
      %v328 = vld [vmem:[%s289 + $0x90] sm:$0xff]
      %v329 = vld [vmem:[%s289 + $0x98] sm:$0xff]
      %v330 = vld [vmem:[%s289 + $0xa0] sm:$0xff]
      %v331 = vld [vmem:[%s289 + $0xa8] sm:$0xff]
      %v332 = vld [vmem:[%s289 + $0xb0] sm:$0xff]
      %v333 = vld [vmem:[%s289 + $0xb8] sm:$0xff]
      %v334 = vld [vmem:[%s289 + $0xc0] sm:$0xff]
      %v335 = vld [vmem:[%s289 + $0xc8] sm:$0xff]
      %v336 = vld [vmem:[%s289 + $0xd0] sm:$0xff]
      %v337 = vld [vmem:[%s289 + $0xd8] sm:$0xff]
      %v338 = vld [vmem:[%s289 + $0xe0] sm:$0xff]
      %v339 = vld [vmem:[%s289 + $0xe8] sm:$0xff]
      %v340 = vld [vmem:[%s289 + $0xf0] sm:$0xff]
      %v341 = vld [vmem:[%s289 + $0xf8] sm:$0xff]
      %v342 = vld [vmem:[%s289 + $0x100] sm:$0xff]
      %v343 = vld [vmem:[%s289 + $0x108] sm:$0xff]
      %v344 = vld [vmem:[%s289 + $0x110] sm:$0xff]
      %v345 = vld [vmem:[%s289 + $0x118] sm:$0xff]
      %v346 = vld [vmem:[%s289 + $0x120] sm:$0xff]
      %v347 = vld [vmem:[%s289 + $0x128] sm:$0xff]
      %v348 = vld [vmem:[%s289 + $0x130] sm:$0xff]
      %v349 = vld [vmem:[%s289 + $0x138] sm:$0xff]
      %v350 = vld [vmem:[%s289 + $0x140] sm:$0xff]
      %v351 = vld [vmem:[%s289 + $0x148] sm:$0xff]
      %v352 = vld [vmem:[%s289 + $0x150] sm:$0xff]
      %v353 = vld [vmem:[%s289 + $0x158] sm:$0xff]
      %v354 = vld [vmem:[%s289 + $0x160] sm:$0xff]
      %v355 = vld [vmem:[%s289 + $0x168] sm:$0xff]
      %v356 = vld [vmem:[%s289 + $0x170] sm:$0xff]
      %v357 = vld [vmem:[%s289 + $0x178] sm:$0xff]
      %v358 = vld [vmem:[%s289 + $0x180] sm:$0xff]
      %v359 = vld [vmem:[%s289 + $0x188] sm:$0xff]
      %v360 = vld [vmem:[%s289 + $0x190] sm:$0xff]
      %v361 = vld [vmem:[%s289 + $0x198] sm:$0xff]
      %v362 = vld [vmem:[%s289 + $0x1a0] sm:$0xff]
      %v363 = vld [vmem:[%s289 + $0x1a8] sm:$0xff]
      %v364 = vld [vmem:[%s289 + $0x1b0] sm:$0xff]
      %v365 = vld [vmem:[%s289 + $0x1b8] sm:$0xff]
      %v366 = vld [vmem:[%s289 + $0x1c0] sm:$0xff]
      %v367 = vld [vmem:[%s289 + $0x1c8] sm:$0xff]
      %v368 = vld [vmem:[%s289 + $0x1d0] sm:$0xff]
      %v369 = vld [vmem:[%s289 + $0x1d8] sm:$0xff]
      %v370 = vld [vmem:[%s289 + $0x1e0] sm:$0xff]
      %v371 = vld [vmem:[%s289 + $0x1e8] sm:$0xff]
      %v372 = vld [vmem:[%s289 + $0x1f0] sm:$0xff]
      %v373 = vld [vmem:[%s289 + $0x1f8] sm:$0xff]
      %v374 = vld [vmem:[%s289 + $0x200] sm:$0xff]
      %v375 = vld [vmem:[%s289 + $0x208] sm:$0xff]
      %v376 = vld [vmem:[%s289 + $0x210] sm:$0xff]
      %v377 = vld [vmem:[%s289 + $0x218] sm:$0xff]
      %v378 = vld [vmem:[%s289 + $0x220] sm:$0xff]
      %v379 = vld [vmem:[%s289 + $0x228] sm:$0xff]
      %v380 = vld [vmem:[%s289 + $0x230] sm:$0xff]
      %v381 = vld [vmem:[%s289 + $0x238] sm:$0xff]
      %v382 = vld [vmem:[%s289 + $0x240] sm:$0xff]
      %v383 = vld [vmem:[%s289 + $0x248] sm:$0xff]
      %v384 = vld [vmem:[%s289 + $0x250] sm:$0xff]
      %v385 = vld [vmem:[%s289 + $0x258] sm:$0xff]
      %v386 = vld [vmem:[%s289 + $0x260] sm:$0xff]
      %v387 = vld [vmem:[%s289 + $0x268] sm:$0xff]
      %v388 = vld [vmem:[%s289 + $0x270] sm:$0xff]
      %v389 = vld [vmem:[%s289 + $0x278] sm:$0xff]
      %v390 = vld [vmem:[%s289 + $0x280] sm:$0xff]
      %v391 = vld [vmem:[%s289 + $0x288] sm:$0xff]
      %v392 = vld [vmem:[%s289 + $0x290] sm:$0xff]
      %v393 = vld [vmem:[%s289 + $0x298] sm:$0xff]
      %v394 = vld [vmem:[%s289 + $0x2a0] sm:$0xff]
      %v395 = vld [vmem:[%s289 + $0x2a8] sm:$0xff]
      %v396 = vld [vmem:[%s289 + $0x2b0] sm:$0xff]
      %v397 = vld [vmem:[%s289 + $0x2b8] sm:$0xff]
      %v398 = vld [vmem:[%s289 + $0x2c0] sm:$0xff]
      %v399 = vld [vmem:[%s289 + $0x2c8] sm:$0xff]
      %v400 = vld [vmem:[%s289 + $0x2d0] sm:$0xff]
      %v401 = vld [vmem:[%s289 + $0x2d8] sm:$0xff]
      %v402 = vld [vmem:[%s289 + $0x2e0] sm:$0xff]
      %v403 = vld [vmem:[%s289 + $0x2e8] sm:$0xff]
      %v404 = vld [vmem:[%s289 + $0x2f0] sm:$0xff]
      %v405 = vld [vmem:[%s289 + $0x2f8] sm:$0xff]
      %v406 = vld [vmem:[%s289 + $0x300] sm:$0xff]
      %v407 = vld [vmem:[%s289 + $0x308] sm:$0xff]
      %v408 = vld [vmem:[%s289 + $0x310] sm:$0xff]
      %v409 = vld [vmem:[%s289 + $0x318] sm:$0xff]
      %v410 = vld [vmem:[%s289 + $0x320] sm:$0xff]
      %v411 = vld [vmem:[%s289 + $0x328] sm:$0xff]
      %v412 = vld [vmem:[%s289 + $0x330] sm:$0xff]
      %v413 = vld [vmem:[%s289 + $0x338] sm:$0xff]
      %v414 = vld [vmem:[%s289 + $0x340] sm:$0xff]
      %v415 = vld [vmem:[%s289 + $0x348] sm:$0xff]
      %v416 = vld [vmem:[%s289 + $0x350] sm:$0xff]
      %v417 = vld [vmem:[%s289 + $0x358] sm:$0xff]
      %v418 = vld [vmem:[%s289 + $0x360] sm:$0xff]
      %v419 = vld [vmem:[%s289 + $0x368] sm:$0xff]
      %v420 = vld [vmem:[%s289 + $0x370] sm:$0xff]
      %v421 = vld [vmem:[%s289 + $0x378] sm:$0xff]
      %v422 = vld [vmem:[%s289 + $0x380] sm:$0xff]
      %v423 = vld [vmem:[%s289 + $0x388] sm:$0xff]
      %v424 = vld [vmem:[%s289 + $0x390] sm:$0xff]
      %v425 = vld [vmem:[%s289 + $0x398] sm:$0xff]
      %v426 = vld [vmem:[%s289 + $0x3a0] sm:$0xff]
      %v427 = vld [vmem:[%s289 + $0x3a8] sm:$0xff]
      %v428 = vld [vmem:[%s289 + $0x3b0] sm:$0xff]
      %v429 = vld [vmem:[%s289 + $0x3b8] sm:$0xff]
      %v430 = vld [vmem:[%s289 + $0x3c0] sm:$0xff]
      %v431 = vld [vmem:[%s289 + $0x3c8] sm:$0xff]
      %v432 = vld [vmem:[%s289 + $0x3d0] sm:$0xff]
      %v433 = vld [vmem:[%s289 + $0x3d8] sm:$0xff]
      %v434 = vld [vmem:[%s289 + $0x3e0] sm:$0xff]
      %v435 = vld [vmem:[%s289 + $0x3e8] sm:$0xff]
      %v436 = vld [vmem:[%s289 + $0x3f0] sm:$0xff]
      %v437 = vld [vmem:[%s289 + $0x3f8] sm:$0xff]
      %v438 = vld [vmem:[%s289 + $0x400] sm:$0xff]
      %v439 = vld [vmem:[%s289 + $0x408] sm:$0xff]
      %v440 = vld [vmem:[%s289 + $0x410] sm:$0xff]
      %v441 = vld [vmem:[%s289 + $0x418] sm:$0xff]
      %v442 = vld [vmem:[%s289 + $0x420] sm:$0xff]
      %v443 = vld [vmem:[%s289 + $0x428] sm:$0xff]
      %v444 = vld [vmem:[%s289 + $0x430] sm:$0xff]
      %v445 = vld [vmem:[%s289 + $0x438] sm:$0xff]
      %v446 = vld [vmem:[%s289 + $0x440] sm:$0xff]
      %v447 = vld [vmem:[%s289 + $0x448] sm:$0xff]
      %v448 = vld [vmem:[%s289 + $0x450] sm:$0xff]
      %v449 = vld [vmem:[%s289 + $0x458] sm:$0xff]
      %v450 = vld [vmem:[%s289 + $0x460] sm:$0xff]
      %v451 = vld [vmem:[%s289 + $0x468] sm:$0xff]
      %v452 = vld [vmem:[%s289 + $0x470] sm:$0xff]
      %v453 = vld [vmem:[%s289 + $0x478] sm:$0xff]
      %v454 = vld [vmem:[%s289 + $0x480] sm:$0xff]
      %v455 = vld [vmem:[%s289 + $0x488] sm:$0xff]
      %v456 = vld [vmem:[%s289 + $0x490] sm:$0xff]
      %v457 = vld [vmem:[%s289 + $0x498] sm:$0xff]
      %v458 = vld [vmem:[%s289 + $0x4a0] sm:$0xff]
      %v459 = vld [vmem:[%s289 + $0x4a8] sm:$0xff]
      %v460 = vld [vmem:[%s289 + $0x4b0] sm:$0xff]
      %v461 = vld [vmem:[%s289 + $0x4b8] sm:$0xff]
      %v462 = vld [vmem:[%s289 + $0x4c0] sm:$0xff]
      %v463 = vld [vmem:[%s289 + $0x4c8] sm:$0xff]
      %v464 = vld [vmem:[%s289 + $0x4d0] sm:$0xff]
      %v465 = vld [vmem:[%s289 + $0x4d8] sm:$0xff]
      %v466 = vld [vmem:[%s289 + $0x4e0] sm:$0xff]
      %v467 = vld [vmem:[%s289 + $0x4e8] sm:$0xff]
      %v468 = vld [vmem:[%s289 + $0x4f0] sm:$0xff]
      %v469 = vld [vmem:[%s289 + $0x4f8] sm:$0xff]
      %v470 = vld [vmem:[%s289 + $0x500] sm:$0xff]
      %v471 = vld [vmem:[%s289 + $0x508] sm:$0xff]
      %v472 = vld [vmem:[%s289 + $0x510] sm:$0xff]
      %v473 = vld [vmem:[%s289 + $0x518] sm:$0xff]
      %v474 = vld [vmem:[%s289 + $0x520] sm:$0xff]
      %v475 = vld [vmem:[%s289 + $0x528] sm:$0xff]
      %v476 = vld [vmem:[%s289 + $0x530] sm:$0xff]
      %v477 = vld [vmem:[%s289 + $0x538] sm:$0xff]
      %v478 = vld [vmem:[%s289 + $0x540] sm:$0xff]
      %v479 = vld [vmem:[%s289 + $0x548] sm:$0xff]
      %v480 = vld [vmem:[%s289 + $0x550] sm:$0xff]
      %v481 = vld [vmem:[%s289 + $0x558] sm:$0xff]
      %v482 = vld [vmem:[%s289 + $0x560] sm:$0xff]
      %v483 = vld [vmem:[%s289 + $0x568] sm:$0xff]
      %v484 = vld [vmem:[%s289 + $0x570] sm:$0xff]
      %v485 = vld [vmem:[%s289 + $0x578] sm:$0xff]
      %v486 = vld [vmem:[%s289 + $0x580] sm:$0xff]
      %v487 = vld [vmem:[%s289 + $0x588] sm:$0xff]
      %v488 = vld [vmem:[%s289 + $0x590] sm:$0xff]
      %v489 = vld [vmem:[%s289 + $0x598] sm:$0xff]
      %v490 = vld [vmem:[%s289 + $0x5a0] sm:$0xff]
      %v491 = vld [vmem:[%s289 + $0x5a8] sm:$0xff]
      %v492 = vld [vmem:[%s289 + $0x5b0] sm:$0xff]
      %v493 = vld [vmem:[%s289 + $0x5b8] sm:$0xff]
      %v494 = vld [vmem:[%s289 + $0x5c0] sm:$0xff]
      %v495 = vld [vmem:[%s289 + $0x5c8] sm:$0xff]
      %v496 = vld [vmem:[%s289 + $0x5d0] sm:$0xff]
      %v497 = vld [vmem:[%s289 + $0x5d8] sm:$0xff]
      %v498 = vld [vmem:[%s289 + $0x5e0] sm:$0xff]
      %v499 = vld [vmem:[%s289 + $0x5e8] sm:$0xff]
      %v500 = vld [vmem:[%s289 + $0x5f0] sm:$0xff]
      %v501 = vld [vmem:[%s289 + $0x5f8] sm:$0xff]
      %v504 = vunpack.c.l.b16 %v308
      %v505 = vunpack.c.h.b16 %v308
      %v506 = vunpack.c.l.b16 %v309
      %v507 = vunpack.c.h.b16 %v309
      %v508 = vpack.c.b16 %v504, %v504
      %v509 = vpack.c.b16 %v505, %v505
      %v510 = vpack.c.b16 %v506, %v506
      %v511 = vpack.c.b16 %v507, %v507
      %v708 = vunpack.c.l.b16 %v310
      %v709 = vunpack.c.h.b16 %v310
      %v710 = vunpack.c.l.b16 %v311
      %v711 = vunpack.c.h.b16 %v311
      %v712 = vunpack.c.l.b16 %v312
      %v713 = vunpack.c.h.b16 %v312
      %v714 = vunpack.c.l.b16 %v313
      %v715 = vunpack.c.h.b16 %v313
      %v716 = vunpack.c.l.b16 %v314
      %v717 = vunpack.c.h.b16 %v314
      %v718 = vunpack.c.l.b16 %v315
      %v719 = vunpack.c.h.b16 %v315
      %v720 = vunpack.c.l.b16 %v316
      %v721 = vunpack.c.h.b16 %v316
      %v722 = vunpack.c.l.b16 %v317
      %v723 = vunpack.c.h.b16 %v317
      %v724 = vunpack.c.l.b16 %v318
      %v725 = vunpack.c.h.b16 %v318
      %v726 = vunpack.c.l.b16 %v319
      %v727 = vunpack.c.h.b16 %v319
      %v728 = vunpack.c.l.b16 %v320
      %v729 = vunpack.c.h.b16 %v320
      %v730 = vunpack.c.l.b16 %v321
      %v731 = vunpack.c.h.b16 %v321
      %v732 = vunpack.c.l.b16 %v322
      %v733 = vunpack.c.h.b16 %v322
      %v734 = vunpack.c.l.b16 %v323
      %v735 = vunpack.c.h.b16 %v323
      %v736 = vunpack.c.l.b16 %v324
      %v737 = vunpack.c.h.b16 %v324
      %v738 = vunpack.c.l.b16 %v325
      %v739 = vunpack.c.h.b16 %v325
      %v740 = vunpack.c.l.b16 %v326
      %v741 = vunpack.c.h.b16 %v326
      %v742 = vunpack.c.l.b16 %v327
      %v743 = vunpack.c.h.b16 %v327
      %v744 = vunpack.c.l.b16 %v328
      %v745 = vunpack.c.h.b16 %v328
      %v746 = vunpack.c.l.b16 %v329
      %v747 = vunpack.c.h.b16 %v329
      %v748 = vunpack.c.l.b16 %v330
      %v749 = vunpack.c.h.b16 %v330
      %v750 = vunpack.c.l.b16 %v331
      %v751 = vunpack.c.h.b16 %v331
      %v752 = vunpack.c.l.b16 %v332
      %v753 = vunpack.c.h.b16 %v332
      %v754 = vunpack.c.l.b16 %v333
      %v755 = vunpack.c.h.b16 %v333
      %v756 = vunpack.c.l.b16 %v334
      %v757 = vunpack.c.h.b16 %v334
      %v758 = vunpack.c.l.b16 %v335
      %v759 = vunpack.c.h.b16 %v335
      %v760 = vunpack.c.l.b16 %v336
      %v761 = vunpack.c.h.b16 %v336
      %v762 = vunpack.c.l.b16 %v337
      %v763 = vunpack.c.h.b16 %v337
      %v764 = vunpack.c.l.b16 %v338
      %v765 = vunpack.c.h.b16 %v338
      %v766 = vunpack.c.l.b16 %v339
      %v767 = vunpack.c.h.b16 %v339
      %v768 = vunpack.c.l.b16 %v340
      %v769 = vunpack.c.h.b16 %v340
      %v770 = vunpack.c.l.b16 %v341
      %v771 = vunpack.c.h.b16 %v341
      %v772 = vunpack.c.l.b16 %v342
      %v773 = vunpack.c.h.b16 %v342
      %v774 = vunpack.c.l.b16 %v343
      %v775 = vunpack.c.h.b16 %v343
      %v776 = vunpack.c.l.b16 %v344
      %v777 = vunpack.c.h.b16 %v344
      %v778 = vunpack.c.l.b16 %v345
      %v779 = vunpack.c.h.b16 %v345
      %v780 = vunpack.c.l.b16 %v346
      %v781 = vunpack.c.h.b16 %v346
      %v782 = vunpack.c.l.b16 %v347
      %v783 = vunpack.c.h.b16 %v347
      %v784 = vunpack.c.l.b16 %v348
      %v785 = vunpack.c.h.b16 %v348
      %v786 = vunpack.c.l.b16 %v349
      %v787 = vunpack.c.h.b16 %v349
      %v788 = vunpack.c.l.b16 %v350
      %v789 = vunpack.c.h.b16 %v350
      %v790 = vunpack.c.l.b16 %v351
      %v791 = vunpack.c.h.b16 %v351
      %v792 = vunpack.c.l.b16 %v352
      %v793 = vunpack.c.h.b16 %v352
      %v794 = vunpack.c.l.b16 %v353
      %v795 = vunpack.c.h.b16 %v353
      %v796 = vunpack.c.l.b16 %v354
      %v797 = vunpack.c.h.b16 %v354
      %v798 = vunpack.c.l.b16 %v355
      %v799 = vunpack.c.h.b16 %v355
      %v800 = vunpack.c.l.b16 %v356
      %v801 = vunpack.c.h.b16 %v356
      %v802 = vunpack.c.l.b16 %v357
      %v803 = vunpack.c.h.b16 %v357
      %v804 = vunpack.c.l.b16 %v358
      %v805 = vunpack.c.h.b16 %v358
      %v806 = vunpack.c.l.b16 %v359
      %v807 = vunpack.c.h.b16 %v359
      %v808 = vunpack.c.l.b16 %v360
      %v809 = vunpack.c.h.b16 %v360
      %v810 = vunpack.c.l.b16 %v361
      %v811 = vunpack.c.h.b16 %v361
      %v812 = vunpack.c.l.b16 %v362
      %v813 = vunpack.c.h.b16 %v362
      %v814 = vunpack.c.l.b16 %v363
      %v815 = vunpack.c.h.b16 %v363
      %v816 = vunpack.c.l.b16 %v364
      %v817 = vunpack.c.h.b16 %v364
      %v818 = vunpack.c.l.b16 %v365
      %v819 = vunpack.c.h.b16 %v365
      %v820 = vunpack.c.l.b16 %v366
      %v821 = vunpack.c.h.b16 %v366
      %v822 = vunpack.c.l.b16 %v367
      %v823 = vunpack.c.h.b16 %v367
      %v824 = vunpack.c.l.b16 %v368
      %v825 = vunpack.c.h.b16 %v368
      %v826 = vunpack.c.l.b16 %v369
      %v827 = vunpack.c.h.b16 %v369
      %v828 = vunpack.c.l.b16 %v370
      %v829 = vunpack.c.h.b16 %v370
      %v830 = vunpack.c.l.b16 %v371
      %v831 = vunpack.c.h.b16 %v371
      %v832 = vunpack.c.l.b16 %v372
      %v833 = vunpack.c.h.b16 %v372
      %v834 = vunpack.c.l.b16 %v373
      %v835 = vunpack.c.h.b16 %v373
      %v836 = vunpack.c.l.b16 %v374
      %v837 = vunpack.c.h.b16 %v374
      %v838 = vunpack.c.l.b16 %v375
      %v839 = vunpack.c.h.b16 %v375
      %v840 = vunpack.c.l.b16 %v376
      %v841 = vunpack.c.h.b16 %v376
      %v842 = vunpack.c.l.b16 %v377
      %v843 = vunpack.c.h.b16 %v377
      %v844 = vunpack.c.l.b16 %v378
      %v845 = vunpack.c.h.b16 %v378
      %v846 = vunpack.c.l.b16 %v379
      %v847 = vunpack.c.h.b16 %v379
      %v848 = vunpack.c.l.b16 %v380
      %v849 = vunpack.c.h.b16 %v380
      %v850 = vunpack.c.l.b16 %v381
      %v851 = vunpack.c.h.b16 %v381
      %v852 = vunpack.c.l.b16 %v382
      %v853 = vunpack.c.h.b16 %v382
      %v854 = vunpack.c.l.b16 %v383
      %v855 = vunpack.c.h.b16 %v383
      %v856 = vunpack.c.l.b16 %v384
      %v857 = vunpack.c.h.b16 %v384
      %v858 = vunpack.c.l.b16 %v385
      %v859 = vunpack.c.h.b16 %v385
      %v860 = vunpack.c.l.b16 %v386
      %v861 = vunpack.c.h.b16 %v386
      %v862 = vunpack.c.l.b16 %v387
      %v863 = vunpack.c.h.b16 %v387
      %v864 = vunpack.c.l.b16 %v388
      %v865 = vunpack.c.h.b16 %v388
      %v866 = vunpack.c.l.b16 %v389
      %v867 = vunpack.c.h.b16 %v389
      %v868 = vunpack.c.l.b16 %v390
      %v869 = vunpack.c.h.b16 %v390
      %v870 = vunpack.c.l.b16 %v391
      %v871 = vunpack.c.h.b16 %v391
      %v872 = vunpack.c.l.b16 %v392
      %v873 = vunpack.c.h.b16 %v392
      %v874 = vunpack.c.l.b16 %v393
      %v875 = vunpack.c.h.b16 %v393
      %v876 = vunpack.c.l.b16 %v394
      %v877 = vunpack.c.h.b16 %v394
      %v878 = vunpack.c.l.b16 %v395
      %v879 = vunpack.c.h.b16 %v395
      %v880 = vunpack.c.l.b16 %v396
      %v881 = vunpack.c.h.b16 %v396
      %v882 = vunpack.c.l.b16 %v397
      %v883 = vunpack.c.h.b16 %v397
      %v884 = vunpack.c.l.b16 %v398
      %v885 = vunpack.c.h.b16 %v398
      %v886 = vunpack.c.l.b16 %v399
      %v887 = vunpack.c.h.b16 %v399
      %v888 = vunpack.c.l.b16 %v400
      %v889 = vunpack.c.h.b16 %v400
      %v890 = vunpack.c.l.b16 %v401
      %v891 = vunpack.c.h.b16 %v401
      %v892 = vunpack.c.l.b16 %v402
      %v893 = vunpack.c.h.b16 %v402
      %v894 = vunpack.c.l.b16 %v403
      %v895 = vunpack.c.h.b16 %v403
      %v896 = vunpack.c.l.b16 %v404
      %v897 = vunpack.c.h.b16 %v404
      %v898 = vunpack.c.l.b16 %v405
      %v899 = vunpack.c.h.b16 %v405
      %v900 = vunpack.c.l.b16 %v406
      %v901 = vunpack.c.h.b16 %v406
      %v902 = vunpack.c.l.b16 %v407
      %v903 = vunpack.c.h.b16 %v407
      %v904 = vunpack.c.l.b16 %v408
      %v905 = vunpack.c.h.b16 %v408
      %v906 = vunpack.c.l.b16 %v409
      %v907 = vunpack.c.h.b16 %v409
      %v908 = vunpack.c.l.b16 %v410
      %v909 = vunpack.c.h.b16 %v410
      %v910 = vunpack.c.l.b16 %v411
      %v911 = vunpack.c.h.b16 %v411
      %v912 = vunpack.c.l.b16 %v412
      %v913 = vunpack.c.h.b16 %v412
      %v914 = vunpack.c.l.b16 %v413
      %v915 = vunpack.c.h.b16 %v413
      %v916 = vunpack.c.l.b16 %v414
      %v917 = vunpack.c.h.b16 %v414
      %v918 = vunpack.c.l.b16 %v415
      %v919 = vunpack.c.h.b16 %v415
      %v920 = vunpack.c.l.b16 %v416
      %v921 = vunpack.c.h.b16 %v416
      %v922 = vunpack.c.l.b16 %v417
      %v923 = vunpack.c.h.b16 %v417
      %v924 = vunpack.c.l.b16 %v418
      %v925 = vunpack.c.h.b16 %v418
      %v926 = vunpack.c.l.b16 %v419
      %v927 = vunpack.c.h.b16 %v419
      %v928 = vunpack.c.l.b16 %v420
      %v929 = vunpack.c.h.b16 %v420
      %v930 = vunpack.c.l.b16 %v421
      %v931 = vunpack.c.h.b16 %v421
      %v932 = vunpack.c.l.b16 %v422
      %v933 = vunpack.c.h.b16 %v422
      %v934 = vunpack.c.l.b16 %v423
      %v935 = vunpack.c.h.b16 %v423
      %v936 = vunpack.c.l.b16 %v424
      %v937 = vunpack.c.h.b16 %v424
      %v938 = vunpack.c.l.b16 %v425
      %v939 = vunpack.c.h.b16 %v425
      %v940 = vunpack.c.l.b16 %v426
      %v941 = vunpack.c.h.b16 %v426
      %v942 = vunpack.c.l.b16 %v427
      %v943 = vunpack.c.h.b16 %v427
      %v944 = vunpack.c.l.b16 %v428
      %v945 = vunpack.c.h.b16 %v428
      %v946 = vunpack.c.l.b16 %v429
      %v947 = vunpack.c.h.b16 %v429
      %v948 = vunpack.c.l.b16 %v430
      %v949 = vunpack.c.h.b16 %v430
      %v950 = vunpack.c.l.b16 %v431
      %v951 = vunpack.c.h.b16 %v431
      %v952 = vunpack.c.l.b16 %v432
      %v953 = vunpack.c.h.b16 %v432
      %v954 = vunpack.c.l.b16 %v433
      %v955 = vunpack.c.h.b16 %v433
      %v956 = vunpack.c.l.b16 %v434
      %v957 = vunpack.c.h.b16 %v434
      %v958 = vunpack.c.l.b16 %v435
      %v959 = vunpack.c.h.b16 %v435
      %v960 = vunpack.c.l.b16 %v436
      %v961 = vunpack.c.h.b16 %v436
      %v962 = vunpack.c.l.b16 %v437
      %v963 = vunpack.c.h.b16 %v437
      %v964 = vunpack.c.l.b16 %v438
      %v965 = vunpack.c.h.b16 %v438
      %v966 = vunpack.c.l.b16 %v439
      %v967 = vunpack.c.h.b16 %v439
      %v968 = vunpack.c.l.b16 %v440
      %v969 = vunpack.c.h.b16 %v440
      %v970 = vunpack.c.l.b16 %v441
      %v971 = vunpack.c.h.b16 %v441
      %v972 = vunpack.c.l.b16 %v442
      %v973 = vunpack.c.h.b16 %v442
      %v974 = vunpack.c.l.b16 %v443
      %v975 = vunpack.c.h.b16 %v443
      %v976 = vunpack.c.l.b16 %v444
      %v977 = vunpack.c.h.b16 %v444
      %v978 = vunpack.c.l.b16 %v445
      %v979 = vunpack.c.h.b16 %v445
      %v980 = vunpack.c.l.b16 %v446
      %v981 = vunpack.c.h.b16 %v446
      %v982 = vunpack.c.l.b16 %v447
      %v983 = vunpack.c.h.b16 %v447
      %v984 = vunpack.c.l.b16 %v448
      %v985 = vunpack.c.h.b16 %v448
      %v986 = vunpack.c.l.b16 %v449
      %v987 = vunpack.c.h.b16 %v449
      %v988 = vunpack.c.l.b16 %v450
      %v989 = vunpack.c.h.b16 %v450
      %v990 = vunpack.c.l.b16 %v451
      %v991 = vunpack.c.h.b16 %v451
      %v992 = vunpack.c.l.b16 %v452
      %v993 = vunpack.c.h.b16 %v452
      %v994 = vunpack.c.l.b16 %v453
      %v995 = vunpack.c.h.b16 %v453
      %v996 = vunpack.c.l.b16 %v454
      %v997 = vunpack.c.h.b16 %v454
      %v998 = vunpack.c.l.b16 %v455
      %v999 = vunpack.c.h.b16 %v455
      %v1000 = vunpack.c.l.b16 %v456
      %v1001 = vunpack.c.h.b16 %v456
      %v1002 = vunpack.c.l.b16 %v457
      %v1003 = vunpack.c.h.b16 %v457
      %v1004 = vunpack.c.l.b16 %v458
      %v1005 = vunpack.c.h.b16 %v458
      %v1006 = vunpack.c.l.b16 %v459
      %v1007 = vunpack.c.h.b16 %v459
      %v1008 = vunpack.c.l.b16 %v460
      %v1009 = vunpack.c.h.b16 %v460
      %v1010 = vunpack.c.l.b16 %v461
      %v1011 = vunpack.c.h.b16 %v461
      %v1012 = vunpack.c.l.b16 %v462
      %v1013 = vunpack.c.h.b16 %v462
      %v1014 = vunpack.c.l.b16 %v463
      %v1015 = vunpack.c.h.b16 %v463
      %v1016 = vunpack.c.l.b16 %v464
      %v1017 = vunpack.c.h.b16 %v464
      %v1018 = vunpack.c.l.b16 %v465
      %v1019 = vunpack.c.h.b16 %v465
      %v1020 = vunpack.c.l.b16 %v466
      %v1021 = vunpack.c.h.b16 %v466
      %v1022 = vunpack.c.l.b16 %v467
      %v1023 = vunpack.c.h.b16 %v467
      %v1024 = vunpack.c.l.b16 %v468
      %v1025 = vunpack.c.h.b16 %v468
      %v1026 = vunpack.c.l.b16 %v469
      %v1027 = vunpack.c.h.b16 %v469
      %v1028 = vunpack.c.l.b16 %v470
      %v1029 = vunpack.c.h.b16 %v470
      %v1030 = vunpack.c.l.b16 %v471
      %v1031 = vunpack.c.h.b16 %v471
      %v1032 = vunpack.c.l.b16 %v472
      %v1033 = vunpack.c.h.b16 %v472
      %v1034 = vunpack.c.l.b16 %v473
      %v1035 = vunpack.c.h.b16 %v473
      %v1036 = vunpack.c.l.b16 %v474
      %v1037 = vunpack.c.h.b16 %v474
      %v1038 = vunpack.c.l.b16 %v475
      %v1039 = vunpack.c.h.b16 %v475
      %v1040 = vunpack.c.l.b16 %v476
      %v1041 = vunpack.c.h.b16 %v476
      %v1042 = vunpack.c.l.b16 %v477
      %v1043 = vunpack.c.h.b16 %v477
      %v1044 = vunpack.c.l.b16 %v478
      %v1045 = vunpack.c.h.b16 %v478
      %v1046 = vunpack.c.l.b16 %v479
      %v1047 = vunpack.c.h.b16 %v479
      %v1048 = vunpack.c.l.b16 %v480
      %v1049 = vunpack.c.h.b16 %v480
      %v1050 = vunpack.c.l.b16 %v481
      %v1051 = vunpack.c.h.b16 %v481
      %v1052 = vunpack.c.l.b16 %v482
      %v1053 = vunpack.c.h.b16 %v482
      %v1054 = vunpack.c.l.b16 %v483
      %v1055 = vunpack.c.h.b16 %v483
      %v1056 = vunpack.c.l.b16 %v484
      %v1057 = vunpack.c.h.b16 %v484
      %v1058 = vunpack.c.l.b16 %v485
      %v1059 = vunpack.c.h.b16 %v485
      %v1060 = vunpack.c.l.b16 %v486
      %v1061 = vunpack.c.h.b16 %v486
      %v1062 = vunpack.c.l.b16 %v487
      %v1063 = vunpack.c.h.b16 %v487
      %v1064 = vunpack.c.l.b16 %v488
      %v1065 = vunpack.c.h.b16 %v488
      %v1066 = vunpack.c.l.b16 %v489
      %v1067 = vunpack.c.h.b16 %v489
      %v1068 = vunpack.c.l.b16 %v490
      %v1069 = vunpack.c.h.b16 %v490
      %v1070 = vunpack.c.l.b16 %v491
      %v1071 = vunpack.c.h.b16 %v491
      %v1072 = vunpack.c.l.b16 %v492
      %v1073 = vunpack.c.h.b16 %v492
      %v1074 = vunpack.c.l.b16 %v493
      %v1075 = vunpack.c.h.b16 %v493
      %v1076 = vunpack.c.l.b16 %v494
      %v1077 = vunpack.c.h.b16 %v494
      %v1078 = vunpack.c.l.b16 %v495
      %v1079 = vunpack.c.h.b16 %v495
      %v1080 = vunpack.c.l.b16 %v496
      %v1081 = vunpack.c.h.b16 %v496
      %v1082 = vunpack.c.l.b16 %v497
      %v1083 = vunpack.c.h.b16 %v497
      %v1084 = vunpack.c.l.b16 %v498
      %v1085 = vunpack.c.h.b16 %v498
      %v1086 = vunpack.c.l.b16 %v499
      %v1087 = vunpack.c.h.b16 %v499
      %v1088 = vunpack.c.l.b16 %v500
      %v1089 = vunpack.c.h.b16 %v500
      %v1090 = vunpack.c.l.b16 %v501
      %v1091 = vunpack.c.h.b16 %v501
      %v1092 = vpack.c.b16 %v714, %v708
      %v1093 = vpack.c.b16 %v715, %v709
      %v1094 = vpack.c.b16 %v716, %v710
      %v1095 = vpack.c.b16 %v717, %v711
      %v1096 = vpack.c.b16 %v718, %v712
      %v1097 = vpack.c.b16 %v719, %v713
      %v1098 = vpack.c.b16 %v726, %v720
      %v1099 = vpack.c.b16 %v727, %v721
      %v1100 = vpack.c.b16 %v728, %v722
      %v1101 = vpack.c.b16 %v729, %v723
      %v1102 = vpack.c.b16 %v730, %v724
      %v1103 = vpack.c.b16 %v731, %v725
      %v1104 = vpack.c.b16 %v738, %v732
      %v1105 = vpack.c.b16 %v739, %v733
      %v1106 = vpack.c.b16 %v740, %v734
      %v1107 = vpack.c.b16 %v741, %v735
      %v1108 = vpack.c.b16 %v742, %v736
      %v1109 = vpack.c.b16 %v743, %v737
      %v1110 = vpack.c.b16 %v750, %v744
      %v1111 = vpack.c.b16 %v751, %v745
      %v1112 = vpack.c.b16 %v752, %v746
      %v1113 = vpack.c.b16 %v753, %v747
      %v1114 = vpack.c.b16 %v754, %v748
      %v1115 = vpack.c.b16 %v755, %v749
      %v1116 = vpack.c.b16 %v762, %v756
      %v1117 = vpack.c.b16 %v763, %v757
      %v1118 = vpack.c.b16 %v764, %v758
      %v1119 = vpack.c.b16 %v765, %v759
      %v1120 = vpack.c.b16 %v766, %v760
      %v1121 = vpack.c.b16 %v767, %v761
      %v1122 = vpack.c.b16 %v774, %v768
      %v1123 = vpack.c.b16 %v775, %v769
      %v1124 = vpack.c.b16 %v776, %v770
      %v1125 = vpack.c.b16 %v777, %v771
      %v1126 = vpack.c.b16 %v778, %v772
      %v1127 = vpack.c.b16 %v779, %v773
      %v1128 = vpack.c.b16 %v786, %v780
      %v1129 = vpack.c.b16 %v787, %v781
      %v1130 = vpack.c.b16 %v788, %v782
      %v1131 = vpack.c.b16 %v789, %v783
      %v1132 = vpack.c.b16 %v790, %v784
      %v1133 = vpack.c.b16 %v791, %v785
      %v1134 = vpack.c.b16 %v798, %v792
      %v1135 = vpack.c.b16 %v799, %v793
      %v1136 = vpack.c.b16 %v800, %v794
      %v1137 = vpack.c.b16 %v801, %v795
      %v1138 = vpack.c.b16 %v802, %v796
      %v1139 = vpack.c.b16 %v803, %v797
      %v1140 = vpack.c.b16 %v810, %v804
      %v1141 = vpack.c.b16 %v811, %v805
      %v1142 = vpack.c.b16 %v812, %v806
      %v1143 = vpack.c.b16 %v813, %v807
      %v1144 = vpack.c.b16 %v814, %v808
      %v1145 = vpack.c.b16 %v815, %v809
      %v1146 = vpack.c.b16 %v822, %v816
      %v1147 = vpack.c.b16 %v823, %v817
      %v1148 = vpack.c.b16 %v824, %v818
      %v1149 = vpack.c.b16 %v825, %v819
      %v1150 = vpack.c.b16 %v826, %v820
      %v1151 = vpack.c.b16 %v827, %v821
      %v1152 = vpack.c.b16 %v834, %v828
      %v1153 = vpack.c.b16 %v835, %v829
      %v1154 = vpack.c.b16 %v836, %v830
      %v1155 = vpack.c.b16 %v837, %v831
      %v1156 = vpack.c.b16 %v838, %v832
      %v1157 = vpack.c.b16 %v839, %v833
      %v1158 = vpack.c.b16 %v846, %v840
      %v1159 = vpack.c.b16 %v847, %v841
      %v1160 = vpack.c.b16 %v848, %v842
      %v1161 = vpack.c.b16 %v849, %v843
      %v1162 = vpack.c.b16 %v850, %v844
      %v1163 = vpack.c.b16 %v851, %v845
      %v1164 = vpack.c.b16 %v858, %v852
      %v1165 = vpack.c.b16 %v859, %v853
      %v1166 = vpack.c.b16 %v860, %v854
      %v1167 = vpack.c.b16 %v861, %v855
      %v1168 = vpack.c.b16 %v862, %v856
      %v1169 = vpack.c.b16 %v863, %v857
      %v1170 = vpack.c.b16 %v870, %v864
      %v1171 = vpack.c.b16 %v871, %v865
      %v1172 = vpack.c.b16 %v872, %v866
      %v1173 = vpack.c.b16 %v873, %v867
      %v1174 = vpack.c.b16 %v874, %v868
      %v1175 = vpack.c.b16 %v875, %v869
      %v1176 = vpack.c.b16 %v882, %v876
      %v1177 = vpack.c.b16 %v883, %v877
      %v1178 = vpack.c.b16 %v884, %v878
      %v1179 = vpack.c.b16 %v885, %v879
      %v1180 = vpack.c.b16 %v886, %v880
      %v1181 = vpack.c.b16 %v887, %v881
      %v1182 = vpack.c.b16 %v894, %v888
      %v1183 = vpack.c.b16 %v895, %v889
      %v1184 = vpack.c.b16 %v896, %v890
      %v1185 = vpack.c.b16 %v897, %v891
      %v1186 = vpack.c.b16 %v898, %v892
      %v1187 = vpack.c.b16 %v899, %v893
      %v1188 = vpack.c.b16 %v906, %v900
      %v1189 = vpack.c.b16 %v907, %v901
      %v1190 = vpack.c.b16 %v908, %v902
      %v1191 = vpack.c.b16 %v909, %v903
      %v1192 = vpack.c.b16 %v910, %v904
      %v1193 = vpack.c.b16 %v911, %v905
      %v1194 = vpack.c.b16 %v918, %v912
      %v1195 = vpack.c.b16 %v919, %v913
      %v1196 = vpack.c.b16 %v920, %v914
      %v1197 = vpack.c.b16 %v921, %v915
      %v1198 = vpack.c.b16 %v922, %v916
      %v1199 = vpack.c.b16 %v923, %v917
      %v1200 = vpack.c.b16 %v930, %v924
      %v1201 = vpack.c.b16 %v931, %v925
      %v1202 = vpack.c.b16 %v932, %v926
      %v1203 = vpack.c.b16 %v933, %v927
      %v1204 = vpack.c.b16 %v934, %v928
      %v1205 = vpack.c.b16 %v935, %v929
      %v1206 = vpack.c.b16 %v942, %v936
      %v1207 = vpack.c.b16 %v943, %v937
      %v1208 = vpack.c.b16 %v944, %v938
      %v1209 = vpack.c.b16 %v945, %v939
      %v1210 = vpack.c.b16 %v946, %v940
      %v1211 = vpack.c.b16 %v947, %v941
      %v1212 = vpack.c.b16 %v954, %v948
      %v1213 = vpack.c.b16 %v955, %v949
      %v1214 = vpack.c.b16 %v956, %v950
      %v1215 = vpack.c.b16 %v957, %v951
      %v1216 = vpack.c.b16 %v958, %v952
      %v1217 = vpack.c.b16 %v959, %v953
      %v1218 = vpack.c.b16 %v966, %v960
      %v1219 = vpack.c.b16 %v967, %v961
      %v1220 = vpack.c.b16 %v968, %v962
      %v1221 = vpack.c.b16 %v969, %v963
      %v1222 = vpack.c.b16 %v970, %v964
      %v1223 = vpack.c.b16 %v971, %v965
      %v1224 = vpack.c.b16 %v978, %v972
      %v1225 = vpack.c.b16 %v979, %v973
      %v1226 = vpack.c.b16 %v980, %v974
      %v1227 = vpack.c.b16 %v981, %v975
      %v1228 = vpack.c.b16 %v982, %v976
      %v1229 = vpack.c.b16 %v983, %v977
      %v1230 = vpack.c.b16 %v990, %v984
      %v1231 = vpack.c.b16 %v991, %v985
      %v1232 = vpack.c.b16 %v992, %v986
      %v1233 = vpack.c.b16 %v993, %v987
      %v1234 = vpack.c.b16 %v994, %v988
      %v1235 = vpack.c.b16 %v995, %v989
      %v1236 = vpack.c.b16 %v1002, %v996
      %v1237 = vpack.c.b16 %v1003, %v997
      %v1238 = vpack.c.b16 %v1004, %v998
      %v1239 = vpack.c.b16 %v1005, %v999
      %v1240 = vpack.c.b16 %v1006, %v1000
      %v1241 = vpack.c.b16 %v1007, %v1001
      %v1242 = vpack.c.b16 %v1014, %v1008
      %v1243 = vpack.c.b16 %v1015, %v1009
      %v1244 = vpack.c.b16 %v1016, %v1010
      %v1245 = vpack.c.b16 %v1017, %v1011
      %v1246 = vpack.c.b16 %v1018, %v1012
      %v1247 = vpack.c.b16 %v1019, %v1013
      %v1248 = vpack.c.b16 %v1026, %v1020
      %v1249 = vpack.c.b16 %v1027, %v1021
      %v1250 = vpack.c.b16 %v1028, %v1022
      %v1251 = vpack.c.b16 %v1029, %v1023
      %v1252 = vpack.c.b16 %v1030, %v1024
      %v1253 = vpack.c.b16 %v1031, %v1025
      %v1254 = vpack.c.b16 %v1038, %v1032
      %v1255 = vpack.c.b16 %v1039, %v1033
      %v1256 = vpack.c.b16 %v1040, %v1034
      %v1257 = vpack.c.b16 %v1041, %v1035
      %v1258 = vpack.c.b16 %v1042, %v1036
      %v1259 = vpack.c.b16 %v1043, %v1037
      %v1260 = vpack.c.b16 %v1050, %v1044
      %v1261 = vpack.c.b16 %v1051, %v1045
      %v1262 = vpack.c.b16 %v1052, %v1046
      %v1263 = vpack.c.b16 %v1053, %v1047
      %v1264 = vpack.c.b16 %v1054, %v1048
      %v1265 = vpack.c.b16 %v1055, %v1049
      %v1266 = vpack.c.b16 %v1062, %v1056
      %v1267 = vpack.c.b16 %v1063, %v1057
      %v1268 = vpack.c.b16 %v1064, %v1058
      %v1269 = vpack.c.b16 %v1065, %v1059
      %v1270 = vpack.c.b16 %v1066, %v1060
      %v1271 = vpack.c.b16 %v1067, %v1061
      %v1272 = vpack.c.b16 %v1074, %v1068
      %v1273 = vpack.c.b16 %v1075, %v1069
      %v1274 = vpack.c.b16 %v1076, %v1070
      %v1275 = vpack.c.b16 %v1077, %v1071
      %v1276 = vpack.c.b16 %v1078, %v1072
      %v1277 = vpack.c.b16 %v1079, %v1073
      %v1278 = vpack.c.b16 %v1086, %v1080
      %v1279 = vpack.c.b16 %v1087, %v1081
      %v1280 = vpack.c.b16 %v1088, %v1082
      %v1281 = vpack.c.b16 %v1089, %v1083
      %v1282 = vpack.c.b16 %v1090, %v1084
      %v1283 = vpack.c.b16 %v1091, %v1085
      %1476 = vmatprep.subr.bf16.mxu0 %v1093
      %1477 = vmatpush1.bf16.msra.mxu0 %v1092
      %1478 = vmatprep.subr.bf16.mxu0 %v1099
      %1479 = vmatpush1.bf16.msra.mxu0 %v1098
      %1480 = vmatprep.subr.bf16.mxu0 %v1105
      %1481 = vmatpush1.bf16.msra.mxu0 %v1104
      %1482 = vmatprep.subr.bf16.mxu0 %v1111
      %1483 = vmatpush1.bf16.msra.mxu0 %v1110
      %1484 = vmatprep.subr.bf16.mxu0 %v1117
      %1485 = vmatpush1.bf16.msra.mxu0 %v1116
      %1486 = vmatprep.subr.bf16.mxu0 %v1123
      %1487 = vmatpush1.bf16.msra.mxu0 %v1122
      %1488 = vmatprep.subr.bf16.mxu0 %v1129
      %1489 = vmatpush1.bf16.msra.mxu0 %v1128
      %1490 = vmatprep.subr.bf16.mxu0 %v1135
      %1491 = vmatpush1.bf16.msra.mxu0 %v1134
      %1492 = vmatprep.subr.bf16.mxu0 %v1141
      %1493 = vmatpush1.bf16.msra.mxu0 %v1140
      %1494 = vmatprep.subr.bf16.mxu0 %v1147
      %1495 = vmatpush1.bf16.msra.mxu0 %v1146
      %1496 = vmatprep.subr.bf16.mxu0 %v1153
      %1497 = vmatpush1.bf16.msra.mxu0 %v1152
      %1498 = vmatprep.subr.bf16.mxu0 %v1159
      %1499 = vmatpush1.bf16.msra.mxu0 %v1158
      %1500 = vmatprep.subr.bf16.mxu0 %v1165
      %1501 = vmatpush1.bf16.msra.mxu0 %v1164
      %1502 = vmatprep.subr.bf16.mxu0 %v1171
      %1503 = vmatpush1.bf16.msra.mxu0 %v1170
      %1504 = vmatprep.subr.bf16.mxu0 %v1177
      %1505 = vmatpush1.bf16.msra.mxu0 %v1176
      %1506 = vmatprep.subr.bf16.mxu0 %v1183
      %1507 = vmatpush1.bf16.msra.mxu0 %v1182
      %1508 = vmatprep.mubr.bf16.mxu0 %v509
      %1509 = vmatmul.mubr.bf16.gmra.mrb[0].mxu0 %v508
      %v1510 = vpop.f32.mrb[0].mxu0
      %v1511 = vadd.f32 0.0, %v1510
      %v1512 = vpop.f32.mrb[0].mxu0
      %v1513 = vadd.f32 0.0, %v1512
      %v1514 = vpop.f32.mrb[0].mxu0
      %v1515 = vpop.f32.mrb[0].mxu0
      %1516 = vdwg.mxu0
      %1517 = vmatprep.subr.bf16.mxu0 %v1189
      %1518 = vmatpush1.bf16.msra.mxu0 %v1188
      %1519 = vmatprep.subr.bf16.mxu0 %v1195
      %1520 = vmatpush1.bf16.msra.mxu0 %v1194
      %1521 = vmatprep.subr.bf16.mxu0 %v1201
      %1522 = vmatpush1.bf16.msra.mxu0 %v1200
      %1523 = vmatprep.subr.bf16.mxu0 %v1207
      %1524 = vmatpush1.bf16.msra.mxu0 %v1206
      %1525 = vmatprep.subr.bf16.mxu0 %v1213
      %1526 = vmatpush1.bf16.msra.mxu0 %v1212
      %1527 = vmatprep.subr.bf16.mxu0 %v1219
      %1528 = vmatpush1.bf16.msra.mxu0 %v1218
      %1529 = vmatprep.subr.bf16.mxu0 %v1225
      %1530 = vmatpush1.bf16.msra.mxu0 %v1224
      %1531 = vmatprep.subr.bf16.mxu0 %v1231
      %1532 = vmatpush1.bf16.msra.mxu0 %v1230
      %1533 = vmatprep.subr.bf16.mxu0 %v1237
      %1534 = vmatpush1.bf16.msra.mxu0 %v1236
      %1535 = vmatprep.subr.bf16.mxu0 %v1243
      %1536 = vmatpush1.bf16.msra.mxu0 %v1242
      %1537 = vmatprep.subr.bf16.mxu0 %v1249
      %1538 = vmatpush1.bf16.msra.mxu0 %v1248
      %1539 = vmatprep.subr.bf16.mxu0 %v1255
      %1540 = vmatpush1.bf16.msra.mxu0 %v1254
      %1541 = vmatprep.subr.bf16.mxu0 %v1261
      %1542 = vmatpush1.bf16.msra.mxu0 %v1260
      %1543 = vmatprep.subr.bf16.mxu0 %v1267
      %1544 = vmatpush1.bf16.msra.mxu0 %v1266
      %1545 = vmatprep.subr.bf16.mxu0 %v1273
      %1546 = vmatpush1.bf16.msra.mxu0 %v1272
      %1547 = vmatprep.subr.bf16.mxu0 %v1279
      %1548 = vmatpush1.bf16.msra.mxu0 %v1278
      %1549 = vmatprep.mubr.bf16.mxu0 %v511
      %1550 = vmatmul.mubr.bf16.gmra.mrb[0].mxu0 %v510
      %v1551 = vpop.f32.mrb[0].mxu0
      %v1552 = vadd.f32 %v1511, %v1551
      %v1553 = vpop.f32.mrb[0].mxu0
      %v1554 = vadd.f32 %v1513, %v1553
      %v1555 = vpop.f32.mrb[0].mxu0
      %v1556 = vpop.f32.mrb[0].mxu0
      %1557 = vdwg.mxu0
      %1558 = vmatprep.subr.bf16.mxu0 %v1095
      %1559 = vmatpush1.bf16.msra.mxu0 %v1094
      %1560 = vmatprep.subr.bf16.mxu0 %v1101
      %1561 = vmatpush1.bf16.msra.mxu0 %v1100
      %1562 = vmatprep.subr.bf16.mxu0 %v1107
      %1563 = vmatpush1.bf16.msra.mxu0 %v1106
      %1564 = vmatprep.subr.bf16.mxu0 %v1113
      %1565 = vmatpush1.bf16.msra.mxu0 %v1112
      %1566 = vmatprep.subr.bf16.mxu0 %v1119
      %1567 = vmatpush1.bf16.msra.mxu0 %v1118
      %1568 = vmatprep.subr.bf16.mxu0 %v1125
      %1569 = vmatpush1.bf16.msra.mxu0 %v1124
      %1570 = vmatprep.subr.bf16.mxu0 %v1131
      %1571 = vmatpush1.bf16.msra.mxu0 %v1130
      %1572 = vmatprep.subr.bf16.mxu0 %v1137
      %1573 = vmatpush1.bf16.msra.mxu0 %v1136
      %1574 = vmatprep.subr.bf16.mxu0 %v1143
      %1575 = vmatpush1.bf16.msra.mxu0 %v1142
      %1576 = vmatprep.subr.bf16.mxu0 %v1149
      %1577 = vmatpush1.bf16.msra.mxu0 %v1148
      %1578 = vmatprep.subr.bf16.mxu0 %v1155
      %1579 = vmatpush1.bf16.msra.mxu0 %v1154
      %1580 = vmatprep.subr.bf16.mxu0 %v1161
      %1581 = vmatpush1.bf16.msra.mxu0 %v1160
      %1582 = vmatprep.subr.bf16.mxu0 %v1167
      %1583 = vmatpush1.bf16.msra.mxu0 %v1166
      %1584 = vmatprep.subr.bf16.mxu0 %v1173
      %1585 = vmatpush1.bf16.msra.mxu0 %v1172
      %1586 = vmatprep.subr.bf16.mxu0 %v1179
      %1587 = vmatpush1.bf16.msra.mxu0 %v1178
      %1588 = vmatprep.subr.bf16.mxu0 %v1185
      %1589 = vmatpush1.bf16.msra.mxu0 %v1184
      %1590 = vmatprep.mubr.bf16.mxu0 %v509
      %1591 = vmatmul.mubr.bf16.gmra.mrb[0].mxu0 %v508
      %v1592 = vpop.f32.mrb[0].mxu0
      %v1593 = vadd.f32 0.0, %v1592
      %v1594 = vpop.f32.mrb[0].mxu0
      %v1595 = vadd.f32 0.0, %v1594
      %v1596 = vpop.f32.mrb[0].mxu0
      %v1597 = vpop.f32.mrb[0].mxu0
      %1598 = vdwg.mxu0
      %1599 = vmatprep.subr.bf16.mxu0 %v1191
      %1600 = vmatpush1.bf16.msra.mxu0 %v1190
      %1601 = vmatprep.subr.bf16.mxu0 %v1197
      %1602 = vmatpush1.bf16.msra.mxu0 %v1196
      %1603 = vmatprep.subr.bf16.mxu0 %v1203
      %1604 = vmatpush1.bf16.msra.mxu0 %v1202
      %1605 = vmatprep.subr.bf16.mxu0 %v1209
      %1606 = vmatpush1.bf16.msra.mxu0 %v1208
      %1607 = vmatprep.subr.bf16.mxu0 %v1215
      %1608 = vmatpush1.bf16.msra.mxu0 %v1214
      %1609 = vmatprep.subr.bf16.mxu0 %v1221
      %1610 = vmatpush1.bf16.msra.mxu0 %v1220
      %1611 = vmatprep.subr.bf16.mxu0 %v1227
      %1612 = vmatpush1.bf16.msra.mxu0 %v1226
      %1613 = vmatprep.subr.bf16.mxu0 %v1233
      %1614 = vmatpush1.bf16.msra.mxu0 %v1232
      %1615 = vmatprep.subr.bf16.mxu0 %v1239
      %1616 = vmatpush1.bf16.msra.mxu0 %v1238
      %1617 = vmatprep.subr.bf16.mxu0 %v1245
      %1618 = vmatpush1.bf16.msra.mxu0 %v1244
      %1619 = vmatprep.subr.bf16.mxu0 %v1251
      %1620 = vmatpush1.bf16.msra.mxu0 %v1250
      %1621 = vmatprep.subr.bf16.mxu0 %v1257
      %1622 = vmatpush1.bf16.msra.mxu0 %v1256
      %1623 = vmatprep.subr.bf16.mxu0 %v1263
      %1624 = vmatpush1.bf16.msra.mxu0 %v1262
      %1625 = vmatprep.subr.bf16.mxu0 %v1269
      %1626 = vmatpush1.bf16.msra.mxu0 %v1268
      %1627 = vmatprep.subr.bf16.mxu0 %v1275
      %1628 = vmatpush1.bf16.msra.mxu0 %v1274
      %1629 = vmatprep.subr.bf16.mxu0 %v1281
      %1630 = vmatpush1.bf16.msra.mxu0 %v1280
      %1631 = vmatprep.mubr.bf16.mxu0 %v511
      %1632 = vmatmul.mubr.bf16.gmra.mrb[0].mxu0 %v510
      %v1633 = vpop.f32.mrb[0].mxu0
      %v1634 = vadd.f32 %v1593, %v1633
      %v1635 = vpop.f32.mrb[0].mxu0
      %v1636 = vadd.f32 %v1595, %v1635
      %v1637 = vpop.f32.mrb[0].mxu0
      %v1638 = vpop.f32.mrb[0].mxu0
      %1639 = vdwg.mxu0
      %1640 = vmatprep.subr.bf16.mxu0 %v1097
      %1641 = vmatpush1.bf16.msra.mxu0 %v1096
      %1642 = vmatprep.subr.bf16.mxu0 %v1103
      %1643 = vmatpush1.bf16.msra.mxu0 %v1102
      %1644 = vmatprep.subr.bf16.mxu0 %v1109
      %1645 = vmatpush1.bf16.msra.mxu0 %v1108
      %1646 = vmatprep.subr.bf16.mxu0 %v1115
      %1647 = vmatpush1.bf16.msra.mxu0 %v1114
      %1648 = vmatprep.subr.bf16.mxu0 %v1121
      %1649 = vmatpush1.bf16.msra.mxu0 %v1120
      %1650 = vmatprep.subr.bf16.mxu0 %v1127
      %1651 = vmatpush1.bf16.msra.mxu0 %v1126
      %1652 = vmatprep.subr.bf16.mxu0 %v1133
      %1653 = vmatpush1.bf16.msra.mxu0 %v1132
      %1654 = vmatprep.subr.bf16.mxu0 %v1139
      %1655 = vmatpush1.bf16.msra.mxu0 %v1138
      %1656 = vmatprep.subr.bf16.mxu0 %v1145
      %1657 = vmatpush1.bf16.msra.mxu0 %v1144
      %1658 = vmatprep.subr.bf16.mxu0 %v1151
      %1659 = vmatpush1.bf16.msra.mxu0 %v1150
      %1660 = vmatprep.subr.bf16.mxu0 %v1157
      %1661 = vmatpush1.bf16.msra.mxu0 %v1156
      %1662 = vmatprep.subr.bf16.mxu0 %v1163
      %1663 = vmatpush1.bf16.msra.mxu0 %v1162
      %1664 = vmatprep.subr.bf16.mxu0 %v1169
      %1665 = vmatpush1.bf16.msra.mxu0 %v1168
      %1666 = vmatprep.subr.bf16.mxu0 %v1175
      %1667 = vmatpush1.bf16.msra.mxu0 %v1174
      %1668 = vmatprep.subr.bf16.mxu0 %v1181
      %1669 = vmatpush1.bf16.msra.mxu0 %v1180
      %1670 = vmatprep.subr.bf16.mxu0 %v1187
      %1671 = vmatpush1.bf16.msra.mxu0 %v1186
      %1672 = vmatprep.mubr.bf16.mxu0 %v509
      %1673 = vmatmul.mubr.bf16.gmra.mrb[0].mxu0 %v508
      %v1674 = vpop.f32.mrb[0].mxu0
      %v1675 = vadd.f32 0.0, %v1674
      %v1676 = vpop.f32.mrb[0].mxu0
      %v1677 = vadd.f32 0.0, %v1676
      %v1678 = vpop.f32.mrb[0].mxu0
      %v1679 = vpop.f32.mrb[0].mxu0
      %1680 = vdwg.mxu0
      %1681 = vmatprep.subr.bf16.mxu0 %v1193
      %1682 = vmatpush1.bf16.msra.mxu0 %v1192
      %1683 = vmatprep.subr.bf16.mxu0 %v1199
      %1684 = vmatpush1.bf16.msra.mxu0 %v1198
      %1685 = vmatprep.subr.bf16.mxu0 %v1205
      %1686 = vmatpush1.bf16.msra.mxu0 %v1204
      %1687 = vmatprep.subr.bf16.mxu0 %v1211
      %1688 = vmatpush1.bf16.msra.mxu0 %v1210
      %1689 = vmatprep.subr.bf16.mxu0 %v1217
      %1690 = vmatpush1.bf16.msra.mxu0 %v1216
      %1691 = vmatprep.subr.bf16.mxu0 %v1223
      %1692 = vmatpush1.bf16.msra.mxu0 %v1222
      %1693 = vmatprep.subr.bf16.mxu0 %v1229
      %1694 = vmatpush1.bf16.msra.mxu0 %v1228
      %1695 = vmatprep.subr.bf16.mxu0 %v1235
      %1696 = vmatpush1.bf16.msra.mxu0 %v1234
      %1697 = vmatprep.subr.bf16.mxu0 %v1241
      %1698 = vmatpush1.bf16.msra.mxu0 %v1240
      %1699 = vmatprep.subr.bf16.mxu0 %v1247
      %1700 = vmatpush1.bf16.msra.mxu0 %v1246
      %1701 = vmatprep.subr.bf16.mxu0 %v1253
      %1702 = vmatpush1.bf16.msra.mxu0 %v1252
      %1703 = vmatprep.subr.bf16.mxu0 %v1259
      %1704 = vmatpush1.bf16.msra.mxu0 %v1258
      %1705 = vmatprep.subr.bf16.mxu0 %v1265
      %1706 = vmatpush1.bf16.msra.mxu0 %v1264
      %1707 = vmatprep.subr.bf16.mxu0 %v1271
      %1708 = vmatpush1.bf16.msra.mxu0 %v1270
      %1709 = vmatprep.subr.bf16.mxu0 %v1277
      %1710 = vmatpush1.bf16.msra.mxu0 %v1276
      %1711 = vmatprep.subr.bf16.mxu0 %v1283
      %1712 = vmatpush1.bf16.msra.mxu0 %v1282
      %1713 = vmatprep.mubr.bf16.mxu0 %v511
      %1714 = vmatmul.mubr.bf16.gmra.mrb[0].mxu0 %v510
      %v1715 = vpop.f32.mrb[0].mxu0
      %v1716 = vadd.f32 %v1675, %v1715
      %v1717 = vpop.f32.mrb[0].mxu0
      %v1718 = vadd.f32 %v1677, %v1717
      %v1719 = vpop.f32.mrb[0].mxu0
      %v1720 = vpop.f32.mrb[0].mxu0
      %1721 = vdwg.mxu0
      %v1722 = vadd.f32 %v302, %v1552
      %v1723 = vadd.f32 %v303, %v1554
      %v1724 = vadd.f32 %v304, %v1634
      %v1725 = vadd.f32 %v305, %v1636
      %v1726 = vadd.f32 %v306, %v1716
      %v1727 = vadd.f32 %v307, %v1718
      %1728 = vst [vmem:[#allocation2] sm:$0xff] %v1722
      %1729 = vst [vmem:[#allocation2 + $0x8] sm:$0xff] %v1723
      %1730 = vst [vmem:[#allocation2 + $0x10] sm:$0xff] %v1724
      %1731 = vst [vmem:[#allocation2 + $0x18] sm:$0xff] %v1725
      %1732 = vst [vmem:[#allocation2 + $0x20] sm:$0xff] %v1726
      %1733 = vst [vmem:[#allocation2 + $0x28] sm:$0xff] %v1727
      %p1734 = scmp.eq.s32.totalorder %s18, 2
      // Predicated region
      $region53: #{can_forward.7} parent=47 // pred_check
        %p1735 = pneg %p1734
      $region54: #{can_forward.7} parent=47 // pred_check_branch
        %1737 = sbr.rel (%p1735) target = $region56
      $region55: #{can_forward.7} parent=47 // pred_region
        %v1738 = vld [vmem:[#allocation2] sm:$0xff]
        %v1739 = vld [vmem:[#allocation2 + $0x8] sm:$0xff]
        %v1740 = vld [vmem:[#allocation2 + $0x10] sm:$0xff]
        %v1741 = vld [vmem:[#allocation2 + $0x18] sm:$0xff]
        %v1742 = vld [vmem:[#allocation2 + $0x20] sm:$0xff]
        %v1743 = vld [vmem:[#allocation2 + $0x28] sm:$0xff]
        %v1744 = vld [vmem:[%s2] sm:$0x3f]
        %v1746 = vlaneseq
        %v1747 = vshrl.u32 %v1746, 7
        %v1748 = vsub.s32 0, %v1747
        %v1749 = vrot.slane %v1744, %v1748
        %v1750 = vlaneseq
        %v1751 = vshrl.u32 %v1750, 7
        %v1752 = vsub.s32 1, %v1751
        %v1753 = vrot.slane %v1744, %v1752
        %v1754 = vlaneseq
        %v1755 = vshrl.u32 %v1754, 7
        %v1756 = vsub.s32 2, %v1755
        %v1757 = vrot.slane %v1744, %v1756
        %v1758 = vlaneseq
        %v1759 = vshrl.u32 %v1758, 7
        %v1760 = vsub.s32 3, %v1759
        %v1761 = vrot.slane %v1744, %v1760
        %v1762 = vlaneseq
        %v1763 = vshrl.u32 %v1762, 7
        %v1764 = vsub.s32 4, %v1763
        %v1765 = vrot.slane %v1744, %v1764
        %v1766 = vlaneseq
        %v1767 = vshrl.u32 %v1766, 7
        %v1768 = vsub.s32 5, %v1767
        %v1769 = vrot.slane %v1744, %v1768
        %v1776 = vadd.f32 %v1738, %v1749
        %v1777 = vadd.f32 %v1739, %v1753
        %v1778 = vadd.f32 %v1740, %v1757
        %v1779 = vadd.f32 %v1741, %v1761
        %v1780 = vadd.f32 %v1742, %v1765
        %v1781 = vadd.f32 %v1743, %v1769
        %v1782 = vmax.f32 %v1776, 0.0
        %v1783 = vmax.f32 %v1777, 0.0
        %v1784 = vmax.f32 %v1778, 0.0
        %v1785 = vmax.f32 %v1779, 0.0
        %v1786 = vmax.f32 %v1780, 0.0
        %v1787 = vmax.f32 %v1781, 0.0
        %v1788 = vpack.c.bf16 %v1782, %v1782
        %v1789 = vpack.c.bf16 %v1783, %v1783
        %v1790 = vpack.c.bf16 %v1784, %v1784
        %v1791 = vpack.c.bf16 %v1785, %v1785
        %v1792 = vpack.c.bf16 %v1786, %v1786
        %v1793 = vpack.c.bf16 %v1787, %v1787
        %v1794 = vld [vmem:[%s3] sm:$0xf]
        %v1795 = vld [vmem:[%s3 + $0x4] sm:$0xf]
        %v1796 = vld [vmem:[%s3 + $0x8] sm:$0xf]
        %v1797 = vld [vmem:[%s3 + $0xc] sm:$0xf]
        %v1798 = vld [vmem:[%s3 + $0x10] sm:$0xf]
        %v1799 = vld [vmem:[%s3 + $0x14] sm:$0xf]
        %v1800 = vld [vmem:[%s3 + $0x18] sm:$0xf]
        %v1801 = vld [vmem:[%s3 + $0x1c] sm:$0xf]
        %v1802 = vld [vmem:[%s3 + $0x20] sm:$0xf]
        %v1803 = vld [vmem:[%s3 + $0x24] sm:$0xf]
        %v1804 = vld [vmem:[%s3 + $0x28] sm:$0xf]
        %v1805 = vld [vmem:[%s3 + $0x2c] sm:$0xf]
        %v1806 = vld [vmem:[%s3 + $0x30] sm:$0xf]
        %v1807 = vld [vmem:[%s3 + $0x34] sm:$0xf]
        %v1808 = vld [vmem:[%s3 + $0x38] sm:$0xf]
        %v1809 = vld [vmem:[%s3 + $0x3c] sm:$0xf]
        %v1810 = vld [vmem:[%s3 + $0x40] sm:$0xf]
        %v1811 = vld [vmem:[%s3 + $0x44] sm:$0xf]
        %v1812 = vld [vmem:[%s3 + $0x48] sm:$0xf]
        %v1813 = vld [vmem:[%s3 + $0x4c] sm:$0xf]
        %v1814 = vld [vmem:[%s3 + $0x50] sm:$0xf]
        %v1815 = vld [vmem:[%s3 + $0x54] sm:$0xf]
        %v1816 = vld [vmem:[%s3 + $0x58] sm:$0xf]
        %v1817 = vld [vmem:[%s3 + $0x5c] sm:$0xf]
        %v1818 = vld [vmem:[%s3 + $0x60] sm:$0xf]
        %v1819 = vld [vmem:[%s3 + $0x64] sm:$0xf]
        %v1820 = vld [vmem:[%s3 + $0x68] sm:$0xf]
        %v1821 = vld [vmem:[%s3 + $0x6c] sm:$0xf]
        %v1822 = vld [vmem:[%s3 + $0x70] sm:$0xf]
        %v1823 = vld [vmem:[%s3 + $0x74] sm:$0xf]
        %v1824 = vld [vmem:[%s3 + $0x78] sm:$0xf]
        %v1825 = vld [vmem:[%s3 + $0x7c] sm:$0xf]
        %v1826 = vld [vmem:[%s3 + $0x80] sm:$0xf]
        %v1827 = vld [vmem:[%s3 + $0x84] sm:$0xf]
        %v1828 = vld [vmem:[%s3 + $0x88] sm:$0xf]
        %v1829 = vld [vmem:[%s3 + $0x8c] sm:$0xf]
        %v1830 = vld [vmem:[%s3 + $0x90] sm:$0xf]
        %v1831 = vld [vmem:[%s3 + $0x94] sm:$0xf]
        %v1832 = vld [vmem:[%s3 + $0x98] sm:$0xf]
        %v1833 = vld [vmem:[%s3 + $0x9c] sm:$0xf]
        %v1834 = vld [vmem:[%s3 + $0xa0] sm:$0xf]
        %v1835 = vld [vmem:[%s3 + $0xa4] sm:$0xf]
        %v1836 = vld [vmem:[%s3 + $0xa8] sm:$0xf]
        %v1837 = vld [vmem:[%s3 + $0xac] sm:$0xf]
        %v1838 = vld [vmem:[%s3 + $0xb0] sm:$0xf]
        %v1839 = vld [vmem:[%s3 + $0xb4] sm:$0xf]
        %v1840 = vld [vmem:[%s3 + $0xb8] sm:$0xf]
        %v1841 = vld [vmem:[%s3 + $0xbc] sm:$0xf]
        %v1842 = vld [vmem:[%s3 + $0xc0] sm:$0xf]
        %v1843 = vld [vmem:[%s3 + $0xc4] sm:$0xf]
        %v1844 = vld [vmem:[%s3 + $0xc8] sm:$0xf]
        %v1845 = vld [vmem:[%s3 + $0xcc] sm:$0xf]
        %v1846 = vld [vmem:[%s3 + $0xd0] sm:$0xf]
        %v1847 = vld [vmem:[%s3 + $0xd4] sm:$0xf]
        %v1848 = vld [vmem:[%s3 + $0xd8] sm:$0xf]
        %v1849 = vld [vmem:[%s3 + $0xdc] sm:$0xf]
        %v1850 = vld [vmem:[%s3 + $0xe0] sm:$0xf]
        %v1851 = vld [vmem:[%s3 + $0xe4] sm:$0xf]
        %v1852 = vld [vmem:[%s3 + $0xe8] sm:$0xf]
        %v1853 = vld [vmem:[%s3 + $0xec] sm:$0xf]
        %v1854 = vld [vmem:[%s3 + $0xf0] sm:$0xf]
        %v1855 = vld [vmem:[%s3 + $0xf4] sm:$0xf]
        %v1856 = vld [vmem:[%s3 + $0xf8] sm:$0xf]
        %v1857 = vld [vmem:[%s3 + $0xfc] sm:$0xf]
        %v1858 = vld [vmem:[%s3 + $0x100] sm:$0xf]
        %v1859 = vld [vmem:[%s3 + $0x104] sm:$0xf]
        %v1860 = vld [vmem:[%s3 + $0x108] sm:$0xf]
        %v1861 = vld [vmem:[%s3 + $0x10c] sm:$0xf]
        %v1862 = vld [vmem:[%s3 + $0x110] sm:$0xf]
        %v1863 = vld [vmem:[%s3 + $0x114] sm:$0xf]
        %v1864 = vld [vmem:[%s3 + $0x118] sm:$0xf]
        %v1865 = vld [vmem:[%s3 + $0x11c] sm:$0xf]
        %v1866 = vld [vmem:[%s3 + $0x120] sm:$0xf]
        %v1867 = vld [vmem:[%s3 + $0x124] sm:$0xf]
        %v1868 = vld [vmem:[%s3 + $0x128] sm:$0xf]
        %v1869 = vld [vmem:[%s3 + $0x12c] sm:$0xf]
        %v1870 = vld [vmem:[%s3 + $0x130] sm:$0xf]
        %v1871 = vld [vmem:[%s3 + $0x134] sm:$0xf]
        %v1872 = vld [vmem:[%s3 + $0x138] sm:$0xf]
        %v1873 = vld [vmem:[%s3 + $0x13c] sm:$0xf]
        %v1874 = vld [vmem:[%s3 + $0x140] sm:$0xf]
        %v1875 = vld [vmem:[%s3 + $0x144] sm:$0xf]
        %v1876 = vld [vmem:[%s3 + $0x148] sm:$0xf]
        %v1877 = vld [vmem:[%s3 + $0x14c] sm:$0xf]
        %v1878 = vld [vmem:[%s3 + $0x150] sm:$0xf]
        %v1879 = vld [vmem:[%s3 + $0x154] sm:$0xf]
        %v1880 = vld [vmem:[%s3 + $0x158] sm:$0xf]
        %v1881 = vld [vmem:[%s3 + $0x15c] sm:$0xf]
        %v1882 = vld [vmem:[%s3 + $0x160] sm:$0xf]
        %v1883 = vld [vmem:[%s3 + $0x164] sm:$0xf]
        %v1884 = vld [vmem:[%s3 + $0x168] sm:$0xf]
        %v1885 = vld [vmem:[%s3 + $0x16c] sm:$0xf]
        %v1886 = vld [vmem:[%s3 + $0x170] sm:$0xf]
        %v1887 = vld [vmem:[%s3 + $0x174] sm:$0xf]
        %v1888 = vld [vmem:[%s3 + $0x178] sm:$0xf]
        %v1889 = vld [vmem:[%s3 + $0x17c] sm:$0xf]
        %v1890 = vld [vmem:[%s4] sm:$0x1]
        %v1892 = vlaneseq
        %v1893 = vshrl.u32 %v1892, 7
        %v1894 = vsub.s32 0, %v1893
        %v1895 = vrot.slane %v1890, %v1894
        %v1993 = vunpack.c.l.b16 %v1794
        %v1994 = vunpack.c.l.b16 %v1795
        %v1995 = vunpack.c.l.b16 %v1796
        %v1996 = vunpack.c.l.b16 %v1797
        %v1997 = vunpack.c.l.b16 %v1798
        %v1998 = vunpack.c.l.b16 %v1799
        %v1999 = vunpack.c.l.b16 %v1800
        %v2000 = vunpack.c.l.b16 %v1801
        %v2001 = vunpack.c.l.b16 %v1802
        %v2002 = vunpack.c.l.b16 %v1803
        %v2003 = vunpack.c.l.b16 %v1804
        %v2004 = vunpack.c.l.b16 %v1805
        %v2005 = vunpack.c.l.b16 %v1806
        %v2006 = vunpack.c.l.b16 %v1807
        %v2007 = vunpack.c.l.b16 %v1808
        %v2008 = vunpack.c.l.b16 %v1809
        %v2009 = vunpack.c.l.b16 %v1810
        %v2010 = vunpack.c.l.b16 %v1811
        %v2011 = vunpack.c.l.b16 %v1812
        %v2012 = vunpack.c.l.b16 %v1813
        %v2013 = vunpack.c.l.b16 %v1814
        %v2014 = vunpack.c.l.b16 %v1815
        %v2015 = vunpack.c.l.b16 %v1816
        %v2016 = vunpack.c.l.b16 %v1817
        %v2017 = vunpack.c.l.b16 %v1818
        %v2018 = vunpack.c.l.b16 %v1819
        %v2019 = vunpack.c.l.b16 %v1820
        %v2020 = vunpack.c.l.b16 %v1821
        %v2021 = vunpack.c.l.b16 %v1822
        %v2022 = vunpack.c.l.b16 %v1823
        %v2023 = vunpack.c.l.b16 %v1824
        %v2024 = vunpack.c.l.b16 %v1825
        %v2025 = vunpack.c.l.b16 %v1826
        %v2026 = vunpack.c.l.b16 %v1827
        %v2027 = vunpack.c.l.b16 %v1828
        %v2028 = vunpack.c.l.b16 %v1829
        %v2029 = vunpack.c.l.b16 %v1830
        %v2030 = vunpack.c.l.b16 %v1831
        %v2031 = vunpack.c.l.b16 %v1832
        %v2032 = vunpack.c.l.b16 %v1833
        %v2033 = vunpack.c.l.b16 %v1834
        %v2034 = vunpack.c.l.b16 %v1835
        %v2035 = vunpack.c.l.b16 %v1836
        %v2036 = vunpack.c.l.b16 %v1837
        %v2037 = vunpack.c.l.b16 %v1838
        %v2038 = vunpack.c.l.b16 %v1839
        %v2039 = vunpack.c.l.b16 %v1840
        %v2040 = vunpack.c.l.b16 %v1841
        %v2041 = vunpack.c.l.b16 %v1842
        %v2042 = vunpack.c.l.b16 %v1843
        %v2043 = vunpack.c.l.b16 %v1844
        %v2044 = vunpack.c.l.b16 %v1845
        %v2045 = vunpack.c.l.b16 %v1846
        %v2046 = vunpack.c.l.b16 %v1847
        %v2047 = vunpack.c.l.b16 %v1848
        %v2048 = vunpack.c.l.b16 %v1849
        %v2049 = vunpack.c.l.b16 %v1850
        %v2050 = vunpack.c.l.b16 %v1851
        %v2051 = vunpack.c.l.b16 %v1852
        %v2052 = vunpack.c.l.b16 %v1853
        %v2053 = vunpack.c.l.b16 %v1854
        %v2054 = vunpack.c.l.b16 %v1855
        %v2055 = vunpack.c.l.b16 %v1856
        %v2056 = vunpack.c.l.b16 %v1857
        %v2057 = vunpack.c.l.b16 %v1858
        %v2058 = vunpack.c.l.b16 %v1859
        %v2059 = vunpack.c.l.b16 %v1860
        %v2060 = vunpack.c.l.b16 %v1861
        %v2061 = vunpack.c.l.b16 %v1862
        %v2062 = vunpack.c.l.b16 %v1863
        %v2063 = vunpack.c.l.b16 %v1864
        %v2064 = vunpack.c.l.b16 %v1865
        %v2065 = vunpack.c.l.b16 %v1866
        %v2066 = vunpack.c.l.b16 %v1867
        %v2067 = vunpack.c.l.b16 %v1868
        %v2068 = vunpack.c.l.b16 %v1869
        %v2069 = vunpack.c.l.b16 %v1870
        %v2070 = vunpack.c.l.b16 %v1871
        %v2071 = vunpack.c.l.b16 %v1872
        %v2072 = vunpack.c.l.b16 %v1873
        %v2073 = vunpack.c.l.b16 %v1874
        %v2074 = vunpack.c.l.b16 %v1875
        %v2075 = vunpack.c.l.b16 %v1876
        %v2076 = vunpack.c.l.b16 %v1877
        %v2077 = vunpack.c.l.b16 %v1878
        %v2078 = vunpack.c.l.b16 %v1879
        %v2079 = vunpack.c.l.b16 %v1880
        %v2080 = vunpack.c.l.b16 %v1881
        %v2081 = vunpack.c.l.b16 %v1882
        %v2082 = vunpack.c.l.b16 %v1883
        %v2083 = vunpack.c.l.b16 %v1884
        %v2084 = vunpack.c.l.b16 %v1885
        %v2085 = vunpack.c.l.b16 %v1886
        %v2086 = vunpack.c.l.b16 %v1887
        %v2087 = vunpack.c.l.b16 %v1888
        %v2088 = vunpack.c.l.b16 %v1889
        %v2089 = vpack.c.b16 %v1994, %v1993
        %v2090 = vpack.c.b16 %v1996, %v1995
        %v2091 = vpack.c.b16 %v1998, %v1997
        %v2092 = vpack.c.b16 %v2000, %v1999
        %v2093 = vpack.c.b16 %v2002, %v2001
        %v2094 = vpack.c.b16 %v2004, %v2003
        %v2095 = vpack.c.b16 %v2006, %v2005
        %v2096 = vpack.c.b16 %v2008, %v2007
        %v2097 = vpack.c.b16 %v2010, %v2009
        %v2098 = vpack.c.b16 %v2012, %v2011
        %v2099 = vpack.c.b16 %v2014, %v2013
        %v2100 = vpack.c.b16 %v2016, %v2015
        %v2101 = vpack.c.b16 %v2018, %v2017
        %v2102 = vpack.c.b16 %v2020, %v2019
        %v2103 = vpack.c.b16 %v2022, %v2021
        %v2104 = vpack.c.b16 %v2024, %v2023
        %v2105 = vpack.c.b16 %v2026, %v2025
        %v2106 = vpack.c.b16 %v2028, %v2027
        %v2107 = vpack.c.b16 %v2030, %v2029
        %v2108 = vpack.c.b16 %v2032, %v2031
        %v2109 = vpack.c.b16 %v2034, %v2033
        %v2110 = vpack.c.b16 %v2036, %v2035
        %v2111 = vpack.c.b16 %v2038, %v2037
        %v2112 = vpack.c.b16 %v2040, %v2039
        %v2113 = vpack.c.b16 %v2042, %v2041
        %v2114 = vpack.c.b16 %v2044, %v2043
        %v2115 = vpack.c.b16 %v2046, %v2045
        %v2116 = vpack.c.b16 %v2048, %v2047
        %v2117 = vpack.c.b16 %v2050, %v2049
        %v2118 = vpack.c.b16 %v2052, %v2051
        %v2119 = vpack.c.b16 %v2054, %v2053
        %v2120 = vpack.c.b16 %v2056, %v2055
        %v2121 = vpack.c.b16 %v2058, %v2057
        %v2122 = vpack.c.b16 %v2060, %v2059
        %v2123 = vpack.c.b16 %v2062, %v2061
        %v2124 = vpack.c.b16 %v2064, %v2063
        %v2125 = vpack.c.b16 %v2066, %v2065
        %v2126 = vpack.c.b16 %v2068, %v2067
        %v2127 = vpack.c.b16 %v2070, %v2069
        %v2128 = vpack.c.b16 %v2072, %v2071
        %v2129 = vpack.c.b16 %v2074, %v2073
        %v2130 = vpack.c.b16 %v2076, %v2075
        %v2131 = vpack.c.b16 %v2078, %v2077
        %v2132 = vpack.c.b16 %v2080, %v2079
        %v2133 = vpack.c.b16 %v2082, %v2081
        %v2134 = vpack.c.b16 %v2084, %v2083
        %v2135 = vpack.c.b16 %v2086, %v2085
        %v2136 = vpack.c.b16 %v2088, %v2087
        %2185 = vmatprep.subr.bf16.mxu0 0
        %2186 = vmatpush1.bf16.msra.mxu0 %v2089
        %2187 = vmatprep.subr.bf16.mxu0 0
        %2188 = vmatpush1.bf16.msra.mxu0 %v2090
        %2189 = vmatprep.subr.bf16.mxu0 0
        %2190 = vmatpush1.bf16.msra.mxu0 %v2091
        %2191 = vmatprep.subr.bf16.mxu0 0
        %2192 = vmatpush1.bf16.msra.mxu0 %v2092
        %2193 = vmatprep.subr.bf16.mxu0 0
        %2194 = vmatpush1.bf16.msra.mxu0 %v2093
        %2195 = vmatprep.subr.bf16.mxu0 0
        %2196 = vmatpush1.bf16.msra.mxu0 %v2094
        %2197 = vmatprep.subr.bf16.mxu0 0
        %2198 = vmatpush1.bf16.msra.mxu0 %v2095
        %2199 = vmatprep.subr.bf16.mxu0 0
        %2200 = vmatpush1.bf16.msra.mxu0 %v2096
        %2201 = vmatprep.subr.bf16.mxu0 0
        %2202 = vmatpush1.bf16.msra.mxu0 %v2097
        %2203 = vmatprep.subr.bf16.mxu0 0
        %2204 = vmatpush1.bf16.msra.mxu0 %v2098
        %2205 = vmatprep.subr.bf16.mxu0 0
        %2206 = vmatpush1.bf16.msra.mxu0 %v2099
        %2207 = vmatprep.subr.bf16.mxu0 0
        %2208 = vmatpush1.bf16.msra.mxu0 %v2100
        %2209 = vmatprep.subr.bf16.mxu0 0
        %2210 = vmatpush1.bf16.msra.mxu0 %v2101
        %2211 = vmatprep.subr.bf16.mxu0 0
        %2212 = vmatpush1.bf16.msra.mxu0 %v2102
        %2213 = vmatprep.subr.bf16.mxu0 0
        %2214 = vmatpush1.bf16.msra.mxu0 %v2103
        %2215 = vmatprep.subr.bf16.mxu0 0
        %2216 = vmatpush1.bf16.msra.mxu0 %v2104
        %2217 = vmatprep.mubr.bf16.mxu0 %v1789
        %2218 = vmatmul.mubr.bf16.gmra.mrb[0].mxu0 %v1788
        %v2219 = vpop.f32.mrb[0].mxu0
        %v2220 = vadd.f32 %v1895, %v2219
        %v2221 = vpop.f32.mrb[0].mxu0
        %v2222 = vpop.f32.mrb[0].mxu0
        %v2223 = vpop.f32.mrb[0].mxu0
        %2224 = vdwg.mxu0
        %2225 = vmatprep.subr.bf16.mxu0 0
        %2226 = vmatpush1.bf16.msra.mxu0 %v2105
        %2227 = vmatprep.subr.bf16.mxu0 0
        %2228 = vmatpush1.bf16.msra.mxu0 %v2106
        %2229 = vmatprep.subr.bf16.mxu0 0
        %2230 = vmatpush1.bf16.msra.mxu0 %v2107
        %2231 = vmatprep.subr.bf16.mxu0 0
        %2232 = vmatpush1.bf16.msra.mxu0 %v2108
        %2233 = vmatprep.subr.bf16.mxu0 0
        %2234 = vmatpush1.bf16.msra.mxu0 %v2109
        %2235 = vmatprep.subr.bf16.mxu0 0
        %2236 = vmatpush1.bf16.msra.mxu0 %v2110
        %2237 = vmatprep.subr.bf16.mxu0 0
        %2238 = vmatpush1.bf16.msra.mxu0 %v2111
        %2239 = vmatprep.subr.bf16.mxu0 0
        %2240 = vmatpush1.bf16.msra.mxu0 %v2112
        %2241 = vmatprep.subr.bf16.mxu0 0
        %2242 = vmatpush1.bf16.msra.mxu0 %v2113
        %2243 = vmatprep.subr.bf16.mxu0 0
        %2244 = vmatpush1.bf16.msra.mxu0 %v2114
        %2245 = vmatprep.subr.bf16.mxu0 0
        %2246 = vmatpush1.bf16.msra.mxu0 %v2115
        %2247 = vmatprep.subr.bf16.mxu0 0
        %2248 = vmatpush1.bf16.msra.mxu0 %v2116
        %2249 = vmatprep.subr.bf16.mxu0 0
        %2250 = vmatpush1.bf16.msra.mxu0 %v2117
        %2251 = vmatprep.subr.bf16.mxu0 0
        %2252 = vmatpush1.bf16.msra.mxu0 %v2118
        %2253 = vmatprep.subr.bf16.mxu0 0
        %2254 = vmatpush1.bf16.msra.mxu0 %v2119
        %2255 = vmatprep.subr.bf16.mxu0 0
        %2256 = vmatpush1.bf16.msra.mxu0 %v2120
        %2257 = vmatprep.mubr.bf16.mxu0 %v1791
        %2258 = vmatmul.mubr.bf16.gmra.mrb[0].mxu0 %v1790
        %v2259 = vpop.f32.mrb[0].mxu0
        %v2260 = vadd.f32 %v2220, %v2259
        %v2261 = vpop.f32.mrb[0].mxu0
        %v2262 = vpop.f32.mrb[0].mxu0
        %v2263 = vpop.f32.mrb[0].mxu0
        %2264 = vdwg.mxu0
        %2265 = vmatprep.subr.bf16.mxu0 0
        %2266 = vmatpush1.bf16.msra.mxu0 %v2121
        %2267 = vmatprep.subr.bf16.mxu0 0
        %2268 = vmatpush1.bf16.msra.mxu0 %v2122
        %2269 = vmatprep.subr.bf16.mxu0 0
        %2270 = vmatpush1.bf16.msra.mxu0 %v2123
        %2271 = vmatprep.subr.bf16.mxu0 0
        %2272 = vmatpush1.bf16.msra.mxu0 %v2124
        %2273 = vmatprep.subr.bf16.mxu0 0
        %2274 = vmatpush1.bf16.msra.mxu0 %v2125
        %2275 = vmatprep.subr.bf16.mxu0 0
        %2276 = vmatpush1.bf16.msra.mxu0 %v2126
        %2277 = vmatprep.subr.bf16.mxu0 0
        %2278 = vmatpush1.bf16.msra.mxu0 %v2127
        %2279 = vmatprep.subr.bf16.mxu0 0
        %2280 = vmatpush1.bf16.msra.mxu0 %v2128
        %2281 = vmatprep.subr.bf16.mxu0 0
        %2282 = vmatpush1.bf16.msra.mxu0 %v2129
        %2283 = vmatprep.subr.bf16.mxu0 0
        %2284 = vmatpush1.bf16.msra.mxu0 %v2130
        %2285 = vmatprep.subr.bf16.mxu0 0
        %2286 = vmatpush1.bf16.msra.mxu0 %v2131
        %2287 = vmatprep.subr.bf16.mxu0 0
        %2288 = vmatpush1.bf16.msra.mxu0 %v2132
        %2289 = vmatprep.subr.bf16.mxu0 0
        %2290 = vmatpush1.bf16.msra.mxu0 %v2133
        %2291 = vmatprep.subr.bf16.mxu0 0
        %2292 = vmatpush1.bf16.msra.mxu0 %v2134
        %2293 = vmatprep.subr.bf16.mxu0 0
        %2294 = vmatpush1.bf16.msra.mxu0 %v2135
        %2295 = vmatprep.subr.bf16.mxu0 0
        %2296 = vmatpush1.bf16.msra.mxu0 %v2136
        %2297 = vmatprep.mubr.bf16.mxu0 %v1793
        %2298 = vmatmul.mubr.bf16.gmra.mrb[0].mxu0 %v1792
        %v2299 = vpop.f32.mrb[0].mxu0
        %v2300 = vadd.f32 %v2260, %v2299
        %v2301 = vpop.f32.mrb[0].mxu0
        %v2302 = vpop.f32.mrb[0].mxu0
        %v2303 = vpop.f32.mrb[0].mxu0
        %2304 = vdwg.mxu0
        %v2305 = vmax.f32 %v2300, 0.0
        %v2306 = vpack.c.bf16 %v2305, %v2305
        %v2307 = vld [vmem:[%s5] sm:$0xf]
        %v2308 = vld [vmem:[%s5 + $0x4] sm:$0xf]
        %v2309 = vld [vmem:[%s5 + $0x8] sm:$0xf]
        %v2310 = vld [vmem:[%s5 + $0xc] sm:$0xf]
        %v2311 = vld [vmem:[%s5 + $0x10] sm:$0xf]
        %v2312 = vld [vmem:[%s5 + $0x14] sm:$0xf]
        %v2313 = vld [vmem:[%s5 + $0x18] sm:$0xf]
        %v2314 = vld [vmem:[%s5 + $0x1c] sm:$0xf]
        %v2315 = vld [vmem:[%s5 + $0x20] sm:$0xf]
        %v2316 = vld [vmem:[%s5 + $0x24] sm:$0xf]
        %v2317 = vld [vmem:[%s5 + $0x28] sm:$0xf]
        %v2318 = vld [vmem:[%s5 + $0x2c] sm:$0xf]
        %v2319 = vld [vmem:[%s5 + $0x30] sm:$0xf]
        %v2320 = vld [vmem:[%s5 + $0x34] sm:$0xf]
        %v2321 = vld [vmem:[%s5 + $0x38] sm:$0xf]
        %v2322 = vld [vmem:[%s5 + $0x3c] sm:$0xf]
        %v2323 = vld [vmem:[%s6] sm:$0x1]
        %v2325 = vlaneseq
        %v2326 = vshrl.u32 %v2325, 7
        %v2327 = vsub.s32 0, %v2326
        %v2328 = vrot.slane %v2323, %v2327
        %v2346 = vunpack.c.l.b16 %v2307
        %v2347 = vunpack.c.l.b16 %v2308
        %v2348 = vunpack.c.l.b16 %v2309
        %v2349 = vunpack.c.l.b16 %v2310
        %v2350 = vunpack.c.l.b16 %v2311
        %v2351 = vunpack.c.l.b16 %v2312
        %v2352 = vunpack.c.l.b16 %v2313
        %v2353 = vunpack.c.l.b16 %v2314
        %v2354 = vunpack.c.l.b16 %v2315
        %v2355 = vunpack.c.l.b16 %v2316
        %v2356 = vunpack.c.l.b16 %v2317
        %v2357 = vunpack.c.l.b16 %v2318
        %v2358 = vunpack.c.l.b16 %v2319
        %v2359 = vunpack.c.l.b16 %v2320
        %v2360 = vunpack.c.l.b16 %v2321
        %v2361 = vunpack.c.l.b16 %v2322
        %v2362 = vpack.c.b16 %v2347, %v2346
        %v2363 = vpack.c.b16 %v2349, %v2348
        %v2364 = vpack.c.b16 %v2351, %v2350
        %v2365 = vpack.c.b16 %v2353, %v2352
        %v2366 = vpack.c.b16 %v2355, %v2354
        %v2367 = vpack.c.b16 %v2357, %v2356
        %v2368 = vpack.c.b16 %v2359, %v2358
        %v2369 = vpack.c.b16 %v2361, %v2360
        %2378 = vmatprep.subr.bf16.mxu0 0
        %2379 = vmatpush1.bf16.msra.mxu0 %v2362
        %2380 = vmatprep.subr.bf16.mxu0 0
        %2381 = vmatpush1.bf16.msra.mxu0 %v2363
        %2382 = vmatprep.subr.bf16.mxu0 0
        %2383 = vmatpush1.bf16.msra.mxu0 %v2364
        %2384 = vmatprep.subr.bf16.mxu0 0
        %2385 = vmatpush1.bf16.msra.mxu0 %v2365
        %2386 = vmatprep.subr.bf16.mxu0 0
        %2387 = vmatpush1.bf16.msra.mxu0 %v2366
        %2388 = vmatprep.subr.bf16.mxu0 0
        %2389 = vmatpush1.bf16.msra.mxu0 %v2367
        %2390 = vmatprep.subr.bf16.mxu0 0
        %2391 = vmatpush1.bf16.msra.mxu0 %v2368
        %2392 = vmatprep.subr.bf16.mxu0 0
        %2393 = vmatpush1.bf16.msra.mxu0 %v2369
        %2394 = vmatprep.subr.bf16.mxu0 0
        %2395 = vmatpush1.bf16.msra.mxu0 0
        %2396 = vmatprep.subr.bf16.mxu0 0
        %2397 = vmatpush1.bf16.msra.mxu0 0
        %2398 = vmatprep.subr.bf16.mxu0 0
        %2399 = vmatpush1.bf16.msra.mxu0 0
        %2400 = vmatprep.subr.bf16.mxu0 0
        %2401 = vmatpush1.bf16.msra.mxu0 0
        %2402 = vmatprep.subr.bf16.mxu0 0
        %2403 = vmatpush1.bf16.msra.mxu0 0
        %2404 = vmatprep.subr.bf16.mxu0 0
        %2405 = vmatpush1.bf16.msra.mxu0 0
        %2406 = vmatprep.subr.bf16.mxu0 0
        %2407 = vmatpush1.bf16.msra.mxu0 0
        %2408 = vmatprep.subr.bf16.mxu0 0
        %2409 = vmatpush1.bf16.msra.mxu0 0
        %2410 = vmatprep.mubr.bf16.mxu0 0
        %2411 = vmatmul.mubr.bf16.gmra.mrb[0].mxu0 %v2306
        %v2412 = vpop.f32.mrb[0].mxu0
        %v2413 = vadd.f32 %v2328, %v2412
        %v2414 = vpop.f32.mrb[0].mxu0
        %v2415 = vpop.f32.mrb[0].mxu0
        %v2416 = vpop.f32.mrb[0].mxu0
        %2417 = vdwg.mxu0
        %2418 = vst [vmem:[%s7] sm:$0xff] %v2413
      $region56: #{can_forward.7} parent=47 // pred_fallthru
        _
      // Predicated region
      $region57: #{can_forward.7} parent=47 // pred_check
        %p2419 = pneg %p188
      $region58: #{can_forward.7} parent=47 // pred_check_branch
        %2421 = sbr.rel (%p2419) target = $region60
      $region59: #{can_forward.7} parent=47 // pred_region
        _
      $region60: #{can_forward.7} parent=47 // pred_fallthru
        _
      // Predicated region
      $region61: #{can_forward.7} parent=47 // pred_check
        %p2422 = pneg %p188
      $region62: #{can_forward.7} parent=47 // pred_check_branch
        %2424 = sbr.rel (%p2422) target = $region64
      $region63: #{can_forward.7} parent=47 // pred_region
        _
      $region64: #{can_forward.7} parent=47 // pred_fallthru
        _
    $region48: #{can_forward.7} parent=5 // pred_fallthru
      _
    %p2425 = scmp.le.s32.totalorder 2, %s13
    // Predicated region
    $region65: #{can_forward.7} parent=5 // pred_check
      %p2426 = pneg %p2425
    $region66: #{can_forward.7} parent=5 // pred_check_branch
      %2428 = sbr.rel (%p2426) target = $region68
    $region67: #{can_forward.7} parent=5 // pred_region
      %s2429 = ssub.s32 %s13, 2
    $region68: #{can_forward.7} parent=5 // pred_fallthru
      _
  $region6: #{can_forward.7} parent=0 // loop_footer
    %s17 = sadd.s32 1, %s13
  $region7: #{can_forward.7} parent=0 // loop_footer_branch
    %12 = sbr.rel target = $region3
  $region8: #{can_forward.7} parent=0 // loop_exit
    _

</llo_original>
